<compile_context>
chip_gen: v6e
topology: v6e:2x2x1
jax: 0.10.0
libtpu: 0.0.40
codegen_flags: <defaults>
</compile_context>

<pallas_src>
import math
from functools import partial

import numpy as np
import jax
import jax.numpy as jnp
from jax.experimental import pallas as pl
from jax.experimental.pallas import tpu as pltpu


# ---------------------------------- in-kernel math helpers ----------------------------------

def _layernorm(x, g, b, eps):
    mu = jnp.mean(x, axis=-1, keepdims=True)
    var = jnp.mean((x - mu) ** 2, axis=-1, keepdims=True)
    return (x - mu) * jax.lax.rsqrt(var + eps) * g + b


def _gelu_tanh(x):
    # tanh GELU: routes the transcendental to the EUP slot.
    # TODO(synk): exact erf-GELU differs by ~1e-3; swap in an erf polynomial if bit-accuracy is required.
    c = math.sqrt(2.0 / math.pi)
    return 0.5 * x * (1.0 + jnp.tanh(c * (x + 0.044715 * x * x * x)))


def _elu(y):
    # ELU(alpha=1); clamp the exp argument so the unselected branch cannot overflow.
    return jnp.where(y > 0.0, y, jnp.exp(jnp.minimum(y, 0.0)) - 1.0)


# ----------------------------------- fused Pallas kernel ------------------------------------

def _make_kernel(cfg, all_size):
    L = cfg['input_size']
    D = cfg['d_model']
    d_b = cfg['d_bottleneck']
    n_head, d_k, d_v = cfg['n_head'], cfg['d_k'], cfg['d_v']
    n_layer = cfg['n_layer']
    window_size = cfg['window_size']
    n_conv = len(window_size)
    N = sum(all_size)
    L0 = all_size[0]

    def kernel(*refs):
        (x_ref, xm_ref, perm_ref, pos_ref, tokw_ref, tokb_ref, tempw_ref, tempb_ref,
         downw_ref, downb_ref, convw_ref, convb_ref) = refs[:12]
        sel_refs = refs[12:12 + n_conv]
        pup_refs = refs[12 + n_conv:12 + 2 * n_conv]
        (pseq_ref, upw_ref, upbias_ref, cg_ref, cb_ref, bias_ref,
         wq_ref, wk_ref, wv_ref, wo_ref, bo_ref, g1_ref, b1n_ref,
         w1_ref, fb1_ref, w2_ref, fb2_ref, g2_ref, b2n_ref) = refs[12 + 2 * n_conv:12 + 2 * n_conv + 19]
        o_ref = refs[12 + 2 * n_conv + 19]

        dot = partial(jnp.dot, preferred_element_type=jnp.float32)

        # ---- DataEmbedding: circular Conv1d(k=3, pad=1) + temporal Linear + positional ----
        xe = x_ref[0]                                    # (L, enc_in)
        xm = xm_ref[0]                                   # (L, mark_dim)
        # val[i] = x[i-1] @ W0 + x[i] @ W1 + x[i+1] @ W2 ; P_prev/P_next are cyclic row permutations.
        a0 = dot(perm_ref[0], dot(xe, tokw_ref[0]))      # rows rolled by +1 -> x[i-1] @ W0
        a1 = dot(xe, tokw_ref[1])
        a2 = dot(perm_ref[1], dot(xe, tokw_ref[2]))      # rows rolled by -1 -> x[i+1] @ W2
        seq = (a0 + a1 + a2 + tokb_ref[...]
               + dot(xm, tempw_ref[...]) + tempb_ref[...] + pos_ref[...])          # (L, D)

        # ---- Bottleneck_Construct: down-proj, stride==kernel convs (BN folded), up-proj, concat, LN
        cur = dot(seq, downw_ref[...]) + downb_ref[...]                             # (L, d_b)
        acc = dot(pseq_ref[...], seq) + upbias_ref[...]                             # (N, D) running all_enc
        for i, wnd in enumerate(window_size):
            wc = convw_ref[i]                            # (wnd*d_b, d_b), BN pre-folded
            y = convb_ref[i]
            for k in range(wnd):
                tap = dot(sel_refs[i][k], cur)           # rows r*wnd + k of cur  -> (Lo, d_b)
                y = y + dot(tap, wc[k * d_b:(k + 1) * d_b, :])
            y = _elu(y)
            cur = y                                      # (Lo, d_b)
            # place this pooled level's up-projection into its rows of all_enc
            acc = acc + dot(pup_refs[i][...], dot(y, upw_ref[...]))
        x = _layernorm(acc, cg_ref[...], cb_ref[...], 1e-5)                         # (N, D)

        # ---- stacked EncoderLayers (post-norm MHA + FFN); weights VMEM-resident across layers ----
        bias = bias_ref[...]                             # (N, N) additive mask: 0 / -1e9
        for l in range(n_layer):
            q = dot(x, wq_ref[l])                        # 1/sqrt(d_k) pre-folded into Wq
            kk = dot(x, wk_ref[l])
            v = dot(x, wv_ref[l])
            wo_l = wo_ref[l]                             # (H*d_v, D)
            proj = bo_ref[l]                             # (1, D), broadcasts
            for h in range(n_head):
                qh = q[:, h * d_k:(h + 1) * d_k]
                kh = kk[:, h * d_k:(h + 1) * d_k]
                vh = v[:, h * d_v:(h + 1) * d_v]
                s = dot(qh, kh.T) + bias
                s = s - jnp.max(s, axis=-1, keepdims=True)
                p = jnp.exp(s)
                p = p * pl.reciprocal(jnp.sum(p, axis=-1, keepdims=True), approx=True)
                ctx = dot(p, vh)                         # (N, d_v)
                proj = proj + dot(ctx, wo_l[h * d_v:(h + 1) * d_v, :])
            x = _layernorm(proj + x, g1_ref[l], b1n_ref[l], 1e-6)

            h1 = _gelu_tanh(dot(x, w1_ref[l]) + fb1_ref[l])
            x = _layernorm(dot(h1, w2_ref[l]) + fb2_ref[l] + x, g2_ref[l], b2n_ref[l], 1e-6)

        # ---- decoder == 'attention' and truncate: keep first all_size[0] positions ----
        o_ref[0] = x[0:L0, :]

    return kernel


# ------------------------------ host-side constants & parameters ----------------------------

def get_mask(input_size, window_size, inner_size):
    """Pyraformer PAM-Naive attention mask.  Returns float mask (1.0 == masked) and all_size."""
    all_size = [input_size]
    for w in window_size:
        all_size.append(all_size[-1] // w)
    seq_length = sum(all_size)
    mask = np.zeros((seq_length, seq_length), dtype=np.float32)

    inner_window = inner_size // 2
    for layer_idx in range(len(all_size)):
        start = sum(all_size[:layer_idx])
        for i in range(start, start + all_size[layer_idx]):
            left = max(i - inner_window, start)
            right = min(i + inner_window + 1, start + all_size[layer_idx])
            mask[i, left:right] = 1
    for layer_idx in range(1, len(all_size)):
        start = sum(all_size[:layer_idx])
        for i in range(start, start + all_size[layer_idx]):
            left = (start - all_size[layer_idx - 1]) + (i - start) * window_size[layer_idx - 1]
            if i == start + all_size[layer_idx] - 1:
                right = start
            else:
                right = (start - all_size[layer_idx - 1]) + (i - start + 1) * window_size[layer_idx - 1]
            mask[i, left:right] = 1
            mask[left:right, i] = 1
    return (1.0 - mask), all_size


def positional_embedding(L, d_model):
    pe = np.zeros((L, d_model), dtype=np.float32)
    position = np.arange(L, dtype=np.float32)[:, None]
    div_term = np.exp(np.arange(0, d_model, 2, dtype=np.float32) * -(math.log(10000.0) / d_model))
    pe[:, 0::2] = np.sin(position * div_term)
    pe[:, 1::2] = np.cos(position * div_term)
    return pe


def _build_static_operands(cfg, all_size, mask_np):
    """Host-precomputed 0/1 matrices so the kernel needs no roll/reshape/concat/unaligned stores."""
    L = cfg['input_size']
    window_size = cfg['window_size']
    N = sum(all_size)

    # cyclic row permutations for the circular token conv: row i picks x[i-1] / x[i+1]
    perm = np.zeros((2, L, L), np.float32)
    for i in range(L):
        perm[0, i, (i - 1) % L] = 1.0
        perm[1, i, (i + 1) % L] = 1.0

    # per conv layer, per tap: row-selection matrices implementing the stride==kernel block gather
    sels = []
    for i, wnd in enumerate(window_size):
        Li, Lo = all_size[i], all_size[i + 1]
        s = np.zeros((wnd, Lo, Li), np.float32)
        for r in range(Lo):
            for k in range(wnd):
                s[k, r, r * wnd + k] = 1.0
        sels.append(jnp.asarray(s))

    # placement matrices building all_enc = [seq_enc ; up(pooled_0) ; up(pooled_1) ; ...]
    place_seq = np.zeros((N, L), np.float32)
    place_seq[np.arange(L), np.arange(L)] = 1.0
    place_up = []
    off = 0
    for i in range(len(window_size)):
        Lo = all_size[i + 1]
        m = np.zeros((N, Lo), np.float32)
        m[L + off + np.arange(Lo), np.arange(Lo)] = 1.0
        place_up.append(jnp.asarray(m))
        off += Lo

    mask_bias = jnp.asarray((-1e9 * mask_np).astype(np.float32))     # additive attention bias
    return jnp.asarray(perm), sels, place_up, jnp.asarray(place_seq), mask_bias


def init_params(key, cfg):
    D, d_b, H = cfg['d_model'], cfg['d_bottleneck'], cfg['n_head']
    dk, dv, d_in = cfg['d_k'], cfg['d_v'], cfg['d_inner']
    keys = iter(jax.random.split(key, 128))

    def w(shape, fan_in):
        return jax.random.normal(next(keys), shape, dtype=jnp.float32) / np.sqrt(fan_in)

    def zb(shape):
        return jnp.zeros(shape, jnp.float32)

    p = {}
    # DataEmbedding: TokenEmbedding circular Conv1d k=3 stored as (tap, in_ch, out_ch),
    # TimeFeatureEmbedding Linear, PositionalEmbedding.
    p['tok_w'] = w((3, cfg['enc_in'], D), 3 * cfg['enc_in'])
    p['tok_b'] = zb((1, D))
    p['temp_w'] = w((cfg['mark_dim'], D), cfg['mark_dim'])
    p['temp_b'] = zb((1, D))
    p['pos_pe'] = jnp.asarray(positional_embedding(cfg['input_size'], D))
    # Bottleneck_Construct (CSCM)
    p['down_w'], p['down_b'] = w((D, d_b), D), zb((1, d_b))
    p['up_w'], p['up_b'] = w((d_b, D), d_b), zb((1, D))
    convs = []
    for wnd in cfg['window_size']:
        convs.append(dict(
            w=w((wnd * d_b, d_b), wnd * d_b),          # Conv1d weight flattened (tap*in_ch, out_ch)
            b=zb((1, d_b)),
            gamma=jnp.ones((1, d_b), jnp.float32), beta=jnp.zeros((1, d_b), jnp.float32),
            mean=jnp.zeros((1, d_b), jnp.float32), var=jnp.ones((1, d_b), jnp.float32)))
    p['convs'] = convs
    p['cscm_ln_g'] = jnp.ones((1, D), jnp.float32)
    p['cscm_ln_b'] = jnp.zeros((1, D), jnp.float32)
    # EncoderLayers (nn.Linear weights stored transposed as (in, out))
    layers = []
    for _ in range(cfg['n_layer']):
        layers.append(dict(
            wq=w((D, H * dk), D), wk=w((D, H * dk), D), wv=w((D, H * dv), D),
            wo=w((H * dv, D), H * dv), bo=zb((1, D)),
            ln1_g=jnp.ones((1, D), jnp.float32), ln1_b=jnp.zeros((1, D), jnp.float32),
            w1=w((D, d_in), D), b1=zb((1, d_in)),
            w2=w((d_in, D), d_in), b2=zb((1, D)),
            ln2_g=jnp.ones((1, D), jnp.float32), ln2_b=jnp.zeros((1, D), jnp.float32)))
    p['layers'] = layers
    return p


# ----------------------------------------- forward ------------------------------------------

def encoder_forward(params, x_enc, x_mark, mask_np, all_size, cfg):
    B, L, enc_in = x_enc.shape
    D, d_b, d_k = cfg['d_model'], cfg['d_bottleneck'], cfg['d_k']
    window_size = cfg['window_size']
    N = sum(all_size)
    L0 = all_size[0]

    assert len(set(window_size)) == 1, "stacked conv weights assume a constant window size"

    perm, sels, place_up, place_seq, mask_bias = _build_static_operands(cfg, all_size, mask_np)

    # ---- one-time parameter transforms (host side, outside the fused kernel) ----
    conv_w, conv_b = [], []
    for cp in params['convs']:
        scale = cp['gamma'] / jnp.sqrt(cp['var'] + 1e-5)          # fold eval-mode BatchNorm1d
        conv_w.append(cp['w'] * scale)
        conv_b.append(cp['b'] * scale + cp['beta'] - cp['mean'] * scale)
    conv_w = jnp.stack(conv_w)                                    # (n_conv, wnd*d_b, d_b)
    conv_b = jnp.stack(conv_b)                                    # (n_conv, 1, d_b)

    stack = lambda name: jnp.stack([lp[name] for lp in params['layers']])
    wq = stack('wq') * (1.0 / math.sqrt(d_k))                     # fold attention scale into Wq
    wk, wv, wo, bo = stack('wk'), stack('wv'), stack('wo'), stack('bo')
    ln1_g, ln1_b = stack('ln1_g'), stack('ln1_b')
    w1, b1, w2, b2 = stack('w1'), stack('b1'), stack('w2'), stack('b2')
    ln2_g, ln2_b = stack('ln2_g'), stack('ln2_b')

    # up-projection bias applied only to the pooled rows of all_enc
    up_bias = jnp.concatenate(
        [jnp.zeros((L, D), jnp.float32), jnp.tile(params['up_b'], (N - L, 1))], axis=0)

    flat_inputs = [
        x_enc, x_mark, perm, params['pos_pe'], params['tok_w'], params['tok_b'],
        params['temp_w'], params['temp_b'], params['down_w'], params['down_b'],
        conv_w, conv_b, *sels, *place_up, place_seq, params['up_w'], up_bias,
        params['cscm_ln_g'], params['cscm_ln_b'], mask_bias,
        wq, wk, wv, wo, bo, ln1_g, ln1_b, w1, b1, w2, b2, ln2_g, ln2_b,
    ]

    def _bcast_spec(a):
        zeros = (0,) * a.ndim
        return pl.BlockSpec(a.shape, lambda b, _z=zeros: _z)

    in_specs = [pl.BlockSpec((1, L, enc_in), lambda b: (b, 0, 0)),
                pl.BlockSpec((1, L, x_mark.shape[-1]), lambda b: (b, 0, 0))]
    in_specs += [_bcast_spec(a) for a in flat_inputs[2:]]

    kernel = _make_kernel(cfg, all_size)
    return pl.pallas_call(
        kernel,
        out_shape=jax.ShapeDtypeStruct((B, L0, D), jnp.float32),
        grid=(B,),
        in_specs=in_specs,
        out_specs=pl.BlockSpec((1, L0, D), lambda b: (b, 0, 0)),
        compiler_params=pltpu.CompilerParams(dimension_semantics=("parallel",)),
    )(*flat_inputs)


# ------------------------------------------- main -------------------------------------------

CFG = dict(batch=2, input_size=16, enc_in=4, mark_dim=4,
           d_model=32, d_inner=64, n_head=4, d_k=8, d_v=8,
           d_bottleneck=16, window_size=[2, 2, 2], inner_size=3,
           n_layer=2, decoder='attention', truncate=True)

if __name__ == "__main__":
    cfg = CFG
    mask_np, all_size = get_mask(cfg['input_size'], cfg['window_size'], cfg['inner_size'])

    root = jax.random.PRNGKey(0)
    kp, kx, km = jax.random.split(root, 3)
    params = init_params(kp, cfg)
    x_enc = jax.random.normal(kx, (cfg['batch'], cfg['input_size'], cfg['enc_in']), dtype=jnp.float32)
    x_mark_enc = jax.random.normal(km, (cfg['batch'], cfg['input_size'], cfg['mark_dim']), dtype=jnp.float32)

    out = encoder_forward(params, x_enc, x_mark_enc, mask_np, all_size, cfg)
    out = jax.block_until_ready(out)
    assert out.shape == (cfg['batch'], all_size[0], cfg['d_model'])
    assert bool(jnp.all(jnp.isfinite(out)))
    print("KERNEL_OK")
</pallas_src>

<mosaic_0001>
module attributes {stable_mosaic.version = 11 : i64} {
  func.func @kernel(%arg0: i32, %arg1: memref<1x16x4xf32, #tpu.memory_space<vmem>>, %arg2: memref<1x16x4xf32, #tpu.memory_space<vmem>>, %arg3: memref<2x16x16xf32, #tpu.memory_space<vmem>>, %arg4: memref<16x32xf32, #tpu.memory_space<vmem>>, %arg5: memref<3x4x32xf32, #tpu.memory_space<vmem>>, %arg6: memref<1x32xf32, #tpu.memory_space<vmem>>, %arg7: memref<4x32xf32, #tpu.memory_space<vmem>>, %arg8: memref<1x32xf32, #tpu.memory_space<vmem>>, %arg9: memref<32x16xf32, #tpu.memory_space<vmem>>, %arg10: memref<1x16xf32, #tpu.memory_space<vmem>>, %arg11: memref<3x32x16xf32, #tpu.memory_space<vmem>>, %arg12: memref<3x1x16xf32, #tpu.memory_space<vmem>>, %arg13: memref<2x8x16xf32, #tpu.memory_space<vmem>>, %arg14: memref<2x4x8xf32, #tpu.memory_space<vmem>>, %arg15: memref<2x2x4xf32, #tpu.memory_space<vmem>>, %arg16: memref<30x8xf32, #tpu.memory_space<vmem>>, %arg17: memref<30x4xf32, #tpu.memory_space<vmem>>, %arg18: memref<30x2xf32, #tpu.memory_space<vmem>>, %arg19: memref<30x16xf32, #tpu.memory_space<vmem>>, %arg20: memref<16x32xf32, #tpu.memory_space<vmem>>, %arg21: memref<30x32xf32, #tpu.memory_space<vmem>>, %arg22: memref<1x32xf32, #tpu.memory_space<vmem>>, %arg23: memref<1x32xf32, #tpu.memory_space<vmem>>, %arg24: memref<30x30xf32, #tpu.memory_space<vmem>>, %arg25: memref<2x32x32xf32, #tpu.memory_space<vmem>>, %arg26: memref<2x32x32xf32, #tpu.memory_space<vmem>>, %arg27: memref<2x32x32xf32, #tpu.memory_space<vmem>>, %arg28: memref<2x32x32xf32, #tpu.memory_space<vmem>>, %arg29: memref<2x1x32xf32, #tpu.memory_space<vmem>>, %arg30: memref<2x1x32xf32, #tpu.memory_space<vmem>>, %arg31: memref<2x1x32xf32, #tpu.memory_space<vmem>>, %arg32: memref<2x32x64xf32, #tpu.memory_space<vmem>>, %arg33: memref<2x1x64xf32, #tpu.memory_space<vmem>>, %arg34: memref<2x64x32xf32, #tpu.memory_space<vmem>>, %arg35: memref<2x1x32xf32, #tpu.memory_space<vmem>>, %arg36: memref<2x1x32xf32, #tpu.memory_space<vmem>>, %arg37: memref<2x1x32xf32, #tpu.memory_space<vmem>>, %arg38: memref<1x16x32xf32, #tpu.memory_space<vmem>>) attributes {dimension_semantics = [#tpu.dimension_semantics<parallel>], iteration_bounds = array<i64: 2>, scalar_prefetch = 0 : i64, scratch_operands = 0 : i64, tpu.core_type = #tpu.core_type<tc>, window_params = [{transform_indices = @transform_0, window_bounds = array<i64: 1, 16, 4>}, {transform_indices = @transform_1, window_bounds = array<i64: 1, 16, 4>}, {pipeline_mode = #tpu.pipeline_mode<synchronous>, transform_indices = @transform_2, window_bounds = array<i64: 2, 16, 16>}, {pipeline_mode = #tpu.pipeline_mode<synchronous>, transform_indices = @transform_3, window_bounds = array<i64: 16, 32>}, {pipeline_mode = #tpu.pipeline_mode<synchronous>, transform_indices = @transform_4, window_bounds = array<i64: 3, 4, 32>}, {pipeline_mode = #tpu.pipeline_mode<synchronous>, transform_indices = @transform_5, window_bounds = array<i64: 1, 32>}, {pipeline_mode = #tpu.pipeline_mode<synchronous>, transform_indices = @transform_6, window_bounds = array<i64: 4, 32>}, {pipeline_mode = #tpu.pipeline_mode<synchronous>, transform_indices = @transform_7, window_bounds = array<i64: 1, 32>}, {pipeline_mode = #tpu.pipeline_mode<synchronous>, transform_indices = @transform_8, window_bounds = array<i64: 32, 16>}, {pipeline_mode = #tpu.pipeline_mode<synchronous>, transform_indices = @transform_9, window_bounds = array<i64: 1, 16>}, {pipeline_mode = #tpu.pipeline_mode<synchronous>, transform_indices = @transform_10, window_bounds = array<i64: 3, 32, 16>}, {pipeline_mode = #tpu.pipeline_mode<synchronous>, transform_indices = @transform_11, window_bounds = array<i64: 3, 1, 16>}, {pipeline_mode = #tpu.pipeline_mode<synchronous>, transform_indices = @transform_12, window_bounds = array<i64: 2, 8, 16>}, {pipeline_mode = #tpu.pipeline_mode<synchronous>, transform_indices = @transform_13, window_bounds = array<i64: 2, 4, 8>}, {pipeline_mode = #tpu.pipeline_mode<synchronous>, transform_indices = @transform_14, window_bounds = array<i64: 2, 2, 4>}, {pipeline_mode = #tpu.pipeline_mode<synchronous>, transform_indices = @transform_15, window_bounds = array<i64: 30, 8>}, {pipeline_mode = #tpu.pipeline_mode<synchronous>, transform_indices = @transform_16, window_bounds = array<i64: 30, 4>}, {pipeline_mode = #tpu.pipeline_mode<synchronous>, transform_indices = @transform_17, window_bounds = array<i64: 30, 2>}, {pipeline_mode = #tpu.pipeline_mode<synchronous>, transform_indices = @transform_18, window_bounds = array<i64: 30, 16>}, {pipeline_mode = #tpu.pipeline_mode<synchronous>, transform_indices = @transform_19, window_bounds = array<i64: 16, 32>}, {pipeline_mode = #tpu.pipeline_mode<synchronous>, transform_indices = @transform_20, window_bounds = array<i64: 30, 32>}, {pipeline_mode = #tpu.pipeline_mode<synchronous>, transform_indices = @transform_21, window_bounds = array<i64: 1, 32>}, {pipeline_mode = #tpu.pipeline_mode<synchronous>, transform_indices = @transform_22, window_bounds = array<i64: 1, 32>}, {pipeline_mode = #tpu.pipeline_mode<synchronous>, transform_indices = @transform_23, window_bounds = array<i64: 30, 30>}, {pipeline_mode = #tpu.pipeline_mode<synchronous>, transform_indices = @transform_24, window_bounds = array<i64: 2, 32, 32>}, {pipeline_mode = #tpu.pipeline_mode<synchronous>, transform_indices = @transform_25, window_bounds = array<i64: 2, 32, 32>}, {pipeline_mode = #tpu.pipeline_mode<synchronous>, transform_indices = @transform_26, window_bounds = array<i64: 2, 32, 32>}, {pipeline_mode = #tpu.pipeline_mode<synchronous>, transform_indices = @transform_27, window_bounds = array<i64: 2, 32, 32>}, {pipeline_mode = #tpu.pipeline_mode<synchronous>, transform_indices = @transform_28, window_bounds = array<i64: 2, 1, 32>}, {pipeline_mode = #tpu.pipeline_mode<synchronous>, transform_indices = @transform_29, window_bounds = array<i64: 2, 1, 32>}, {pipeline_mode = #tpu.pipeline_mode<synchronous>, transform_indices = @transform_30, window_bounds = array<i64: 2, 1, 32>}, {pipeline_mode = #tpu.pipeline_mode<synchronous>, transform_indices = @transform_31, window_bounds = array<i64: 2, 32, 64>}, {pipeline_mode = #tpu.pipeline_mode<synchronous>, transform_indices = @transform_32, window_bounds = array<i64: 2, 1, 64>}, {pipeline_mode = #tpu.pipeline_mode<synchronous>, transform_indices = @transform_33, window_bounds = array<i64: 2, 64, 32>}, {pipeline_mode = #tpu.pipeline_mode<synchronous>, transform_indices = @transform_34, window_bounds = array<i64: 2, 1, 32>}, {pipeline_mode = #tpu.pipeline_mode<synchronous>, transform_indices = @transform_35, window_bounds = array<i64: 2, 1, 32>}, {pipeline_mode = #tpu.pipeline_mode<synchronous>, transform_indices = @transform_36, window_bounds = array<i64: 2, 1, 32>}, {transform_indices = @transform_37, window_bounds = array<i64: 1, 16, 32>}]} {
    %c0 = arith.constant 0 : index
    %c0_0 = arith.constant 0 : index
    %c0_1 = arith.constant 0 : index
    %0 = vector.load %arg1[%c0, %c0_0, %c0_1] : memref<1x16x4xf32, #tpu.memory_space<vmem>>, vector<1x16x4xf32>
    %1 = vector.shape_cast %0 : vector<1x16x4xf32> to vector<16x4xf32>
    %c0_2 = arith.constant 0 : index
    %c0_3 = arith.constant 0 : index
    %c0_4 = arith.constant 0 : index
    %2 = vector.load %arg2[%c0_2, %c0_3, %c0_4] : memref<1x16x4xf32, #tpu.memory_space<vmem>>, vector<1x16x4xf32>
    %3 = vector.shape_cast %2 : vector<1x16x4xf32> to vector<16x4xf32>
    %c0_5 = arith.constant 0 : index
    %c0_6 = arith.constant 0 : index
    %c0_7 = arith.constant 0 : index
    %4 = vector.load %arg3[%c0_5, %c0_6, %c0_7] : memref<2x16x16xf32, #tpu.memory_space<vmem>>, vector<1x16x16xf32>
    %5 = vector.shape_cast %4 : vector<1x16x16xf32> to vector<16x16xf32>
    %c0_8 = arith.constant 0 : index
    %c0_9 = arith.constant 0 : index
    %c0_10 = arith.constant 0 : index
    %6 = vector.load %arg5[%c0_8, %c0_9, %c0_10] : memref<3x4x32xf32, #tpu.memory_space<vmem>>, vector<1x4x32xf32>
    %7 = vector.shape_cast %6 : vector<1x4x32xf32> to vector<4x32xf32>
    %cst = arith.constant dense<0.000000e+00> : vector<16x32xf32>
    %8 = tpu.matmul %1, %7, %cst {dimension_numbers = #tpu.dot_dimension_numbers<[1], [0], [0], [1], [0, 0, 1, 1], [], []>} : vector<16x4xf32>, vector<4x32xf32>, vector<16x32xf32> -> vector<16x32xf32>
    %cst_11 = arith.constant dense<0.000000e+00> : vector<16x32xf32>
    %9 = tpu.matmul %5, %8, %cst_11 {dimension_numbers = #tpu.dot_dimension_numbers<[1], [0], [0], [1], [0, 0, 1, 1], [], []>} : vector<16x16xf32>, vector<16x32xf32>, vector<16x32xf32> -> vector<16x32xf32>
    %c1 = arith.constant 1 : index
    %c0_12 = arith.constant 0 : index
    %c0_13 = arith.constant 0 : index
    %10 = vector.load %arg5[%c1, %c0_12, %c0_13] : memref<3x4x32xf32, #tpu.memory_space<vmem>>, vector<1x4x32xf32>
    %11 = vector.shape_cast %10 : vector<1x4x32xf32> to vector<4x32xf32>
    %cst_14 = arith.constant dense<0.000000e+00> : vector<16x32xf32>
    %12 = tpu.matmul %1, %11, %cst_14 {dimension_numbers = #tpu.dot_dimension_numbers<[1], [0], [0], [1], [0, 0, 1, 1], [], []>} : vector<16x4xf32>, vector<4x32xf32>, vector<16x32xf32> -> vector<16x32xf32>
    %c1_15 = arith.constant 1 : index
    %c0_16 = arith.constant 0 : index
    %c0_17 = arith.constant 0 : index
    %13 = vector.load %arg3[%c1_15, %c0_16, %c0_17] : memref<2x16x16xf32, #tpu.memory_space<vmem>>, vector<1x16x16xf32>
    %14 = vector.shape_cast %13 : vector<1x16x16xf32> to vector<16x16xf32>
    %c2 = arith.constant 2 : index
    %c0_18 = arith.constant 0 : index
    %c0_19 = arith.constant 0 : index
    %15 = vector.load %arg5[%c2, %c0_18, %c0_19] : memref<3x4x32xf32, #tpu.memory_space<vmem>>, vector<1x4x32xf32>
    %16 = vector.shape_cast %15 : vector<1x4x32xf32> to vector<4x32xf32>
    %cst_20 = arith.constant dense<0.000000e+00> : vector<16x32xf32>
    %17 = tpu.matmul %1, %16, %cst_20 {dimension_numbers = #tpu.dot_dimension_numbers<[1], [0], [0], [1], [0, 0, 1, 1], [], []>} : vector<16x4xf32>, vector<4x32xf32>, vector<16x32xf32> -> vector<16x32xf32>
    %cst_21 = arith.constant dense<0.000000e+00> : vector<16x32xf32>
    %18 = tpu.matmul %14, %17, %cst_21 {dimension_numbers = #tpu.dot_dimension_numbers<[1], [0], [0], [1], [0, 0, 1, 1], [], []>} : vector<16x16xf32>, vector<16x32xf32>, vector<16x32xf32> -> vector<16x32xf32>
    %19 = arith.addf %9, %12 : vector<16x32xf32>
    %20 = arith.addf %19, %18 : vector<16x32xf32>
    %c0_22 = arith.constant 0 : index
    %c0_23 = arith.constant 0 : index
    %21 = vector.load %arg6[%c0_22, %c0_23] : memref<1x32xf32, #tpu.memory_space<vmem>>, vector<1x32xf32>
    %22 = vector.broadcast %21 : vector<1x32xf32> to vector<16x32xf32>
    %23 = arith.addf %20, %22 : vector<16x32xf32>
    %c0_24 = arith.constant 0 : index
    %c0_25 = arith.constant 0 : index
    %24 = vector.load %arg7[%c0_24, %c0_25] : memref<4x32xf32, #tpu.memory_space<vmem>>, vector<4x32xf32>
    %cst_26 = arith.constant dense<0.000000e+00> : vector<16x32xf32>
    %25 = tpu.matmul %3, %24, %cst_26 {dimension_numbers = #tpu.dot_dimension_numbers<[1], [0], [0], [1], [0, 0, 1, 1], [], []>} : vector<16x4xf32>, vector<4x32xf32>, vector<16x32xf32> -> vector<16x32xf32>
    %26 = arith.addf %23, %25 : vector<16x32xf32>
    %c0_27 = arith.constant 0 : index
    %c0_28 = arith.constant 0 : index
    %27 = vector.load %arg8[%c0_27, %c0_28] : memref<1x32xf32, #tpu.memory_space<vmem>>, vector<1x32xf32>
    %28 = vector.broadcast %27 : vector<1x32xf32> to vector<16x32xf32>
    %29 = arith.addf %26, %28 : vector<16x32xf32>
    %c0_29 = arith.constant 0 : index
    %c0_30 = arith.constant 0 : index
    %30 = vector.load %arg4[%c0_29, %c0_30] : memref<16x32xf32, #tpu.memory_space<vmem>>, vector<16x32xf32>
    %31 = arith.addf %29, %30 : vector<16x32xf32>
    %c0_31 = arith.constant 0 : index
    %c0_32 = arith.constant 0 : index
    %32 = vector.load %arg9[%c0_31, %c0_32] : memref<32x16xf32, #tpu.memory_space<vmem>>, vector<32x16xf32>
    %cst_33 = arith.constant dense<0.000000e+00> : vector<16x16xf32>
    %33 = tpu.matmul %31, %32, %cst_33 {dimension_numbers = #tpu.dot_dimension_numbers<[1], [0], [0], [1], [0, 0, 1, 1], [], []>} : vector<16x32xf32>, vector<32x16xf32>, vector<16x16xf32> -> vector<16x16xf32>
    %c0_34 = arith.constant 0 : index
    %c0_35 = arith.constant 0 : index
    %34 = vector.load %arg10[%c0_34, %c0_35] : memref<1x16xf32, #tpu.memory_space<vmem>>, vector<1x16xf32>
    %35 = vector.broadcast %34 : vector<1x16xf32> to vector<16x16xf32>
    %36 = arith.addf %33, %35 : vector<16x16xf32>
    %c0_36 = arith.constant 0 : index
    %c0_37 = arith.constant 0 : index
    %37 = vector.load %arg19[%c0_36, %c0_37] : memref<30x16xf32, #tpu.memory_space<vmem>>, vector<30x16xf32>
    %cst_38 = arith.constant dense<0.000000e+00> : vector<30x32xf32>
    %38 = tpu.matmul %37, %31, %cst_38 {dimension_numbers = #tpu.dot_dimension_numbers<[1], [0], [0], [1], [0, 0, 1, 1], [], []>} : vector<30x16xf32>, vector<16x32xf32>, vector<30x32xf32> -> vector<30x32xf32>
    %c0_39 = arith.constant 0 : index
    %c0_40 = arith.constant 0 : index
    %39 = vector.load %arg21[%c0_39, %c0_40] : memref<30x32xf32, #tpu.memory_space<vmem>>, vector<30x32xf32>
    %40 = arith.addf %38, %39 : vector<30x32xf32>
    %c0_41 = arith.constant 0 : index
    %c0_42 = arith.constant 0 : index
    %c0_43 = arith.constant 0 : index
    %41 = vector.load %arg11[%c0_41, %c0_42, %c0_43] : memref<3x32x16xf32, #tpu.memory_space<vmem>>, vector<1x32x16xf32>
    %42 = vector.shape_cast %41 : vector<1x32x16xf32> to vector<32x16xf32>
    %c0_44 = arith.constant 0 : index
    %c0_45 = arith.constant 0 : index
    %c0_46 = arith.constant 0 : index
    %43 = vector.load %arg12[%c0_44, %c0_45, %c0_46] : memref<3x1x16xf32, #tpu.memory_space<vmem>>, vector<1x1x16xf32>
    %44 = vector.shape_cast %43 : vector<1x1x16xf32> to vector<1x16xf32>
    %c0_47 = arith.constant 0 : index
    %c0_48 = arith.constant 0 : index
    %c0_49 = arith.constant 0 : index
    %45 = vector.load %arg13[%c0_47, %c0_48, %c0_49] : memref<2x8x16xf32, #tpu.memory_space<vmem>>, vector<1x8x16xf32>
    %46 = vector.shape_cast %45 : vector<1x8x16xf32> to vector<8x16xf32>
    %cst_50 = arith.constant dense<0.000000e+00> : vector<8x16xf32>
    %47 = tpu.matmul %46, %36, %cst_50 {dimension_numbers = #tpu.dot_dimension_numbers<[1], [0], [0], [1], [0, 0, 1, 1], [], []>} : vector<8x16xf32>, vector<16x16xf32>, vector<8x16xf32> -> vector<8x16xf32>
    %48 = vector.extract_strided_slice %42 {offsets = [0, 0], sizes = [16, 16], strides = [1, 1]} : vector<32x16xf32> to vector<16x16xf32>
    %cst_51 = arith.constant dense<0.000000e+00> : vector<8x16xf32>
    %49 = tpu.matmul %47, %48, %cst_51 {dimension_numbers = #tpu.dot_dimension_numbers<[1], [0], [0], [1], [0, 0, 1, 1], [], []>} : vector<8x16xf32>, vector<16x16xf32>, vector<8x16xf32> -> vector<8x16xf32>
    %50 = vector.broadcast %44 : vector<1x16xf32> to vector<8x16xf32>
    %51 = arith.addf %50, %49 : vector<8x16xf32>
    %c1_52 = arith.constant 1 : index
    %c0_53 = arith.constant 0 : index
    %c0_54 = arith.constant 0 : index
    %52 = vector.load %arg13[%c1_52, %c0_53, %c0_54] : memref<2x8x16xf32, #tpu.memory_space<vmem>>, vector<1x8x16xf32>
    %53 = vector.shape_cast %52 : vector<1x8x16xf32> to vector<8x16xf32>
    %cst_55 = arith.constant dense<0.000000e+00> : vector<8x16xf32>
    %54 = tpu.matmul %53, %36, %cst_55 {dimension_numbers = #tpu.dot_dimension_numbers<[1], [0], [0], [1], [0, 0, 1, 1], [], []>} : vector<8x16xf32>, vector<16x16xf32>, vector<8x16xf32> -> vector<8x16xf32>
    %55 = vector.extract_strided_slice %42 {offsets = [16, 0], sizes = [16, 16], strides = [1, 1]} : vector<32x16xf32> to vector<16x16xf32>
    %cst_56 = arith.constant dense<0.000000e+00> : vector<8x16xf32>
    %56 = tpu.matmul %54, %55, %cst_56 {dimension_numbers = #tpu.dot_dimension_numbers<[1], [0], [0], [1], [0, 0, 1, 1], [], []>} : vector<8x16xf32>, vector<16x16xf32>, vector<8x16xf32> -> vector<8x16xf32>
    %57 = arith.addf %51, %56 : vector<8x16xf32>
    %cst_57 = arith.constant 0.000000e+00 : f32
    %58 = vector.broadcast %cst_57 : f32 to vector<8x16xf32>
    %59 = arith.cmpf ogt, %57, %58 : vector<8x16xf32>
    %cst_58 = arith.constant 0.000000e+00 : f32
    %60 = vector.broadcast %cst_58 : f32 to vector<8x16xf32>
    %61 = arith.minimumf %57, %60 : vector<8x16xf32>
    %62 = math.exp %61 : vector<8x16xf32>
    %cst_59 = arith.constant 1.000000e+00 : f32
    %63 = vector.broadcast %cst_59 : f32 to vector<8x16xf32>
    %64 = arith.subf %62, %63 : vector<8x16xf32>
    %65 = arith.select %59, %57, %64 : vector<8x16xi1>, vector<8x16xf32>
    %c0_60 = arith.constant 0 : index
    %c0_61 = arith.constant 0 : index
    %66 = vector.load %arg16[%c0_60, %c0_61] : memref<30x8xf32, #tpu.memory_space<vmem>>, vector<30x8xf32>
    %c0_62 = arith.constant 0 : index
    %c0_63 = arith.constant 0 : index
    %67 = vector.load %arg20[%c0_62, %c0_63] : memref<16x32xf32, #tpu.memory_space<vmem>>, vector<16x32xf32>
    %cst_64 = arith.constant dense<0.000000e+00> : vector<8x32xf32>
    %68 = tpu.matmul %65, %67, %cst_64 {dimension_numbers = #tpu.dot_dimension_numbers<[1], [0], [0], [1], [0, 0, 1, 1], [], []>} : vector<8x16xf32>, vector<16x32xf32>, vector<8x32xf32> -> vector<8x32xf32>
    %cst_65 = arith.constant dense<0.000000e+00> : vector<30x32xf32>
    %69 = tpu.matmul %66, %68, %cst_65 {dimension_numbers = #tpu.dot_dimension_numbers<[1], [0], [0], [1], [0, 0, 1, 1], [], []>} : vector<30x8xf32>, vector<8x32xf32>, vector<30x32xf32> -> vector<30x32xf32>
    %70 = arith.addf %40, %69 : vector<30x32xf32>
    %c1_66 = arith.constant 1 : index
    %c0_67 = arith.constant 0 : index
    %c0_68 = arith.constant 0 : index
    %71 = vector.load %arg11[%c1_66, %c0_67, %c0_68] : memref<3x32x16xf32, #tpu.memory_space<vmem>>, vector<1x32x16xf32>
    %72 = vector.shape_cast %71 : vector<1x32x16xf32> to vector<32x16xf32>
    %c1_69 = arith.constant 1 : index
    %c0_70 = arith.constant 0 : index
    %c0_71 = arith.constant 0 : index
    %73 = vector.load %arg12[%c1_69, %c0_70, %c0_71] : memref<3x1x16xf32, #tpu.memory_space<vmem>>, vector<1x1x16xf32>
    %74 = vector.shape_cast %73 : vector<1x1x16xf32> to vector<1x16xf32>
    %c0_72 = arith.constant 0 : index
    %c0_73 = arith.constant 0 : index
    %c0_74 = arith.constant 0 : index
    %75 = vector.load %arg14[%c0_72, %c0_73, %c0_74] : memref<2x4x8xf32, #tpu.memory_space<vmem>>, vector<1x4x8xf32>
    %76 = vector.shape_cast %75 : vector<1x4x8xf32> to vector<4x8xf32>
    %cst_75 = arith.constant dense<0.000000e+00> : vector<4x16xf32>
    %77 = tpu.matmul %76, %65, %cst_75 {dimension_numbers = #tpu.dot_dimension_numbers<[1], [0], [0], [1], [0, 0, 1, 1], [], []>} : vector<4x8xf32>, vector<8x16xf32>, vector<4x16xf32> -> vector<4x16xf32>
    %78 = vector.extract_strided_slice %72 {offsets = [0, 0], sizes = [16, 16], strides = [1, 1]} : vector<32x16xf32> to vector<16x16xf32>
    %cst_76 = arith.constant dense<0.000000e+00> : vector<4x16xf32>
    %79 = tpu.matmul %77, %78, %cst_76 {dimension_numbers = #tpu.dot_dimension_numbers<[1], [0], [0], [1], [0, 0, 1, 1], [], []>} : vector<4x16xf32>, vector<16x16xf32>, vector<4x16xf32> -> vector<4x16xf32>
    %80 = vector.broadcast %74 : vector<1x16xf32> to vector<4x16xf32>
    %81 = arith.addf %80, %79 : vector<4x16xf32>
    %c1_77 = arith.constant 1 : index
    %c0_78 = arith.constant 0 : index
    %c0_79 = arith.constant 0 : index
    %82 = vector.load %arg14[%c1_77, %c0_78, %c0_79] : memref<2x4x8xf32, #tpu.memory_space<vmem>>, vector<1x4x8xf32>
    %83 = vector.shape_cast %82 : vector<1x4x8xf32> to vector<4x8xf32>
    %cst_80 = arith.constant dense<0.000000e+00> : vector<4x16xf32>
    %84 = tpu.matmul %83, %65, %cst_80 {dimension_numbers = #tpu.dot_dimension_numbers<[1], [0], [0], [1], [0, 0, 1, 1], [], []>} : vector<4x8xf32>, vector<8x16xf32>, vector<4x16xf32> -> vector<4x16xf32>
    %85 = vector.extract_strided_slice %72 {offsets = [16, 0], sizes = [16, 16], strides = [1, 1]} : vector<32x16xf32> to vector<16x16xf32>
    %cst_81 = arith.constant dense<0.000000e+00> : vector<4x16xf32>
    %86 = tpu.matmul %84, %85, %cst_81 {dimension_numbers = #tpu.dot_dimension_numbers<[1], [0], [0], [1], [0, 0, 1, 1], [], []>} : vector<4x16xf32>, vector<16x16xf32>, vector<4x16xf32> -> vector<4x16xf32>
    %87 = arith.addf %81, %86 : vector<4x16xf32>
    %cst_82 = arith.constant 0.000000e+00 : f32
    %88 = vector.broadcast %cst_82 : f32 to vector<4x16xf32>
    %89 = arith.cmpf ogt, %87, %88 : vector<4x16xf32>
    %cst_83 = arith.constant 0.000000e+00 : f32
    %90 = vector.broadcast %cst_83 : f32 to vector<4x16xf32>
    %91 = arith.minimumf %87, %90 : vector<4x16xf32>
    %92 = math.exp %91 : vector<4x16xf32>
    %cst_84 = arith.constant 1.000000e+00 : f32
    %93 = vector.broadcast %cst_84 : f32 to vector<4x16xf32>
    %94 = arith.subf %92, %93 : vector<4x16xf32>
    %95 = arith.select %89, %87, %94 : vector<4x16xi1>, vector<4x16xf32>
    %c0_85 = arith.constant 0 : index
    %c0_86 = arith.constant 0 : index
    %96 = vector.load %arg17[%c0_85, %c0_86] : memref<30x4xf32, #tpu.memory_space<vmem>>, vector<30x4xf32>
    %c0_87 = arith.constant 0 : index
    %c0_88 = arith.constant 0 : index
    %97 = vector.load %arg20[%c0_87, %c0_88] : memref<16x32xf32, #tpu.memory_space<vmem>>, vector<16x32xf32>
    %cst_89 = arith.constant dense<0.000000e+00> : vector<4x32xf32>
    %98 = tpu.matmul %95, %97, %cst_89 {dimension_numbers = #tpu.dot_dimension_numbers<[1], [0], [0], [1], [0, 0, 1, 1], [], []>} : vector<4x16xf32>, vector<16x32xf32>, vector<4x32xf32> -> vector<4x32xf32>
    %cst_90 = arith.constant dense<0.000000e+00> : vector<30x32xf32>
    %99 = tpu.matmul %96, %98, %cst_90 {dimension_numbers = #tpu.dot_dimension_numbers<[1], [0], [0], [1], [0, 0, 1, 1], [], []>} : vector<30x4xf32>, vector<4x32xf32>, vector<30x32xf32> -> vector<30x32xf32>
    %100 = arith.addf %70, %99 : vector<30x32xf32>
    %c2_91 = arith.constant 2 : index
    %c0_92 = arith.constant 0 : index
    %c0_93 = arith.constant 0 : index
    %101 = vector.load %arg11[%c2_91, %c0_92, %c0_93] : memref<3x32x16xf32, #tpu.memory_space<vmem>>, vector<1x32x16xf32>
    %102 = vector.shape_cast %101 : vector<1x32x16xf32> to vector<32x16xf32>
    %c2_94 = arith.constant 2 : index
    %c0_95 = arith.constant 0 : index
    %c0_96 = arith.constant 0 : index
    %103 = vector.load %arg12[%c2_94, %c0_95, %c0_96] : memref<3x1x16xf32, #tpu.memory_space<vmem>>, vector<1x1x16xf32>
    %104 = vector.shape_cast %103 : vector<1x1x16xf32> to vector<1x16xf32>
    %c0_97 = arith.constant 0 : index
    %c0_98 = arith.constant 0 : index
    %c0_99 = arith.constant 0 : index
    %105 = vector.load %arg15[%c0_97, %c0_98, %c0_99] : memref<2x2x4xf32, #tpu.memory_space<vmem>>, vector<1x2x4xf32>
    %106 = vector.shape_cast %105 : vector<1x2x4xf32> to vector<2x4xf32>
    %cst_100 = arith.constant dense<0.000000e+00> : vector<2x16xf32>
    %107 = tpu.matmul %106, %95, %cst_100 {dimension_numbers = #tpu.dot_dimension_numbers<[1], [0], [0], [1], [0, 0, 1, 1], [], []>} : vector<2x4xf32>, vector<4x16xf32>, vector<2x16xf32> -> vector<2x16xf32>
    %108 = vector.extract_strided_slice %102 {offsets = [0, 0], sizes = [16, 16], strides = [1, 1]} : vector<32x16xf32> to vector<16x16xf32>
    %cst_101 = arith.constant dense<0.000000e+00> : vector<2x16xf32>
    %109 = tpu.matmul %107, %108, %cst_101 {dimension_numbers = #tpu.dot_dimension_numbers<[1], [0], [0], [1], [0, 0, 1, 1], [], []>} : vector<2x16xf32>, vector<16x16xf32>, vector<2x16xf32> -> vector<2x16xf32>
    %110 = vector.broadcast %104 : vector<1x16xf32> to vector<2x16xf32>
    %111 = arith.addf %110, %109 : vector<2x16xf32>
    %c1_102 = arith.constant 1 : index
    %c0_103 = arith.constant 0 : index
    %c0_104 = arith.constant 0 : index
    %112 = vector.load %arg15[%c1_102, %c0_103, %c0_104] : memref<2x2x4xf32, #tpu.memory_space<vmem>>, vector<1x2x4xf32>
    %113 = vector.shape_cast %112 : vector<1x2x4xf32> to vector<2x4xf32>
    %cst_105 = arith.constant dense<0.000000e+00> : vector<2x16xf32>
    %114 = tpu.matmul %113, %95, %cst_105 {dimension_numbers = #tpu.dot_dimension_numbers<[1], [0], [0], [1], [0, 0, 1, 1], [], []>} : vector<2x4xf32>, vector<4x16xf32>, vector<2x16xf32> -> vector<2x16xf32>
    %115 = vector.extract_strided_slice %102 {offsets = [16, 0], sizes = [16, 16], strides = [1, 1]} : vector<32x16xf32> to vector<16x16xf32>
    %cst_106 = arith.constant dense<0.000000e+00> : vector<2x16xf32>
    %116 = tpu.matmul %114, %115, %cst_106 {dimension_numbers = #tpu.dot_dimension_numbers<[1], [0], [0], [1], [0, 0, 1, 1], [], []>} : vector<2x16xf32>, vector<16x16xf32>, vector<2x16xf32> -> vector<2x16xf32>
    %117 = arith.addf %111, %116 : vector<2x16xf32>
    %cst_107 = arith.constant 0.000000e+00 : f32
    %118 = vector.broadcast %cst_107 : f32 to vector<2x16xf32>
    %119 = arith.cmpf ogt, %117, %118 : vector<2x16xf32>
    %cst_108 = arith.constant 0.000000e+00 : f32
    %120 = vector.broadcast %cst_108 : f32 to vector<2x16xf32>
    %121 = arith.minimumf %117, %120 : vector<2x16xf32>
    %122 = math.exp %121 : vector<2x16xf32>
    %cst_109 = arith.constant 1.000000e+00 : f32
    %123 = vector.broadcast %cst_109 : f32 to vector<2x16xf32>
    %124 = arith.subf %122, %123 : vector<2x16xf32>
    %125 = arith.select %119, %117, %124 : vector<2x16xi1>, vector<2x16xf32>
    %c0_110 = arith.constant 0 : index
    %c0_111 = arith.constant 0 : index
    %126 = vector.load %arg18[%c0_110, %c0_111] : memref<30x2xf32, #tpu.memory_space<vmem>>, vector<30x2xf32>
    %c0_112 = arith.constant 0 : index
    %c0_113 = arith.constant 0 : index
    %127 = vector.load %arg20[%c0_112, %c0_113] : memref<16x32xf32, #tpu.memory_space<vmem>>, vector<16x32xf32>
    %cst_114 = arith.constant dense<0.000000e+00> : vector<2x32xf32>
    %128 = tpu.matmul %125, %127, %cst_114 {dimension_numbers = #tpu.dot_dimension_numbers<[1], [0], [0], [1], [0, 0, 1, 1], [], []>} : vector<2x16xf32>, vector<16x32xf32>, vector<2x32xf32> -> vector<2x32xf32>
    %cst_115 = arith.constant dense<0.000000e+00> : vector<30x32xf32>
    %129 = tpu.matmul %126, %128, %cst_115 {dimension_numbers = #tpu.dot_dimension_numbers<[1], [0], [0], [1], [0, 0, 1, 1], [], []>} : vector<30x2xf32>, vector<2x32xf32>, vector<30x32xf32> -> vector<30x32xf32>
    %130 = arith.addf %100, %129 : vector<30x32xf32>
    %c0_116 = arith.constant 0 : index
    %c0_117 = arith.constant 0 : index
    %131 = vector.load %arg22[%c0_116, %c0_117] : memref<1x32xf32, #tpu.memory_space<vmem>>, vector<1x32xf32>
    %c0_118 = arith.constant 0 : index
    %c0_119 = arith.constant 0 : index
    %132 = vector.load %arg23[%c0_118, %c0_119] : memref<1x32xf32, #tpu.memory_space<vmem>>, vector<1x32xf32>
    %cst_120 = arith.constant dense<0.000000e+00> : vector<30xf32>
    %133 = vector.multi_reduction <add>, %130, %cst_120 [1] : vector<30x32xf32> to vector<30xf32>
    %134 = vector.shape_cast %133 : vector<30xf32> to vector<30x1xf32>
    %cst_121 = arith.constant 3.200000e+01 : f32
    %135 = vector.broadcast %cst_121 : f32 to vector<30x1xf32>
    %136 = arith.divf %134, %135 : vector<30x1xf32>
    %137 = vector.broadcast %136 : vector<30x1xf32> to vector<30x32xf32>
    %138 = arith.subf %130, %137 : vector<30x32xf32>
    %139 = arith.mulf %138, %138 : vector<30x32xf32>
    %cst_122 = arith.constant dense<0.000000e+00> : vector<30xf32>
    %140 = vector.multi_reduction <add>, %139, %cst_122 [1] : vector<30x32xf32> to vector<30xf32>
    %141 = vector.shape_cast %140 : vector<30xf32> to vector<30x1xf32>
    %cst_123 = arith.constant 3.200000e+01 : f32
    %142 = vector.broadcast %cst_123 : f32 to vector<30x1xf32>
    %143 = arith.divf %141, %142 : vector<30x1xf32>
    %144 = vector.broadcast %136 : vector<30x1xf32> to vector<30x32xf32>
    %145 = arith.subf %130, %144 : vector<30x32xf32>
    %cst_124 = arith.constant 9.99999974E-6 : f32
    %146 = vector.broadcast %cst_124 : f32 to vector<30x1xf32>
    %147 = arith.addf %143, %146 : vector<30x1xf32>
    %148 = math.rsqrt %147 : vector<30x1xf32>
    %149 = vector.broadcast %148 : vector<30x1xf32> to vector<30x32xf32>
    %150 = arith.mulf %145, %149 : vector<30x32xf32>
    %151 = vector.broadcast %131 : vector<1x32xf32> to vector<30x32xf32>
    %152 = arith.mulf %150, %151 : vector<30x32xf32>
    %153 = vector.broadcast %132 : vector<1x32xf32> to vector<30x32xf32>
    %154 = arith.addf %152, %153 : vector<30x32xf32>
    %c0_125 = arith.constant 0 : index
    %c0_126 = arith.constant 0 : index
    %155 = vector.load %arg24[%c0_125, %c0_126] : memref<30x30xf32, #tpu.memory_space<vmem>>, vector<30x30xf32>
    %c0_127 = arith.constant 0 : index
    %c0_128 = arith.constant 0 : index
    %c0_129 = arith.constant 0 : index
    %156 = vector.load %arg25[%c0_127, %c0_128, %c0_129] : memref<2x32x32xf32, #tpu.memory_space<vmem>>, vector<1x32x32xf32>
    %157 = vector.shape_cast %156 : vector<1x32x32xf32> to vector<32x32xf32>
    %cst_130 = arith.constant dense<0.000000e+00> : vector<30x32xf32>
    %158 = tpu.matmul %154, %157, %cst_130 {dimension_numbers = #tpu.dot_dimension_numbers<[1], [0], [0], [1], [0, 0, 1, 1], [], []>} : vector<30x32xf32>, vector<32x32xf32>, vector<30x32xf32> -> vector<30x32xf32>
    %c0_131 = arith.constant 0 : index
    %c0_132 = arith.constant 0 : index
    %c0_133 = arith.constant 0 : index
    %159 = vector.load %arg26[%c0_131, %c0_132, %c0_133] : memref<2x32x32xf32, #tpu.memory_space<vmem>>, vector<1x32x32xf32>
    %160 = vector.shape_cast %159 : vector<1x32x32xf32> to vector<32x32xf32>
    %cst_134 = arith.constant dense<0.000000e+00> : vector<30x32xf32>
    %161 = tpu.matmul %154, %160, %cst_134 {dimension_numbers = #tpu.dot_dimension_numbers<[1], [0], [0], [1], [0, 0, 1, 1], [], []>} : vector<30x32xf32>, vector<32x32xf32>, vector<30x32xf32> -> vector<30x32xf32>
    %c0_135 = arith.constant 0 : index
    %c0_136 = arith.constant 0 : index
    %c0_137 = arith.constant 0 : index
    %162 = vector.load %arg27[%c0_135, %c0_136, %c0_137] : memref<2x32x32xf32, #tpu.memory_space<vmem>>, vector<1x32x32xf32>
    %163 = vector.shape_cast %162 : vector<1x32x32xf32> to vector<32x32xf32>
    %cst_138 = arith.constant dense<0.000000e+00> : vector<30x32xf32>
    %164 = tpu.matmul %154, %163, %cst_138 {dimension_numbers = #tpu.dot_dimension_numbers<[1], [0], [0], [1], [0, 0, 1, 1], [], []>} : vector<30x32xf32>, vector<32x32xf32>, vector<30x32xf32> -> vector<30x32xf32>
    %c0_139 = arith.constant 0 : index
    %c0_140 = arith.constant 0 : index
    %c0_141 = arith.constant 0 : index
    %165 = vector.load %arg28[%c0_139, %c0_140, %c0_141] : memref<2x32x32xf32, #tpu.memory_space<vmem>>, vector<1x32x32xf32>
    %166 = vector.shape_cast %165 : vector<1x32x32xf32> to vector<32x32xf32>
    %c0_142 = arith.constant 0 : index
    %c0_143 = arith.constant 0 : index
    %c0_144 = arith.constant 0 : index
    %167 = vector.load %arg29[%c0_142, %c0_143, %c0_144] : memref<2x1x32xf32, #tpu.memory_space<vmem>>, vector<1x1x32xf32>
    %168 = vector.shape_cast %167 : vector<1x1x32xf32> to vector<1x32xf32>
    %169 = vector.extract_strided_slice %158 {offsets = [0, 0], sizes = [30, 8], strides = [1, 1]} : vector<30x32xf32> to vector<30x8xf32>
    %170 = vector.extract_strided_slice %161 {offsets = [0, 0], sizes = [30, 8], strides = [1, 1]} : vector<30x32xf32> to vector<30x8xf32>
    %171 = vector.extract_strided_slice %164 {offsets = [0, 0], sizes = [30, 8], strides = [1, 1]} : vector<30x32xf32> to vector<30x8xf32>
    %172 = tpu.transpose %170, [1, 0] : vector<30x8xf32> -> vector<8x30xf32>
    %cst_145 = arith.constant dense<0.000000e+00> : vector<30x30xf32>
    %173 = tpu.matmul %169, %172, %cst_145 {dimension_numbers = #tpu.dot_dimension_numbers<[1], [0], [0], [1], [0, 0, 1, 1], [], []>} : vector<30x8xf32>, vector<8x30xf32>, vector<30x30xf32> -> vector<30x30xf32>
    %174 = arith.addf %173, %155 : vector<30x30xf32>
    %cst_146 = arith.constant dense<0xFF800000> : vector<30xf32>
    %175 = vector.multi_reduction <maximumf>, %174, %cst_146 [1] : vector<30x30xf32> to vector<30xf32>
    %176 = vector.shape_cast %175 : vector<30xf32> to vector<30x1xf32>
    %177 = vector.broadcast %176 : vector<30x1xf32> to vector<30x30xf32>
    %178 = arith.subf %174, %177 : vector<30x30xf32>
    %179 = math.exp %178 : vector<30x30xf32>
    %cst_147 = arith.constant dense<0.000000e+00> : vector<30xf32>
    %180 = vector.multi_reduction <add>, %179, %cst_147 [1] : vector<30x30xf32> to vector<30xf32>
    %181 = vector.shape_cast %180 : vector<30xf32> to vector<30x1xf32>
    %182 = tpu.reciprocal %181 {approx = true} : vector<30x1xf32> -> vector<30x1xf32>
    %183 = vector.broadcast %182 : vector<30x1xf32> to vector<30x30xf32>
    %184 = arith.mulf %179, %183 : vector<30x30xf32>
    %cst_148 = arith.constant dense<0.000000e+00> : vector<30x8xf32>
    %185 = tpu.matmul %184, %171, %cst_148 {dimension_numbers = #tpu.dot_dimension_numbers<[1], [0], [0], [1], [0, 0, 1, 1], [], []>} : vector<30x30xf32>, vector<30x8xf32>, vector<30x8xf32> -> vector<30x8xf32>
    %186 = vector.extract_strided_slice %166 {offsets = [0, 0], sizes = [8, 32], strides = [1, 1]} : vector<32x32xf32> to vector<8x32xf32>
    %cst_149 = arith.constant dense<0.000000e+00> : vector<30x32xf32>
    %187 = tpu.matmul %185, %186, %cst_149 {dimension_numbers = #tpu.dot_dimension_numbers<[1], [0], [0], [1], [0, 0, 1, 1], [], []>} : vector<30x8xf32>, vector<8x32xf32>, vector<30x32xf32> -> vector<30x32xf32>
    %188 = vector.broadcast %168 : vector<1x32xf32> to vector<30x32xf32>
    %189 = arith.addf %188, %187 : vector<30x32xf32>
    %190 = vector.extract_strided_slice %158 {offsets = [0, 8], sizes = [30, 8], strides = [1, 1]} : vector<30x32xf32> to vector<30x8xf32>
    %191 = vector.extract_strided_slice %161 {offsets = [0, 8], sizes = [30, 8], strides = [1, 1]} : vector<30x32xf32> to vector<30x8xf32>
    %192 = vector.extract_strided_slice %164 {offsets = [0, 8], sizes = [30, 8], strides = [1, 1]} : vector<30x32xf32> to vector<30x8xf32>
    %193 = tpu.transpose %191, [1, 0] : vector<30x8xf32> -> vector<8x30xf32>
    %cst_150 = arith.constant dense<0.000000e+00> : vector<30x30xf32>
    %194 = tpu.matmul %190, %193, %cst_150 {dimension_numbers = #tpu.dot_dimension_numbers<[1], [0], [0], [1], [0, 0, 1, 1], [], []>} : vector<30x8xf32>, vector<8x30xf32>, vector<30x30xf32> -> vector<30x30xf32>
    %195 = arith.addf %194, %155 : vector<30x30xf32>
    %cst_151 = arith.constant dense<0xFF800000> : vector<30xf32>
    %196 = vector.multi_reduction <maximumf>, %195, %cst_151 [1] : vector<30x30xf32> to vector<30xf32>
    %197 = vector.shape_cast %196 : vector<30xf32> to vector<30x1xf32>
    %198 = vector.broadcast %197 : vector<30x1xf32> to vector<30x30xf32>
    %199 = arith.subf %195, %198 : vector<30x30xf32>
    %200 = math.exp %199 : vector<30x30xf32>
    %cst_152 = arith.constant dense<0.000000e+00> : vector<30xf32>
    %201 = vector.multi_reduction <add>, %200, %cst_152 [1] : vector<30x30xf32> to vector<30xf32>
    %202 = vector.shape_cast %201 : vector<30xf32> to vector<30x1xf32>
    %203 = tpu.reciprocal %202 {approx = true} : vector<30x1xf32> -> vector<30x1xf32>
    %204 = vector.broadcast %203 : vector<30x1xf32> to vector<30x30xf32>
    %205 = arith.mulf %200, %204 : vector<30x30xf32>
    %cst_153 = arith.constant dense<0.000000e+00> : vector<30x8xf32>
    %206 = tpu.matmul %205, %192, %cst_153 {dimension_numbers = #tpu.dot_dimension_numbers<[1], [0], [0], [1], [0, 0, 1, 1], [], []>} : vector<30x30xf32>, vector<30x8xf32>, vector<30x8xf32> -> vector<30x8xf32>
    %207 = vector.extract_strided_slice %166 {offsets = [8, 0], sizes = [8, 32], strides = [1, 1]} : vector<32x32xf32> to vector<8x32xf32>
    %cst_154 = arith.constant dense<0.000000e+00> : vector<30x32xf32>
    %208 = tpu.matmul %206, %207, %cst_154 {dimension_numbers = #tpu.dot_dimension_numbers<[1], [0], [0], [1], [0, 0, 1, 1], [], []>} : vector<30x8xf32>, vector<8x32xf32>, vector<30x32xf32> -> vector<30x32xf32>
    %209 = arith.addf %189, %208 : vector<30x32xf32>
    %210 = vector.extract_strided_slice %158 {offsets = [0, 16], sizes = [30, 8], strides = [1, 1]} : vector<30x32xf32> to vector<30x8xf32>
    %211 = vector.extract_strided_slice %161 {offsets = [0, 16], sizes = [30, 8], strides = [1, 1]} : vector<30x32xf32> to vector<30x8xf32>
    %212 = vector.extract_strided_slice %164 {offsets = [0, 16], sizes = [30, 8], strides = [1, 1]} : vector<30x32xf32> to vector<30x8xf32>
    %213 = tpu.transpose %211, [1, 0] : vector<30x8xf32> -> vector<8x30xf32>
    %cst_155 = arith.constant dense<0.000000e+00> : vector<30x30xf32>
    %214 = tpu.matmul %210, %213, %cst_155 {dimension_numbers = #tpu.dot_dimension_numbers<[1], [0], [0], [1], [0, 0, 1, 1], [], []>} : vector<30x8xf32>, vector<8x30xf32>, vector<30x30xf32> -> vector<30x30xf32>
    %215 = arith.addf %214, %155 : vector<30x30xf32>
    %cst_156 = arith.constant dense<0xFF800000> : vector<30xf32>
    %216 = vector.multi_reduction <maximumf>, %215, %cst_156 [1] : vector<30x30xf32> to vector<30xf32>
    %217 = vector.shape_cast %216 : vector<30xf32> to vector<30x1xf32>
    %218 = vector.broadcast %217 : vector<30x1xf32> to vector<30x30xf32>
    %219 = arith.subf %215, %218 : vector<30x30xf32>
    %220 = math.exp %219 : vector<30x30xf32>
    %cst_157 = arith.constant dense<0.000000e+00> : vector<30xf32>
    %221 = vector.multi_reduction <add>, %220, %cst_157 [1] : vector<30x30xf32> to vector<30xf32>
    %222 = vector.shape_cast %221 : vector<30xf32> to vector<30x1xf32>
    %223 = tpu.reciprocal %222 {approx = true} : vector<30x1xf32> -> vector<30x1xf32>
    %224 = vector.broadcast %223 : vector<30x1xf32> to vector<30x30xf32>
    %225 = arith.mulf %220, %224 : vector<30x30xf32>
    %cst_158 = arith.constant dense<0.000000e+00> : vector<30x8xf32>
    %226 = tpu.matmul %225, %212, %cst_158 {dimension_numbers = #tpu.dot_dimension_numbers<[1], [0], [0], [1], [0, 0, 1, 1], [], []>} : vector<30x30xf32>, vector<30x8xf32>, vector<30x8xf32> -> vector<30x8xf32>
    %227 = vector.extract_strided_slice %166 {offsets = [16, 0], sizes = [8, 32], strides = [1, 1]} : vector<32x32xf32> to vector<8x32xf32>
    %cst_159 = arith.constant dense<0.000000e+00> : vector<30x32xf32>
    %228 = tpu.matmul %226, %227, %cst_159 {dimension_numbers = #tpu.dot_dimension_numbers<[1], [0], [0], [1], [0, 0, 1, 1], [], []>} : vector<30x8xf32>, vector<8x32xf32>, vector<30x32xf32> -> vector<30x32xf32>
    %229 = arith.addf %209, %228 : vector<30x32xf32>
    %230 = vector.extract_strided_slice %158 {offsets = [0, 24], sizes = [30, 8], strides = [1, 1]} : vector<30x32xf32> to vector<30x8xf32>
    %231 = vector.extract_strided_slice %161 {offsets = [0, 24], sizes = [30, 8], strides = [1, 1]} : vector<30x32xf32> to vector<30x8xf32>
    %232 = vector.extract_strided_slice %164 {offsets = [0, 24], sizes = [30, 8], strides = [1, 1]} : vector<30x32xf32> to vector<30x8xf32>
    %233 = tpu.transpose %231, [1, 0] : vector<30x8xf32> -> vector<8x30xf32>
    %cst_160 = arith.constant dense<0.000000e+00> : vector<30x30xf32>
    %234 = tpu.matmul %230, %233, %cst_160 {dimension_numbers = #tpu.dot_dimension_numbers<[1], [0], [0], [1], [0, 0, 1, 1], [], []>} : vector<30x8xf32>, vector<8x30xf32>, vector<30x30xf32> -> vector<30x30xf32>
    %235 = arith.addf %234, %155 : vector<30x30xf32>
    %cst_161 = arith.constant dense<0xFF800000> : vector<30xf32>
    %236 = vector.multi_reduction <maximumf>, %235, %cst_161 [1] : vector<30x30xf32> to vector<30xf32>
    %237 = vector.shape_cast %236 : vector<30xf32> to vector<30x1xf32>
    %238 = vector.broadcast %237 : vector<30x1xf32> to vector<30x30xf32>
    %239 = arith.subf %235, %238 : vector<30x30xf32>
    %240 = math.exp %239 : vector<30x30xf32>
    %cst_162 = arith.constant dense<0.000000e+00> : vector<30xf32>
    %241 = vector.multi_reduction <add>, %240, %cst_162 [1] : vector<30x30xf32> to vector<30xf32>
    %242 = vector.shape_cast %241 : vector<30xf32> to vector<30x1xf32>
    %243 = tpu.reciprocal %242 {approx = true} : vector<30x1xf32> -> vector<30x1xf32>
    %244 = vector.broadcast %243 : vector<30x1xf32> to vector<30x30xf32>
    %245 = arith.mulf %240, %244 : vector<30x30xf32>
    %cst_163 = arith.constant dense<0.000000e+00> : vector<30x8xf32>
    %246 = tpu.matmul %245, %232, %cst_163 {dimension_numbers = #tpu.dot_dimension_numbers<[1], [0], [0], [1], [0, 0, 1, 1], [], []>} : vector<30x30xf32>, vector<30x8xf32>, vector<30x8xf32> -> vector<30x8xf32>
    %247 = vector.extract_strided_slice %166 {offsets = [24, 0], sizes = [8, 32], strides = [1, 1]} : vector<32x32xf32> to vector<8x32xf32>
    %cst_164 = arith.constant dense<0.000000e+00> : vector<30x32xf32>
    %248 = tpu.matmul %246, %247, %cst_164 {dimension_numbers = #tpu.dot_dimension_numbers<[1], [0], [0], [1], [0, 0, 1, 1], [], []>} : vector<30x8xf32>, vector<8x32xf32>, vector<30x32xf32> -> vector<30x32xf32>
    %249 = arith.addf %229, %248 : vector<30x32xf32>
    %250 = arith.addf %249, %154 : vector<30x32xf32>
    %c0_165 = arith.constant 0 : index
    %c0_166 = arith.constant 0 : index
    %c0_167 = arith.constant 0 : index
    %251 = vector.load %arg30[%c0_165, %c0_166, %c0_167] : memref<2x1x32xf32, #tpu.memory_space<vmem>>, vector<1x1x32xf32>
    %252 = vector.shape_cast %251 : vector<1x1x32xf32> to vector<1x32xf32>
    %c0_168 = arith.constant 0 : index
    %c0_169 = arith.constant 0 : index
    %c0_170 = arith.constant 0 : index
    %253 = vector.load %arg31[%c0_168, %c0_169, %c0_170] : memref<2x1x32xf32, #tpu.memory_space<vmem>>, vector<1x1x32xf32>
    %254 = vector.shape_cast %253 : vector<1x1x32xf32> to vector<1x32xf32>
    %cst_171 = arith.constant dense<0.000000e+00> : vector<30xf32>
    %255 = vector.multi_reduction <add>, %250, %cst_171 [1] : vector<30x32xf32> to vector<30xf32>
    %256 = vector.shape_cast %255 : vector<30xf32> to vector<30x1xf32>
    %cst_172 = arith.constant 3.200000e+01 : f32
    %257 = vector.broadcast %cst_172 : f32 to vector<30x1xf32>
    %258 = arith.divf %256, %257 : vector<30x1xf32>
    %259 = vector.broadcast %258 : vector<30x1xf32> to vector<30x32xf32>
    %260 = arith.subf %250, %259 : vector<30x32xf32>
    %261 = arith.mulf %260, %260 : vector<30x32xf32>
    %cst_173 = arith.constant dense<0.000000e+00> : vector<30xf32>
    %262 = vector.multi_reduction <add>, %261, %cst_173 [1] : vector<30x32xf32> to vector<30xf32>
    %263 = vector.shape_cast %262 : vector<30xf32> to vector<30x1xf32>
    %cst_174 = arith.constant 3.200000e+01 : f32
    %264 = vector.broadcast %cst_174 : f32 to vector<30x1xf32>
    %265 = arith.divf %263, %264 : vector<30x1xf32>
    %266 = vector.broadcast %258 : vector<30x1xf32> to vector<30x32xf32>
    %267 = arith.subf %250, %266 : vector<30x32xf32>
    %cst_175 = arith.constant 9.99999997E-7 : f32
    %268 = vector.broadcast %cst_175 : f32 to vector<30x1xf32>
    %269 = arith.addf %265, %268 : vector<30x1xf32>
    %270 = math.rsqrt %269 : vector<30x1xf32>
    %271 = vector.broadcast %270 : vector<30x1xf32> to vector<30x32xf32>
    %272 = arith.mulf %267, %271 : vector<30x32xf32>
    %273 = vector.broadcast %252 : vector<1x32xf32> to vector<30x32xf32>
    %274 = arith.mulf %272, %273 : vector<30x32xf32>
    %275 = vector.broadcast %254 : vector<1x32xf32> to vector<30x32xf32>
    %276 = arith.addf %274, %275 : vector<30x32xf32>
    %c0_176 = arith.constant 0 : index
    %c0_177 = arith.constant 0 : index
    %c0_178 = arith.constant 0 : index
    %277 = vector.load %arg32[%c0_176, %c0_177, %c0_178] : memref<2x32x64xf32, #tpu.memory_space<vmem>>, vector<1x32x64xf32>
    %278 = vector.shape_cast %277 : vector<1x32x64xf32> to vector<32x64xf32>
    %cst_179 = arith.constant dense<0.000000e+00> : vector<30x64xf32>
    %279 = tpu.matmul %276, %278, %cst_179 {dimension_numbers = #tpu.dot_dimension_numbers<[1], [0], [0], [1], [0, 0, 1, 1], [], []>} : vector<30x32xf32>, vector<32x64xf32>, vector<30x64xf32> -> vector<30x64xf32>
    %c0_180 = arith.constant 0 : index
    %c0_181 = arith.constant 0 : index
    %c0_182 = arith.constant 0 : index
    %280 = vector.load %arg33[%c0_180, %c0_181, %c0_182] : memref<2x1x64xf32, #tpu.memory_space<vmem>>, vector<1x1x64xf32>
    %281 = vector.shape_cast %280 : vector<1x1x64xf32> to vector<1x64xf32>
    %282 = vector.broadcast %281 : vector<1x64xf32> to vector<30x64xf32>
    %283 = arith.addf %279, %282 : vector<30x64xf32>
    %cst_183 = arith.constant 5.000000e-01 : f32
    %284 = vector.broadcast %cst_183 : f32 to vector<30x64xf32>
    %285 = arith.mulf %284, %283 : vector<30x64xf32>
    %cst_184 = arith.constant 4.471500e-02 : f32
    %286 = vector.broadcast %cst_184 : f32 to vector<30x64xf32>
    %287 = arith.mulf %286, %283 : vector<30x64xf32>
    %288 = arith.mulf %287, %283 : vector<30x64xf32>
    %289 = arith.mulf %288, %283 : vector<30x64xf32>
    %290 = arith.addf %283, %289 : vector<30x64xf32>
    %cst_185 = arith.constant 0.797884583 : f32
    %291 = vector.broadcast %cst_185 : f32 to vector<30x64xf32>
    %292 = arith.mulf %291, %290 : vector<30x64xf32>
    %293 = math.tanh %292 : vector<30x64xf32>
    %cst_186 = arith.constant 1.000000e+00 : f32
    %294 = vector.broadcast %cst_186 : f32 to vector<30x64xf32>
    %295 = arith.addf %294, %293 : vector<30x64xf32>
    %296 = arith.mulf %285, %295 : vector<30x64xf32>
    %c0_187 = arith.constant 0 : index
    %c0_188 = arith.constant 0 : index
    %c0_189 = arith.constant 0 : index
    %297 = vector.load %arg34[%c0_187, %c0_188, %c0_189] : memref<2x64x32xf32, #tpu.memory_space<vmem>>, vector<1x64x32xf32>
    %298 = vector.shape_cast %297 : vector<1x64x32xf32> to vector<64x32xf32>
    %cst_190 = arith.constant dense<0.000000e+00> : vector<30x32xf32>
    %299 = tpu.matmul %296, %298, %cst_190 {dimension_numbers = #tpu.dot_dimension_numbers<[1], [0], [0], [1], [0, 0, 1, 1], [], []>} : vector<30x64xf32>, vector<64x32xf32>, vector<30x32xf32> -> vector<30x32xf32>
    %c0_191 = arith.constant 0 : index
    %c0_192 = arith.constant 0 : index
    %c0_193 = arith.constant 0 : index
    %300 = vector.load %arg35[%c0_191, %c0_192, %c0_193] : memref<2x1x32xf32, #tpu.memory_space<vmem>>, vector<1x1x32xf32>
    %301 = vector.shape_cast %300 : vector<1x1x32xf32> to vector<1x32xf32>
    %302 = vector.broadcast %301 : vector<1x32xf32> to vector<30x32xf32>
    %303 = arith.addf %299, %302 : vector<30x32xf32>
    %304 = arith.addf %303, %276 : vector<30x32xf32>
    %c0_194 = arith.constant 0 : index
    %c0_195 = arith.constant 0 : index
    %c0_196 = arith.constant 0 : index
    %305 = vector.load %arg36[%c0_194, %c0_195, %c0_196] : memref<2x1x32xf32, #tpu.memory_space<vmem>>, vector<1x1x32xf32>
    %306 = vector.shape_cast %305 : vector<1x1x32xf32> to vector<1x32xf32>
    %c0_197 = arith.constant 0 : index
    %c0_198 = arith.constant 0 : index
    %c0_199 = arith.constant 0 : index
    %307 = vector.load %arg37[%c0_197, %c0_198, %c0_199] : memref<2x1x32xf32, #tpu.memory_space<vmem>>, vector<1x1x32xf32>
    %308 = vector.shape_cast %307 : vector<1x1x32xf32> to vector<1x32xf32>
    %cst_200 = arith.constant dense<0.000000e+00> : vector<30xf32>
    %309 = vector.multi_reduction <add>, %304, %cst_200 [1] : vector<30x32xf32> to vector<30xf32>
    %310 = vector.shape_cast %309 : vector<30xf32> to vector<30x1xf32>
    %cst_201 = arith.constant 3.200000e+01 : f32
    %311 = vector.broadcast %cst_201 : f32 to vector<30x1xf32>
    %312 = arith.divf %310, %311 : vector<30x1xf32>
    %313 = vector.broadcast %312 : vector<30x1xf32> to vector<30x32xf32>
    %314 = arith.subf %304, %313 : vector<30x32xf32>
    %315 = arith.mulf %314, %314 : vector<30x32xf32>
    %cst_202 = arith.constant dense<0.000000e+00> : vector<30xf32>
    %316 = vector.multi_reduction <add>, %315, %cst_202 [1] : vector<30x32xf32> to vector<30xf32>
    %317 = vector.shape_cast %316 : vector<30xf32> to vector<30x1xf32>
    %cst_203 = arith.constant 3.200000e+01 : f32
    %318 = vector.broadcast %cst_203 : f32 to vector<30x1xf32>
    %319 = arith.divf %317, %318 : vector<30x1xf32>
    %320 = vector.broadcast %312 : vector<30x1xf32> to vector<30x32xf32>
    %321 = arith.subf %304, %320 : vector<30x32xf32>
    %cst_204 = arith.constant 9.99999997E-7 : f32
    %322 = vector.broadcast %cst_204 : f32 to vector<30x1xf32>
    %323 = arith.addf %319, %322 : vector<30x1xf32>
    %324 = math.rsqrt %323 : vector<30x1xf32>
    %325 = vector.broadcast %324 : vector<30x1xf32> to vector<30x32xf32>
    %326 = arith.mulf %321, %325 : vector<30x32xf32>
    %327 = vector.broadcast %306 : vector<1x32xf32> to vector<30x32xf32>
    %328 = arith.mulf %326, %327 : vector<30x32xf32>
    %329 = vector.broadcast %308 : vector<1x32xf32> to vector<30x32xf32>
    %330 = arith.addf %328, %329 : vector<30x32xf32>
    %c1_205 = arith.constant 1 : index
    %c0_206 = arith.constant 0 : index
    %c0_207 = arith.constant 0 : index
    %331 = vector.load %arg25[%c1_205, %c0_206, %c0_207] : memref<2x32x32xf32, #tpu.memory_space<vmem>>, vector<1x32x32xf32>
    %332 = vector.shape_cast %331 : vector<1x32x32xf32> to vector<32x32xf32>
    %cst_208 = arith.constant dense<0.000000e+00> : vector<30x32xf32>
    %333 = tpu.matmul %330, %332, %cst_208 {dimension_numbers = #tpu.dot_dimension_numbers<[1], [0], [0], [1], [0, 0, 1, 1], [], []>} : vector<30x32xf32>, vector<32x32xf32>, vector<30x32xf32> -> vector<30x32xf32>
    %c1_209 = arith.constant 1 : index
    %c0_210 = arith.constant 0 : index
    %c0_211 = arith.constant 0 : index
    %334 = vector.load %arg26[%c1_209, %c0_210, %c0_211] : memref<2x32x32xf32, #tpu.memory_space<vmem>>, vector<1x32x32xf32>
    %335 = vector.shape_cast %334 : vector<1x32x32xf32> to vector<32x32xf32>
    %cst_212 = arith.constant dense<0.000000e+00> : vector<30x32xf32>
    %336 = tpu.matmul %330, %335, %cst_212 {dimension_numbers = #tpu.dot_dimension_numbers<[1], [0], [0], [1], [0, 0, 1, 1], [], []>} : vector<30x32xf32>, vector<32x32xf32>, vector<30x32xf32> -> vector<30x32xf32>
    %c1_213 = arith.constant 1 : index
    %c0_214 = arith.constant 0 : index
    %c0_215 = arith.constant 0 : index
    %337 = vector.load %arg27[%c1_213, %c0_214, %c0_215] : memref<2x32x32xf32, #tpu.memory_space<vmem>>, vector<1x32x32xf32>
    %338 = vector.shape_cast %337 : vector<1x32x32xf32> to vector<32x32xf32>
    %cst_216 = arith.constant dense<0.000000e+00> : vector<30x32xf32>
    %339 = tpu.matmul %330, %338, %cst_216 {dimension_numbers = #tpu.dot_dimension_numbers<[1], [0], [0], [1], [0, 0, 1, 1], [], []>} : vector<30x32xf32>, vector<32x32xf32>, vector<30x32xf32> -> vector<30x32xf32>
    %c1_217 = arith.constant 1 : index
    %c0_218 = arith.constant 0 : index
    %c0_219 = arith.constant 0 : index
    %340 = vector.load %arg28[%c1_217, %c0_218, %c0_219] : memref<2x32x32xf32, #tpu.memory_space<vmem>>, vector<1x32x32xf32>
    %341 = vector.shape_cast %340 : vector<1x32x32xf32> to vector<32x32xf32>
    %c1_220 = arith.constant 1 : index
    %c0_221 = arith.constant 0 : index
    %c0_222 = arith.constant 0 : index
    %342 = vector.load %arg29[%c1_220, %c0_221, %c0_222] : memref<2x1x32xf32, #tpu.memory_space<vmem>>, vector<1x1x32xf32>
    %343 = vector.shape_cast %342 : vector<1x1x32xf32> to vector<1x32xf32>
    %344 = vector.extract_strided_slice %333 {offsets = [0, 0], sizes = [30, 8], strides = [1, 1]} : vector<30x32xf32> to vector<30x8xf32>
    %345 = vector.extract_strided_slice %336 {offsets = [0, 0], sizes = [30, 8], strides = [1, 1]} : vector<30x32xf32> to vector<30x8xf32>
    %346 = vector.extract_strided_slice %339 {offsets = [0, 0], sizes = [30, 8], strides = [1, 1]} : vector<30x32xf32> to vector<30x8xf32>
    %347 = tpu.transpose %345, [1, 0] : vector<30x8xf32> -> vector<8x30xf32>
    %cst_223 = arith.constant dense<0.000000e+00> : vector<30x30xf32>
    %348 = tpu.matmul %344, %347, %cst_223 {dimension_numbers = #tpu.dot_dimension_numbers<[1], [0], [0], [1], [0, 0, 1, 1], [], []>} : vector<30x8xf32>, vector<8x30xf32>, vector<30x30xf32> -> vector<30x30xf32>
    %349 = arith.addf %348, %155 : vector<30x30xf32>
    %cst_224 = arith.constant dense<0xFF800000> : vector<30xf32>
    %350 = vector.multi_reduction <maximumf>, %349, %cst_224 [1] : vector<30x30xf32> to vector<30xf32>
    %351 = vector.shape_cast %350 : vector<30xf32> to vector<30x1xf32>
    %352 = vector.broadcast %351 : vector<30x1xf32> to vector<30x30xf32>
    %353 = arith.subf %349, %352 : vector<30x30xf32>
    %354 = math.exp %353 : vector<30x30xf32>
    %cst_225 = arith.constant dense<0.000000e+00> : vector<30xf32>
    %355 = vector.multi_reduction <add>, %354, %cst_225 [1] : vector<30x30xf32> to vector<30xf32>
    %356 = vector.shape_cast %355 : vector<30xf32> to vector<30x1xf32>
    %357 = tpu.reciprocal %356 {approx = true} : vector<30x1xf32> -> vector<30x1xf32>
    %358 = vector.broadcast %357 : vector<30x1xf32> to vector<30x30xf32>
    %359 = arith.mulf %354, %358 : vector<30x30xf32>
    %cst_226 = arith.constant dense<0.000000e+00> : vector<30x8xf32>
    %360 = tpu.matmul %359, %346, %cst_226 {dimension_numbers = #tpu.dot_dimension_numbers<[1], [0], [0], [1], [0, 0, 1, 1], [], []>} : vector<30x30xf32>, vector<30x8xf32>, vector<30x8xf32> -> vector<30x8xf32>
    %361 = vector.extract_strided_slice %341 {offsets = [0, 0], sizes = [8, 32], strides = [1, 1]} : vector<32x32xf32> to vector<8x32xf32>
    %cst_227 = arith.constant dense<0.000000e+00> : vector<30x32xf32>
    %362 = tpu.matmul %360, %361, %cst_227 {dimension_numbers = #tpu.dot_dimension_numbers<[1], [0], [0], [1], [0, 0, 1, 1], [], []>} : vector<30x8xf32>, vector<8x32xf32>, vector<30x32xf32> -> vector<30x32xf32>
    %363 = vector.broadcast %343 : vector<1x32xf32> to vector<30x32xf32>
    %364 = arith.addf %363, %362 : vector<30x32xf32>
    %365 = vector.extract_strided_slice %333 {offsets = [0, 8], sizes = [30, 8], strides = [1, 1]} : vector<30x32xf32> to vector<30x8xf32>
    %366 = vector.extract_strided_slice %336 {offsets = [0, 8], sizes = [30, 8], strides = [1, 1]} : vector<30x32xf32> to vector<30x8xf32>
    %367 = vector.extract_strided_slice %339 {offsets = [0, 8], sizes = [30, 8], strides = [1, 1]} : vector<30x32xf32> to vector<30x8xf32>
    %368 = tpu.transpose %366, [1, 0] : vector<30x8xf32> -> vector<8x30xf32>
    %cst_228 = arith.constant dense<0.000000e+00> : vector<30x30xf32>
    %369 = tpu.matmul %365, %368, %cst_228 {dimension_numbers = #tpu.dot_dimension_numbers<[1], [0], [0], [1], [0, 0, 1, 1], [], []>} : vector<30x8xf32>, vector<8x30xf32>, vector<30x30xf32> -> vector<30x30xf32>
    %370 = arith.addf %369, %155 : vector<30x30xf32>
    %cst_229 = arith.constant dense<0xFF800000> : vector<30xf32>
    %371 = vector.multi_reduction <maximumf>, %370, %cst_229 [1] : vector<30x30xf32> to vector<30xf32>
    %372 = vector.shape_cast %371 : vector<30xf32> to vector<30x1xf32>
    %373 = vector.broadcast %372 : vector<30x1xf32> to vector<30x30xf32>
    %374 = arith.subf %370, %373 : vector<30x30xf32>
    %375 = math.exp %374 : vector<30x30xf32>
    %cst_230 = arith.constant dense<0.000000e+00> : vector<30xf32>
    %376 = vector.multi_reduction <add>, %375, %cst_230 [1] : vector<30x30xf32> to vector<30xf32>
    %377 = vector.shape_cast %376 : vector<30xf32> to vector<30x1xf32>
    %378 = tpu.reciprocal %377 {approx = true} : vector<30x1xf32> -> vector<30x1xf32>
    %379 = vector.broadcast %378 : vector<30x1xf32> to vector<30x30xf32>
    %380 = arith.mulf %375, %379 : vector<30x30xf32>
    %cst_231 = arith.constant dense<0.000000e+00> : vector<30x8xf32>
    %381 = tpu.matmul %380, %367, %cst_231 {dimension_numbers = #tpu.dot_dimension_numbers<[1], [0], [0], [1], [0, 0, 1, 1], [], []>} : vector<30x30xf32>, vector<30x8xf32>, vector<30x8xf32> -> vector<30x8xf32>
    %382 = vector.extract_strided_slice %341 {offsets = [8, 0], sizes = [8, 32], strides = [1, 1]} : vector<32x32xf32> to vector<8x32xf32>
    %cst_232 = arith.constant dense<0.000000e+00> : vector<30x32xf32>
    %383 = tpu.matmul %381, %382, %cst_232 {dimension_numbers = #tpu.dot_dimension_numbers<[1], [0], [0], [1], [0, 0, 1, 1], [], []>} : vector<30x8xf32>, vector<8x32xf32>, vector<30x32xf32> -> vector<30x32xf32>
    %384 = arith.addf %364, %383 : vector<30x32xf32>
    %385 = vector.extract_strided_slice %333 {offsets = [0, 16], sizes = [30, 8], strides = [1, 1]} : vector<30x32xf32> to vector<30x8xf32>
    %386 = vector.extract_strided_slice %336 {offsets = [0, 16], sizes = [30, 8], strides = [1, 1]} : vector<30x32xf32> to vector<30x8xf32>
    %387 = vector.extract_strided_slice %339 {offsets = [0, 16], sizes = [30, 8], strides = [1, 1]} : vector<30x32xf32> to vector<30x8xf32>
    %388 = tpu.transpose %386, [1, 0] : vector<30x8xf32> -> vector<8x30xf32>
    %cst_233 = arith.constant dense<0.000000e+00> : vector<30x30xf32>
    %389 = tpu.matmul %385, %388, %cst_233 {dimension_numbers = #tpu.dot_dimension_numbers<[1], [0], [0], [1], [0, 0, 1, 1], [], []>} : vector<30x8xf32>, vector<8x30xf32>, vector<30x30xf32> -> vector<30x30xf32>
    %390 = arith.addf %389, %155 : vector<30x30xf32>
    %cst_234 = arith.constant dense<0xFF800000> : vector<30xf32>
    %391 = vector.multi_reduction <maximumf>, %390, %cst_234 [1] : vector<30x30xf32> to vector<30xf32>
    %392 = vector.shape_cast %391 : vector<30xf32> to vector<30x1xf32>
    %393 = vector.broadcast %392 : vector<30x1xf32> to vector<30x30xf32>
    %394 = arith.subf %390, %393 : vector<30x30xf32>
    %395 = math.exp %394 : vector<30x30xf32>
    %cst_235 = arith.constant dense<0.000000e+00> : vector<30xf32>
    %396 = vector.multi_reduction <add>, %395, %cst_235 [1] : vector<30x30xf32> to vector<30xf32>
    %397 = vector.shape_cast %396 : vector<30xf32> to vector<30x1xf32>
    %398 = tpu.reciprocal %397 {approx = true} : vector<30x1xf32> -> vector<30x1xf32>
    %399 = vector.broadcast %398 : vector<30x1xf32> to vector<30x30xf32>
    %400 = arith.mulf %395, %399 : vector<30x30xf32>
    %cst_236 = arith.constant dense<0.000000e+00> : vector<30x8xf32>
    %401 = tpu.matmul %400, %387, %cst_236 {dimension_numbers = #tpu.dot_dimension_numbers<[1], [0], [0], [1], [0, 0, 1, 1], [], []>} : vector<30x30xf32>, vector<30x8xf32>, vector<30x8xf32> -> vector<30x8xf32>
    %402 = vector.extract_strided_slice %341 {offsets = [16, 0], sizes = [8, 32], strides = [1, 1]} : vector<32x32xf32> to vector<8x32xf32>
    %cst_237 = arith.constant dense<0.000000e+00> : vector<30x32xf32>
    %403 = tpu.matmul %401, %402, %cst_237 {dimension_numbers = #tpu.dot_dimension_numbers<[1], [0], [0], [1], [0, 0, 1, 1], [], []>} : vector<30x8xf32>, vector<8x32xf32>, vector<30x32xf32> -> vector<30x32xf32>
    %404 = arith.addf %384, %403 : vector<30x32xf32>
    %405 = vector.extract_strided_slice %333 {offsets = [0, 24], sizes = [30, 8], strides = [1, 1]} : vector<30x32xf32> to vector<30x8xf32>
    %406 = vector.extract_strided_slice %336 {offsets = [0, 24], sizes = [30, 8], strides = [1, 1]} : vector<30x32xf32> to vector<30x8xf32>
    %407 = vector.extract_strided_slice %339 {offsets = [0, 24], sizes = [30, 8], strides = [1, 1]} : vector<30x32xf32> to vector<30x8xf32>
    %408 = tpu.transpose %406, [1, 0] : vector<30x8xf32> -> vector<8x30xf32>
    %cst_238 = arith.constant dense<0.000000e+00> : vector<30x30xf32>
    %409 = tpu.matmul %405, %408, %cst_238 {dimension_numbers = #tpu.dot_dimension_numbers<[1], [0], [0], [1], [0, 0, 1, 1], [], []>} : vector<30x8xf32>, vector<8x30xf32>, vector<30x30xf32> -> vector<30x30xf32>
    %410 = arith.addf %409, %155 : vector<30x30xf32>
    %cst_239 = arith.constant dense<0xFF800000> : vector<30xf32>
    %411 = vector.multi_reduction <maximumf>, %410, %cst_239 [1] : vector<30x30xf32> to vector<30xf32>
    %412 = vector.shape_cast %411 : vector<30xf32> to vector<30x1xf32>
    %413 = vector.broadcast %412 : vector<30x1xf32> to vector<30x30xf32>
    %414 = arith.subf %410, %413 : vector<30x30xf32>
    %415 = math.exp %414 : vector<30x30xf32>
    %cst_240 = arith.constant dense<0.000000e+00> : vector<30xf32>
    %416 = vector.multi_reduction <add>, %415, %cst_240 [1] : vector<30x30xf32> to vector<30xf32>
    %417 = vector.shape_cast %416 : vector<30xf32> to vector<30x1xf32>
    %418 = tpu.reciprocal %417 {approx = true} : vector<30x1xf32> -> vector<30x1xf32>
    %419 = vector.broadcast %418 : vector<30x1xf32> to vector<30x30xf32>
    %420 = arith.mulf %415, %419 : vector<30x30xf32>
    %cst_241 = arith.constant dense<0.000000e+00> : vector<30x8xf32>
    %421 = tpu.matmul %420, %407, %cst_241 {dimension_numbers = #tpu.dot_dimension_numbers<[1], [0], [0], [1], [0, 0, 1, 1], [], []>} : vector<30x30xf32>, vector<30x8xf32>, vector<30x8xf32> -> vector<30x8xf32>
    %422 = vector.extract_strided_slice %341 {offsets = [24, 0], sizes = [8, 32], strides = [1, 1]} : vector<32x32xf32> to vector<8x32xf32>
    %cst_242 = arith.constant dense<0.000000e+00> : vector<30x32xf32>
    %423 = tpu.matmul %421, %422, %cst_242 {dimension_numbers = #tpu.dot_dimension_numbers<[1], [0], [0], [1], [0, 0, 1, 1], [], []>} : vector<30x8xf32>, vector<8x32xf32>, vector<30x32xf32> -> vector<30x32xf32>
    %424 = arith.addf %404, %423 : vector<30x32xf32>
    %425 = arith.addf %424, %330 : vector<30x32xf32>
    %c1_243 = arith.constant 1 : index
    %c0_244 = arith.constant 0 : index
    %c0_245 = arith.constant 0 : index
    %426 = vector.load %arg30[%c1_243, %c0_244, %c0_245] : memref<2x1x32xf32, #tpu.memory_space<vmem>>, vector<1x1x32xf32>
    %427 = vector.shape_cast %426 : vector<1x1x32xf32> to vector<1x32xf32>
    %c1_246 = arith.constant 1 : index
    %c0_247 = arith.constant 0 : index
    %c0_248 = arith.constant 0 : index
    %428 = vector.load %arg31[%c1_246, %c0_247, %c0_248] : memref<2x1x32xf32, #tpu.memory_space<vmem>>, vector<1x1x32xf32>
    %429 = vector.shape_cast %428 : vector<1x1x32xf32> to vector<1x32xf32>
    %cst_249 = arith.constant dense<0.000000e+00> : vector<30xf32>
    %430 = vector.multi_reduction <add>, %425, %cst_249 [1] : vector<30x32xf32> to vector<30xf32>
    %431 = vector.shape_cast %430 : vector<30xf32> to vector<30x1xf32>
    %cst_250 = arith.constant 3.200000e+01 : f32
    %432 = vector.broadcast %cst_250 : f32 to vector<30x1xf32>
    %433 = arith.divf %431, %432 : vector<30x1xf32>
    %434 = vector.broadcast %433 : vector<30x1xf32> to vector<30x32xf32>
    %435 = arith.subf %425, %434 : vector<30x32xf32>
    %436 = arith.mulf %435, %435 : vector<30x32xf32>
    %cst_251 = arith.constant dense<0.000000e+00> : vector<30xf32>
    %437 = vector.multi_reduction <add>, %436, %cst_251 [1] : vector<30x32xf32> to vector<30xf32>
    %438 = vector.shape_cast %437 : vector<30xf32> to vector<30x1xf32>
    %cst_252 = arith.constant 3.200000e+01 : f32
    %439 = vector.broadcast %cst_252 : f32 to vector<30x1xf32>
    %440 = arith.divf %438, %439 : vector<30x1xf32>
    %441 = vector.broadcast %433 : vector<30x1xf32> to vector<30x32xf32>
    %442 = arith.subf %425, %441 : vector<30x32xf32>
    %cst_253 = arith.constant 9.99999997E-7 : f32
    %443 = vector.broadcast %cst_253 : f32 to vector<30x1xf32>
    %444 = arith.addf %440, %443 : vector<30x1xf32>
    %445 = math.rsqrt %444 : vector<30x1xf32>
    %446 = vector.broadcast %445 : vector<30x1xf32> to vector<30x32xf32>
    %447 = arith.mulf %442, %446 : vector<30x32xf32>
    %448 = vector.broadcast %427 : vector<1x32xf32> to vector<30x32xf32>
    %449 = arith.mulf %447, %448 : vector<30x32xf32>
    %450 = vector.broadcast %429 : vector<1x32xf32> to vector<30x32xf32>
    %451 = arith.addf %449, %450 : vector<30x32xf32>
    %c1_254 = arith.constant 1 : index
    %c0_255 = arith.constant 0 : index
    %c0_256 = arith.constant 0 : index
    %452 = vector.load %arg32[%c1_254, %c0_255, %c0_256] : memref<2x32x64xf32, #tpu.memory_space<vmem>>, vector<1x32x64xf32>
    %453 = vector.shape_cast %452 : vector<1x32x64xf32> to vector<32x64xf32>
    %cst_257 = arith.constant dense<0.000000e+00> : vector<30x64xf32>
    %454 = tpu.matmul %451, %453, %cst_257 {dimension_numbers = #tpu.dot_dimension_numbers<[1], [0], [0], [1], [0, 0, 1, 1], [], []>} : vector<30x32xf32>, vector<32x64xf32>, vector<30x64xf32> -> vector<30x64xf32>
    %c1_258 = arith.constant 1 : index
    %c0_259 = arith.constant 0 : index
    %c0_260 = arith.constant 0 : index
    %455 = vector.load %arg33[%c1_258, %c0_259, %c0_260] : memref<2x1x64xf32, #tpu.memory_space<vmem>>, vector<1x1x64xf32>
    %456 = vector.shape_cast %455 : vector<1x1x64xf32> to vector<1x64xf32>
    %457 = vector.broadcast %456 : vector<1x64xf32> to vector<30x64xf32>
    %458 = arith.addf %454, %457 : vector<30x64xf32>
    %cst_261 = arith.constant 5.000000e-01 : f32
    %459 = vector.broadcast %cst_261 : f32 to vector<30x64xf32>
    %460 = arith.mulf %459, %458 : vector<30x64xf32>
    %cst_262 = arith.constant 4.471500e-02 : f32
    %461 = vector.broadcast %cst_262 : f32 to vector<30x64xf32>
    %462 = arith.mulf %461, %458 : vector<30x64xf32>
    %463 = arith.mulf %462, %458 : vector<30x64xf32>
    %464 = arith.mulf %463, %458 : vector<30x64xf32>
    %465 = arith.addf %458, %464 : vector<30x64xf32>
    %cst_263 = arith.constant 0.797884583 : f32
    %466 = vector.broadcast %cst_263 : f32 to vector<30x64xf32>
    %467 = arith.mulf %466, %465 : vector<30x64xf32>
    %468 = math.tanh %467 : vector<30x64xf32>
    %cst_264 = arith.constant 1.000000e+00 : f32
    %469 = vector.broadcast %cst_264 : f32 to vector<30x64xf32>
    %470 = arith.addf %469, %468 : vector<30x64xf32>
    %471 = arith.mulf %460, %470 : vector<30x64xf32>
    %c1_265 = arith.constant 1 : index
    %c0_266 = arith.constant 0 : index
    %c0_267 = arith.constant 0 : index
    %472 = vector.load %arg34[%c1_265, %c0_266, %c0_267] : memref<2x64x32xf32, #tpu.memory_space<vmem>>, vector<1x64x32xf32>
    %473 = vector.shape_cast %472 : vector<1x64x32xf32> to vector<64x32xf32>
    %cst_268 = arith.constant dense<0.000000e+00> : vector<30x32xf32>
    %474 = tpu.matmul %471, %473, %cst_268 {dimension_numbers = #tpu.dot_dimension_numbers<[1], [0], [0], [1], [0, 0, 1, 1], [], []>} : vector<30x64xf32>, vector<64x32xf32>, vector<30x32xf32> -> vector<30x32xf32>
    %c1_269 = arith.constant 1 : index
    %c0_270 = arith.constant 0 : index
    %c0_271 = arith.constant 0 : index
    %475 = vector.load %arg35[%c1_269, %c0_270, %c0_271] : memref<2x1x32xf32, #tpu.memory_space<vmem>>, vector<1x1x32xf32>
    %476 = vector.shape_cast %475 : vector<1x1x32xf32> to vector<1x32xf32>
    %477 = vector.broadcast %476 : vector<1x32xf32> to vector<30x32xf32>
    %478 = arith.addf %474, %477 : vector<30x32xf32>
    %479 = arith.addf %478, %451 : vector<30x32xf32>
    %c1_272 = arith.constant 1 : index
    %c0_273 = arith.constant 0 : index
    %c0_274 = arith.constant 0 : index
    %480 = vector.load %arg36[%c1_272, %c0_273, %c0_274] : memref<2x1x32xf32, #tpu.memory_space<vmem>>, vector<1x1x32xf32>
    %481 = vector.shape_cast %480 : vector<1x1x32xf32> to vector<1x32xf32>
    %c1_275 = arith.constant 1 : index
    %c0_276 = arith.constant 0 : index
    %c0_277 = arith.constant 0 : index
    %482 = vector.load %arg37[%c1_275, %c0_276, %c0_277] : memref<2x1x32xf32, #tpu.memory_space<vmem>>, vector<1x1x32xf32>
    %483 = vector.shape_cast %482 : vector<1x1x32xf32> to vector<1x32xf32>
    %cst_278 = arith.constant dense<0.000000e+00> : vector<30xf32>
    %484 = vector.multi_reduction <add>, %479, %cst_278 [1] : vector<30x32xf32> to vector<30xf32>
    %485 = vector.shape_cast %484 : vector<30xf32> to vector<30x1xf32>
    %cst_279 = arith.constant 3.200000e+01 : f32
    %486 = vector.broadcast %cst_279 : f32 to vector<30x1xf32>
    %487 = arith.divf %485, %486 : vector<30x1xf32>
    %488 = vector.broadcast %487 : vector<30x1xf32> to vector<30x32xf32>
    %489 = arith.subf %479, %488 : vector<30x32xf32>
    %490 = arith.mulf %489, %489 : vector<30x32xf32>
    %cst_280 = arith.constant dense<0.000000e+00> : vector<30xf32>
    %491 = vector.multi_reduction <add>, %490, %cst_280 [1] : vector<30x32xf32> to vector<30xf32>
    %492 = vector.shape_cast %491 : vector<30xf32> to vector<30x1xf32>
    %cst_281 = arith.constant 3.200000e+01 : f32
    %493 = vector.broadcast %cst_281 : f32 to vector<30x1xf32>
    %494 = arith.divf %492, %493 : vector<30x1xf32>
    %495 = vector.broadcast %487 : vector<30x1xf32> to vector<30x32xf32>
    %496 = arith.subf %479, %495 : vector<30x32xf32>
    %cst_282 = arith.constant 9.99999997E-7 : f32
    %497 = vector.broadcast %cst_282 : f32 to vector<30x1xf32>
    %498 = arith.addf %494, %497 : vector<30x1xf32>
    %499 = math.rsqrt %498 : vector<30x1xf32>
    %500 = vector.broadcast %499 : vector<30x1xf32> to vector<30x32xf32>
    %501 = arith.mulf %496, %500 : vector<30x32xf32>
    %502 = vector.broadcast %481 : vector<1x32xf32> to vector<30x32xf32>
    %503 = arith.mulf %501, %502 : vector<30x32xf32>
    %504 = vector.broadcast %483 : vector<1x32xf32> to vector<30x32xf32>
    %505 = arith.addf %503, %504 : vector<30x32xf32>
    %506 = vector.extract_strided_slice %505 {offsets = [0, 0], sizes = [16, 32], strides = [1, 1]} : vector<30x32xf32> to vector<16x32xf32>
    %c0_283 = arith.constant 0 : index
    %c0_284 = arith.constant 0 : index
    %c0_285 = arith.constant 0 : index
    %507 = vector.load %arg38[%c0_283, %c0_284, %c0_285] : memref<1x16x32xf32, #tpu.memory_space<vmem>>, vector<1x16x32xf32>
    %508 = vector.shape_cast %507 : vector<1x16x32xf32> to vector<16x32xf32>
    %509 = vector.shape_cast %506 : vector<16x32xf32> to vector<1x16x32xf32>
    tpu.vector_store %arg38[%c0_283, %c0_284, %c0_285], %509 {strides = array<i32>} : memref<1x16x32xf32, #tpu.memory_space<vmem>>, vector<1x16x32xf32>,
    return
  }
  func.func @transform_0(%arg0: i32) -> (i32, i32, i32) {
    %c0_i32 = arith.constant 0 : i32
    %c0_i32_0 = arith.constant 0 : i32
    %c0_i32_1 = arith.constant 0 : i32
    return %arg0, %c0_i32, %c0_i32_0 : i32, i32, i32
  }
  func.func @transform_1(%arg0: i32) -> (i32, i32, i32) {
    %c0_i32 = arith.constant 0 : i32
    %c0_i32_0 = arith.constant 0 : i32
    %c0_i32_1 = arith.constant 0 : i32
    return %arg0, %c0_i32, %c0_i32_0 : i32, i32, i32
  }
  func.func @transform_2(%arg0: i32) -> (i32, i32, i32) {
    %c0_i32 = arith.constant 0 : i32
    %c0_i32_0 = arith.constant 0 : i32
    %c0_i32_1 = arith.constant 0 : i32
    %c0_i32_2 = arith.constant 0 : i32
    return %c0_i32, %c0_i32_0, %c0_i32_1 : i32, i32, i32
  }
  func.func @transform_3(%arg0: i32) -> (i32, i32) {
    %c0_i32 = arith.constant 0 : i32
    %c0_i32_0 = arith.constant 0 : i32
    %c0_i32_1 = arith.constant 0 : i32
    return %c0_i32, %c0_i32_0 : i32, i32
  }
  func.func @transform_4(%arg0: i32) -> (i32, i32, i32) {
    %c0_i32 = arith.constant 0 : i32
    %c0_i32_0 = arith.constant 0 : i32
    %c0_i32_1 = arith.constant 0 : i32
    %c0_i32_2 = arith.constant 0 : i32
    return %c0_i32, %c0_i32_0, %c0_i32_1 : i32, i32, i32
  }
  func.func @transform_5(%arg0: i32) -> (i32, i32) {
    %c0_i32 = arith.constant 0 : i32
    %c0_i32_0 = arith.constant 0 : i32
    %c0_i32_1 = arith.constant 0 : i32
    return %c0_i32, %c0_i32_0 : i32, i32
  }
  func.func @transform_6(%arg0: i32) -> (i32, i32) {
    %c0_i32 = arith.constant 0 : i32
    %c0_i32_0 = arith.constant 0 : i32
    %c0_i32_1 = arith.constant 0 : i32
    return %c0_i32, %c0_i32_0 : i32, i32
  }
  func.func @transform_7(%arg0: i32) -> (i32, i32) {
    %c0_i32 = arith.constant 0 : i32
    %c0_i32_0 = arith.constant 0 : i32
    %c0_i32_1 = arith.constant 0 : i32
    return %c0_i32, %c0_i32_0 : i32, i32
  }
  func.func @transform_8(%arg0: i32) -> (i32, i32) {
    %c0_i32 = arith.constant 0 : i32
    %c0_i32_0 = arith.constant 0 : i32
    %c0_i32_1 = arith.constant 0 : i32
    return %c0_i32, %c0_i32_0 : i32, i32
  }
  func.func @transform_9(%arg0: i32) -> (i32, i32) {
    %c0_i32 = arith.constant 0 : i32
    %c0_i32_0 = arith.constant 0 : i32
    %c0_i32_1 = arith.constant 0 : i32
    return %c0_i32, %c0_i32_0 : i32, i32
  }
  func.func @transform_10(%arg0: i32) -> (i32, i32, i32) {
    %c0_i32 = arith.constant 0 : i32
    %c0_i32_0 = arith.constant 0 : i32
    %c0_i32_1 = arith.constant 0 : i32
    %c0_i32_2 = arith.constant 0 : i32
    return %c0_i32, %c0_i32_0, %c0_i32_1 : i32, i32, i32
  }
  func.func @transform_11(%arg0: i32) -> (i32, i32, i32) {
    %c0_i32 = arith.constant 0 : i32
    %c0_i32_0 = arith.constant 0 : i32
    %c0_i32_1 = arith.constant 0 : i32
    %c0_i32_2 = arith.constant 0 : i32
    return %c0_i32, %c0_i32_0, %c0_i32_1 : i32, i32, i32
  }
  func.func @transform_12(%arg0: i32) -> (i32, i32, i32) {
    %c0_i32 = arith.constant 0 : i32
    %c0_i32_0 = arith.constant 0 : i32
    %c0_i32_1 = arith.constant 0 : i32
    %c0_i32_2 = arith.constant 0 : i32
    return %c0_i32, %c0_i32_0, %c0_i32_1 : i32, i32, i32
  }
  func.func @transform_13(%arg0: i32) -> (i32, i32, i32) {
    %c0_i32 = arith.constant 0 : i32
    %c0_i32_0 = arith.constant 0 : i32
    %c0_i32_1 = arith.constant 0 : i32
    %c0_i32_2 = arith.constant 0 : i32
    return %c0_i32, %c0_i32_0, %c0_i32_1 : i32, i32, i32
  }
  func.func @transform_14(%arg0: i32) -> (i32, i32, i32) {
    %c0_i32 = arith.constant 0 : i32
    %c0_i32_0 = arith.constant 0 : i32
    %c0_i32_1 = arith.constant 0 : i32
    %c0_i32_2 = arith.constant 0 : i32
    return %c0_i32, %c0_i32_0, %c0_i32_1 : i32, i32, i32
  }
  func.func @transform_15(%arg0: i32) -> (i32, i32) {
    %c0_i32 = arith.constant 0 : i32
    %c0_i32_0 = arith.constant 0 : i32
    %c0_i32_1 = arith.constant 0 : i32
    return %c0_i32, %c0_i32_0 : i32, i32
  }
  func.func @transform_16(%arg0: i32) -> (i32, i32) {
    %c0_i32 = arith.constant 0 : i32
    %c0_i32_0 = arith.constant 0 : i32
    %c0_i32_1 = arith.constant 0 : i32
    return %c0_i32, %c0_i32_0 : i32, i32
  }
  func.func @transform_17(%arg0: i32) -> (i32, i32) {
    %c0_i32 = arith.constant 0 : i32
    %c0_i32_0 = arith.constant 0 : i32
    %c0_i32_1 = arith.constant 0 : i32
    return %c0_i32, %c0_i32_0 : i32, i32
  }
  func.func @transform_18(%arg0: i32) -> (i32, i32) {
    %c0_i32 = arith.constant 0 : i32
    %c0_i32_0 = arith.constant 0 : i32
    %c0_i32_1 = arith.constant 0 : i32
    return %c0_i32, %c0_i32_0 : i32, i32
  }
  func.func @transform_19(%arg0: i32) -> (i32, i32) {
    %c0_i32 = arith.constant 0 : i32
    %c0_i32_0 = arith.constant 0 : i32
    %c0_i32_1 = arith.constant 0 : i32
    return %c0_i32, %c0_i32_0 : i32, i32
  }
  func.func @transform_20(%arg0: i32) -> (i32, i32) {
    %c0_i32 = arith.constant 0 : i32
    %c0_i32_0 = arith.constant 0 : i32
    %c0_i32_1 = arith.constant 0 : i32
    return %c0_i32, %c0_i32_0 : i32, i32
  }
  func.func @transform_21(%arg0: i32) -> (i32, i32) {
    %c0_i32 = arith.constant 0 : i32
    %c0_i32_0 = arith.constant 0 : i32
    %c0_i32_1 = arith.constant 0 : i32
    return %c0_i32, %c0_i32_0 : i32, i32
  }
  func.func @transform_22(%arg0: i32) -> (i32, i32) {
    %c0_i32 = arith.constant 0 : i32
    %c0_i32_0 = arith.constant 0 : i32
    %c0_i32_1 = arith.constant 0 : i32
    return %c0_i32, %c0_i32_0 : i32, i32
  }
  func.func @transform_23(%arg0: i32) -> (i32, i32) {
    %c0_i32 = arith.constant 0 : i32
    %c0_i32_0 = arith.constant 0 : i32
    %c0_i32_1 = arith.constant 0 : i32
    return %c0_i32, %c0_i32_0 : i32, i32
  }
  func.func @transform_24(%arg0: i32) -> (i32, i32, i32) {
    %c0_i32 = arith.constant 0 : i32
    %c0_i32_0 = arith.constant 0 : i32
    %c0_i32_1 = arith.constant 0 : i32
    %c0_i32_2 = arith.constant 0 : i32
    return %c0_i32, %c0_i32_0, %c0_i32_1 : i32, i32, i32
  }
  func.func @transform_25(%arg0: i32) -> (i32, i32, i32) {
    %c0_i32 = arith.constant 0 : i32
    %c0_i32_0 = arith.constant 0 : i32
    %c0_i32_1 = arith.constant 0 : i32
    %c0_i32_2 = arith.constant 0 : i32
    return %c0_i32, %c0_i32_0, %c0_i32_1 : i32, i32, i32
  }
  func.func @transform_26(%arg0: i32) -> (i32, i32, i32) {
    %c0_i32 = arith.constant 0 : i32
    %c0_i32_0 = arith.constant 0 : i32
    %c0_i32_1 = arith.constant 0 : i32
    %c0_i32_2 = arith.constant 0 : i32
    return %c0_i32, %c0_i32_0, %c0_i32_1 : i32, i32, i32
  }
  func.func @transform_27(%arg0: i32) -> (i32, i32, i32) {
    %c0_i32 = arith.constant 0 : i32
    %c0_i32_0 = arith.constant 0 : i32
    %c0_i32_1 = arith.constant 0 : i32
    %c0_i32_2 = arith.constant 0 : i32
    return %c0_i32, %c0_i32_0, %c0_i32_1 : i32, i32, i32
  }
  func.func @transform_28(%arg0: i32) -> (i32, i32, i32) {
    %c0_i32 = arith.constant 0 : i32
    %c0_i32_0 = arith.constant 0 : i32
    %c0_i32_1 = arith.constant 0 : i32
    %c0_i32_2 = arith.constant 0 : i32
    return %c0_i32, %c0_i32_0, %c0_i32_1 : i32, i32, i32
  }
  func.func @transform_29(%arg0: i32) -> (i32, i32, i32) {
    %c0_i32 = arith.constant 0 : i32
    %c0_i32_0 = arith.constant 0 : i32
    %c0_i32_1 = arith.constant 0 : i32
    %c0_i32_2 = arith.constant 0 : i32
    return %c0_i32, %c0_i32_0, %c0_i32_1 : i32, i32, i32
  }
  func.func @transform_30(%arg0: i32) -> (i32, i32, i32) {
    %c0_i32 = arith.constant 0 : i32
    %c0_i32_0 = arith.constant 0 : i32
    %c0_i32_1 = arith.constant 0 : i32
    %c0_i32_2 = arith.constant 0 : i32
    return %c0_i32, %c0_i32_0, %c0_i32_1 : i32, i32, i32
  }
  func.func @transform_31(%arg0: i32) -> (i32, i32, i32) {
    %c0_i32 = arith.constant 0 : i32
    %c0_i32_0 = arith.constant 0 : i32
    %c0_i32_1 = arith.constant 0 : i32
    %c0_i32_2 = arith.constant 0 : i32
    return %c0_i32, %c0_i32_0, %c0_i32_1 : i32, i32, i32
  }
  func.func @transform_32(%arg0: i32) -> (i32, i32, i32) {
    %c0_i32 = arith.constant 0 : i32
    %c0_i32_0 = arith.constant 0 : i32
    %c0_i32_1 = arith.constant 0 : i32
    %c0_i32_2 = arith.constant 0 : i32
    return %c0_i32, %c0_i32_0, %c0_i32_1 : i32, i32, i32
  }
  func.func @transform_33(%arg0: i32) -> (i32, i32, i32) {
    %c0_i32 = arith.constant 0 : i32
    %c0_i32_0 = arith.constant 0 : i32
    %c0_i32_1 = arith.constant 0 : i32
    %c0_i32_2 = arith.constant 0 : i32
    return %c0_i32, %c0_i32_0, %c0_i32_1 : i32, i32, i32
  }
  func.func @transform_34(%arg0: i32) -> (i32, i32, i32) {
    %c0_i32 = arith.constant 0 : i32
    %c0_i32_0 = arith.constant 0 : i32
    %c0_i32_1 = arith.constant 0 : i32
    %c0_i32_2 = arith.constant 0 : i32
    return %c0_i32, %c0_i32_0, %c0_i32_1 : i32, i32, i32
  }
  func.func @transform_35(%arg0: i32) -> (i32, i32, i32) {
    %c0_i32 = arith.constant 0 : i32
    %c0_i32_0 = arith.constant 0 : i32
    %c0_i32_1 = arith.constant 0 : i32
    %c0_i32_2 = arith.constant 0 : i32
    return %c0_i32, %c0_i32_0, %c0_i32_1 : i32, i32, i32
  }
  func.func @transform_36(%arg0: i32) -> (i32, i32, i32) {
    %c0_i32 = arith.constant 0 : i32
    %c0_i32_0 = arith.constant 0 : i32
    %c0_i32_1 = arith.constant 0 : i32
    %c0_i32_2 = arith.constant 0 : i32
    return %c0_i32, %c0_i32_0, %c0_i32_1 : i32, i32, i32
  }
  func.func @transform_37(%arg0: i32) -> (i32, i32, i32) {
    %c0_i32 = arith.constant 0 : i32
    %c0_i32_0 = arith.constant 0 : i32
    %c0_i32_1 = arith.constant 0 : i32
    return %arg0, %c0_i32, %c0_i32_0 : i32, i32, i32
  }
}

</mosaic_0001>

<llo_original>
// kernel: tpu_custom_call.1
$region0: #{tpu_custom_call.1}
  #allocation0 [shape = 'u32[]', space=smem, size = 0x4, offset = 0x4, fixed_abs, tag = 'smem constant byte address 0x4 - core index']
  #allocation1 [shape = 'u32[144,128]{1,0:T(1,128)}', space=vmem, size = 0x12000, scoped, tag = 'internal scratch']
  %s0 = inlined_call_operand.smem [shape: u32[38], index: -1, kind: input, shape index: {}]
  %s1 = sld [smem:[%s0]]
  %s2 = scalar_lea.smem %s0, 1
  %s3 = sld [smem:[%s2]]
  %s4 = scalar_lea.smem %s0, 2
  %s5 = sld [smem:[%s4]]
  %s6 = scalar_lea.smem %s0, 3
  %s7 = sld [smem:[%s6]]
  %s8 = scalar_lea.smem %s0, 4
  %s9 = sld [smem:[%s8]]
  %s10 = scalar_lea.smem %s0, 5
  %s11 = sld [smem:[%s10]]
  %s12 = scalar_lea.smem %s0, 6
  %s13 = sld [smem:[%s12]]
  %s14 = scalar_lea.smem %s0, 7
  %s15 = sld [smem:[%s14]]
  %s16 = scalar_lea.smem %s0, 8
  %s17 = sld [smem:[%s16]]
  %s18 = scalar_lea.smem %s0, 9
  %s19 = sld [smem:[%s18]]
  %s20 = scalar_lea.smem %s0, 10
  %s21 = sld [smem:[%s20]]
  %s22 = scalar_lea.smem %s0, 11
  %s23 = sld [smem:[%s22]]
  %s24 = scalar_lea.smem %s0, 12
  %s25 = sld [smem:[%s24]]
  %s26 = scalar_lea.smem %s0, 13
  %s27 = sld [smem:[%s26]]
  %s28 = scalar_lea.smem %s0, 14
  %s29 = sld [smem:[%s28]]
  %s30 = scalar_lea.smem %s0, 15
  %s31 = sld [smem:[%s30]]
  %s32 = scalar_lea.smem %s0, 16
  %s33 = sld [smem:[%s32]]
  %s34 = scalar_lea.smem %s0, 17
  %s35 = sld [smem:[%s34]]
  %s36 = scalar_lea.smem %s0, 18
  %s37 = sld [smem:[%s36]]
  %s38 = scalar_lea.smem %s0, 19
  %s39 = sld [smem:[%s38]]
  %s40 = scalar_lea.smem %s0, 20
  %s41 = sld [smem:[%s40]]
  %s42 = scalar_lea.smem %s0, 21
  %s43 = sld [smem:[%s42]]
  %s44 = scalar_lea.smem %s0, 22
  %s45 = sld [smem:[%s44]]
  %s46 = scalar_lea.smem %s0, 23
  %s47 = sld [smem:[%s46]]
  %s48 = scalar_lea.smem %s0, 24
  %s49 = sld [smem:[%s48]]
  %s50 = scalar_lea.smem %s0, 25
  %s51 = sld [smem:[%s50]]
  %s52 = scalar_lea.smem %s0, 26
  %s53 = sld [smem:[%s52]]
  %s54 = scalar_lea.smem %s0, 27
  %s55 = sld [smem:[%s54]]
  %s56 = scalar_lea.smem %s0, 28
  %s57 = sld [smem:[%s56]]
  %s58 = scalar_lea.smem %s0, 29
  %s59 = sld [smem:[%s58]]
  %s60 = scalar_lea.smem %s0, 30
  %s61 = sld [smem:[%s60]]
  %s62 = scalar_lea.smem %s0, 31
  %s63 = sld [smem:[%s62]]
  %s64 = scalar_lea.smem %s0, 32
  %s65 = sld [smem:[%s64]]
  %s66 = scalar_lea.smem %s0, 33
  %s67 = sld [smem:[%s66]]
  %s68 = scalar_lea.smem %s0, 34
  %s69 = sld [smem:[%s68]]
  %s70 = scalar_lea.smem %s0, 35
  %s71 = sld [smem:[%s70]]
  %s72 = scalar_lea.smem %s0, 36
  %s73 = sld [smem:[%s72]]
  %s74 = scalar_lea.smem %s0, 37
  %s75 = sld [smem:[%s74]]
  %s76 = sld [smem:[#allocation0]]
  $region205: #{tpu_custom_call.1} parent=0
    _
  %s78 = ssub.s32 1, %s76
  %s79 = scalar_select 0, %s78, %s76
  $region1: #{tpu_custom_call.1} parent=0
    #allocation2 [shape = 'u8[512]{0}', space=vmem, size = 0x400, scoped, tag = 'input window, operand 5, single buffered']
    #allocation3 [shape = 's32[2]{0}', space=sflag, size = 0x8, scoped, tag = 'scoped memory for tpu_custom_call.1']
    #allocation4 [shape = 's32[2]{0}', space=sflag, size = 0x8, scoped, tag = 'scoped memory for tpu_custom_call.1']
    #allocation5 [shape = 'u8[2048]{0}', space=vmem, size = 0x800, scoped, tag = 'input window, operand 6, single buffered']
    #allocation6 [shape = 's32[1]{0}', space=sflag, size = 0x4, scoped, tag = 'scoped memory for tpu_custom_call.1']
    #allocation7 [shape = 'u8[512]{0}', space=vmem, size = 0x400, scoped, tag = 'input window, operand 7, single buffered']
    #allocation8 [shape = 'u8[512]{0}', space=vmem, size = 0x400, scoped, tag = 'input window, operand 9, single buffered']
    #allocation9 [shape = 's32[1]{0}', space=sflag, size = 0x4, scoped, tag = 'scoped memory for tpu_custom_call.1']
    #allocation10 [shape = 'u8[1536]{0}', space=vmem, size = 0x800, scoped, tag = 'input window, operand 11, single buffered']
    #allocation11 [shape = 'u8[2048]{0}', space=vmem, size = 0x800, scoped, tag = 'input window, operand 14, single buffered']
    #allocation12 [shape = 's32[1]{0}', space=sflag, size = 0x4, scoped, tag = 'scoped memory for tpu_custom_call.1']
    #allocation13 [shape = 'u8[16384]{0}', space=vmem, size = 0x4000, scoped, tag = 'output window, operand 0']
    %80 = vsyncpa [#allocation3], 0
    %81 = vsyncpa [#allocation6], 0
    %82 = vsyncpa [#allocation9], 0
    %83 = vsyncpa [#allocation12], 0
    %84 = vsyncpa [#allocation4], 0
    %s85 = scalar_lea.sflag [#allocation4], 1
    %86 = vsyncpa %s85, 0
    loop: start=0, step=1, limit=4
    $region2: #{tpu_custom_call.1} parent=1 // loop_pre_header
      _
    $region3: #{tpu_custom_call.1} parent=1 // loop_header
      %s88 = sphi 0, %s92
      %p89 = scmp.ge.s32.totalorder %s88, 4
      %s98 = sphi 0, %s100
      %s101 = sphi 0, %s98
      %s102 = sphi 0, %s101
      %s118 = sphi 0, %s102
      %s124 = sphi 0, %s126
      %s127 = sphi 0, %s124
      %s128 = sphi 0, %s127
      %s144 = sphi 0, %s128
      %s148 = sphi 0, %s148
      %s150 = sphi 0, %s148
      %s151 = sphi 0, %s150
      %s165 = sphi 0, %s151
      %s169 = sphi 0, %s169
      %s171 = sphi 0, %s169
      %s172 = sphi 0, %s171
      %s186 = sphi 0, %s172
      %s190 = sphi 0, %s190
      %s192 = sphi 0, %s190
      %s193 = sphi 0, %s192
      %s207 = sphi 0, %s193
      %s211 = sphi 0, %s211
      %s213 = sphi 0, %s211
      %s214 = sphi 0, %s213
      %s228 = sphi 0, %s214
      %s232 = sphi 0, %s232
      %s234 = sphi 0, %s232
      %s235 = sphi 0, %s234
      %s249 = sphi 0, %s235
      %s253 = sphi 0, %s253
      %s255 = sphi 0, %s253
      %s256 = sphi 0, %s255
      %s270 = sphi 0, %s256
      %s274 = sphi 0, %s274
      %s276 = sphi 0, %s274
      %s277 = sphi 0, %s276
      %s291 = sphi 0, %s277
      %s295 = sphi 0, %s295
      %s297 = sphi 0, %s295
      %s298 = sphi 0, %s297
      %s312 = sphi 0, %s298
      %s316 = sphi 0, %s316
      %s318 = sphi 0, %s316
      %s319 = sphi 0, %s318
      %s333 = sphi 0, %s319
      %s337 = sphi 0, %s337
      %s339 = sphi 0, %s337
      %s340 = sphi 0, %s339
      %s354 = sphi 0, %s340
      %s358 = sphi 0, %s358
      %s360 = sphi 0, %s358
      %s361 = sphi 0, %s360
      %s375 = sphi 0, %s361
      %s379 = sphi 0, %s379
      %s381 = sphi 0, %s379
      %s382 = sphi 0, %s381
      %s396 = sphi 0, %s382
      %s400 = sphi 0, %s400
      %s402 = sphi 0, %s400
      %s403 = sphi 0, %s402
      %s417 = sphi 0, %s403
      %s421 = sphi 0, %s421
      %s423 = sphi 0, %s421
      %s424 = sphi 0, %s423
      %s438 = sphi 0, %s424
      %s442 = sphi 0, %s442
      %s444 = sphi 0, %s442
      %s445 = sphi 0, %s444
      %s459 = sphi 0, %s445
      %s463 = sphi 0, %s463
      %s465 = sphi 0, %s463
      %s466 = sphi 0, %s465
      %s480 = sphi 0, %s466
      %s484 = sphi 0, %s484
      %s486 = sphi 0, %s484
      %s487 = sphi 0, %s486
      %s501 = sphi 0, %s487
      %s505 = sphi 0, %s505
      %s507 = sphi 0, %s505
      %s508 = sphi 0, %s507
      %s522 = sphi 0, %s508
      %s526 = sphi 0, %s526
      %s528 = sphi 0, %s526
      %s529 = sphi 0, %s528
      %s543 = sphi 0, %s529
      %s547 = sphi 0, %s547
      %s549 = sphi 0, %s547
      %s550 = sphi 0, %s549
      %s564 = sphi 0, %s550
      %s568 = sphi 0, %s568
      %s570 = sphi 0, %s568
      %s571 = sphi 0, %s570
      %s585 = sphi 0, %s571
      %s589 = sphi 0, %s589
      %s591 = sphi 0, %s589
      %s592 = sphi 0, %s591
      %s606 = sphi 0, %s592
      %s610 = sphi 0, %s610
      %s612 = sphi 0, %s610
      %s613 = sphi 0, %s612
      %s627 = sphi 0, %s613
      %s631 = sphi 0, %s631
      %s633 = sphi 0, %s631
      %s634 = sphi 0, %s633
      %s648 = sphi 0, %s634
      %s652 = sphi 0, %s652
      %s654 = sphi 0, %s652
      %s655 = sphi 0, %s654
      %s669 = sphi 0, %s655
      %s673 = sphi 0, %s673
      %s675 = sphi 0, %s673
      %s676 = sphi 0, %s675
      %s690 = sphi 0, %s676
      %s694 = sphi 0, %s694
      %s696 = sphi 0, %s694
      %s697 = sphi 0, %s696
      %s711 = sphi 0, %s697
      %s715 = sphi 0, %s715
      %s717 = sphi 0, %s715
      %s718 = sphi 0, %s717
      %s732 = sphi 0, %s718
      %s736 = sphi 0, %s736
      %s738 = sphi 0, %s736
      %s739 = sphi 0, %s738
      %s753 = sphi 0, %s739
      %s757 = sphi 0, %s757
      %s759 = sphi 0, %s757
      %s760 = sphi 0, %s759
      %s774 = sphi 0, %s760
      %s778 = sphi 0, %s778
      %s780 = sphi 0, %s778
      %s781 = sphi 0, %s780
      %s795 = sphi 0, %s781
      %s799 = sphi 0, %s799
      %s801 = sphi 0, %s799
      %s802 = sphi 0, %s801
      %s816 = sphi 0, %s802
      %s820 = sphi 0, %s820
      %s822 = sphi 0, %s820
      %s823 = sphi 0, %s822
      %s837 = sphi 0, %s823
      %s841 = sphi 0, %s841
      %s843 = sphi 0, %s841
      %s844 = sphi 0, %s843
      %s858 = sphi 0, %s844
      %s862 = sphi 0, %s862
      %s864 = sphi 0, %s862
      %s865 = sphi 0, %s864
      %s879 = sphi 0, %s865
      %s885 = sphi 0, %s887
      %s888 = sphi 0, %s885
      %s889 = sphi 0, %s888
      %s905 = sphi 0, %s889
    $region4: #{tpu_custom_call.1} parent=1 // loop_header_branch
      %91 = sbr.rel (%p89) target = $region8
    $region5: #{tpu_custom_call.1} parent=1 // loop_body
      %s93 = ssub.s32 %s88, 1
      %s94 = ssub.s32 %s88, 2
      %s95 = sadd.s32 %s88, 1
      %s96 = ssub.s32 %s88, %s95
      %p97 = scmp.eq.s32.totalorder %s96, 0
      %s99 = sadd.s32 %s98, 1
      %s100 = scalar_select %p97, %s98, %s99
      %p103 = pneg %p97
      %p104 = scmp.eq.s32.totalorder %s88, 1
      %p105 = por %p103, %p104
      %p106 = scmp.ne.s32.totalorder %s98, %s101
      %p107 = scmp.eq.s32.totalorder %s88, 0
      %p108 = por %p106, %p107
      %p109 = scmp.ne.s32.totalorder %s98, %s101
      %p110 = scmp.eq.s32.totalorder %s93, 1
      %p111 = por %p109, %p110
      %p112 = scmp.ne.s32.totalorder %s101, %s102
      %p113 = scmp.eq.s32.totalorder %s93, 0
      %p114 = por %p112, %p113
      %p115 = scmp.ne.s32.totalorder %s101, %s102
      %p116 = scmp.eq.s32.totalorder %s94, 1
      %p117 = por %p115, %p116
      %p119 = scmp.ne.s32.totalorder %s102, %s118
      %p120 = scmp.eq.s32.totalorder %s94, 0
      %p121 = por %p119, %p120
      %s122 = ssub.s32 %s88, %s95
      %p123 = scmp.eq.s32.totalorder %s122, 0
      %s125 = sadd.s32 %s124, 1
      %s126 = scalar_select %p123, %s124, %s125
      %p129 = pneg %p123
      %p130 = scmp.eq.s32.totalorder %s88, 1
      %p131 = por %p129, %p130
      %p132 = scmp.ne.s32.totalorder %s124, %s127
      %p133 = scmp.eq.s32.totalorder %s88, 0
      %p134 = por %p132, %p133
      %p135 = scmp.ne.s32.totalorder %s124, %s127
      %p136 = scmp.eq.s32.totalorder %s93, 1
      %p137 = por %p135, %p136
      %p138 = scmp.ne.s32.totalorder %s127, %s128
      %p139 = scmp.eq.s32.totalorder %s93, 0
      %p140 = por %p138, %p139
      %p141 = scmp.ne.s32.totalorder %s127, %s128
      %p142 = scmp.eq.s32.totalorder %s94, 1
      %p143 = por %p141, %p142
      %p145 = scmp.ne.s32.totalorder %s128, %s144
      %p146 = scmp.eq.s32.totalorder %s94, 0
      %p147 = por %p145, %p146
      %s149 = sadd.s32 %s148, 1
      %p152 = scmp.eq.s32.totalorder %s88, 1
      %p153 = scmp.ne.s32.totalorder %s148, %s150
      %p154 = scmp.eq.s32.totalorder %s88, 0
      %p155 = por %p153, %p154
      %p156 = scmp.ne.s32.totalorder %s148, %s150
      %p157 = scmp.eq.s32.totalorder %s93, 1
      %p158 = por %p156, %p157
      %p159 = scmp.ne.s32.totalorder %s150, %s151
      %p160 = scmp.eq.s32.totalorder %s93, 0
      %p161 = por %p159, %p160
      %p162 = scmp.ne.s32.totalorder %s150, %s151
      %p163 = scmp.eq.s32.totalorder %s94, 1
      %p164 = por %p162, %p163
      %p166 = scmp.ne.s32.totalorder %s151, %s165
      %p167 = scmp.eq.s32.totalorder %s94, 0
      %p168 = por %p166, %p167
      %s170 = sadd.s32 %s169, 1
      %p173 = scmp.eq.s32.totalorder %s88, 1
      %p174 = scmp.ne.s32.totalorder %s169, %s171
      %p175 = scmp.eq.s32.totalorder %s88, 0
      %p176 = por %p174, %p175
      %p177 = scmp.ne.s32.totalorder %s169, %s171
      %p178 = scmp.eq.s32.totalorder %s93, 1
      %p179 = por %p177, %p178
      %p180 = scmp.ne.s32.totalorder %s171, %s172
      %p181 = scmp.eq.s32.totalorder %s93, 0
      %p182 = por %p180, %p181
      %p183 = scmp.ne.s32.totalorder %s171, %s172
      %p184 = scmp.eq.s32.totalorder %s94, 1
      %p185 = por %p183, %p184
      %p187 = scmp.ne.s32.totalorder %s172, %s186
      %p188 = scmp.eq.s32.totalorder %s94, 0
      %p189 = por %p187, %p188
      %s191 = sadd.s32 %s190, 1
      %p194 = scmp.eq.s32.totalorder %s88, 1
      %p195 = scmp.ne.s32.totalorder %s190, %s192
      %p196 = scmp.eq.s32.totalorder %s88, 0
      %p197 = por %p195, %p196
      %p198 = scmp.ne.s32.totalorder %s190, %s192
      %p199 = scmp.eq.s32.totalorder %s93, 1
      %p200 = por %p198, %p199
      %p201 = scmp.ne.s32.totalorder %s192, %s193
      %p202 = scmp.eq.s32.totalorder %s93, 0
      %p203 = por %p201, %p202
      %p204 = scmp.ne.s32.totalorder %s192, %s193
      %p205 = scmp.eq.s32.totalorder %s94, 1
      %p206 = por %p204, %p205
      %p208 = scmp.ne.s32.totalorder %s193, %s207
      %p209 = scmp.eq.s32.totalorder %s94, 0
      %p210 = por %p208, %p209
      %s212 = sadd.s32 %s211, 1
      %p215 = scmp.eq.s32.totalorder %s88, 1
      %p216 = scmp.ne.s32.totalorder %s211, %s213
      %p217 = scmp.eq.s32.totalorder %s88, 0
      %p218 = por %p216, %p217
      %p219 = scmp.ne.s32.totalorder %s211, %s213
      %p220 = scmp.eq.s32.totalorder %s93, 1
      %p221 = por %p219, %p220
      %p222 = scmp.ne.s32.totalorder %s213, %s214
      %p223 = scmp.eq.s32.totalorder %s93, 0
      %p224 = por %p222, %p223
      %p225 = scmp.ne.s32.totalorder %s213, %s214
      %p226 = scmp.eq.s32.totalorder %s94, 1
      %p227 = por %p225, %p226
      %p229 = scmp.ne.s32.totalorder %s214, %s228
      %p230 = scmp.eq.s32.totalorder %s94, 0
      %p231 = por %p229, %p230
      %s233 = sadd.s32 %s232, 1
      %p236 = scmp.eq.s32.totalorder %s88, 1
      %p237 = scmp.ne.s32.totalorder %s232, %s234
      %p238 = scmp.eq.s32.totalorder %s88, 0
      %p239 = por %p237, %p238
      %p240 = scmp.ne.s32.totalorder %s232, %s234
      %p241 = scmp.eq.s32.totalorder %s93, 1
      %p242 = por %p240, %p241
      %p243 = scmp.ne.s32.totalorder %s234, %s235
      %p244 = scmp.eq.s32.totalorder %s93, 0
      %p245 = por %p243, %p244
      %p246 = scmp.ne.s32.totalorder %s234, %s235
      %p247 = scmp.eq.s32.totalorder %s94, 1
      %p248 = por %p246, %p247
      %p250 = scmp.ne.s32.totalorder %s235, %s249
      %p251 = scmp.eq.s32.totalorder %s94, 0
      %p252 = por %p250, %p251
      %s254 = sadd.s32 %s253, 1
      %p257 = scmp.eq.s32.totalorder %s88, 1
      %p258 = scmp.ne.s32.totalorder %s253, %s255
      %p259 = scmp.eq.s32.totalorder %s88, 0
      %p260 = por %p258, %p259
      %p261 = scmp.ne.s32.totalorder %s253, %s255
      %p262 = scmp.eq.s32.totalorder %s93, 1
      %p263 = por %p261, %p262
      %p264 = scmp.ne.s32.totalorder %s255, %s256
      %p265 = scmp.eq.s32.totalorder %s93, 0
      %p266 = por %p264, %p265
      %p267 = scmp.ne.s32.totalorder %s255, %s256
      %p268 = scmp.eq.s32.totalorder %s94, 1
      %p269 = por %p267, %p268
      %p271 = scmp.ne.s32.totalorder %s256, %s270
      %p272 = scmp.eq.s32.totalorder %s94, 0
      %p273 = por %p271, %p272
      %s275 = sadd.s32 %s274, 1
      %p278 = scmp.eq.s32.totalorder %s88, 1
      %p279 = scmp.ne.s32.totalorder %s274, %s276
      %p280 = scmp.eq.s32.totalorder %s88, 0
      %p281 = por %p279, %p280
      %p282 = scmp.ne.s32.totalorder %s274, %s276
      %p283 = scmp.eq.s32.totalorder %s93, 1
      %p284 = por %p282, %p283
      %p285 = scmp.ne.s32.totalorder %s276, %s277
      %p286 = scmp.eq.s32.totalorder %s93, 0
      %p287 = por %p285, %p286
      %p288 = scmp.ne.s32.totalorder %s276, %s277
      %p289 = scmp.eq.s32.totalorder %s94, 1
      %p290 = por %p288, %p289
      %p292 = scmp.ne.s32.totalorder %s277, %s291
      %p293 = scmp.eq.s32.totalorder %s94, 0
      %p294 = por %p292, %p293
      %s296 = sadd.s32 %s295, 1
      %p299 = scmp.eq.s32.totalorder %s88, 1
      %p300 = scmp.ne.s32.totalorder %s295, %s297
      %p301 = scmp.eq.s32.totalorder %s88, 0
      %p302 = por %p300, %p301
      %p303 = scmp.ne.s32.totalorder %s295, %s297
      %p304 = scmp.eq.s32.totalorder %s93, 1
      %p305 = por %p303, %p304
      %p306 = scmp.ne.s32.totalorder %s297, %s298
      %p307 = scmp.eq.s32.totalorder %s93, 0
      %p308 = por %p306, %p307
      %p309 = scmp.ne.s32.totalorder %s297, %s298
      %p310 = scmp.eq.s32.totalorder %s94, 1
      %p311 = por %p309, %p310
      %p313 = scmp.ne.s32.totalorder %s298, %s312
      %p314 = scmp.eq.s32.totalorder %s94, 0
      %p315 = por %p313, %p314
      %s317 = sadd.s32 %s316, 1
      %p320 = scmp.eq.s32.totalorder %s88, 1
      %p321 = scmp.ne.s32.totalorder %s316, %s318
      %p322 = scmp.eq.s32.totalorder %s88, 0
      %p323 = por %p321, %p322
      %p324 = scmp.ne.s32.totalorder %s316, %s318
      %p325 = scmp.eq.s32.totalorder %s93, 1
      %p326 = por %p324, %p325
      %p327 = scmp.ne.s32.totalorder %s318, %s319
      %p328 = scmp.eq.s32.totalorder %s93, 0
      %p329 = por %p327, %p328
      %p330 = scmp.ne.s32.totalorder %s318, %s319
      %p331 = scmp.eq.s32.totalorder %s94, 1
      %p332 = por %p330, %p331
      %p334 = scmp.ne.s32.totalorder %s319, %s333
      %p335 = scmp.eq.s32.totalorder %s94, 0
      %p336 = por %p334, %p335
      %s338 = sadd.s32 %s337, 1
      %p341 = scmp.eq.s32.totalorder %s88, 1
      %p342 = scmp.ne.s32.totalorder %s337, %s339
      %p343 = scmp.eq.s32.totalorder %s88, 0
      %p344 = por %p342, %p343
      %p345 = scmp.ne.s32.totalorder %s337, %s339
      %p346 = scmp.eq.s32.totalorder %s93, 1
      %p347 = por %p345, %p346
      %p348 = scmp.ne.s32.totalorder %s339, %s340
      %p349 = scmp.eq.s32.totalorder %s93, 0
      %p350 = por %p348, %p349
      %p351 = scmp.ne.s32.totalorder %s339, %s340
      %p352 = scmp.eq.s32.totalorder %s94, 1
      %p353 = por %p351, %p352
      %p355 = scmp.ne.s32.totalorder %s340, %s354
      %p356 = scmp.eq.s32.totalorder %s94, 0
      %p357 = por %p355, %p356
      %s359 = sadd.s32 %s358, 1
      %p362 = scmp.eq.s32.totalorder %s88, 1
      %p363 = scmp.ne.s32.totalorder %s358, %s360
      %p364 = scmp.eq.s32.totalorder %s88, 0
      %p365 = por %p363, %p364
      %p366 = scmp.ne.s32.totalorder %s358, %s360
      %p367 = scmp.eq.s32.totalorder %s93, 1
      %p368 = por %p366, %p367
      %p369 = scmp.ne.s32.totalorder %s360, %s361
      %p370 = scmp.eq.s32.totalorder %s93, 0
      %p371 = por %p369, %p370
      %p372 = scmp.ne.s32.totalorder %s360, %s361
      %p373 = scmp.eq.s32.totalorder %s94, 1
      %p374 = por %p372, %p373
      %p376 = scmp.ne.s32.totalorder %s361, %s375
      %p377 = scmp.eq.s32.totalorder %s94, 0
      %p378 = por %p376, %p377
      %s380 = sadd.s32 %s379, 1
      %p383 = scmp.eq.s32.totalorder %s88, 1
      %p384 = scmp.ne.s32.totalorder %s379, %s381
      %p385 = scmp.eq.s32.totalorder %s88, 0
      %p386 = por %p384, %p385
      %p387 = scmp.ne.s32.totalorder %s379, %s381
      %p388 = scmp.eq.s32.totalorder %s93, 1
      %p389 = por %p387, %p388
      %p390 = scmp.ne.s32.totalorder %s381, %s382
      %p391 = scmp.eq.s32.totalorder %s93, 0
      %p392 = por %p390, %p391
      %p393 = scmp.ne.s32.totalorder %s381, %s382
      %p394 = scmp.eq.s32.totalorder %s94, 1
      %p395 = por %p393, %p394
      %p397 = scmp.ne.s32.totalorder %s382, %s396
      %p398 = scmp.eq.s32.totalorder %s94, 0
      %p399 = por %p397, %p398
      %s401 = sadd.s32 %s400, 1
      %p404 = scmp.eq.s32.totalorder %s88, 1
      %p405 = scmp.ne.s32.totalorder %s400, %s402
      %p406 = scmp.eq.s32.totalorder %s88, 0
      %p407 = por %p405, %p406
      %p408 = scmp.ne.s32.totalorder %s400, %s402
      %p409 = scmp.eq.s32.totalorder %s93, 1
      %p410 = por %p408, %p409
      %p411 = scmp.ne.s32.totalorder %s402, %s403
      %p412 = scmp.eq.s32.totalorder %s93, 0
      %p413 = por %p411, %p412
      %p414 = scmp.ne.s32.totalorder %s402, %s403
      %p415 = scmp.eq.s32.totalorder %s94, 1
      %p416 = por %p414, %p415
      %p418 = scmp.ne.s32.totalorder %s403, %s417
      %p419 = scmp.eq.s32.totalorder %s94, 0
      %p420 = por %p418, %p419
      %s422 = sadd.s32 %s421, 1
      %p425 = scmp.eq.s32.totalorder %s88, 1
      %p426 = scmp.ne.s32.totalorder %s421, %s423
      %p427 = scmp.eq.s32.totalorder %s88, 0
      %p428 = por %p426, %p427
      %p429 = scmp.ne.s32.totalorder %s421, %s423
      %p430 = scmp.eq.s32.totalorder %s93, 1
      %p431 = por %p429, %p430
      %p432 = scmp.ne.s32.totalorder %s423, %s424
      %p433 = scmp.eq.s32.totalorder %s93, 0
      %p434 = por %p432, %p433
      %p435 = scmp.ne.s32.totalorder %s423, %s424
      %p436 = scmp.eq.s32.totalorder %s94, 1
      %p437 = por %p435, %p436
      %p439 = scmp.ne.s32.totalorder %s424, %s438
      %p440 = scmp.eq.s32.totalorder %s94, 0
      %p441 = por %p439, %p440
      %s443 = sadd.s32 %s442, 1
      %p446 = scmp.eq.s32.totalorder %s88, 1
      %p447 = scmp.ne.s32.totalorder %s442, %s444
      %p448 = scmp.eq.s32.totalorder %s88, 0
      %p449 = por %p447, %p448
      %p450 = scmp.ne.s32.totalorder %s442, %s444
      %p451 = scmp.eq.s32.totalorder %s93, 1
      %p452 = por %p450, %p451
      %p453 = scmp.ne.s32.totalorder %s444, %s445
      %p454 = scmp.eq.s32.totalorder %s93, 0
      %p455 = por %p453, %p454
      %p456 = scmp.ne.s32.totalorder %s444, %s445
      %p457 = scmp.eq.s32.totalorder %s94, 1
      %p458 = por %p456, %p457
      %p460 = scmp.ne.s32.totalorder %s445, %s459
      %p461 = scmp.eq.s32.totalorder %s94, 0
      %p462 = por %p460, %p461
      %s464 = sadd.s32 %s463, 1
      %p467 = scmp.eq.s32.totalorder %s88, 1
      %p468 = scmp.ne.s32.totalorder %s463, %s465
      %p469 = scmp.eq.s32.totalorder %s88, 0
      %p470 = por %p468, %p469
      %p471 = scmp.ne.s32.totalorder %s463, %s465
      %p472 = scmp.eq.s32.totalorder %s93, 1
      %p473 = por %p471, %p472
      %p474 = scmp.ne.s32.totalorder %s465, %s466
      %p475 = scmp.eq.s32.totalorder %s93, 0
      %p476 = por %p474, %p475
      %p477 = scmp.ne.s32.totalorder %s465, %s466
      %p478 = scmp.eq.s32.totalorder %s94, 1
      %p479 = por %p477, %p478
      %p481 = scmp.ne.s32.totalorder %s466, %s480
      %p482 = scmp.eq.s32.totalorder %s94, 0
      %p483 = por %p481, %p482
      %s485 = sadd.s32 %s484, 1
      %p488 = scmp.eq.s32.totalorder %s88, 1
      %p489 = scmp.ne.s32.totalorder %s484, %s486
      %p490 = scmp.eq.s32.totalorder %s88, 0
      %p491 = por %p489, %p490
      %p492 = scmp.ne.s32.totalorder %s484, %s486
      %p493 = scmp.eq.s32.totalorder %s93, 1
      %p494 = por %p492, %p493
      %p495 = scmp.ne.s32.totalorder %s486, %s487
      %p496 = scmp.eq.s32.totalorder %s93, 0
      %p497 = por %p495, %p496
      %p498 = scmp.ne.s32.totalorder %s486, %s487
      %p499 = scmp.eq.s32.totalorder %s94, 1
      %p500 = por %p498, %p499
      %p502 = scmp.ne.s32.totalorder %s487, %s501
      %p503 = scmp.eq.s32.totalorder %s94, 0
      %p504 = por %p502, %p503
      %s506 = sadd.s32 %s505, 1
      %p509 = scmp.eq.s32.totalorder %s88, 1
      %p510 = scmp.ne.s32.totalorder %s505, %s507
      %p511 = scmp.eq.s32.totalorder %s88, 0
      %p512 = por %p510, %p511
      %p513 = scmp.ne.s32.totalorder %s505, %s507
      %p514 = scmp.eq.s32.totalorder %s93, 1
      %p515 = por %p513, %p514
      %p516 = scmp.ne.s32.totalorder %s507, %s508
      %p517 = scmp.eq.s32.totalorder %s93, 0
      %p518 = por %p516, %p517
      %p519 = scmp.ne.s32.totalorder %s507, %s508
      %p520 = scmp.eq.s32.totalorder %s94, 1
      %p521 = por %p519, %p520
      %p523 = scmp.ne.s32.totalorder %s508, %s522
      %p524 = scmp.eq.s32.totalorder %s94, 0
      %p525 = por %p523, %p524
      %s527 = sadd.s32 %s526, 1
      %p530 = scmp.eq.s32.totalorder %s88, 1
      %p531 = scmp.ne.s32.totalorder %s526, %s528
      %p532 = scmp.eq.s32.totalorder %s88, 0
      %p533 = por %p531, %p532
      %p534 = scmp.ne.s32.totalorder %s526, %s528
      %p535 = scmp.eq.s32.totalorder %s93, 1
      %p536 = por %p534, %p535
      %p537 = scmp.ne.s32.totalorder %s528, %s529
      %p538 = scmp.eq.s32.totalorder %s93, 0
      %p539 = por %p537, %p538
      %p540 = scmp.ne.s32.totalorder %s528, %s529
      %p541 = scmp.eq.s32.totalorder %s94, 1
      %p542 = por %p540, %p541
      %p544 = scmp.ne.s32.totalorder %s529, %s543
      %p545 = scmp.eq.s32.totalorder %s94, 0
      %p546 = por %p544, %p545
      %s548 = sadd.s32 %s547, 1
      %p551 = scmp.eq.s32.totalorder %s88, 1
      %p552 = scmp.ne.s32.totalorder %s547, %s549
      %p553 = scmp.eq.s32.totalorder %s88, 0
      %p554 = por %p552, %p553
      %p555 = scmp.ne.s32.totalorder %s547, %s549
      %p556 = scmp.eq.s32.totalorder %s93, 1
      %p557 = por %p555, %p556
      %p558 = scmp.ne.s32.totalorder %s549, %s550
      %p559 = scmp.eq.s32.totalorder %s93, 0
      %p560 = por %p558, %p559
      %p561 = scmp.ne.s32.totalorder %s549, %s550
      %p562 = scmp.eq.s32.totalorder %s94, 1
      %p563 = por %p561, %p562
      %p565 = scmp.ne.s32.totalorder %s550, %s564
      %p566 = scmp.eq.s32.totalorder %s94, 0
      %p567 = por %p565, %p566
      %s569 = sadd.s32 %s568, 1
      %p572 = scmp.eq.s32.totalorder %s88, 1
      %p573 = scmp.ne.s32.totalorder %s568, %s570
      %p574 = scmp.eq.s32.totalorder %s88, 0
      %p575 = por %p573, %p574
      %p576 = scmp.ne.s32.totalorder %s568, %s570
      %p577 = scmp.eq.s32.totalorder %s93, 1
      %p578 = por %p576, %p577
      %p579 = scmp.ne.s32.totalorder %s570, %s571
      %p580 = scmp.eq.s32.totalorder %s93, 0
      %p581 = por %p579, %p580
      %p582 = scmp.ne.s32.totalorder %s570, %s571
      %p583 = scmp.eq.s32.totalorder %s94, 1
      %p584 = por %p582, %p583
      %p586 = scmp.ne.s32.totalorder %s571, %s585
      %p587 = scmp.eq.s32.totalorder %s94, 0
      %p588 = por %p586, %p587
      %s590 = sadd.s32 %s589, 1
      %p593 = scmp.eq.s32.totalorder %s88, 1
      %p594 = scmp.ne.s32.totalorder %s589, %s591
      %p595 = scmp.eq.s32.totalorder %s88, 0
      %p596 = por %p594, %p595
      %p597 = scmp.ne.s32.totalorder %s589, %s591
      %p598 = scmp.eq.s32.totalorder %s93, 1
      %p599 = por %p597, %p598
      %p600 = scmp.ne.s32.totalorder %s591, %s592
      %p601 = scmp.eq.s32.totalorder %s93, 0
      %p602 = por %p600, %p601
      %p603 = scmp.ne.s32.totalorder %s591, %s592
      %p604 = scmp.eq.s32.totalorder %s94, 1
      %p605 = por %p603, %p604
      %p607 = scmp.ne.s32.totalorder %s592, %s606
      %p608 = scmp.eq.s32.totalorder %s94, 0
      %p609 = por %p607, %p608
      %s611 = sadd.s32 %s610, 1
      %p614 = scmp.eq.s32.totalorder %s88, 1
      %p615 = scmp.ne.s32.totalorder %s610, %s612
      %p616 = scmp.eq.s32.totalorder %s88, 0
      %p617 = por %p615, %p616
      %p618 = scmp.ne.s32.totalorder %s610, %s612
      %p619 = scmp.eq.s32.totalorder %s93, 1
      %p620 = por %p618, %p619
      %p621 = scmp.ne.s32.totalorder %s612, %s613
      %p622 = scmp.eq.s32.totalorder %s93, 0
      %p623 = por %p621, %p622
      %p624 = scmp.ne.s32.totalorder %s612, %s613
      %p625 = scmp.eq.s32.totalorder %s94, 1
      %p626 = por %p624, %p625
      %p628 = scmp.ne.s32.totalorder %s613, %s627
      %p629 = scmp.eq.s32.totalorder %s94, 0
      %p630 = por %p628, %p629
      %s632 = sadd.s32 %s631, 1
      %p635 = scmp.eq.s32.totalorder %s88, 1
      %p636 = scmp.ne.s32.totalorder %s631, %s633
      %p637 = scmp.eq.s32.totalorder %s88, 0
      %p638 = por %p636, %p637
      %p639 = scmp.ne.s32.totalorder %s631, %s633
      %p640 = scmp.eq.s32.totalorder %s93, 1
      %p641 = por %p639, %p640
      %p642 = scmp.ne.s32.totalorder %s633, %s634
      %p643 = scmp.eq.s32.totalorder %s93, 0
      %p644 = por %p642, %p643
      %p645 = scmp.ne.s32.totalorder %s633, %s634
      %p646 = scmp.eq.s32.totalorder %s94, 1
      %p647 = por %p645, %p646
      %p649 = scmp.ne.s32.totalorder %s634, %s648
      %p650 = scmp.eq.s32.totalorder %s94, 0
      %p651 = por %p649, %p650
      %s653 = sadd.s32 %s652, 1
      %p656 = scmp.eq.s32.totalorder %s88, 1
      %p657 = scmp.ne.s32.totalorder %s652, %s654
      %p658 = scmp.eq.s32.totalorder %s88, 0
      %p659 = por %p657, %p658
      %p660 = scmp.ne.s32.totalorder %s652, %s654
      %p661 = scmp.eq.s32.totalorder %s93, 1
      %p662 = por %p660, %p661
      %p663 = scmp.ne.s32.totalorder %s654, %s655
      %p664 = scmp.eq.s32.totalorder %s93, 0
      %p665 = por %p663, %p664
      %p666 = scmp.ne.s32.totalorder %s654, %s655
      %p667 = scmp.eq.s32.totalorder %s94, 1
      %p668 = por %p666, %p667
      %p670 = scmp.ne.s32.totalorder %s655, %s669
      %p671 = scmp.eq.s32.totalorder %s94, 0
      %p672 = por %p670, %p671
      %s674 = sadd.s32 %s673, 1
      %p677 = scmp.eq.s32.totalorder %s88, 1
      %p678 = scmp.ne.s32.totalorder %s673, %s675
      %p679 = scmp.eq.s32.totalorder %s88, 0
      %p680 = por %p678, %p679
      %p681 = scmp.ne.s32.totalorder %s673, %s675
      %p682 = scmp.eq.s32.totalorder %s93, 1
      %p683 = por %p681, %p682
      %p684 = scmp.ne.s32.totalorder %s675, %s676
      %p685 = scmp.eq.s32.totalorder %s93, 0
      %p686 = por %p684, %p685
      %p687 = scmp.ne.s32.totalorder %s675, %s676
      %p688 = scmp.eq.s32.totalorder %s94, 1
      %p689 = por %p687, %p688
      %p691 = scmp.ne.s32.totalorder %s676, %s690
      %p692 = scmp.eq.s32.totalorder %s94, 0
      %p693 = por %p691, %p692
      %s695 = sadd.s32 %s694, 1
      %p698 = scmp.eq.s32.totalorder %s88, 1
      %p699 = scmp.ne.s32.totalorder %s694, %s696
      %p700 = scmp.eq.s32.totalorder %s88, 0
      %p701 = por %p699, %p700
      %p702 = scmp.ne.s32.totalorder %s694, %s696
      %p703 = scmp.eq.s32.totalorder %s93, 1
      %p704 = por %p702, %p703
      %p705 = scmp.ne.s32.totalorder %s696, %s697
      %p706 = scmp.eq.s32.totalorder %s93, 0
      %p707 = por %p705, %p706
      %p708 = scmp.ne.s32.totalorder %s696, %s697
      %p709 = scmp.eq.s32.totalorder %s94, 1
      %p710 = por %p708, %p709
      %p712 = scmp.ne.s32.totalorder %s697, %s711
      %p713 = scmp.eq.s32.totalorder %s94, 0
      %p714 = por %p712, %p713
      %s716 = sadd.s32 %s715, 1
      %p719 = scmp.eq.s32.totalorder %s88, 1
      %p720 = scmp.ne.s32.totalorder %s715, %s717
      %p721 = scmp.eq.s32.totalorder %s88, 0
      %p722 = por %p720, %p721
      %p723 = scmp.ne.s32.totalorder %s715, %s717
      %p724 = scmp.eq.s32.totalorder %s93, 1
      %p725 = por %p723, %p724
      %p726 = scmp.ne.s32.totalorder %s717, %s718
      %p727 = scmp.eq.s32.totalorder %s93, 0
      %p728 = por %p726, %p727
      %p729 = scmp.ne.s32.totalorder %s717, %s718
      %p730 = scmp.eq.s32.totalorder %s94, 1
      %p731 = por %p729, %p730
      %p733 = scmp.ne.s32.totalorder %s718, %s732
      %p734 = scmp.eq.s32.totalorder %s94, 0
      %p735 = por %p733, %p734
      %s737 = sadd.s32 %s736, 1
      %p740 = scmp.eq.s32.totalorder %s88, 1
      %p741 = scmp.ne.s32.totalorder %s736, %s738
      %p742 = scmp.eq.s32.totalorder %s88, 0
      %p743 = por %p741, %p742
      %p744 = scmp.ne.s32.totalorder %s736, %s738
      %p745 = scmp.eq.s32.totalorder %s93, 1
      %p746 = por %p744, %p745
      %p747 = scmp.ne.s32.totalorder %s738, %s739
      %p748 = scmp.eq.s32.totalorder %s93, 0
      %p749 = por %p747, %p748
      %p750 = scmp.ne.s32.totalorder %s738, %s739
      %p751 = scmp.eq.s32.totalorder %s94, 1
      %p752 = por %p750, %p751
      %p754 = scmp.ne.s32.totalorder %s739, %s753
      %p755 = scmp.eq.s32.totalorder %s94, 0
      %p756 = por %p754, %p755
      %s758 = sadd.s32 %s757, 1
      %p761 = scmp.eq.s32.totalorder %s88, 1
      %p762 = scmp.ne.s32.totalorder %s757, %s759
      %p763 = scmp.eq.s32.totalorder %s88, 0
      %p764 = por %p762, %p763
      %p765 = scmp.ne.s32.totalorder %s757, %s759
      %p766 = scmp.eq.s32.totalorder %s93, 1
      %p767 = por %p765, %p766
      %p768 = scmp.ne.s32.totalorder %s759, %s760
      %p769 = scmp.eq.s32.totalorder %s93, 0
      %p770 = por %p768, %p769
      %p771 = scmp.ne.s32.totalorder %s759, %s760
      %p772 = scmp.eq.s32.totalorder %s94, 1
      %p773 = por %p771, %p772
      %p775 = scmp.ne.s32.totalorder %s760, %s774
      %p776 = scmp.eq.s32.totalorder %s94, 0
      %p777 = por %p775, %p776
      %s779 = sadd.s32 %s778, 1
      %p782 = scmp.eq.s32.totalorder %s88, 1
      %p783 = scmp.ne.s32.totalorder %s778, %s780
      %p784 = scmp.eq.s32.totalorder %s88, 0
      %p785 = por %p783, %p784
      %p786 = scmp.ne.s32.totalorder %s778, %s780
      %p787 = scmp.eq.s32.totalorder %s93, 1
      %p788 = por %p786, %p787
      %p789 = scmp.ne.s32.totalorder %s780, %s781
      %p790 = scmp.eq.s32.totalorder %s93, 0
      %p791 = por %p789, %p790
      %p792 = scmp.ne.s32.totalorder %s780, %s781
      %p793 = scmp.eq.s32.totalorder %s94, 1
      %p794 = por %p792, %p793
      %p796 = scmp.ne.s32.totalorder %s781, %s795
      %p797 = scmp.eq.s32.totalorder %s94, 0
      %p798 = por %p796, %p797
      %s800 = sadd.s32 %s799, 1
      %p803 = scmp.eq.s32.totalorder %s88, 1
      %p804 = scmp.ne.s32.totalorder %s799, %s801
      %p805 = scmp.eq.s32.totalorder %s88, 0
      %p806 = por %p804, %p805
      %p807 = scmp.ne.s32.totalorder %s799, %s801
      %p808 = scmp.eq.s32.totalorder %s93, 1
      %p809 = por %p807, %p808
      %p810 = scmp.ne.s32.totalorder %s801, %s802
      %p811 = scmp.eq.s32.totalorder %s93, 0
      %p812 = por %p810, %p811
      %p813 = scmp.ne.s32.totalorder %s801, %s802
      %p814 = scmp.eq.s32.totalorder %s94, 1
      %p815 = por %p813, %p814
      %p817 = scmp.ne.s32.totalorder %s802, %s816
      %p818 = scmp.eq.s32.totalorder %s94, 0
      %p819 = por %p817, %p818
      %s821 = sadd.s32 %s820, 1
      %p824 = scmp.eq.s32.totalorder %s88, 1
      %p825 = scmp.ne.s32.totalorder %s820, %s822
      %p826 = scmp.eq.s32.totalorder %s88, 0
      %p827 = por %p825, %p826
      %p828 = scmp.ne.s32.totalorder %s820, %s822
      %p829 = scmp.eq.s32.totalorder %s93, 1
      %p830 = por %p828, %p829
      %p831 = scmp.ne.s32.totalorder %s822, %s823
      %p832 = scmp.eq.s32.totalorder %s93, 0
      %p833 = por %p831, %p832
      %p834 = scmp.ne.s32.totalorder %s822, %s823
      %p835 = scmp.eq.s32.totalorder %s94, 1
      %p836 = por %p834, %p835
      %p838 = scmp.ne.s32.totalorder %s823, %s837
      %p839 = scmp.eq.s32.totalorder %s94, 0
      %p840 = por %p838, %p839
      %s842 = sadd.s32 %s841, 1
      %p845 = scmp.eq.s32.totalorder %s88, 1
      %p846 = scmp.ne.s32.totalorder %s841, %s843
      %p847 = scmp.eq.s32.totalorder %s88, 0
      %p848 = por %p846, %p847
      %p849 = scmp.ne.s32.totalorder %s841, %s843
      %p850 = scmp.eq.s32.totalorder %s93, 1
      %p851 = por %p849, %p850
      %p852 = scmp.ne.s32.totalorder %s843, %s844
      %p853 = scmp.eq.s32.totalorder %s93, 0
      %p854 = por %p852, %p853
      %p855 = scmp.ne.s32.totalorder %s843, %s844
      %p856 = scmp.eq.s32.totalorder %s94, 1
      %p857 = por %p855, %p856
      %p859 = scmp.ne.s32.totalorder %s844, %s858
      %p860 = scmp.eq.s32.totalorder %s94, 0
      %p861 = por %p859, %p860
      %s863 = sadd.s32 %s862, 1
      %p866 = scmp.eq.s32.totalorder %s88, 1
      %p867 = scmp.ne.s32.totalorder %s862, %s864
      %p868 = scmp.eq.s32.totalorder %s88, 0
      %p869 = por %p867, %p868
      %p870 = scmp.ne.s32.totalorder %s862, %s864
      %p871 = scmp.eq.s32.totalorder %s93, 1
      %p872 = por %p870, %p871
      %p873 = scmp.ne.s32.totalorder %s864, %s865
      %p874 = scmp.eq.s32.totalorder %s93, 0
      %p875 = por %p873, %p874
      %p876 = scmp.ne.s32.totalorder %s864, %s865
      %p877 = scmp.eq.s32.totalorder %s94, 1
      %p878 = por %p876, %p877
      %p880 = scmp.ne.s32.totalorder %s865, %s879
      %p881 = scmp.eq.s32.totalorder %s94, 0
      %p882 = por %p880, %p881
      %s883 = ssub.s32 %s88, %s95
      %p884 = scmp.eq.s32.totalorder %s883, 0
      %s886 = sadd.s32 %s885, 1
      %s887 = scalar_select %p884, %s885, %s886
      %p890 = pneg %p884
      %p891 = scmp.eq.s32.totalorder %s88, 1
      %p892 = por %p890, %p891
      %p893 = scmp.ne.s32.totalorder %s885, %s888
      %p894 = scmp.eq.s32.totalorder %s88, 0
      %p895 = por %p893, %p894
      %p896 = scmp.ne.s32.totalorder %s885, %s888
      %p897 = scmp.eq.s32.totalorder %s93, 1
      %p898 = por %p896, %p897
      %p899 = scmp.ne.s32.totalorder %s888, %s889
      %p900 = scmp.eq.s32.totalorder %s93, 0
      %p901 = por %p899, %p900
      %p902 = scmp.ne.s32.totalorder %s888, %s889
      %p903 = scmp.eq.s32.totalorder %s94, 1
      %p904 = por %p902, %p903
      %p906 = scmp.ne.s32.totalorder %s889, %s905
      %p907 = scmp.eq.s32.totalorder %s94, 0
      %p908 = por %p906, %p907
      %p909 = scmp.le.s32.totalorder 1, %s88
      %p910 = scmp.lt.s32.totalorder %s88, 3
      %p911 = pnand %p909, %p910
      %p912 = pneg %p911
      // Predicated region
      $region9: #{tpu_custom_call.1} parent=5 // pred_check
        _
      $region10: #{tpu_custom_call.1} parent=5 // pred_check_branch
        %914 = sbr.rel (%p911) target = $region12
      $region11: #{tpu_custom_call.1} parent=5 // pred_region
        %s915 = ssub.s32 %s88, 1
        // Predicated region
        $region13: #{tpu_custom_call.1} parent=11 // pred_check
          %p916 = pneg %p161
        $region14: #{tpu_custom_call.1} parent=11 // pred_check_branch
          %918 = sbr.rel (%p916) target = $region16
        $region15: #{tpu_custom_call.1} parent=11 // pred_region
          _
        $region16: #{tpu_custom_call.1} parent=11 // pred_fallthru
          _
        // Predicated region
        $region17: #{tpu_custom_call.1} parent=11 // pred_check
          %p919 = pneg %p182
        $region18: #{tpu_custom_call.1} parent=11 // pred_check_branch
          %921 = sbr.rel (%p919) target = $region20
        $region19: #{tpu_custom_call.1} parent=11 // pred_region
          _
        $region20: #{tpu_custom_call.1} parent=11 // pred_fallthru
          _
        // Predicated region
        $region21: #{tpu_custom_call.1} parent=11 // pred_check
          %p922 = pneg %p203
        $region22: #{tpu_custom_call.1} parent=11 // pred_check_branch
          %924 = sbr.rel (%p922) target = $region24
        $region23: #{tpu_custom_call.1} parent=11 // pred_region
          _
        $region24: #{tpu_custom_call.1} parent=11 // pred_fallthru
          _
        // Predicated region
        $region25: #{tpu_custom_call.1} parent=11 // pred_check
          %p925 = pneg %p224
        $region26: #{tpu_custom_call.1} parent=11 // pred_check_branch
          %927 = sbr.rel (%p925) target = $region28
        $region27: #{tpu_custom_call.1} parent=11 // pred_region
          %s929 = ssub.s32 16, 16
          %930 = vsyncadd [#allocation3], %s929
          %s932 = sshll.u32 [#allocation2], 4
          %s933 = int_to_ptr.vmem [resolvable:$true] %s932
          %935 = dma.hbm_to_vmem [thread:$0]  %s11, 16, %s933, [#allocation3]
        $region28: #{tpu_custom_call.1} parent=11 // pred_fallthru
          _
        // Predicated region
        $region29: #{tpu_custom_call.1} parent=11 // pred_check
          %p936 = pneg %p245
        $region30: #{tpu_custom_call.1} parent=11 // pred_check_branch
          %938 = sbr.rel (%p936) target = $region32
        $region31: #{tpu_custom_call.1} parent=11 // pred_region
          %s940 = ssub.s32 64, 64
          %941 = vsyncadd [#allocation6], %s940
          %s943 = sshll.u32 [#allocation5], 4
          %s944 = int_to_ptr.vmem [resolvable:$true] %s943
          %946 = dma.hbm_to_vmem [thread:$0]  %s13, 64, %s944, [#allocation6]
        $region32: #{tpu_custom_call.1} parent=11 // pred_fallthru
          _
        // Predicated region
        $region33: #{tpu_custom_call.1} parent=11 // pred_check
          %p947 = pneg %p266
        $region34: #{tpu_custom_call.1} parent=11 // pred_check_branch
          %949 = sbr.rel (%p947) target = $region36
        $region35: #{tpu_custom_call.1} parent=11 // pred_region
          %s951 = ssub.s32 16, 16
          %952 = vsyncadd [#allocation6], %s951
          %s954 = sshll.u32 [#allocation7], 4
          %s955 = int_to_ptr.vmem [resolvable:$true] %s954
          %957 = dma.hbm_to_vmem [thread:$0]  %s15, 16, %s955, [#allocation6]
        $region36: #{tpu_custom_call.1} parent=11 // pred_fallthru
          _
        // Predicated region
        $region37: #{tpu_custom_call.1} parent=11 // pred_check
          %p958 = pneg %p287
        $region38: #{tpu_custom_call.1} parent=11 // pred_check_branch
          %960 = sbr.rel (%p958) target = $region40
        $region39: #{tpu_custom_call.1} parent=11 // pred_region
          _
        $region40: #{tpu_custom_call.1} parent=11 // pred_fallthru
          _
        // Predicated region
        $region41: #{tpu_custom_call.1} parent=11 // pred_check
          %p961 = pneg %p308
        $region42: #{tpu_custom_call.1} parent=11 // pred_check_branch
          %963 = sbr.rel (%p961) target = $region44
        $region43: #{tpu_custom_call.1} parent=11 // pred_region
          %s965 = ssub.s32 16, 16
          %966 = vsyncadd [#allocation9], %s965
          %s968 = sshll.u32 [#allocation8], 4
          %s969 = int_to_ptr.vmem [resolvable:$true] %s968
          %971 = dma.hbm_to_vmem [thread:$0]  %s19, 16, %s969, [#allocation9]
        $region44: #{tpu_custom_call.1} parent=11 // pred_fallthru
          _
        // Predicated region
        $region45: #{tpu_custom_call.1} parent=11 // pred_check
          %p972 = pneg %p329
        $region46: #{tpu_custom_call.1} parent=11 // pred_check_branch
          %974 = sbr.rel (%p972) target = $region48
        $region47: #{tpu_custom_call.1} parent=11 // pred_region
          _
        $region48: #{tpu_custom_call.1} parent=11 // pred_fallthru
          _
        // Predicated region
        $region49: #{tpu_custom_call.1} parent=11 // pred_check
          %p975 = pneg %p350
        $region50: #{tpu_custom_call.1} parent=11 // pred_check_branch
          %977 = sbr.rel (%p975) target = $region52
        $region51: #{tpu_custom_call.1} parent=11 // pred_region
          %s979 = ssub.s32 48, 48
          %980 = vsyncadd [#allocation9], %s979
          %s981 = sshll.u32 [#allocation10], 4
          %s982 = int_to_ptr.vmem [resolvable:$true] %s981
          %987 = dma.hbm_to_vmem [thread:$0]  %s23, 48, %s982, [#allocation9], 16, 16, 1
        $region52: #{tpu_custom_call.1} parent=11 // pred_fallthru
          _
        // Predicated region
        $region53: #{tpu_custom_call.1} parent=11 // pred_check
          %p988 = pneg %p371
        $region54: #{tpu_custom_call.1} parent=11 // pred_check_branch
          %990 = sbr.rel (%p988) target = $region56
        $region55: #{tpu_custom_call.1} parent=11 // pred_region
          _
        $region56: #{tpu_custom_call.1} parent=11 // pred_fallthru
          _
        // Predicated region
        $region57: #{tpu_custom_call.1} parent=11 // pred_check
          %p991 = pneg %p392
        $region58: #{tpu_custom_call.1} parent=11 // pred_check_branch
          %993 = sbr.rel (%p991) target = $region60
        $region59: #{tpu_custom_call.1} parent=11 // pred_region
          _
        $region60: #{tpu_custom_call.1} parent=11 // pred_fallthru
          _
        // Predicated region
        $region61: #{tpu_custom_call.1} parent=11 // pred_check
          %p994 = pneg %p413
        $region62: #{tpu_custom_call.1} parent=11 // pred_check_branch
          %996 = sbr.rel (%p994) target = $region64
        $region63: #{tpu_custom_call.1} parent=11 // pred_region
          %s998 = ssub.s32 64, 64
          %999 = vsyncadd [#allocation12], %s998
          %s1000 = sshll.u32 [#allocation11], 4
          %s1001 = int_to_ptr.vmem [resolvable:$true] %s1000
          %1006 = dma.hbm_to_vmem [thread:$0]  %s29, 64, %s1001, [#allocation12], 32, 32, 2
        $region64: #{tpu_custom_call.1} parent=11 // pred_fallthru
          _
        // Predicated region
        $region65: #{tpu_custom_call.1} parent=11 // pred_check
          %p1007 = pneg %p434
        $region66: #{tpu_custom_call.1} parent=11 // pred_check_branch
          %1009 = sbr.rel (%p1007) target = $region68
        $region67: #{tpu_custom_call.1} parent=11 // pred_region
          _
        $region68: #{tpu_custom_call.1} parent=11 // pred_fallthru
          _
        // Predicated region
        $region69: #{tpu_custom_call.1} parent=11 // pred_check
          %p1010 = pneg %p455
        $region70: #{tpu_custom_call.1} parent=11 // pred_check_branch
          %1012 = sbr.rel (%p1010) target = $region72
        $region71: #{tpu_custom_call.1} parent=11 // pred_region
          _
        $region72: #{tpu_custom_call.1} parent=11 // pred_fallthru
          _
        // Predicated region
        $region73: #{tpu_custom_call.1} parent=11 // pred_check
          %p1013 = pneg %p476
        $region74: #{tpu_custom_call.1} parent=11 // pred_check_branch
          %1015 = sbr.rel (%p1013) target = $region76
        $region75: #{tpu_custom_call.1} parent=11 // pred_region
          _
        $region76: #{tpu_custom_call.1} parent=11 // pred_fallthru
          _
        // Predicated region
        $region77: #{tpu_custom_call.1} parent=11 // pred_check
          %p1016 = pneg %p497
        $region78: #{tpu_custom_call.1} parent=11 // pred_check_branch
          %1018 = sbr.rel (%p1016) target = $region80
        $region79: #{tpu_custom_call.1} parent=11 // pred_region
          _
        $region80: #{tpu_custom_call.1} parent=11 // pred_fallthru
          _
        // Predicated region
        $region81: #{tpu_custom_call.1} parent=11 // pred_check
          %p1019 = pneg %p518
        $region82: #{tpu_custom_call.1} parent=11 // pred_check_branch
          %1021 = sbr.rel (%p1019) target = $region84
        $region83: #{tpu_custom_call.1} parent=11 // pred_region
          _
        $region84: #{tpu_custom_call.1} parent=11 // pred_fallthru
          _
        // Predicated region
        $region85: #{tpu_custom_call.1} parent=11 // pred_check
          %p1022 = pneg %p539
        $region86: #{tpu_custom_call.1} parent=11 // pred_check_branch
          %1024 = sbr.rel (%p1022) target = $region88
        $region87: #{tpu_custom_call.1} parent=11 // pred_region
          _
        $region88: #{tpu_custom_call.1} parent=11 // pred_fallthru
          _
        // Predicated region
        $region89: #{tpu_custom_call.1} parent=11 // pred_check
          %p1025 = pneg %p560
        $region90: #{tpu_custom_call.1} parent=11 // pred_check_branch
          %1027 = sbr.rel (%p1025) target = $region92
        $region91: #{tpu_custom_call.1} parent=11 // pred_region
          _
        $region92: #{tpu_custom_call.1} parent=11 // pred_fallthru
          _
        // Predicated region
        $region93: #{tpu_custom_call.1} parent=11 // pred_check
          %p1028 = pneg %p581
        $region94: #{tpu_custom_call.1} parent=11 // pred_check_branch
          %1030 = sbr.rel (%p1028) target = $region96
        $region95: #{tpu_custom_call.1} parent=11 // pred_region
          _
        $region96: #{tpu_custom_call.1} parent=11 // pred_fallthru
          _
        // Predicated region
        $region97: #{tpu_custom_call.1} parent=11 // pred_check
          %p1031 = pneg %p602
        $region98: #{tpu_custom_call.1} parent=11 // pred_check_branch
          %1033 = sbr.rel (%p1031) target = $region100
        $region99: #{tpu_custom_call.1} parent=11 // pred_region
          _
        $region100: #{tpu_custom_call.1} parent=11 // pred_fallthru
          _
        // Predicated region
        $region101: #{tpu_custom_call.1} parent=11 // pred_check
          %p1034 = pneg %p623
        $region102: #{tpu_custom_call.1} parent=11 // pred_check_branch
          %1036 = sbr.rel (%p1034) target = $region104
        $region103: #{tpu_custom_call.1} parent=11 // pred_region
          _
        $region104: #{tpu_custom_call.1} parent=11 // pred_fallthru
          _
        // Predicated region
        $region105: #{tpu_custom_call.1} parent=11 // pred_check
          %p1037 = pneg %p644
        $region106: #{tpu_custom_call.1} parent=11 // pred_check_branch
          %1039 = sbr.rel (%p1037) target = $region108
        $region107: #{tpu_custom_call.1} parent=11 // pred_region
          _
        $region108: #{tpu_custom_call.1} parent=11 // pred_fallthru
          _
        // Predicated region
        $region109: #{tpu_custom_call.1} parent=11 // pred_check
          %p1040 = pneg %p665
        $region110: #{tpu_custom_call.1} parent=11 // pred_check_branch
          %1042 = sbr.rel (%p1040) target = $region112
        $region111: #{tpu_custom_call.1} parent=11 // pred_region
          _
        $region112: #{tpu_custom_call.1} parent=11 // pred_fallthru
          _
        // Predicated region
        $region113: #{tpu_custom_call.1} parent=11 // pred_check
          %p1043 = pneg %p686
        $region114: #{tpu_custom_call.1} parent=11 // pred_check_branch
          %1045 = sbr.rel (%p1043) target = $region116
        $region115: #{tpu_custom_call.1} parent=11 // pred_region
          _
        $region116: #{tpu_custom_call.1} parent=11 // pred_fallthru
          _
        // Predicated region
        $region117: #{tpu_custom_call.1} parent=11 // pred_check
          %p1046 = pneg %p707
        $region118: #{tpu_custom_call.1} parent=11 // pred_check_branch
          %1048 = sbr.rel (%p1046) target = $region120
        $region119: #{tpu_custom_call.1} parent=11 // pred_region
          _
        $region120: #{tpu_custom_call.1} parent=11 // pred_fallthru
          _
        // Predicated region
        $region121: #{tpu_custom_call.1} parent=11 // pred_check
          %p1049 = pneg %p728
        $region122: #{tpu_custom_call.1} parent=11 // pred_check_branch
          %1051 = sbr.rel (%p1049) target = $region124
        $region123: #{tpu_custom_call.1} parent=11 // pred_region
          _
        $region124: #{tpu_custom_call.1} parent=11 // pred_fallthru
          _
        // Predicated region
        $region125: #{tpu_custom_call.1} parent=11 // pred_check
          %p1052 = pneg %p749
        $region126: #{tpu_custom_call.1} parent=11 // pred_check_branch
          %1054 = sbr.rel (%p1052) target = $region128
        $region127: #{tpu_custom_call.1} parent=11 // pred_region
          _
        $region128: #{tpu_custom_call.1} parent=11 // pred_fallthru
          _
        // Predicated region
        $region129: #{tpu_custom_call.1} parent=11 // pred_check
          %p1055 = pneg %p770
        $region130: #{tpu_custom_call.1} parent=11 // pred_check_branch
          %1057 = sbr.rel (%p1055) target = $region132
        $region131: #{tpu_custom_call.1} parent=11 // pred_region
          _
        $region132: #{tpu_custom_call.1} parent=11 // pred_fallthru
          _
        // Predicated region
        $region133: #{tpu_custom_call.1} parent=11 // pred_check
          %p1058 = pneg %p791
        $region134: #{tpu_custom_call.1} parent=11 // pred_check_branch
          %1060 = sbr.rel (%p1058) target = $region136
        $region135: #{tpu_custom_call.1} parent=11 // pred_region
          _
        $region136: #{tpu_custom_call.1} parent=11 // pred_fallthru
          _
        // Predicated region
        $region137: #{tpu_custom_call.1} parent=11 // pred_check
          %p1061 = pneg %p812
        $region138: #{tpu_custom_call.1} parent=11 // pred_check_branch
          %1063 = sbr.rel (%p1061) target = $region140
        $region139: #{tpu_custom_call.1} parent=11 // pred_region
          _
        $region140: #{tpu_custom_call.1} parent=11 // pred_fallthru
          _
        // Predicated region
        $region141: #{tpu_custom_call.1} parent=11 // pred_check
          %p1064 = pneg %p833
        $region142: #{tpu_custom_call.1} parent=11 // pred_check_branch
          %1066 = sbr.rel (%p1064) target = $region144
        $region143: #{tpu_custom_call.1} parent=11 // pred_region
          _
        $region144: #{tpu_custom_call.1} parent=11 // pred_fallthru
          _
        // Predicated region
        $region145: #{tpu_custom_call.1} parent=11 // pred_check
          %p1067 = pneg %p854
        $region146: #{tpu_custom_call.1} parent=11 // pred_check_branch
          %1069 = sbr.rel (%p1067) target = $region148
        $region147: #{tpu_custom_call.1} parent=11 // pred_region
          _
        $region148: #{tpu_custom_call.1} parent=11 // pred_fallthru
          _
        // Predicated region
        $region149: #{tpu_custom_call.1} parent=11 // pred_check
          %p1070 = pneg %p875
        $region150: #{tpu_custom_call.1} parent=11 // pred_check_branch
          %1072 = sbr.rel (%p1070) target = $region152
        $region151: #{tpu_custom_call.1} parent=11 // pred_region
          _
        $region152: #{tpu_custom_call.1} parent=11 // pred_fallthru
          _
      $region12: #{tpu_custom_call.1} parent=5 // pred_fallthru
        _
      %p1073 = scmp.lt.s32.totalorder %s88, 2
      // Predicated region
      $region153: #{tpu_custom_call.1} parent=5 // pred_check
        %p1074 = pneg %p1073
      $region154: #{tpu_custom_call.1} parent=5 // pred_check_branch
        %1076 = sbr.rel (%p1074) target = $region156
      $region155: #{tpu_custom_call.1} parent=5 // pred_region
        // Predicated region
        $region157: #{tpu_custom_call.1} parent=155 // pred_check
          %p1077 = pneg %p108
        $region158: #{tpu_custom_call.1} parent=155 // pred_check_branch
          %1079 = sbr.rel (%p1077) target = $region160
        $region159: #{tpu_custom_call.1} parent=155 // pred_region
          %p1080 = scmp.lt.s32.totalorder %s88, 1
          %s1081 = scalar_select %p1080, %s88, 1
          %s1082 = smul.addr %s1081, 2
          %s1083 = smul.addr %s1082, 8
          %s1084 = scalar_lea.vmem %s1, %s1083
        $region160: #{tpu_custom_call.1} parent=155 // pred_fallthru
          _
        // Predicated region
        $region161: #{tpu_custom_call.1} parent=155 // pred_check
          %p1085 = pneg %p134
        $region162: #{tpu_custom_call.1} parent=155 // pred_check_branch
          %1087 = sbr.rel (%p1085) target = $region164
        $region163: #{tpu_custom_call.1} parent=155 // pred_region
          %p1088 = scmp.lt.s32.totalorder %s88, 1
          %s1089 = scalar_select %p1088, %s88, 1
          %s1090 = smul.addr %s1089, 2
          %s1091 = smul.addr %s1090, 8
          %s1092 = scalar_lea.vmem %s3, %s1091
        $region164: #{tpu_custom_call.1} parent=155 // pred_fallthru
          _
      $region156: #{tpu_custom_call.1} parent=5 // pred_fallthru
        _
      %p1093 = scmp.le.s32.totalorder 1, %s88
      %p1094 = scmp.lt.s32.totalorder %s88, 3
      %p1095 = pnand %p1093, %p1094
      %p1096 = pneg %p1095
      // Predicated region
      $region165: #{tpu_custom_call.1} parent=5 // pred_check
        _
      $region166: #{tpu_custom_call.1} parent=5 // pred_check_branch
        %1098 = sbr.rel (%p1095) target = $region168
      $region167: #{tpu_custom_call.1} parent=5 // pred_region
        %s1099 = ssub.s32 %s88, 1
        // Predicated region
        $region169: #{tpu_custom_call.1} parent=167 // pred_check
          %p1100 = pneg %p224
        $region170: #{tpu_custom_call.1} parent=167 // pred_check_branch
          %1102 = sbr.rel (%p1100) target = $region172
        $region171: #{tpu_custom_call.1} parent=167 // pred_region
          %1103 = dma.done [#allocation3], 16
        $region172: #{tpu_custom_call.1} parent=167 // pred_fallthru
          _
        // Predicated region
        $region173: #{tpu_custom_call.1} parent=167 // pred_check
          %p1104 = pneg %p245
        $region174: #{tpu_custom_call.1} parent=167 // pred_check_branch
          %1106 = sbr.rel (%p1104) target = $region176
        $region175: #{tpu_custom_call.1} parent=167 // pred_region
          %1107 = dma.done [#allocation6], 64
        $region176: #{tpu_custom_call.1} parent=167 // pred_fallthru
          _
        // Predicated region
        $region177: #{tpu_custom_call.1} parent=167 // pred_check
          %p1108 = pneg %p266
        $region178: #{tpu_custom_call.1} parent=167 // pred_check_branch
          %1110 = sbr.rel (%p1108) target = $region180
        $region179: #{tpu_custom_call.1} parent=167 // pred_region
          %1111 = dma.done [#allocation6], 16
        $region180: #{tpu_custom_call.1} parent=167 // pred_fallthru
          _
        // Predicated region
        $region181: #{tpu_custom_call.1} parent=167 // pred_check
          %p1112 = pneg %p308
        $region182: #{tpu_custom_call.1} parent=167 // pred_check_branch
          %1114 = sbr.rel (%p1112) target = $region184
        $region183: #{tpu_custom_call.1} parent=167 // pred_region
          %1115 = dma.done [#allocation9], 16
        $region184: #{tpu_custom_call.1} parent=167 // pred_fallthru
          _
        // Predicated region
        $region185: #{tpu_custom_call.1} parent=167 // pred_check
          %p1116 = pneg %p350
        $region186: #{tpu_custom_call.1} parent=167 // pred_check_branch
          %1118 = sbr.rel (%p1116) target = $region188
        $region187: #{tpu_custom_call.1} parent=167 // pred_region
          %1119 = dma.done [#allocation9], 48
        $region188: #{tpu_custom_call.1} parent=167 // pred_fallthru
          _
        // Predicated region
        $region189: #{tpu_custom_call.1} parent=167 // pred_check
          %p1120 = pneg %p413
        $region190: #{tpu_custom_call.1} parent=167 // pred_check_branch
          %1122 = sbr.rel (%p1120) target = $region192
        $region191: #{tpu_custom_call.1} parent=167 // pred_region
          %1123 = dma.done [#allocation12], 64
        $region192: #{tpu_custom_call.1} parent=167 // pred_fallthru
          _
        %p1124 = scmp.lt.s32.totalorder %s93, 1
        %s1125 = scalar_select %p1124, %s93, 1
        %s1126 = smul.addr %s1125, 2
        %s1127 = smul.addr %s1126, 8
        %s1128 = scalar_lea.vmem %s1, %s1127
        %p1129 = pneg %p114
        %p1130 = pneg %p111
        %p1131 = scmp.lt.s32.totalorder %s93, 1
        %s1132 = scalar_select %p1131, %s93, 1
        %s1133 = smul.addr %s1132, 2
        %s1134 = smul.addr %s1133, 8
        %s1135 = scalar_lea.vmem %s3, %s1134
        %p1136 = pneg %p140
        %p1137 = pneg %p137
        %p1138 = pneg %p161
        %p1139 = pneg %p158
        %p1140 = pneg %p182
        %p1141 = pneg %p179
        %p1142 = pneg %p203
        %p1143 = pneg %p200
        %p1144 = pneg %p224
        %p1145 = pneg %p221
        %p1146 = pneg %p245
        %p1147 = pneg %p242
        %p1148 = pneg %p266
        %p1149 = pneg %p263
        %p1150 = pneg %p287
        %p1151 = pneg %p284
        %p1152 = pneg %p308
        %p1153 = pneg %p305
        %p1154 = pneg %p329
        %p1155 = pneg %p326
        %p1156 = pneg %p350
        %p1157 = pneg %p347
        %p1158 = pneg %p371
        %p1159 = pneg %p368
        %p1160 = pneg %p392
        %p1161 = pneg %p389
        %p1162 = pneg %p413
        %p1163 = pneg %p410
        %p1164 = pneg %p434
        %p1165 = pneg %p431
        %p1166 = pneg %p455
        %p1167 = pneg %p452
        %p1168 = pneg %p476
        %p1169 = pneg %p473
        %p1170 = pneg %p497
        %p1171 = pneg %p494
        %p1172 = pneg %p518
        %p1173 = pneg %p515
        %p1174 = pneg %p539
        %p1175 = pneg %p536
        %p1176 = pneg %p560
        %p1177 = pneg %p557
        %p1178 = pneg %p581
        %p1179 = pneg %p578
        %p1180 = pneg %p602
        %p1181 = pneg %p599
        %p1182 = pneg %p623
        %p1183 = pneg %p620
        %p1184 = pneg %p644
        %p1185 = pneg %p641
        %p1186 = pneg %p665
        %p1187 = pneg %p662
        %p1188 = pneg %p686
        %p1189 = pneg %p683
        %p1190 = pneg %p707
        %p1191 = pneg %p704
        %p1192 = pneg %p728
        %p1193 = pneg %p725
        %p1194 = pneg %p749
        %p1195 = pneg %p746
        %p1196 = pneg %p770
        %p1197 = pneg %p767
        %p1198 = pneg %p791
        %p1199 = pneg %p788
        %p1200 = pneg %p812
        %p1201 = pneg %p809
        %p1202 = pneg %p833
        %p1203 = pneg %p830
        %p1204 = pneg %p854
        %p1205 = pneg %p851
        %p1206 = pneg %p875
        %p1207 = pneg %p872
        %p1208 = pneg %p901
        %p1209 = pneg %p898
        %s1210 = sand.u32 %s888, 1
        %s1211 = scalar_lea.sflag [#allocation4], %s1210
        %s1212 = sand.u32 %s888, 1
        %s1213 = smul.addr %s1212, 16
        %s1214 = scalar_lea.vmem [#allocation13], %s1213
        %p1215 = scmp.lt.s32.totalorder %s93, 1
        %s1216 = scalar_select %p1215, %s93, 1
        %s1217 = smul.addr %s1216, 2
        %s1218 = smul.addr %s1217, 8
        %s1219 = scalar_lea.vmem %s1, %s1218
        %p1220 = scmp.lt.s32.totalorder %s93, 1
        %s1221 = scalar_select %p1220, %s93, 1
        %s1222 = smul.addr %s1221, 2
        %s1223 = smul.addr %s1222, 8
        %s1224 = scalar_lea.vmem %s3, %s1223
        %v1225 = vld [vmem:[%s1219] sm:$0xff]
        %v1226 = vld [vmem:[%s1219 + $0x8] sm:$0xff]
        %v1227 = vld [vmem:[%s1224] sm:$0xff]
        %v1228 = vld [vmem:[%s1224 + $0x8] sm:$0xff]
        %v1229 = vld [vmem:[%s5] sm:$0xff]
        %v1230 = vld [vmem:[%s5 + $0x8] sm:$0xff]
        %v1231 = vld [vmem:[%s9] sm:$0xf]
        %vm1232 = vcmask 31744
        %v1234 = vsel %vm1232, %v1225, 0
        %v1237 = vsel %vm1232, %v1226, 0
        %vm1239 = vcmask 1043456
        %v1241 = vsel %vm1239, %v1231, 0
        %1243 = vmatprep.subr.mxu0 0.0
        %1244 = vmatpush1.msra.mxu0 0.0
        %1245 = vmatprep.subr.mxu0 0.0
        %1246 = vmatpush1.msra.mxu0 0.0
        %1247 = vmatprep.subr.mxu0 0.0
        %1248 = vmatpush1.msra.mxu0 0.0
        %1249 = vmatprep.subr.mxu0 0.0
        %1250 = vmatpush1.msra.mxu0 0.0
        %1251 = vmatprep.subr.mxu0 0.0
        %1252 = vmatpush1.msra.mxu0 0.0
        %1253 = vmatprep.subr.mxu0 0.0
        %1254 = vmatpush1.msra.mxu0 0.0
        %1255 = vmatprep.subr.mxu0 0.0
        %1256 = vmatpush1.msra.mxu0 0.0
        %1257 = vmatprep.subr.mxu0 0.0
        %1258 = vmatpush1.msra.mxu0 0.0
        %1259 = vmatprep.subr.mxu0 0.0
        %1260 = vmatpush1.msra.mxu0 0.0
        %1261 = vmatprep.subr.mxu0 0.0
        %1262 = vmatpush1.msra.mxu0 0.0
        %1263 = vmatprep.subr.mxu0 0.0
        %1264 = vmatpush1.msra.mxu0 0.0
        %1265 = vmatprep.subr.mxu0 0.0
        %1266 = vmatpush1.msra.mxu0 0.0
        %1267 = vmatprep.subr.mxu0 0.0
        %1268 = vmatpush1.msra.mxu0 0.0
        %1269 = vmatprep.subr.mxu0 0.0
        %1270 = vmatpush1.msra.mxu0 0.0
        %1271 = vmatprep.subr.mxu0 0.0
        %1272 = vmatpush1.msra.mxu0 0.0
        %1273 = vmatprep.subr.mxu0 0.0
        %1274 = vmatpush1.msra.mxu0 %v1241
        %1275 = vmatprep.subr.mxu0 0.0
        %1276 = vmatpush2.msra.mxu0 0.0
        %1277 = vmatprep.subr.mxu0 0.0
        %1278 = vmatpush2.msra.mxu0 0.0
        %1279 = vmatprep.subr.mxu0 0.0
        %1280 = vmatpush2.msra.mxu0 0.0
        %1281 = vmatprep.subr.mxu0 0.0
        %1282 = vmatpush2.msra.mxu0 0.0
        %1283 = vmatprep.subr.mxu0 0.0
        %1284 = vmatpush2.msra.mxu0 0.0
        %1285 = vmatprep.subr.mxu0 0.0
        %1286 = vmatpush2.msra.mxu0 0.0
        %1287 = vmatprep.subr.mxu0 0.0
        %1288 = vmatpush2.msra.mxu0 0.0
        %1289 = vmatprep.subr.mxu0 0.0
        %1290 = vmatpush2.msra.mxu0 0.0
        %1291 = vmatprep.subr.mxu0 0.0
        %1292 = vmatpush2.msra.mxu0 0.0
        %1293 = vmatprep.subr.mxu0 0.0
        %1294 = vmatpush2.msra.mxu0 0.0
        %1295 = vmatprep.subr.mxu0 0.0
        %1296 = vmatpush2.msra.mxu0 0.0
        %1297 = vmatprep.subr.mxu0 0.0
        %1298 = vmatpush2.msra.mxu0 0.0
        %1299 = vmatprep.subr.mxu0 0.0
        %1300 = vmatpush2.msra.mxu0 0.0
        %1301 = vmatprep.subr.mxu0 0.0
        %1302 = vmatpush2.msra.mxu0 0.0
        %1303 = vmatprep.subr.mxu0 0.0
        %1304 = vmatpush2.msra.mxu0 0.0
        %1305 = vmatprep.subr.mxu0 0.0
        %1306 = vmatpush2.msra.mxu0 0.0
        %1307 = vmatprep.mubr.f32.mxu0 0.0
        %1308 = vmatmul.mubr.f32.gmra.mxu0 %v1234
        %v1309 = vpop.f32.mrf.mxu0
        %v1310 = vadd.f32 0.0, %v1309
        %v1311 = vpop.f32.mrf.mxu0
        %1312 = vmatprep.mubr.f32.mxu0 0.0
        %1313 = vmatmul.mubr.f32.gmra.mxu0 %v1237
        %v1314 = vpop.f32.mrf.mxu0
        %v1315 = vadd.f32 0.0, %v1314
        %v1316 = vpop.f32.mrf.mxu0
        %1317 = vdwg.mxu0
        %s1318 = scalar_lea.vmem %s9, 4
        %v1319 = vld [vmem:[%s1318] sm:$0xf]
        %v1321 = vsel %vm1239, %v1319, 0
        %1323 = vmatprep.subr.mxu0 0.0
        %1324 = vmatpush1.msra.mxu0 0.0
        %1325 = vmatprep.subr.mxu0 0.0
        %1326 = vmatpush1.msra.mxu0 0.0
        %1327 = vmatprep.subr.mxu0 0.0
        %1328 = vmatpush1.msra.mxu0 0.0
        %1329 = vmatprep.subr.mxu0 0.0
        %1330 = vmatpush1.msra.mxu0 0.0
        %1331 = vmatprep.subr.mxu0 0.0
        %1332 = vmatpush1.msra.mxu0 0.0
        %1333 = vmatprep.subr.mxu0 0.0
        %1334 = vmatpush1.msra.mxu0 0.0
        %1335 = vmatprep.subr.mxu0 0.0
        %1336 = vmatpush1.msra.mxu0 0.0
        %1337 = vmatprep.subr.mxu0 0.0
        %1338 = vmatpush1.msra.mxu0 0.0
        %1339 = vmatprep.subr.mxu0 0.0
        %1340 = vmatpush1.msra.mxu0 0.0
        %1341 = vmatprep.subr.mxu0 0.0
        %1342 = vmatpush1.msra.mxu0 0.0
        %1343 = vmatprep.subr.mxu0 0.0
        %1344 = vmatpush1.msra.mxu0 0.0
        %1345 = vmatprep.subr.mxu0 0.0
        %1346 = vmatpush1.msra.mxu0 0.0
        %1347 = vmatprep.subr.mxu0 0.0
        %1348 = vmatpush1.msra.mxu0 0.0
        %1349 = vmatprep.subr.mxu0 0.0
        %1350 = vmatpush1.msra.mxu0 0.0
        %1351 = vmatprep.subr.mxu0 0.0
        %1352 = vmatpush1.msra.mxu0 0.0
        %1353 = vmatprep.subr.mxu0 0.0
        %1354 = vmatpush1.msra.mxu0 %v1321
        %1355 = vmatprep.subr.mxu0 0.0
        %1356 = vmatpush2.msra.mxu0 0.0
        %1357 = vmatprep.subr.mxu0 0.0
        %1358 = vmatpush2.msra.mxu0 0.0
        %1359 = vmatprep.subr.mxu0 0.0
        %1360 = vmatpush2.msra.mxu0 0.0
        %1361 = vmatprep.subr.mxu0 0.0
        %1362 = vmatpush2.msra.mxu0 0.0
        %1363 = vmatprep.subr.mxu0 0.0
        %1364 = vmatpush2.msra.mxu0 0.0
        %1365 = vmatprep.subr.mxu0 0.0
        %1366 = vmatpush2.msra.mxu0 0.0
        %1367 = vmatprep.subr.mxu0 0.0
        %1368 = vmatpush2.msra.mxu0 0.0
        %1369 = vmatprep.subr.mxu0 0.0
        %1370 = vmatpush2.msra.mxu0 0.0
        %1371 = vmatprep.subr.mxu0 0.0
        %1372 = vmatpush2.msra.mxu0 0.0
        %1373 = vmatprep.subr.mxu0 0.0
        %1374 = vmatpush2.msra.mxu0 0.0
        %1375 = vmatprep.subr.mxu0 0.0
        %1376 = vmatpush2.msra.mxu0 0.0
        %1377 = vmatprep.subr.mxu0 0.0
        %1378 = vmatpush2.msra.mxu0 0.0
        %1379 = vmatprep.subr.mxu0 0.0
        %1380 = vmatpush2.msra.mxu0 0.0
        %1381 = vmatprep.subr.mxu0 0.0
        %1382 = vmatpush2.msra.mxu0 0.0
        %1383 = vmatprep.subr.mxu0 0.0
        %1384 = vmatpush2.msra.mxu0 0.0
        %1385 = vmatprep.subr.mxu0 0.0
        %1386 = vmatpush2.msra.mxu0 0.0
        %1387 = vmatprep.mubr.f32.mxu0 0.0
        %1388 = vmatmul.mubr.f32.gmra.mxu0 %v1234
        %v1389 = vpop.f32.mrf.mxu0
        %v1390 = vadd.f32 0.0, %v1389
        %v1391 = vpop.f32.mrf.mxu0
        %1392 = vmatprep.mubr.f32.mxu0 0.0
        %1393 = vmatmul.mubr.f32.gmra.mxu0 %v1237
        %v1394 = vpop.f32.mrf.mxu0
        %v1395 = vadd.f32 0.0, %v1394
        %v1396 = vpop.f32.mrf.mxu0
        %1397 = vdwg.mxu0
        %s1398 = scalar_lea.vmem %s5, 16
        %v1399 = vld [vmem:[%s1398] sm:$0xff]
        %v1400 = vld [vmem:[%s1398 + $0x8] sm:$0xff]
        %s1401 = scalar_lea.vmem %s9, 8
        %v1402 = vld [vmem:[%s1401] sm:$0xf]
        %v1404 = vsel %vm1239, %v1402, 0
        %1406 = vmatprep.subr.mxu0 0.0
        %1407 = vmatpush1.msra.mxu0 0.0
        %1408 = vmatprep.subr.mxu0 0.0
        %1409 = vmatpush1.msra.mxu0 0.0
        %1410 = vmatprep.subr.mxu0 0.0
        %1411 = vmatpush1.msra.mxu0 0.0
        %1412 = vmatprep.subr.mxu0 0.0
        %1413 = vmatpush1.msra.mxu0 0.0
        %1414 = vmatprep.subr.mxu0 0.0
        %1415 = vmatpush1.msra.mxu0 0.0
        %1416 = vmatprep.subr.mxu0 0.0
        %1417 = vmatpush1.msra.mxu0 0.0
        %1418 = vmatprep.subr.mxu0 0.0
        %1419 = vmatpush1.msra.mxu0 0.0
        %1420 = vmatprep.subr.mxu0 0.0
        %1421 = vmatpush1.msra.mxu0 0.0
        %1422 = vmatprep.subr.mxu0 0.0
        %1423 = vmatpush1.msra.mxu0 0.0
        %1424 = vmatprep.subr.mxu0 0.0
        %1425 = vmatpush1.msra.mxu0 0.0
        %1426 = vmatprep.subr.mxu0 0.0
        %1427 = vmatpush1.msra.mxu0 0.0
        %1428 = vmatprep.subr.mxu0 0.0
        %1429 = vmatpush1.msra.mxu0 0.0
        %1430 = vmatprep.subr.mxu0 0.0
        %1431 = vmatpush1.msra.mxu0 0.0
        %1432 = vmatprep.subr.mxu0 0.0
        %1433 = vmatpush1.msra.mxu0 0.0
        %1434 = vmatprep.subr.mxu0 0.0
        %1435 = vmatpush1.msra.mxu0 0.0
        %1436 = vmatprep.subr.mxu0 0.0
        %1437 = vmatpush1.msra.mxu0 %v1404
        %1438 = vmatprep.subr.mxu0 0.0
        %1439 = vmatpush2.msra.mxu0 0.0
        %1440 = vmatprep.subr.mxu0 0.0
        %1441 = vmatpush2.msra.mxu0 0.0
        %1442 = vmatprep.subr.mxu0 0.0
        %1443 = vmatpush2.msra.mxu0 0.0
        %1444 = vmatprep.subr.mxu0 0.0
        %1445 = vmatpush2.msra.mxu0 0.0
        %1446 = vmatprep.subr.mxu0 0.0
        %1447 = vmatpush2.msra.mxu0 0.0
        %1448 = vmatprep.subr.mxu0 0.0
        %1449 = vmatpush2.msra.mxu0 0.0
        %1450 = vmatprep.subr.mxu0 0.0
        %1451 = vmatpush2.msra.mxu0 0.0
        %1452 = vmatprep.subr.mxu0 0.0
        %1453 = vmatpush2.msra.mxu0 0.0
        %1454 = vmatprep.subr.mxu0 0.0
        %1455 = vmatpush2.msra.mxu0 0.0
        %1456 = vmatprep.subr.mxu0 0.0
        %1457 = vmatpush2.msra.mxu0 0.0
        %1458 = vmatprep.subr.mxu0 0.0
        %1459 = vmatpush2.msra.mxu0 0.0
        %1460 = vmatprep.subr.mxu0 0.0
        %1461 = vmatpush2.msra.mxu0 0.0
        %1462 = vmatprep.subr.mxu0 0.0
        %1463 = vmatpush2.msra.mxu0 0.0
        %1464 = vmatprep.subr.mxu0 0.0
        %1465 = vmatpush2.msra.mxu0 0.0
        %1466 = vmatprep.subr.mxu0 0.0
        %1467 = vmatpush2.msra.mxu0 0.0
        %1468 = vmatprep.subr.mxu0 0.0
        %1469 = vmatpush2.msra.mxu0 0.0
        %1470 = vmatprep.mubr.f32.mxu0 0.0
        %1471 = vmatmul.mubr.f32.gmra.mxu0 %v1234
        %v1472 = vpop.f32.mrf.mxu0
        %v1473 = vadd.f32 0.0, %v1472
        %v1474 = vpop.f32.mrf.mxu0
        %1475 = vmatprep.mubr.f32.mxu0 0.0
        %1476 = vmatmul.mubr.f32.gmra.mxu0 %v1237
        %v1477 = vpop.f32.mrf.mxu0
        %v1478 = vadd.f32 0.0, %v1477
        %v1479 = vpop.f32.mrf.mxu0
        %1480 = vdwg.mxu0
        %vm1481 = vcmask 130048
        %v1483 = vsel %vm1481, %v1399, 0
        %v1486 = vsel %vm1481, %v1400, 0
        %1488 = vmatprep.subr.mxu0 0.0
        %1489 = vmatpush1.msra.mxu0 0.0
        %1490 = vmatprep.subr.mxu0 0.0
        %1491 = vmatpush1.msra.mxu0 0.0
        %1492 = vmatprep.subr.mxu0 0.0
        %1493 = vmatpush1.msra.mxu0 0.0
        %1494 = vmatprep.subr.mxu0 0.0
        %1495 = vmatpush1.msra.mxu0 0.0
        %1496 = vmatprep.subr.mxu0 0.0
        %1497 = vmatpush1.msra.mxu0 0.0
        %1498 = vmatprep.subr.mxu0 0.0
        %1499 = vmatpush1.msra.mxu0 0.0
        %1500 = vmatprep.subr.mxu0 0.0
        %1501 = vmatpush1.msra.mxu0 0.0
        %1502 = vmatprep.subr.mxu0 0.0
        %1503 = vmatpush1.msra.mxu0 0.0
        %1504 = vmatprep.subr.mxu0 0.0
        %1505 = vmatpush1.msra.mxu0 0.0
        %1506 = vmatprep.subr.mxu0 0.0
        %1507 = vmatpush1.msra.mxu0 0.0
        %1508 = vmatprep.subr.mxu0 0.0
        %1509 = vmatpush1.msra.mxu0 0.0
        %1510 = vmatprep.subr.mxu0 0.0
        %1511 = vmatpush1.msra.mxu0 0.0
        %1512 = vmatprep.subr.mxu0 0.0
        %1513 = vmatpush1.msra.mxu0 0.0
        %1514 = vmatprep.subr.mxu0 0.0
        %1515 = vmatpush1.msra.mxu0 0.0
        %1516 = vmatprep.subr.mxu0 0.0
        %1517 = vmatpush1.msra.mxu0 %v1478
        %1518 = vmatprep.subr.mxu0 0.0
        %1519 = vmatpush1.msra.mxu0 %v1473
        %1520 = vmatprep.subr.mxu0 0.0
        %1521 = vmatpush2.msra.mxu0 0.0
        %1522 = vmatprep.subr.mxu0 0.0
        %1523 = vmatpush2.msra.mxu0 0.0
        %1524 = vmatprep.subr.mxu0 0.0
        %1525 = vmatpush2.msra.mxu0 0.0
        %1526 = vmatprep.subr.mxu0 0.0
        %1527 = vmatpush2.msra.mxu0 0.0
        %1528 = vmatprep.subr.mxu0 0.0
        %1529 = vmatpush2.msra.mxu0 0.0
        %1530 = vmatprep.subr.mxu0 0.0
        %1531 = vmatpush2.msra.mxu0 0.0
        %1532 = vmatprep.subr.mxu0 0.0
        %1533 = vmatpush2.msra.mxu0 0.0
        %1534 = vmatprep.subr.mxu0 0.0
        %1535 = vmatpush2.msra.mxu0 0.0
        %1536 = vmatprep.subr.mxu0 0.0
        %1537 = vmatpush2.msra.mxu0 0.0
        %1538 = vmatprep.subr.mxu0 0.0
        %1539 = vmatpush2.msra.mxu0 0.0
        %1540 = vmatprep.subr.mxu0 0.0
        %1541 = vmatpush2.msra.mxu0 0.0
        %1542 = vmatprep.subr.mxu0 0.0
        %1543 = vmatpush2.msra.mxu0 0.0
        %1544 = vmatprep.subr.mxu0 0.0
        %1545 = vmatpush2.msra.mxu0 0.0
        %1546 = vmatprep.subr.mxu0 0.0
        %1547 = vmatpush2.msra.mxu0 0.0
        %1548 = vmatprep.subr.mxu0 0.0
        %1549 = vmatpush2.msra.mxu0 0.0
        %1550 = vmatprep.subr.mxu0 0.0
        %1551 = vmatpush2.msra.mxu0 0.0
        %1552 = vmatprep.mubr.f32.mxu0 0.0
        %1553 = vmatmul.mubr.f32.gmra.mxu0 %v1483
        %v1554 = vpop.f32.mrf.mxu0
        %v1555 = vadd.f32 0.0, %v1554
        %v1556 = vpop.f32.mrf.mxu0
        %1557 = vmatprep.mubr.f32.mxu0 0.0
        %1558 = vmatmul.mubr.f32.gmra.mxu0 %v1486
        %v1559 = vpop.f32.mrf.mxu0
        %v1560 = vadd.f32 0.0, %v1559
        %v1561 = vpop.f32.mrf.mxu0
        %1562 = vdwg.mxu0
        %v1564 = vsel %vm1481, %v1229, 0
        %v1567 = vsel %vm1481, %v1230, 0
        %1569 = vmatprep.subr.mxu0 0.0
        %1570 = vmatpush1.msra.mxu0 0.0
        %1571 = vmatprep.subr.mxu0 0.0
        %1572 = vmatpush1.msra.mxu0 0.0
        %1573 = vmatprep.subr.mxu0 0.0
        %1574 = vmatpush1.msra.mxu0 0.0
        %1575 = vmatprep.subr.mxu0 0.0
        %1576 = vmatpush1.msra.mxu0 0.0
        %1577 = vmatprep.subr.mxu0 0.0
        %1578 = vmatpush1.msra.mxu0 0.0
        %1579 = vmatprep.subr.mxu0 0.0
        %1580 = vmatpush1.msra.mxu0 0.0
        %1581 = vmatprep.subr.mxu0 0.0
        %1582 = vmatpush1.msra.mxu0 0.0
        %1583 = vmatprep.subr.mxu0 0.0
        %1584 = vmatpush1.msra.mxu0 0.0
        %1585 = vmatprep.subr.mxu0 0.0
        %1586 = vmatpush1.msra.mxu0 0.0
        %1587 = vmatprep.subr.mxu0 0.0
        %1588 = vmatpush1.msra.mxu0 0.0
        %1589 = vmatprep.subr.mxu0 0.0
        %1590 = vmatpush1.msra.mxu0 0.0
        %1591 = vmatprep.subr.mxu0 0.0
        %1592 = vmatpush1.msra.mxu0 0.0
        %1593 = vmatprep.subr.mxu0 0.0
        %1594 = vmatpush1.msra.mxu0 0.0
        %1595 = vmatprep.subr.mxu0 0.0
        %1596 = vmatpush1.msra.mxu0 0.0
        %1597 = vmatprep.subr.mxu0 0.0
        %1598 = vmatpush1.msra.mxu0 %v1315
        %1599 = vmatprep.subr.mxu0 0.0
        %1600 = vmatpush1.msra.mxu0 %v1310
        %1601 = vmatprep.subr.mxu0 0.0
        %1602 = vmatpush2.msra.mxu0 0.0
        %1603 = vmatprep.subr.mxu0 0.0
        %1604 = vmatpush2.msra.mxu0 0.0
        %1605 = vmatprep.subr.mxu0 0.0
        %1606 = vmatpush2.msra.mxu0 0.0
        %1607 = vmatprep.subr.mxu0 0.0
        %1608 = vmatpush2.msra.mxu0 0.0
        %1609 = vmatprep.subr.mxu0 0.0
        %1610 = vmatpush2.msra.mxu0 0.0
        %1611 = vmatprep.subr.mxu0 0.0
        %1612 = vmatpush2.msra.mxu0 0.0
        %1613 = vmatprep.subr.mxu0 0.0
        %1614 = vmatpush2.msra.mxu0 0.0
        %1615 = vmatprep.subr.mxu0 0.0
        %1616 = vmatpush2.msra.mxu0 0.0
        %1617 = vmatprep.subr.mxu0 0.0
        %1618 = vmatpush2.msra.mxu0 0.0
        %1619 = vmatprep.subr.mxu0 0.0
        %1620 = vmatpush2.msra.mxu0 0.0
        %1621 = vmatprep.subr.mxu0 0.0
        %1622 = vmatpush2.msra.mxu0 0.0
        %1623 = vmatprep.subr.mxu0 0.0
        %1624 = vmatpush2.msra.mxu0 0.0
        %1625 = vmatprep.subr.mxu0 0.0
        %1626 = vmatpush2.msra.mxu0 0.0
        %1627 = vmatprep.subr.mxu0 0.0
        %1628 = vmatpush2.msra.mxu0 0.0
        %1629 = vmatprep.subr.mxu0 0.0
        %1630 = vmatpush2.msra.mxu0 0.0
        %1631 = vmatprep.subr.mxu0 0.0
        %1632 = vmatpush2.msra.mxu0 0.0
        %1633 = vmatprep.mubr.f32.mxu0 0.0
        %1634 = vmatmul.mubr.f32.gmra.mxu0 %v1564
        %v1635 = vpop.f32.mrf.mxu0
        %v1636 = vadd.f32 %v1390, %v1635
        %v1637 = vpop.f32.mrf.mxu0
        %1638 = vmatprep.mubr.f32.mxu0 0.0
        %1639 = vmatmul.mubr.f32.gmra.mxu0 %v1567
        %v1640 = vpop.f32.mrf.mxu0
        %v1641 = vadd.f32 %v1395, %v1640
        %v1642 = vpop.f32.mrf.mxu0
        %1643 = vdwg.mxu0
        %v1644 = vadd.f32 %v1636, %v1555
        %v1645 = vadd.f32 %v1641, %v1560
        %v1646 = vld [vmem:[#allocation2] sm:$0x1]
        %v1648 = vlaneseq
        %v1649 = vshrl.u32 %v1648, 7
        %v1650 = vsub.s32 0, %v1649
        %v1651 = vrot.slane %v1646, %v1650
        %v1653 = vadd.f32 %v1644, %v1651
        %v1654 = vadd.f32 %v1645, %v1651
        %v1655 = vld [vmem:[#allocation5] sm:$0xf]
        %v1657 = vsel %vm1232, %v1227, 0
        %v1660 = vsel %vm1232, %v1228, 0
        %v1663 = vsel %vm1239, %v1655, 0
        %1665 = vmatprep.subr.mxu0 0.0
        %1666 = vmatpush1.msra.mxu0 0.0
        %1667 = vmatprep.subr.mxu0 0.0
        %1668 = vmatpush1.msra.mxu0 0.0
        %1669 = vmatprep.subr.mxu0 0.0
        %1670 = vmatpush1.msra.mxu0 0.0
        %1671 = vmatprep.subr.mxu0 0.0
        %1672 = vmatpush1.msra.mxu0 0.0
        %1673 = vmatprep.subr.mxu0 0.0
        %1674 = vmatpush1.msra.mxu0 0.0
        %1675 = vmatprep.subr.mxu0 0.0
        %1676 = vmatpush1.msra.mxu0 0.0
        %1677 = vmatprep.subr.mxu0 0.0
        %1678 = vmatpush1.msra.mxu0 0.0
        %1679 = vmatprep.subr.mxu0 0.0
        %1680 = vmatpush1.msra.mxu0 0.0
        %1681 = vmatprep.subr.mxu0 0.0
        %1682 = vmatpush1.msra.mxu0 0.0
        %1683 = vmatprep.subr.mxu0 0.0
        %1684 = vmatpush1.msra.mxu0 0.0
        %1685 = vmatprep.subr.mxu0 0.0
        %1686 = vmatpush1.msra.mxu0 0.0
        %1687 = vmatprep.subr.mxu0 0.0
        %1688 = vmatpush1.msra.mxu0 0.0
        %1689 = vmatprep.subr.mxu0 0.0
        %1690 = vmatpush1.msra.mxu0 0.0
        %1691 = vmatprep.subr.mxu0 0.0
        %1692 = vmatpush1.msra.mxu0 0.0
        %1693 = vmatprep.subr.mxu0 0.0
        %1694 = vmatpush1.msra.mxu0 0.0
        %1695 = vmatprep.subr.mxu0 0.0
        %1696 = vmatpush1.msra.mxu0 %v1663
        %1697 = vmatprep.subr.mxu0 0.0
        %1698 = vmatpush2.msra.mxu0 0.0
        %1699 = vmatprep.subr.mxu0 0.0
        %1700 = vmatpush2.msra.mxu0 0.0
        %1701 = vmatprep.subr.mxu0 0.0
        %1702 = vmatpush2.msra.mxu0 0.0
        %1703 = vmatprep.subr.mxu0 0.0
        %1704 = vmatpush2.msra.mxu0 0.0
        %1705 = vmatprep.subr.mxu0 0.0
        %1706 = vmatpush2.msra.mxu0 0.0
        %1707 = vmatprep.subr.mxu0 0.0
        %1708 = vmatpush2.msra.mxu0 0.0
        %1709 = vmatprep.subr.mxu0 0.0
        %1710 = vmatpush2.msra.mxu0 0.0
        %1711 = vmatprep.subr.mxu0 0.0
        %1712 = vmatpush2.msra.mxu0 0.0
        %1713 = vmatprep.subr.mxu0 0.0
        %1714 = vmatpush2.msra.mxu0 0.0
        %1715 = vmatprep.subr.mxu0 0.0
        %1716 = vmatpush2.msra.mxu0 0.0
        %1717 = vmatprep.subr.mxu0 0.0
        %1718 = vmatpush2.msra.mxu0 0.0
        %1719 = vmatprep.subr.mxu0 0.0
        %1720 = vmatpush2.msra.mxu0 0.0
        %1721 = vmatprep.subr.mxu0 0.0
        %1722 = vmatpush2.msra.mxu0 0.0
        %1723 = vmatprep.subr.mxu0 0.0
        %1724 = vmatpush2.msra.mxu0 0.0
        %1725 = vmatprep.subr.mxu0 0.0
        %1726 = vmatpush2.msra.mxu0 0.0
        %1727 = vmatprep.subr.mxu0 0.0
        %1728 = vmatpush2.msra.mxu0 0.0
        %1729 = vmatprep.mubr.f32.mxu0 0.0
        %1730 = vmatmul.mubr.f32.gmra.mxu0 %v1657
        %v1731 = vpop.f32.mrf.mxu0
        %v1732 = vadd.f32 0.0, %v1731
        %v1733 = vpop.f32.mrf.mxu0
        %1734 = vmatprep.mubr.f32.mxu0 0.0
        %1735 = vmatmul.mubr.f32.gmra.mxu0 %v1660
        %v1736 = vpop.f32.mrf.mxu0
        %v1737 = vadd.f32 0.0, %v1736
        %v1738 = vpop.f32.mrf.mxu0
        %1739 = vdwg.mxu0
        %v1740 = vadd.f32 %v1653, %v1732
        %v1741 = vadd.f32 %v1654, %v1737
        %v1742 = vld [vmem:[#allocation7] sm:$0x1]
        %v1744 = vlaneseq
        %v1745 = vshrl.u32 %v1744, 7
        %v1746 = vsub.s32 0, %v1745
        %v1747 = vrot.slane %v1742, %v1746
        %v1749 = vadd.f32 %v1740, %v1747
        %v1750 = vadd.f32 %v1741, %v1747
        %v1751 = vld [vmem:[%s7] sm:$0xff]
        %v1752 = vld [vmem:[%s7 + $0x8] sm:$0xff]
        %v1753 = vadd.f32 %v1749, %v1751
        %v1754 = vadd.f32 %v1750, %v1752
        %v1755 = vld [vmem:[%s17] sm:$0xff]
        %v1756 = vld [vmem:[%s17 + $0x8] sm:$0xff]
        %v1757 = vld [vmem:[%s17 + $0x10] sm:$0xff]
        %v1758 = vld [vmem:[%s17 + $0x18] sm:$0xff]
        %v1759 = vld [vmem:[#allocation8] sm:$0x1]
        %v1761 = vlaneseq
        %v1762 = vshrl.u32 %v1761, 7
        %v1763 = vsub.s32 0, %v1762
        %v1764 = vrot.slane %v1759, %v1763
        %vm1766 = vcmask 261120
        %v1768 = vsel %vm1766, %v1753, 0
        %v1771 = vsel %vm1766, %v1754, 0
        %1773 = vmatprep.subr.mxu0 0.0
        %1774 = vmatpush1.msra.mxu0 0.0
        %1775 = vmatprep.subr.mxu0 0.0
        %1776 = vmatpush1.msra.mxu0 0.0
        %1777 = vmatprep.subr.mxu0 0.0
        %1778 = vmatpush1.msra.mxu0 0.0
        %1779 = vmatprep.subr.mxu0 0.0
        %1780 = vmatpush1.msra.mxu0 0.0
        %1781 = vmatprep.subr.mxu0 0.0
        %1782 = vmatpush1.msra.mxu0 0.0
        %1783 = vmatprep.subr.mxu0 0.0
        %1784 = vmatpush1.msra.mxu0 0.0
        %1785 = vmatprep.subr.mxu0 0.0
        %1786 = vmatpush1.msra.mxu0 0.0
        %1787 = vmatprep.subr.mxu0 0.0
        %1788 = vmatpush1.msra.mxu0 0.0
        %1789 = vmatprep.subr.mxu0 0.0
        %1790 = vmatpush1.msra.mxu0 0.0
        %1791 = vmatprep.subr.mxu0 0.0
        %1792 = vmatpush1.msra.mxu0 0.0
        %1793 = vmatprep.subr.mxu0 0.0
        %1794 = vmatpush1.msra.mxu0 0.0
        %1795 = vmatprep.subr.mxu0 0.0
        %1796 = vmatpush1.msra.mxu0 0.0
        %1797 = vmatprep.subr.mxu0 0.0
        %1798 = vmatpush1.msra.mxu0 %v1758
        %1799 = vmatprep.subr.mxu0 0.0
        %1800 = vmatpush1.msra.mxu0 %v1757
        %1801 = vmatprep.subr.mxu0 0.0
        %1802 = vmatpush1.msra.mxu0 %v1756
        %1803 = vmatprep.subr.mxu0 0.0
        %1804 = vmatpush1.msra.mxu0 %v1755
        %1805 = vmatprep.subr.mxu0 0.0
        %1806 = vmatpush2.msra.mxu0 0.0
        %1807 = vmatprep.subr.mxu0 0.0
        %1808 = vmatpush2.msra.mxu0 0.0
        %1809 = vmatprep.subr.mxu0 0.0
        %1810 = vmatpush2.msra.mxu0 0.0
        %1811 = vmatprep.subr.mxu0 0.0
        %1812 = vmatpush2.msra.mxu0 0.0
        %1813 = vmatprep.subr.mxu0 0.0
        %1814 = vmatpush2.msra.mxu0 0.0
        %1815 = vmatprep.subr.mxu0 0.0
        %1816 = vmatpush2.msra.mxu0 0.0
        %1817 = vmatprep.subr.mxu0 0.0
        %1818 = vmatpush2.msra.mxu0 0.0
        %1819 = vmatprep.subr.mxu0 0.0
        %1820 = vmatpush2.msra.mxu0 0.0
        %1821 = vmatprep.subr.mxu0 0.0
        %1822 = vmatpush2.msra.mxu0 0.0
        %1823 = vmatprep.subr.mxu0 0.0
        %1824 = vmatpush2.msra.mxu0 0.0
        %1825 = vmatprep.subr.mxu0 0.0
        %1826 = vmatpush2.msra.mxu0 0.0
        %1827 = vmatprep.subr.mxu0 0.0
        %1828 = vmatpush2.msra.mxu0 0.0
        %1829 = vmatprep.subr.mxu0 0.0
        %1830 = vmatpush2.msra.mxu0 0.0
        %1831 = vmatprep.subr.mxu0 0.0
        %1832 = vmatpush2.msra.mxu0 0.0
        %1833 = vmatprep.subr.mxu0 0.0
        %1834 = vmatpush2.msra.mxu0 0.0
        %1835 = vmatprep.subr.mxu0 0.0
        %1836 = vmatpush2.msra.mxu0 0.0
        %1837 = vmatprep.mubr.f32.mxu0 0.0
        %1838 = vmatmul.mubr.f32.gmra.mxu0 %v1768
        %v1839 = vpop.f32.mrf.mxu0
        %v1840 = vadd.f32 %v1764, %v1839
        %v1841 = vpop.f32.mrf.mxu0
        %1842 = vmatprep.mubr.f32.mxu0 0.0
        %1843 = vmatmul.mubr.f32.gmra.mxu0 %v1771
        %v1844 = vpop.f32.mrf.mxu0
        %v1845 = vadd.f32 %v1764, %v1844
        %v1846 = vpop.f32.mrf.mxu0
        %1847 = vdwg.mxu0
        %v1848 = vld [vmem:[%s37] sm:$0xff]
        %v1849 = vld [vmem:[%s37 + $0x8] sm:$0xff]
        %v1850 = vld [vmem:[%s37 + $0x10] sm:$0xff]
        %v1851 = vld [vmem:[%s37 + $0x18] sm:$0x3f]
        %v1852 = vld [vmem:[%s41] sm:$0xff]
        %v1853 = vld [vmem:[%s41 + $0x8] sm:$0xff]
        %v1854 = vld [vmem:[%s41 + $0x10] sm:$0xff]
        %v1855 = vld [vmem:[%s41 + $0x18] sm:$0x3f]
        %v1857 = vsel %vm1481, %v1848, 0
        %v1860 = vsel %vm1481, %v1849, 0
        %v1863 = vsel %vm1481, %v1850, 0
        %v1866 = vsel %vm1481, %v1851, 0
        %1868 = vmatprep.subr.mxu0 0.0
        %1869 = vmatpush1.msra.mxu0 0.0
        %1870 = vmatprep.subr.mxu0 0.0
        %1871 = vmatpush1.msra.mxu0 0.0
        %1872 = vmatprep.subr.mxu0 0.0
        %1873 = vmatpush1.msra.mxu0 0.0
        %1874 = vmatprep.subr.mxu0 0.0
        %1875 = vmatpush1.msra.mxu0 0.0
        %1876 = vmatprep.subr.mxu0 0.0
        %1877 = vmatpush1.msra.mxu0 0.0
        %1878 = vmatprep.subr.mxu0 0.0
        %1879 = vmatpush1.msra.mxu0 0.0
        %1880 = vmatprep.subr.mxu0 0.0
        %1881 = vmatpush1.msra.mxu0 0.0
        %1882 = vmatprep.subr.mxu0 0.0
        %1883 = vmatpush1.msra.mxu0 0.0
        %1884 = vmatprep.subr.mxu0 0.0
        %1885 = vmatpush1.msra.mxu0 0.0
        %1886 = vmatprep.subr.mxu0 0.0
        %1887 = vmatpush1.msra.mxu0 0.0
        %1888 = vmatprep.subr.mxu0 0.0
        %1889 = vmatpush1.msra.mxu0 0.0
        %1890 = vmatprep.subr.mxu0 0.0
        %1891 = vmatpush1.msra.mxu0 0.0
        %1892 = vmatprep.subr.mxu0 0.0
        %1893 = vmatpush1.msra.mxu0 0.0
        %1894 = vmatprep.subr.mxu0 0.0
        %1895 = vmatpush1.msra.mxu0 0.0
        %1896 = vmatprep.subr.mxu0 0.0
        %1897 = vmatpush1.msra.mxu0 %v1754
        %1898 = vmatprep.subr.mxu0 0.0
        %1899 = vmatpush1.msra.mxu0 %v1753
        %1900 = vmatprep.subr.mxu0 0.0
        %1901 = vmatpush2.msra.mxu0 0.0
        %1902 = vmatprep.subr.mxu0 0.0
        %1903 = vmatpush2.msra.mxu0 0.0
        %1904 = vmatprep.subr.mxu0 0.0
        %1905 = vmatpush2.msra.mxu0 0.0
        %1906 = vmatprep.subr.mxu0 0.0
        %1907 = vmatpush2.msra.mxu0 0.0
        %1908 = vmatprep.subr.mxu0 0.0
        %1909 = vmatpush2.msra.mxu0 0.0
        %1910 = vmatprep.subr.mxu0 0.0
        %1911 = vmatpush2.msra.mxu0 0.0
        %1912 = vmatprep.subr.mxu0 0.0
        %1913 = vmatpush2.msra.mxu0 0.0
        %1914 = vmatprep.subr.mxu0 0.0
        %1915 = vmatpush2.msra.mxu0 0.0
        %1916 = vmatprep.subr.mxu0 0.0
        %1917 = vmatpush2.msra.mxu0 0.0
        %1918 = vmatprep.subr.mxu0 0.0
        %1919 = vmatpush2.msra.mxu0 0.0
        %1920 = vmatprep.subr.mxu0 0.0
        %1921 = vmatpush2.msra.mxu0 0.0
        %1922 = vmatprep.subr.mxu0 0.0
        %1923 = vmatpush2.msra.mxu0 0.0
        %1924 = vmatprep.subr.mxu0 0.0
        %1925 = vmatpush2.msra.mxu0 0.0
        %1926 = vmatprep.subr.mxu0 0.0
        %1927 = vmatpush2.msra.mxu0 0.0
        %1928 = vmatprep.subr.mxu0 0.0
        %1929 = vmatpush2.msra.mxu0 0.0
        %1930 = vmatprep.subr.mxu0 0.0
        %1931 = vmatpush2.msra.mxu0 0.0
        %1932 = vmatprep.mubr.f32.mxu0 0.0
        %1933 = vmatmul.mubr.f32.gmra.mxu0 %v1857
        %v1934 = vpop.f32.mrf.mxu0
        %v1935 = vadd.f32 %v1852, %v1934
        %v1936 = vpop.f32.mrf.mxu0
        %1937 = vmatprep.mubr.f32.mxu0 0.0
        %1938 = vmatmul.mubr.f32.gmra.mxu0 %v1860
        %v1939 = vpop.f32.mrf.mxu0
        %v1940 = vadd.f32 %v1853, %v1939
        %v1941 = vpop.f32.mrf.mxu0
        %1942 = vmatprep.mubr.f32.mxu0 0.0
        %1943 = vmatmul.mubr.f32.gmra.mxu0 %v1863
        %v1944 = vpop.f32.mrf.mxu0
        %v1945 = vadd.f32 %v1854, %v1944
        %v1946 = vpop.f32.mrf.mxu0
        %1947 = vmatprep.mubr.f32.mxu0 0.0
        %1948 = vmatmul.mubr.f32.gmra.mxu0 %v1866
        %v1949 = vpop.f32.mrf.mxu0
        %v1950 = vadd.f32 %v1855, %v1949
        %v1951 = vpop.f32.mrf.mxu0
        %1952 = vdwg.mxu0
        %v1953 = vld [vmem:[%s21] sm:$0xff]
        %v1954 = vld [vmem:[%s21 + $0x8] sm:$0xff]
        %v1955 = vld [vmem:[%s21 + $0x10] sm:$0xff]
        %v1956 = vld [vmem:[%s21 + $0x18] sm:$0xff]
        %v1957 = vld [vmem:[#allocation10] sm:$0x1]
        %v1958 = vld [vmem:[%s25] sm:$0xff]
        %v1960 = vsel %vm1481, %v1958, 0
        %1962 = vmatprep.subr.mxu0 0.0
        %1963 = vmatpush1.msra.mxu0 0.0
        %1964 = vmatprep.subr.mxu0 0.0
        %1965 = vmatpush1.msra.mxu0 0.0
        %1966 = vmatprep.subr.mxu0 0.0
        %1967 = vmatpush1.msra.mxu0 0.0
        %1968 = vmatprep.subr.mxu0 0.0
        %1969 = vmatpush1.msra.mxu0 0.0
        %1970 = vmatprep.subr.mxu0 0.0
        %1971 = vmatpush1.msra.mxu0 0.0
        %1972 = vmatprep.subr.mxu0 0.0
        %1973 = vmatpush1.msra.mxu0 0.0
        %1974 = vmatprep.subr.mxu0 0.0
        %1975 = vmatpush1.msra.mxu0 0.0
        %1976 = vmatprep.subr.mxu0 0.0
        %1977 = vmatpush1.msra.mxu0 0.0
        %1978 = vmatprep.subr.mxu0 0.0
        %1979 = vmatpush1.msra.mxu0 0.0
        %1980 = vmatprep.subr.mxu0 0.0
        %1981 = vmatpush1.msra.mxu0 0.0
        %1982 = vmatprep.subr.mxu0 0.0
        %1983 = vmatpush1.msra.mxu0 0.0
        %1984 = vmatprep.subr.mxu0 0.0
        %1985 = vmatpush1.msra.mxu0 0.0
        %1986 = vmatprep.subr.mxu0 0.0
        %1987 = vmatpush1.msra.mxu0 0.0
        %1988 = vmatprep.subr.mxu0 0.0
        %1989 = vmatpush1.msra.mxu0 0.0
        %1990 = vmatprep.subr.mxu0 0.0
        %1991 = vmatpush1.msra.mxu0 %v1845
        %1992 = vmatprep.subr.mxu0 0.0
        %1993 = vmatpush1.msra.mxu0 %v1840
        %1994 = vmatprep.subr.mxu0 0.0
        %1995 = vmatpush2.msra.mxu0 0.0
        %1996 = vmatprep.subr.mxu0 0.0
        %1997 = vmatpush2.msra.mxu0 0.0
        %1998 = vmatprep.subr.mxu0 0.0
        %1999 = vmatpush2.msra.mxu0 0.0
        %2000 = vmatprep.subr.mxu0 0.0
        %2001 = vmatpush2.msra.mxu0 0.0
        %2002 = vmatprep.subr.mxu0 0.0
        %2003 = vmatpush2.msra.mxu0 0.0
        %2004 = vmatprep.subr.mxu0 0.0
        %2005 = vmatpush2.msra.mxu0 0.0
        %2006 = vmatprep.subr.mxu0 0.0
        %2007 = vmatpush2.msra.mxu0 0.0
        %2008 = vmatprep.subr.mxu0 0.0
        %2009 = vmatpush2.msra.mxu0 0.0
        %2010 = vmatprep.subr.mxu0 0.0
        %2011 = vmatpush2.msra.mxu0 0.0
        %2012 = vmatprep.subr.mxu0 0.0
        %2013 = vmatpush2.msra.mxu0 0.0
        %2014 = vmatprep.subr.mxu0 0.0
        %2015 = vmatpush2.msra.mxu0 0.0
        %2016 = vmatprep.subr.mxu0 0.0
        %2017 = vmatpush2.msra.mxu0 0.0
        %2018 = vmatprep.subr.mxu0 0.0
        %2019 = vmatpush2.msra.mxu0 0.0
        %2020 = vmatprep.subr.mxu0 0.0
        %2021 = vmatpush2.msra.mxu0 0.0
        %2022 = vmatprep.subr.mxu0 0.0
        %2023 = vmatpush2.msra.mxu0 0.0
        %2024 = vmatprep.subr.mxu0 0.0
        %2025 = vmatpush2.msra.mxu0 0.0
        %2026 = vmatprep.mubr.f32.mxu0 0.0
        %2027 = vmatmul.mubr.f32.gmra.mxu0 %v1960
        %v2028 = vpop.f32.mrf.mxu0
        %v2029 = vadd.f32 0.0, %v2028
        %v2030 = vpop.f32.mrf.mxu0
        %2031 = vdwg.mxu0
        %v2033 = vsel %vm1481, %v2029, 0
        %2035 = vmatprep.subr.mxu0 0.0
        %2036 = vmatpush1.msra.mxu0 0.0
        %2037 = vmatprep.subr.mxu0 0.0
        %2038 = vmatpush1.msra.mxu0 0.0
        %2039 = vmatprep.subr.mxu0 0.0
        %2040 = vmatpush1.msra.mxu0 0.0
        %2041 = vmatprep.subr.mxu0 0.0
        %2042 = vmatpush1.msra.mxu0 0.0
        %2043 = vmatprep.subr.mxu0 0.0
        %2044 = vmatpush1.msra.mxu0 0.0
        %2045 = vmatprep.subr.mxu0 0.0
        %2046 = vmatpush1.msra.mxu0 0.0
        %2047 = vmatprep.subr.mxu0 0.0
        %2048 = vmatpush1.msra.mxu0 0.0
        %2049 = vmatprep.subr.mxu0 0.0
        %2050 = vmatpush1.msra.mxu0 0.0
        %2051 = vmatprep.subr.mxu0 0.0
        %2052 = vmatpush1.msra.mxu0 0.0
        %2053 = vmatprep.subr.mxu0 0.0
        %2054 = vmatpush1.msra.mxu0 0.0
        %2055 = vmatprep.subr.mxu0 0.0
        %2056 = vmatpush1.msra.mxu0 0.0
        %2057 = vmatprep.subr.mxu0 0.0
        %2058 = vmatpush1.msra.mxu0 0.0
        %2059 = vmatprep.subr.mxu0 0.0
        %2060 = vmatpush1.msra.mxu0 0.0
        %2061 = vmatprep.subr.mxu0 0.0
        %2062 = vmatpush1.msra.mxu0 0.0
        %2063 = vmatprep.subr.mxu0 0.0
        %2064 = vmatpush1.msra.mxu0 %v1954
        %2065 = vmatprep.subr.mxu0 0.0
        %2066 = vmatpush1.msra.mxu0 %v1953
        %2067 = vmatprep.subr.mxu0 0.0
        %2068 = vmatpush2.msra.mxu0 0.0
        %2069 = vmatprep.subr.mxu0 0.0
        %2070 = vmatpush2.msra.mxu0 0.0
        %2071 = vmatprep.subr.mxu0 0.0
        %2072 = vmatpush2.msra.mxu0 0.0
        %2073 = vmatprep.subr.mxu0 0.0
        %2074 = vmatpush2.msra.mxu0 0.0
        %2075 = vmatprep.subr.mxu0 0.0
        %2076 = vmatpush2.msra.mxu0 0.0
        %2077 = vmatprep.subr.mxu0 0.0
        %2078 = vmatpush2.msra.mxu0 0.0
        %2079 = vmatprep.subr.mxu0 0.0
        %2080 = vmatpush2.msra.mxu0 0.0
        %2081 = vmatprep.subr.mxu0 0.0
        %2082 = vmatpush2.msra.mxu0 0.0
        %2083 = vmatprep.subr.mxu0 0.0
        %2084 = vmatpush2.msra.mxu0 0.0
        %2085 = vmatprep.subr.mxu0 0.0
        %2086 = vmatpush2.msra.mxu0 0.0
        %2087 = vmatprep.subr.mxu0 0.0
        %2088 = vmatpush2.msra.mxu0 0.0
        %2089 = vmatprep.subr.mxu0 0.0
        %2090 = vmatpush2.msra.mxu0 0.0
        %2091 = vmatprep.subr.mxu0 0.0
        %2092 = vmatpush2.msra.mxu0 0.0
        %2093 = vmatprep.subr.mxu0 0.0
        %2094 = vmatpush2.msra.mxu0 0.0
        %2095 = vmatprep.subr.mxu0 0.0
        %2096 = vmatpush2.msra.mxu0 0.0
        %2097 = vmatprep.subr.mxu0 0.0
        %2098 = vmatpush2.msra.mxu0 0.0
        %2099 = vmatprep.mubr.f32.mxu0 0.0
        %2100 = vmatmul.mubr.f32.gmra.mxu0 %v2033
        %v2101 = vpop.f32.mrf.mxu0
        %v2102 = vadd.f32 0.0, %v2101
        %v2103 = vpop.f32.mrf.mxu0
        %2104 = vdwg.mxu0
        %v2106 = vlaneseq
        %v2107 = vshrl.u32 %v2106, 7
        %v2108 = vsub.s32 0, %v2107
        %v2109 = vrot.slane %v1957, %v2108
        %v2111 = vadd.f32 %v2109, %v2102
        %s2112 = scalar_lea.vmem %s25, 8
        %v2113 = vld [vmem:[%s2112] sm:$0xff]
        %v2115 = vsel %vm1481, %v2113, 0
        %2117 = vmatprep.subr.mxu0 0.0
        %2118 = vmatpush1.msra.mxu0 0.0
        %2119 = vmatprep.subr.mxu0 0.0
        %2120 = vmatpush1.msra.mxu0 0.0
        %2121 = vmatprep.subr.mxu0 0.0
        %2122 = vmatpush1.msra.mxu0 0.0
        %2123 = vmatprep.subr.mxu0 0.0
        %2124 = vmatpush1.msra.mxu0 0.0
        %2125 = vmatprep.subr.mxu0 0.0
        %2126 = vmatpush1.msra.mxu0 0.0
        %2127 = vmatprep.subr.mxu0 0.0
        %2128 = vmatpush1.msra.mxu0 0.0
        %2129 = vmatprep.subr.mxu0 0.0
        %2130 = vmatpush1.msra.mxu0 0.0
        %2131 = vmatprep.subr.mxu0 0.0
        %2132 = vmatpush1.msra.mxu0 0.0
        %2133 = vmatprep.subr.mxu0 0.0
        %2134 = vmatpush1.msra.mxu0 0.0
        %2135 = vmatprep.subr.mxu0 0.0
        %2136 = vmatpush1.msra.mxu0 0.0
        %2137 = vmatprep.subr.mxu0 0.0
        %2138 = vmatpush1.msra.mxu0 0.0
        %2139 = vmatprep.subr.mxu0 0.0
        %2140 = vmatpush1.msra.mxu0 0.0
        %2141 = vmatprep.subr.mxu0 0.0
        %2142 = vmatpush1.msra.mxu0 0.0
        %2143 = vmatprep.subr.mxu0 0.0
        %2144 = vmatpush1.msra.mxu0 0.0
        %2145 = vmatprep.subr.mxu0 0.0
        %2146 = vmatpush1.msra.mxu0 %v1845
        %2147 = vmatprep.subr.mxu0 0.0
        %2148 = vmatpush1.msra.mxu0 %v1840
        %2149 = vmatprep.subr.mxu0 0.0
        %2150 = vmatpush2.msra.mxu0 0.0
        %2151 = vmatprep.subr.mxu0 0.0
        %2152 = vmatpush2.msra.mxu0 0.0
        %2153 = vmatprep.subr.mxu0 0.0
        %2154 = vmatpush2.msra.mxu0 0.0
        %2155 = vmatprep.subr.mxu0 0.0
        %2156 = vmatpush2.msra.mxu0 0.0
        %2157 = vmatprep.subr.mxu0 0.0
        %2158 = vmatpush2.msra.mxu0 0.0
        %2159 = vmatprep.subr.mxu0 0.0
        %2160 = vmatpush2.msra.mxu0 0.0
        %2161 = vmatprep.subr.mxu0 0.0
        %2162 = vmatpush2.msra.mxu0 0.0
        %2163 = vmatprep.subr.mxu0 0.0
        %2164 = vmatpush2.msra.mxu0 0.0
        %2165 = vmatprep.subr.mxu0 0.0
        %2166 = vmatpush2.msra.mxu0 0.0
        %2167 = vmatprep.subr.mxu0 0.0
        %2168 = vmatpush2.msra.mxu0 0.0
        %2169 = vmatprep.subr.mxu0 0.0
        %2170 = vmatpush2.msra.mxu0 0.0
        %2171 = vmatprep.subr.mxu0 0.0
        %2172 = vmatpush2.msra.mxu0 0.0
        %2173 = vmatprep.subr.mxu0 0.0
        %2174 = vmatpush2.msra.mxu0 0.0
        %2175 = vmatprep.subr.mxu0 0.0
        %2176 = vmatpush2.msra.mxu0 0.0
        %2177 = vmatprep.subr.mxu0 0.0
        %2178 = vmatpush2.msra.mxu0 0.0
        %2179 = vmatprep.subr.mxu0 0.0
        %2180 = vmatpush2.msra.mxu0 0.0
        %2181 = vmatprep.mubr.f32.mxu0 0.0
        %2182 = vmatmul.mubr.f32.gmra.mxu0 %v2115
        %v2183 = vpop.f32.mrf.mxu0
        %v2184 = vadd.f32 0.0, %v2183
        %v2185 = vpop.f32.mrf.mxu0
        %2186 = vdwg.mxu0
        %v2188 = vsel %vm1481, %v2184, 0
        %2190 = vmatprep.subr.mxu0 0.0
        %2191 = vmatpush1.msra.mxu0 0.0
        %2192 = vmatprep.subr.mxu0 0.0
        %2193 = vmatpush1.msra.mxu0 0.0
        %2194 = vmatprep.subr.mxu0 0.0
        %2195 = vmatpush1.msra.mxu0 0.0
        %2196 = vmatprep.subr.mxu0 0.0
        %2197 = vmatpush1.msra.mxu0 0.0
        %2198 = vmatprep.subr.mxu0 0.0
        %2199 = vmatpush1.msra.mxu0 0.0
        %2200 = vmatprep.subr.mxu0 0.0
        %2201 = vmatpush1.msra.mxu0 0.0
        %2202 = vmatprep.subr.mxu0 0.0
        %2203 = vmatpush1.msra.mxu0 0.0
        %2204 = vmatprep.subr.mxu0 0.0
        %2205 = vmatpush1.msra.mxu0 0.0
        %2206 = vmatprep.subr.mxu0 0.0
        %2207 = vmatpush1.msra.mxu0 0.0
        %2208 = vmatprep.subr.mxu0 0.0
        %2209 = vmatpush1.msra.mxu0 0.0
        %2210 = vmatprep.subr.mxu0 0.0
        %2211 = vmatpush1.msra.mxu0 0.0
        %2212 = vmatprep.subr.mxu0 0.0
        %2213 = vmatpush1.msra.mxu0 0.0
        %2214 = vmatprep.subr.mxu0 0.0
        %2215 = vmatpush1.msra.mxu0 0.0
        %2216 = vmatprep.subr.mxu0 0.0
        %2217 = vmatpush1.msra.mxu0 0.0
        %2218 = vmatprep.subr.mxu0 0.0
        %2219 = vmatpush1.msra.mxu0 %v1956
        %2220 = vmatprep.subr.mxu0 0.0
        %2221 = vmatpush1.msra.mxu0 %v1955
        %2222 = vmatprep.subr.mxu0 0.0
        %2223 = vmatpush2.msra.mxu0 0.0
        %2224 = vmatprep.subr.mxu0 0.0
        %2225 = vmatpush2.msra.mxu0 0.0
        %2226 = vmatprep.subr.mxu0 0.0
        %2227 = vmatpush2.msra.mxu0 0.0
        %2228 = vmatprep.subr.mxu0 0.0
        %2229 = vmatpush2.msra.mxu0 0.0
        %2230 = vmatprep.subr.mxu0 0.0
        %2231 = vmatpush2.msra.mxu0 0.0
        %2232 = vmatprep.subr.mxu0 0.0
        %2233 = vmatpush2.msra.mxu0 0.0
        %2234 = vmatprep.subr.mxu0 0.0
        %2235 = vmatpush2.msra.mxu0 0.0
        %2236 = vmatprep.subr.mxu0 0.0
        %2237 = vmatpush2.msra.mxu0 0.0
        %2238 = vmatprep.subr.mxu0 0.0
        %2239 = vmatpush2.msra.mxu0 0.0
        %2240 = vmatprep.subr.mxu0 0.0
        %2241 = vmatpush2.msra.mxu0 0.0
        %2242 = vmatprep.subr.mxu0 0.0
        %2243 = vmatpush2.msra.mxu0 0.0
        %2244 = vmatprep.subr.mxu0 0.0
        %2245 = vmatpush2.msra.mxu0 0.0
        %2246 = vmatprep.subr.mxu0 0.0
        %2247 = vmatpush2.msra.mxu0 0.0
        %2248 = vmatprep.subr.mxu0 0.0
        %2249 = vmatpush2.msra.mxu0 0.0
        %2250 = vmatprep.subr.mxu0 0.0
        %2251 = vmatpush2.msra.mxu0 0.0
        %2252 = vmatprep.subr.mxu0 0.0
        %2253 = vmatpush2.msra.mxu0 0.0
        %2254 = vmatprep.mubr.f32.mxu0 0.0
        %2255 = vmatmul.mubr.f32.gmra.mxu0 %v2188
        %v2256 = vpop.f32.mrf.mxu0
        %v2257 = vadd.f32 0.0, %v2256
        %v2258 = vpop.f32.mrf.mxu0
        %2259 = vdwg.mxu0
        %v2260 = vadd.f32 %v2111, %v2257
        %vm2261 = vcmp.gt.f32.partialorder %v2260, 0.0
        %v2262 = vmin.f32 %v2260, 0.0
        %v2263 = vmul.f32 %v2262, 1.442695
        %v2264 = vpow.pop %v2263
        %v2265 = vsub.f32 %v2264, 1.0
        %v2266 = vsel %vm2261, %v2260, %v2265
        %v2267 = vld [vmem:[%s31] sm:$0xff]
        %v2268 = vld [vmem:[%s31 + $0x8] sm:$0xff]
        %v2269 = vld [vmem:[%s31 + $0x10] sm:$0xff]
        %v2270 = vld [vmem:[%s31 + $0x18] sm:$0x3f]
        %v2271 = vld [vmem:[%s39] sm:$0xff]
        %v2272 = vld [vmem:[%s39 + $0x8] sm:$0xff]
        %v2274 = vsel %vm1481, %v2266, 0
        %2276 = vmatprep.subr.mxu0 0.0
        %2277 = vmatpush1.msra.mxu0 0.0
        %2278 = vmatprep.subr.mxu0 0.0
        %2279 = vmatpush1.msra.mxu0 0.0
        %2280 = vmatprep.subr.mxu0 0.0
        %2281 = vmatpush1.msra.mxu0 0.0
        %2282 = vmatprep.subr.mxu0 0.0
        %2283 = vmatpush1.msra.mxu0 0.0
        %2284 = vmatprep.subr.mxu0 0.0
        %2285 = vmatpush1.msra.mxu0 0.0
        %2286 = vmatprep.subr.mxu0 0.0
        %2287 = vmatpush1.msra.mxu0 0.0
        %2288 = vmatprep.subr.mxu0 0.0
        %2289 = vmatpush1.msra.mxu0 0.0
        %2290 = vmatprep.subr.mxu0 0.0
        %2291 = vmatpush1.msra.mxu0 0.0
        %2292 = vmatprep.subr.mxu0 0.0
        %2293 = vmatpush1.msra.mxu0 0.0
        %2294 = vmatprep.subr.mxu0 0.0
        %2295 = vmatpush1.msra.mxu0 0.0
        %2296 = vmatprep.subr.mxu0 0.0
        %2297 = vmatpush1.msra.mxu0 0.0
        %2298 = vmatprep.subr.mxu0 0.0
        %2299 = vmatpush1.msra.mxu0 0.0
        %2300 = vmatprep.subr.mxu0 0.0
        %2301 = vmatpush1.msra.mxu0 0.0
        %2302 = vmatprep.subr.mxu0 0.0
        %2303 = vmatpush1.msra.mxu0 0.0
        %2304 = vmatprep.subr.mxu0 0.0
        %2305 = vmatpush1.msra.mxu0 %v2272
        %2306 = vmatprep.subr.mxu0 0.0
        %2307 = vmatpush1.msra.mxu0 %v2271
        %2308 = vmatprep.subr.mxu0 0.0
        %2309 = vmatpush2.msra.mxu0 0.0
        %2310 = vmatprep.subr.mxu0 0.0
        %2311 = vmatpush2.msra.mxu0 0.0
        %2312 = vmatprep.subr.mxu0 0.0
        %2313 = vmatpush2.msra.mxu0 0.0
        %2314 = vmatprep.subr.mxu0 0.0
        %2315 = vmatpush2.msra.mxu0 0.0
        %2316 = vmatprep.subr.mxu0 0.0
        %2317 = vmatpush2.msra.mxu0 0.0
        %2318 = vmatprep.subr.mxu0 0.0
        %2319 = vmatpush2.msra.mxu0 0.0
        %2320 = vmatprep.subr.mxu0 0.0
        %2321 = vmatpush2.msra.mxu0 0.0
        %2322 = vmatprep.subr.mxu0 0.0
        %2323 = vmatpush2.msra.mxu0 0.0
        %2324 = vmatprep.subr.mxu0 0.0
        %2325 = vmatpush2.msra.mxu0 0.0
        %2326 = vmatprep.subr.mxu0 0.0
        %2327 = vmatpush2.msra.mxu0 0.0
        %2328 = vmatprep.subr.mxu0 0.0
        %2329 = vmatpush2.msra.mxu0 0.0
        %2330 = vmatprep.subr.mxu0 0.0
        %2331 = vmatpush2.msra.mxu0 0.0
        %2332 = vmatprep.subr.mxu0 0.0
        %2333 = vmatpush2.msra.mxu0 0.0
        %2334 = vmatprep.subr.mxu0 0.0
        %2335 = vmatpush2.msra.mxu0 0.0
        %2336 = vmatprep.subr.mxu0 0.0
        %2337 = vmatpush2.msra.mxu0 0.0
        %2338 = vmatprep.subr.mxu0 0.0
        %2339 = vmatpush2.msra.mxu0 0.0
        %2340 = vmatprep.mubr.f32.mxu0 0.0
        %2341 = vmatmul.mubr.f32.gmra.mxu0 %v2274
        %v2342 = vpop.f32.mrf.mxu0
        %v2343 = vadd.f32 0.0, %v2342
        %v2344 = vpop.f32.mrf.mxu0
        %2345 = vdwg.mxu0
        %vm2346 = vcmask 64512
        %v2348 = vsel %vm2346, %v2267, 0
        %v2351 = vsel %vm2346, %v2268, 0
        %v2354 = vsel %vm2346, %v2269, 0
        %v2357 = vsel %vm2346, %v2270, 0
        %2359 = vmatprep.subr.mxu0 0.0
        %2360 = vmatpush1.msra.mxu0 0.0
        %2361 = vmatprep.subr.mxu0 0.0
        %2362 = vmatpush1.msra.mxu0 0.0
        %2363 = vmatprep.subr.mxu0 0.0
        %2364 = vmatpush1.msra.mxu0 0.0
        %2365 = vmatprep.subr.mxu0 0.0
        %2366 = vmatpush1.msra.mxu0 0.0
        %2367 = vmatprep.subr.mxu0 0.0
        %2368 = vmatpush1.msra.mxu0 0.0
        %2369 = vmatprep.subr.mxu0 0.0
        %2370 = vmatpush1.msra.mxu0 0.0
        %2371 = vmatprep.subr.mxu0 0.0
        %2372 = vmatpush1.msra.mxu0 0.0
        %2373 = vmatprep.subr.mxu0 0.0
        %2374 = vmatpush1.msra.mxu0 0.0
        %2375 = vmatprep.subr.mxu0 0.0
        %2376 = vmatpush1.msra.mxu0 0.0
        %2377 = vmatprep.subr.mxu0 0.0
        %2378 = vmatpush1.msra.mxu0 0.0
        %2379 = vmatprep.subr.mxu0 0.0
        %2380 = vmatpush1.msra.mxu0 0.0
        %2381 = vmatprep.subr.mxu0 0.0
        %2382 = vmatpush1.msra.mxu0 0.0
        %2383 = vmatprep.subr.mxu0 0.0
        %2384 = vmatpush1.msra.mxu0 0.0
        %2385 = vmatprep.subr.mxu0 0.0
        %2386 = vmatpush1.msra.mxu0 0.0
        %2387 = vmatprep.subr.mxu0 0.0
        %2388 = vmatpush1.msra.mxu0 0.0
        %2389 = vmatprep.subr.mxu0 0.0
        %2390 = vmatpush1.msra.mxu0 %v2343
        %2391 = vmatprep.subr.mxu0 0.0
        %2392 = vmatpush2.msra.mxu0 0.0
        %2393 = vmatprep.subr.mxu0 0.0
        %2394 = vmatpush2.msra.mxu0 0.0
        %2395 = vmatprep.subr.mxu0 0.0
        %2396 = vmatpush2.msra.mxu0 0.0
        %2397 = vmatprep.subr.mxu0 0.0
        %2398 = vmatpush2.msra.mxu0 0.0
        %2399 = vmatprep.subr.mxu0 0.0
        %2400 = vmatpush2.msra.mxu0 0.0
        %2401 = vmatprep.subr.mxu0 0.0
        %2402 = vmatpush2.msra.mxu0 0.0
        %2403 = vmatprep.subr.mxu0 0.0
        %2404 = vmatpush2.msra.mxu0 0.0
        %2405 = vmatprep.subr.mxu0 0.0
        %2406 = vmatpush2.msra.mxu0 0.0
        %2407 = vmatprep.subr.mxu0 0.0
        %2408 = vmatpush2.msra.mxu0 0.0
        %2409 = vmatprep.subr.mxu0 0.0
        %2410 = vmatpush2.msra.mxu0 0.0
        %2411 = vmatprep.subr.mxu0 0.0
        %2412 = vmatpush2.msra.mxu0 0.0
        %2413 = vmatprep.subr.mxu0 0.0
        %2414 = vmatpush2.msra.mxu0 0.0
        %2415 = vmatprep.subr.mxu0 0.0
        %2416 = vmatpush2.msra.mxu0 0.0
        %2417 = vmatprep.subr.mxu0 0.0
        %2418 = vmatpush2.msra.mxu0 0.0
        %2419 = vmatprep.subr.mxu0 0.0
        %2420 = vmatpush2.msra.mxu0 0.0
        %2421 = vmatprep.subr.mxu0 0.0
        %2422 = vmatpush2.msra.mxu0 0.0
        %2423 = vmatprep.mubr.f32.mxu0 0.0
        %2424 = vmatmul.mubr.f32.gmra.mxu0 %v2348
        %v2425 = vpop.f32.mrf.mxu0
        %v2426 = vadd.f32 0.0, %v2425
        %v2427 = vpop.f32.mrf.mxu0
        %2428 = vmatprep.mubr.f32.mxu0 0.0
        %2429 = vmatmul.mubr.f32.gmra.mxu0 %v2351
        %v2430 = vpop.f32.mrf.mxu0
        %v2431 = vadd.f32 0.0, %v2430
        %v2432 = vpop.f32.mrf.mxu0
        %2433 = vmatprep.mubr.f32.mxu0 0.0
        %2434 = vmatmul.mubr.f32.gmra.mxu0 %v2354
        %v2435 = vpop.f32.mrf.mxu0
        %v2436 = vadd.f32 0.0, %v2435
        %v2437 = vpop.f32.mrf.mxu0
        %2438 = vmatprep.mubr.f32.mxu0 0.0
        %2439 = vmatmul.mubr.f32.gmra.mxu0 %v2357
        %v2440 = vpop.f32.mrf.mxu0
        %v2441 = vadd.f32 0.0, %v2440
        %v2442 = vpop.f32.mrf.mxu0
        %2443 = vdwg.mxu0
        %v2444 = vadd.f32 %v1935, %v2426
        %v2445 = vadd.f32 %v1940, %v2431
        %v2446 = vadd.f32 %v1945, %v2436
        %v2447 = vadd.f32 %v1950, %v2441
        %s2448 = scalar_lea.vmem %s21, 32
        %v2449 = vld [vmem:[%s2448] sm:$0xff]
        %v2450 = vld [vmem:[%s2448 + $0x8] sm:$0xff]
        %v2451 = vld [vmem:[%s2448 + $0x10] sm:$0xff]
        %v2452 = vld [vmem:[%s2448 + $0x18] sm:$0xff]
        %s2453 = scalar_lea.vmem [#allocation10], 1
        %v2454 = vld [vmem:[%s2453] sm:$0x1]
        %v2455 = vld [vmem:[%s27] sm:$0xf]
        %v2457 = vsel %vm2346, %v2455, 0
        %2459 = vmatprep.subr.mxu0 0.0
        %2460 = vmatpush1.msra.mxu0 0.0
        %2461 = vmatprep.subr.mxu0 0.0
        %2462 = vmatpush1.msra.mxu0 0.0
        %2463 = vmatprep.subr.mxu0 0.0
        %2464 = vmatpush1.msra.mxu0 0.0
        %2465 = vmatprep.subr.mxu0 0.0
        %2466 = vmatpush1.msra.mxu0 0.0
        %2467 = vmatprep.subr.mxu0 0.0
        %2468 = vmatpush1.msra.mxu0 0.0
        %2469 = vmatprep.subr.mxu0 0.0
        %2470 = vmatpush1.msra.mxu0 0.0
        %2471 = vmatprep.subr.mxu0 0.0
        %2472 = vmatpush1.msra.mxu0 0.0
        %2473 = vmatprep.subr.mxu0 0.0
        %2474 = vmatpush1.msra.mxu0 0.0
        %2475 = vmatprep.subr.mxu0 0.0
        %2476 = vmatpush1.msra.mxu0 0.0
        %2477 = vmatprep.subr.mxu0 0.0
        %2478 = vmatpush1.msra.mxu0 0.0
        %2479 = vmatprep.subr.mxu0 0.0
        %2480 = vmatpush1.msra.mxu0 0.0
        %2481 = vmatprep.subr.mxu0 0.0
        %2482 = vmatpush1.msra.mxu0 0.0
        %2483 = vmatprep.subr.mxu0 0.0
        %2484 = vmatpush1.msra.mxu0 0.0
        %2485 = vmatprep.subr.mxu0 0.0
        %2486 = vmatpush1.msra.mxu0 0.0
        %2487 = vmatprep.subr.mxu0 0.0
        %2488 = vmatpush1.msra.mxu0 0.0
        %2489 = vmatprep.subr.mxu0 0.0
        %2490 = vmatpush1.msra.mxu0 %v2266
        %2491 = vmatprep.subr.mxu0 0.0
        %2492 = vmatpush2.msra.mxu0 0.0
        %2493 = vmatprep.subr.mxu0 0.0
        %2494 = vmatpush2.msra.mxu0 0.0
        %2495 = vmatprep.subr.mxu0 0.0
        %2496 = vmatpush2.msra.mxu0 0.0
        %2497 = vmatprep.subr.mxu0 0.0
        %2498 = vmatpush2.msra.mxu0 0.0
        %2499 = vmatprep.subr.mxu0 0.0
        %2500 = vmatpush2.msra.mxu0 0.0
        %2501 = vmatprep.subr.mxu0 0.0
        %2502 = vmatpush2.msra.mxu0 0.0
        %2503 = vmatprep.subr.mxu0 0.0
        %2504 = vmatpush2.msra.mxu0 0.0
        %2505 = vmatprep.subr.mxu0 0.0
        %2506 = vmatpush2.msra.mxu0 0.0
        %2507 = vmatprep.subr.mxu0 0.0
        %2508 = vmatpush2.msra.mxu0 0.0
        %2509 = vmatprep.subr.mxu0 0.0
        %2510 = vmatpush2.msra.mxu0 0.0
        %2511 = vmatprep.subr.mxu0 0.0
        %2512 = vmatpush2.msra.mxu0 0.0
        %2513 = vmatprep.subr.mxu0 0.0
        %2514 = vmatpush2.msra.mxu0 0.0
        %2515 = vmatprep.subr.mxu0 0.0
        %2516 = vmatpush2.msra.mxu0 0.0
        %2517 = vmatprep.subr.mxu0 0.0
        %2518 = vmatpush2.msra.mxu0 0.0
        %2519 = vmatprep.subr.mxu0 0.0
        %2520 = vmatpush2.msra.mxu0 0.0
        %2521 = vmatprep.subr.mxu0 0.0
        %2522 = vmatpush2.msra.mxu0 0.0
        %2523 = vmatprep.mubr.f32.mxu0 0.0
        %2524 = vmatmul.mubr.f32.gmra.mxu0 %v2457
        %v2525 = vpop.f32.mrf.mxu0
        %v2526 = vadd.f32 0.0, %v2525
        %v2527 = vpop.f32.mrf.mxu0
        %2528 = vdwg.mxu0
        %v2530 = vsel %vm1481, %v2526, 0
        %2532 = vmatprep.subr.mxu0 0.0
        %2533 = vmatpush1.msra.mxu0 0.0
        %2534 = vmatprep.subr.mxu0 0.0
        %2535 = vmatpush1.msra.mxu0 0.0
        %2536 = vmatprep.subr.mxu0 0.0
        %2537 = vmatpush1.msra.mxu0 0.0
        %2538 = vmatprep.subr.mxu0 0.0
        %2539 = vmatpush1.msra.mxu0 0.0
        %2540 = vmatprep.subr.mxu0 0.0
        %2541 = vmatpush1.msra.mxu0 0.0
        %2542 = vmatprep.subr.mxu0 0.0
        %2543 = vmatpush1.msra.mxu0 0.0
        %2544 = vmatprep.subr.mxu0 0.0
        %2545 = vmatpush1.msra.mxu0 0.0
        %2546 = vmatprep.subr.mxu0 0.0
        %2547 = vmatpush1.msra.mxu0 0.0
        %2548 = vmatprep.subr.mxu0 0.0
        %2549 = vmatpush1.msra.mxu0 0.0
        %2550 = vmatprep.subr.mxu0 0.0
        %2551 = vmatpush1.msra.mxu0 0.0
        %2552 = vmatprep.subr.mxu0 0.0
        %2553 = vmatpush1.msra.mxu0 0.0
        %2554 = vmatprep.subr.mxu0 0.0
        %2555 = vmatpush1.msra.mxu0 0.0
        %2556 = vmatprep.subr.mxu0 0.0
        %2557 = vmatpush1.msra.mxu0 0.0
        %2558 = vmatprep.subr.mxu0 0.0
        %2559 = vmatpush1.msra.mxu0 0.0
        %2560 = vmatprep.subr.mxu0 0.0
        %2561 = vmatpush1.msra.mxu0 %v2450
        %2562 = vmatprep.subr.mxu0 0.0
        %2563 = vmatpush1.msra.mxu0 %v2449
        %2564 = vmatprep.subr.mxu0 0.0
        %2565 = vmatpush2.msra.mxu0 0.0
        %2566 = vmatprep.subr.mxu0 0.0
        %2567 = vmatpush2.msra.mxu0 0.0
        %2568 = vmatprep.subr.mxu0 0.0
        %2569 = vmatpush2.msra.mxu0 0.0
        %2570 = vmatprep.subr.mxu0 0.0
        %2571 = vmatpush2.msra.mxu0 0.0
        %2572 = vmatprep.subr.mxu0 0.0
        %2573 = vmatpush2.msra.mxu0 0.0
        %2574 = vmatprep.subr.mxu0 0.0
        %2575 = vmatpush2.msra.mxu0 0.0
        %2576 = vmatprep.subr.mxu0 0.0
        %2577 = vmatpush2.msra.mxu0 0.0
        %2578 = vmatprep.subr.mxu0 0.0
        %2579 = vmatpush2.msra.mxu0 0.0
        %2580 = vmatprep.subr.mxu0 0.0
        %2581 = vmatpush2.msra.mxu0 0.0
        %2582 = vmatprep.subr.mxu0 0.0
        %2583 = vmatpush2.msra.mxu0 0.0
        %2584 = vmatprep.subr.mxu0 0.0
        %2585 = vmatpush2.msra.mxu0 0.0
        %2586 = vmatprep.subr.mxu0 0.0
        %2587 = vmatpush2.msra.mxu0 0.0
        %2588 = vmatprep.subr.mxu0 0.0
        %2589 = vmatpush2.msra.mxu0 0.0
        %2590 = vmatprep.subr.mxu0 0.0
        %2591 = vmatpush2.msra.mxu0 0.0
        %2592 = vmatprep.subr.mxu0 0.0
        %2593 = vmatpush2.msra.mxu0 0.0
        %2594 = vmatprep.subr.mxu0 0.0
        %2595 = vmatpush2.msra.mxu0 0.0
        %2596 = vmatprep.mubr.f32.mxu0 0.0
        %2597 = vmatmul.mubr.f32.gmra.mxu0 %v2530
        %v2598 = vpop.f32.mrf.mxu0
        %v2599 = vadd.f32 0.0, %v2598
        %v2600 = vpop.f32.mrf.mxu0
        %2601 = vdwg.mxu0
        %v2603 = vlaneseq
        %v2604 = vshrl.u32 %v2603, 7
        %v2605 = vsub.s32 0, %v2604
        %v2606 = vrot.slane %v2454, %v2605
        %v2608 = vadd.f32 %v2606, %v2599
        %s2609 = scalar_lea.vmem %s27, 4
        %v2610 = vld [vmem:[%s2609] sm:$0xf]
        %v2612 = vsel %vm2346, %v2610, 0
        %2614 = vmatprep.subr.mxu0 0.0
        %2615 = vmatpush1.msra.mxu0 0.0
        %2616 = vmatprep.subr.mxu0 0.0
        %2617 = vmatpush1.msra.mxu0 0.0
        %2618 = vmatprep.subr.mxu0 0.0
        %2619 = vmatpush1.msra.mxu0 0.0
        %2620 = vmatprep.subr.mxu0 0.0
        %2621 = vmatpush1.msra.mxu0 0.0
        %2622 = vmatprep.subr.mxu0 0.0
        %2623 = vmatpush1.msra.mxu0 0.0
        %2624 = vmatprep.subr.mxu0 0.0
        %2625 = vmatpush1.msra.mxu0 0.0
        %2626 = vmatprep.subr.mxu0 0.0
        %2627 = vmatpush1.msra.mxu0 0.0
        %2628 = vmatprep.subr.mxu0 0.0
        %2629 = vmatpush1.msra.mxu0 0.0
        %2630 = vmatprep.subr.mxu0 0.0
        %2631 = vmatpush1.msra.mxu0 0.0
        %2632 = vmatprep.subr.mxu0 0.0
        %2633 = vmatpush1.msra.mxu0 0.0
        %2634 = vmatprep.subr.mxu0 0.0
        %2635 = vmatpush1.msra.mxu0 0.0
        %2636 = vmatprep.subr.mxu0 0.0
        %2637 = vmatpush1.msra.mxu0 0.0
        %2638 = vmatprep.subr.mxu0 0.0
        %2639 = vmatpush1.msra.mxu0 0.0
        %2640 = vmatprep.subr.mxu0 0.0
        %2641 = vmatpush1.msra.mxu0 0.0
        %2642 = vmatprep.subr.mxu0 0.0
        %2643 = vmatpush1.msra.mxu0 0.0
        %2644 = vmatprep.subr.mxu0 0.0
        %2645 = vmatpush1.msra.mxu0 %v2266
        %2646 = vmatprep.subr.mxu0 0.0
        %2647 = vmatpush2.msra.mxu0 0.0
        %2648 = vmatprep.subr.mxu0 0.0
        %2649 = vmatpush2.msra.mxu0 0.0
        %2650 = vmatprep.subr.mxu0 0.0
        %2651 = vmatpush2.msra.mxu0 0.0
        %2652 = vmatprep.subr.mxu0 0.0
        %2653 = vmatpush2.msra.mxu0 0.0
        %2654 = vmatprep.subr.mxu0 0.0
        %2655 = vmatpush2.msra.mxu0 0.0
        %2656 = vmatprep.subr.mxu0 0.0
        %2657 = vmatpush2.msra.mxu0 0.0
        %2658 = vmatprep.subr.mxu0 0.0
        %2659 = vmatpush2.msra.mxu0 0.0
        %2660 = vmatprep.subr.mxu0 0.0
        %2661 = vmatpush2.msra.mxu0 0.0
        %2662 = vmatprep.subr.mxu0 0.0
        %2663 = vmatpush2.msra.mxu0 0.0
        %2664 = vmatprep.subr.mxu0 0.0
        %2665 = vmatpush2.msra.mxu0 0.0
        %2666 = vmatprep.subr.mxu0 0.0
        %2667 = vmatpush2.msra.mxu0 0.0
        %2668 = vmatprep.subr.mxu0 0.0
        %2669 = vmatpush2.msra.mxu0 0.0
        %2670 = vmatprep.subr.mxu0 0.0
        %2671 = vmatpush2.msra.mxu0 0.0
        %2672 = vmatprep.subr.mxu0 0.0
        %2673 = vmatpush2.msra.mxu0 0.0
        %2674 = vmatprep.subr.mxu0 0.0
        %2675 = vmatpush2.msra.mxu0 0.0
        %2676 = vmatprep.subr.mxu0 0.0
        %2677 = vmatpush2.msra.mxu0 0.0
        %2678 = vmatprep.mubr.f32.mxu0 0.0
        %2679 = vmatmul.mubr.f32.gmra.mxu0 %v2612
        %v2680 = vpop.f32.mrf.mxu0
        %v2681 = vadd.f32 0.0, %v2680
        %v2682 = vpop.f32.mrf.mxu0
        %2683 = vdwg.mxu0
        %v2685 = vsel %vm1481, %v2681, 0
        %2687 = vmatprep.subr.mxu0 0.0
        %2688 = vmatpush1.msra.mxu0 0.0
        %2689 = vmatprep.subr.mxu0 0.0
        %2690 = vmatpush1.msra.mxu0 0.0
        %2691 = vmatprep.subr.mxu0 0.0
        %2692 = vmatpush1.msra.mxu0 0.0
        %2693 = vmatprep.subr.mxu0 0.0
        %2694 = vmatpush1.msra.mxu0 0.0
        %2695 = vmatprep.subr.mxu0 0.0
        %2696 = vmatpush1.msra.mxu0 0.0
        %2697 = vmatprep.subr.mxu0 0.0
        %2698 = vmatpush1.msra.mxu0 0.0
        %2699 = vmatprep.subr.mxu0 0.0
        %2700 = vmatpush1.msra.mxu0 0.0
        %2701 = vmatprep.subr.mxu0 0.0
        %2702 = vmatpush1.msra.mxu0 0.0
        %2703 = vmatprep.subr.mxu0 0.0
        %2704 = vmatpush1.msra.mxu0 0.0
        %2705 = vmatprep.subr.mxu0 0.0
        %2706 = vmatpush1.msra.mxu0 0.0
        %2707 = vmatprep.subr.mxu0 0.0
        %2708 = vmatpush1.msra.mxu0 0.0
        %2709 = vmatprep.subr.mxu0 0.0
        %2710 = vmatpush1.msra.mxu0 0.0
        %2711 = vmatprep.subr.mxu0 0.0
        %2712 = vmatpush1.msra.mxu0 0.0
        %2713 = vmatprep.subr.mxu0 0.0
        %2714 = vmatpush1.msra.mxu0 0.0
        %2715 = vmatprep.subr.mxu0 0.0
        %2716 = vmatpush1.msra.mxu0 %v2452
        %2717 = vmatprep.subr.mxu0 0.0
        %2718 = vmatpush1.msra.mxu0 %v2451
        %2719 = vmatprep.subr.mxu0 0.0
        %2720 = vmatpush2.msra.mxu0 0.0
        %2721 = vmatprep.subr.mxu0 0.0
        %2722 = vmatpush2.msra.mxu0 0.0
        %2723 = vmatprep.subr.mxu0 0.0
        %2724 = vmatpush2.msra.mxu0 0.0
        %2725 = vmatprep.subr.mxu0 0.0
        %2726 = vmatpush2.msra.mxu0 0.0
        %2727 = vmatprep.subr.mxu0 0.0
        %2728 = vmatpush2.msra.mxu0 0.0
        %2729 = vmatprep.subr.mxu0 0.0
        %2730 = vmatpush2.msra.mxu0 0.0
        %2731 = vmatprep.subr.mxu0 0.0
        %2732 = vmatpush2.msra.mxu0 0.0
        %2733 = vmatprep.subr.mxu0 0.0
        %2734 = vmatpush2.msra.mxu0 0.0
        %2735 = vmatprep.subr.mxu0 0.0
        %2736 = vmatpush2.msra.mxu0 0.0
        %2737 = vmatprep.subr.mxu0 0.0
        %2738 = vmatpush2.msra.mxu0 0.0
        %2739 = vmatprep.subr.mxu0 0.0
        %2740 = vmatpush2.msra.mxu0 0.0
        %2741 = vmatprep.subr.mxu0 0.0
        %2742 = vmatpush2.msra.mxu0 0.0
        %2743 = vmatprep.subr.mxu0 0.0
        %2744 = vmatpush2.msra.mxu0 0.0
        %2745 = vmatprep.subr.mxu0 0.0
        %2746 = vmatpush2.msra.mxu0 0.0
        %2747 = vmatprep.subr.mxu0 0.0
        %2748 = vmatpush2.msra.mxu0 0.0
        %2749 = vmatprep.subr.mxu0 0.0
        %2750 = vmatpush2.msra.mxu0 0.0
        %2751 = vmatprep.mubr.f32.mxu0 0.0
        %2752 = vmatmul.mubr.f32.gmra.mxu0 %v2685
        %v2753 = vpop.f32.mrf.mxu0
        %v2754 = vadd.f32 0.0, %v2753
        %v2755 = vpop.f32.mrf.mxu0
        %2756 = vdwg.mxu0
        %v2757 = vadd.f32 %v2608, %v2754
        %vm2758 = vcmp.gt.f32.partialorder %v2757, 0.0
        %v2759 = vmin.f32 %v2757, 0.0
        %v2760 = vmul.f32 %v2759, 1.442695
        %v2761 = vpow.pop %v2760
        %v2762 = vsub.f32 %v2761, 1.0
        %v2763 = vsel %vm2758, %v2757, %v2762
        %v2764 = vld [vmem:[%s33] sm:$0xff]
        %v2765 = vld [vmem:[%s33 + $0x8] sm:$0xff]
        %v2766 = vld [vmem:[%s33 + $0x10] sm:$0xff]
        %v2767 = vld [vmem:[%s33 + $0x18] sm:$0x3f]
        %v2769 = vsel %vm1481, %v2763, 0
        %2771 = vmatprep.subr.mxu0 0.0
        %2772 = vmatpush1.msra.mxu0 0.0
        %2773 = vmatprep.subr.mxu0 0.0
        %2774 = vmatpush1.msra.mxu0 0.0
        %2775 = vmatprep.subr.mxu0 0.0
        %2776 = vmatpush1.msra.mxu0 0.0
        %2777 = vmatprep.subr.mxu0 0.0
        %2778 = vmatpush1.msra.mxu0 0.0
        %2779 = vmatprep.subr.mxu0 0.0
        %2780 = vmatpush1.msra.mxu0 0.0
        %2781 = vmatprep.subr.mxu0 0.0
        %2782 = vmatpush1.msra.mxu0 0.0
        %2783 = vmatprep.subr.mxu0 0.0
        %2784 = vmatpush1.msra.mxu0 0.0
        %2785 = vmatprep.subr.mxu0 0.0
        %2786 = vmatpush1.msra.mxu0 0.0
        %2787 = vmatprep.subr.mxu0 0.0
        %2788 = vmatpush1.msra.mxu0 0.0
        %2789 = vmatprep.subr.mxu0 0.0
        %2790 = vmatpush1.msra.mxu0 0.0
        %2791 = vmatprep.subr.mxu0 0.0
        %2792 = vmatpush1.msra.mxu0 0.0
        %2793 = vmatprep.subr.mxu0 0.0
        %2794 = vmatpush1.msra.mxu0 0.0
        %2795 = vmatprep.subr.mxu0 0.0
        %2796 = vmatpush1.msra.mxu0 0.0
        %2797 = vmatprep.subr.mxu0 0.0
        %2798 = vmatpush1.msra.mxu0 0.0
        %2799 = vmatprep.subr.mxu0 0.0
        %2800 = vmatpush1.msra.mxu0 %v2272
        %2801 = vmatprep.subr.mxu0 0.0
        %2802 = vmatpush1.msra.mxu0 %v2271
        %2803 = vmatprep.subr.mxu0 0.0
        %2804 = vmatpush2.msra.mxu0 0.0
        %2805 = vmatprep.subr.mxu0 0.0
        %2806 = vmatpush2.msra.mxu0 0.0
        %2807 = vmatprep.subr.mxu0 0.0
        %2808 = vmatpush2.msra.mxu0 0.0
        %2809 = vmatprep.subr.mxu0 0.0
        %2810 = vmatpush2.msra.mxu0 0.0
        %2811 = vmatprep.subr.mxu0 0.0
        %2812 = vmatpush2.msra.mxu0 0.0
        %2813 = vmatprep.subr.mxu0 0.0
        %2814 = vmatpush2.msra.mxu0 0.0
        %2815 = vmatprep.subr.mxu0 0.0
        %2816 = vmatpush2.msra.mxu0 0.0
        %2817 = vmatprep.subr.mxu0 0.0
        %2818 = vmatpush2.msra.mxu0 0.0
        %2819 = vmatprep.subr.mxu0 0.0
        %2820 = vmatpush2.msra.mxu0 0.0
        %2821 = vmatprep.subr.mxu0 0.0
        %2822 = vmatpush2.msra.mxu0 0.0
        %2823 = vmatprep.subr.mxu0 0.0
        %2824 = vmatpush2.msra.mxu0 0.0
        %2825 = vmatprep.subr.mxu0 0.0
        %2826 = vmatpush2.msra.mxu0 0.0
        %2827 = vmatprep.subr.mxu0 0.0
        %2828 = vmatpush2.msra.mxu0 0.0
        %2829 = vmatprep.subr.mxu0 0.0
        %2830 = vmatpush2.msra.mxu0 0.0
        %2831 = vmatprep.subr.mxu0 0.0
        %2832 = vmatpush2.msra.mxu0 0.0
        %2833 = vmatprep.subr.mxu0 0.0
        %2834 = vmatpush2.msra.mxu0 0.0
        %2835 = vmatprep.mubr.f32.mxu0 0.0
        %2836 = vmatmul.mubr.f32.gmra.mxu0 %v2769
        %v2837 = vpop.f32.mrf.mxu0
        %v2838 = vadd.f32 0.0, %v2837
        %v2839 = vpop.f32.mrf.mxu0
        %2840 = vdwg.mxu0
        %v2842 = vsel %vm1232, %v2764, 0
        %v2845 = vsel %vm1232, %v2765, 0
        %v2848 = vsel %vm1232, %v2766, 0
        %v2851 = vsel %vm1232, %v2767, 0
        %v2854 = vsel %vm1239, %v2838, 0
        %2856 = vmatprep.subr.mxu0 0.0
        %2857 = vmatpush1.msra.mxu0 0.0
        %2858 = vmatprep.subr.mxu0 0.0
        %2859 = vmatpush1.msra.mxu0 0.0
        %2860 = vmatprep.subr.mxu0 0.0
        %2861 = vmatpush1.msra.mxu0 0.0
        %2862 = vmatprep.subr.mxu0 0.0
        %2863 = vmatpush1.msra.mxu0 0.0
        %2864 = vmatprep.subr.mxu0 0.0
        %2865 = vmatpush1.msra.mxu0 0.0
        %2866 = vmatprep.subr.mxu0 0.0
        %2867 = vmatpush1.msra.mxu0 0.0
        %2868 = vmatprep.subr.mxu0 0.0
        %2869 = vmatpush1.msra.mxu0 0.0
        %2870 = vmatprep.subr.mxu0 0.0
        %2871 = vmatpush1.msra.mxu0 0.0
        %2872 = vmatprep.subr.mxu0 0.0
        %2873 = vmatpush1.msra.mxu0 0.0
        %2874 = vmatprep.subr.mxu0 0.0
        %2875 = vmatpush1.msra.mxu0 0.0
        %2876 = vmatprep.subr.mxu0 0.0
        %2877 = vmatpush1.msra.mxu0 0.0
        %2878 = vmatprep.subr.mxu0 0.0
        %2879 = vmatpush1.msra.mxu0 0.0
        %2880 = vmatprep.subr.mxu0 0.0
        %2881 = vmatpush1.msra.mxu0 0.0
        %2882 = vmatprep.subr.mxu0 0.0
        %2883 = vmatpush1.msra.mxu0 0.0
        %2884 = vmatprep.subr.mxu0 0.0
        %2885 = vmatpush1.msra.mxu0 0.0
        %2886 = vmatprep.subr.mxu0 0.0
        %2887 = vmatpush1.msra.mxu0 %v2854
        %2888 = vmatprep.subr.mxu0 0.0
        %2889 = vmatpush2.msra.mxu0 0.0
        %2890 = vmatprep.subr.mxu0 0.0
        %2891 = vmatpush2.msra.mxu0 0.0
        %2892 = vmatprep.subr.mxu0 0.0
        %2893 = vmatpush2.msra.mxu0 0.0
        %2894 = vmatprep.subr.mxu0 0.0
        %2895 = vmatpush2.msra.mxu0 0.0
        %2896 = vmatprep.subr.mxu0 0.0
        %2897 = vmatpush2.msra.mxu0 0.0
        %2898 = vmatprep.subr.mxu0 0.0
        %2899 = vmatpush2.msra.mxu0 0.0
        %2900 = vmatprep.subr.mxu0 0.0
        %2901 = vmatpush2.msra.mxu0 0.0
        %2902 = vmatprep.subr.mxu0 0.0
        %2903 = vmatpush2.msra.mxu0 0.0
        %2904 = vmatprep.subr.mxu0 0.0
        %2905 = vmatpush2.msra.mxu0 0.0
        %2906 = vmatprep.subr.mxu0 0.0
        %2907 = vmatpush2.msra.mxu0 0.0
        %2908 = vmatprep.subr.mxu0 0.0
        %2909 = vmatpush2.msra.mxu0 0.0
        %2910 = vmatprep.subr.mxu0 0.0
        %2911 = vmatpush2.msra.mxu0 0.0
        %2912 = vmatprep.subr.mxu0 0.0
        %2913 = vmatpush2.msra.mxu0 0.0
        %2914 = vmatprep.subr.mxu0 0.0
        %2915 = vmatpush2.msra.mxu0 0.0
        %2916 = vmatprep.subr.mxu0 0.0
        %2917 = vmatpush2.msra.mxu0 0.0
        %2918 = vmatprep.subr.mxu0 0.0
        %2919 = vmatpush2.msra.mxu0 0.0
        %2920 = vmatprep.mubr.f32.mxu0 0.0
        %2921 = vmatmul.mubr.f32.gmra.mxu0 %v2842
        %v2922 = vpop.f32.mrf.mxu0
        %v2923 = vadd.f32 0.0, %v2922
        %v2924 = vpop.f32.mrf.mxu0
        %2925 = vmatprep.mubr.f32.mxu0 0.0
        %2926 = vmatmul.mubr.f32.gmra.mxu0 %v2845
        %v2927 = vpop.f32.mrf.mxu0
        %v2928 = vadd.f32 0.0, %v2927
        %v2929 = vpop.f32.mrf.mxu0
        %2930 = vmatprep.mubr.f32.mxu0 0.0
        %2931 = vmatmul.mubr.f32.gmra.mxu0 %v2848
        %v2932 = vpop.f32.mrf.mxu0
        %v2933 = vadd.f32 0.0, %v2932
        %v2934 = vpop.f32.mrf.mxu0
        %2935 = vmatprep.mubr.f32.mxu0 0.0
        %2936 = vmatmul.mubr.f32.gmra.mxu0 %v2851
        %v2937 = vpop.f32.mrf.mxu0
        %v2938 = vadd.f32 0.0, %v2937
        %v2939 = vpop.f32.mrf.mxu0
        %2940 = vdwg.mxu0
        %v2941 = vadd.f32 %v2444, %v2923
        %v2942 = vadd.f32 %v2445, %v2928
        %v2943 = vadd.f32 %v2446, %v2933
        %v2944 = vadd.f32 %v2447, %v2938
        %s2945 = scalar_lea.vmem %s21, 64
        %v2946 = vld [vmem:[%s2945] sm:$0xff]
        %v2947 = vld [vmem:[%s2945 + $0x8] sm:$0xff]
        %v2948 = vld [vmem:[%s2945 + $0x10] sm:$0xff]
        %v2949 = vld [vmem:[%s2945 + $0x18] sm:$0xff]
        %s2950 = scalar_lea.vmem [#allocation10], 2
        %v2951 = vld [vmem:[%s2950] sm:$0x1]
        %v2952 = vld [vmem:[#allocation11] sm:$0x3]
        %v2954 = vsel %vm1232, %v2952, 0
        %v2956 = vsel %vm1239, %v2763, 0
        %2958 = vmatprep.subr.mxu0 0.0
        %2959 = vmatpush1.msra.mxu0 0.0
        %2960 = vmatprep.subr.mxu0 0.0
        %2961 = vmatpush1.msra.mxu0 0.0
        %2962 = vmatprep.subr.mxu0 0.0
        %2963 = vmatpush1.msra.mxu0 0.0
        %2964 = vmatprep.subr.mxu0 0.0
        %2965 = vmatpush1.msra.mxu0 0.0
        %2966 = vmatprep.subr.mxu0 0.0
        %2967 = vmatpush1.msra.mxu0 0.0
        %2968 = vmatprep.subr.mxu0 0.0
        %2969 = vmatpush1.msra.mxu0 0.0
        %2970 = vmatprep.subr.mxu0 0.0
        %2971 = vmatpush1.msra.mxu0 0.0
        %2972 = vmatprep.subr.mxu0 0.0
        %2973 = vmatpush1.msra.mxu0 0.0
        %2974 = vmatprep.subr.mxu0 0.0
        %2975 = vmatpush1.msra.mxu0 0.0
        %2976 = vmatprep.subr.mxu0 0.0
        %2977 = vmatpush1.msra.mxu0 0.0
        %2978 = vmatprep.subr.mxu0 0.0
        %2979 = vmatpush1.msra.mxu0 0.0
        %2980 = vmatprep.subr.mxu0 0.0
        %2981 = vmatpush1.msra.mxu0 0.0
        %2982 = vmatprep.subr.mxu0 0.0
        %2983 = vmatpush1.msra.mxu0 0.0
        %2984 = vmatprep.subr.mxu0 0.0
        %2985 = vmatpush1.msra.mxu0 0.0
        %2986 = vmatprep.subr.mxu0 0.0
        %2987 = vmatpush1.msra.mxu0 0.0
        %2988 = vmatprep.subr.mxu0 0.0
        %2989 = vmatpush1.msra.mxu0 %v2956
        %2990 = vmatprep.subr.mxu0 0.0
        %2991 = vmatpush2.msra.mxu0 0.0
        %2992 = vmatprep.subr.mxu0 0.0
        %2993 = vmatpush2.msra.mxu0 0.0
        %2994 = vmatprep.subr.mxu0 0.0
        %2995 = vmatpush2.msra.mxu0 0.0
        %2996 = vmatprep.subr.mxu0 0.0
        %2997 = vmatpush2.msra.mxu0 0.0
        %2998 = vmatprep.subr.mxu0 0.0
        %2999 = vmatpush2.msra.mxu0 0.0
        %3000 = vmatprep.subr.mxu0 0.0
        %3001 = vmatpush2.msra.mxu0 0.0
        %3002 = vmatprep.subr.mxu0 0.0
        %3003 = vmatpush2.msra.mxu0 0.0
        %3004 = vmatprep.subr.mxu0 0.0
        %3005 = vmatpush2.msra.mxu0 0.0
        %3006 = vmatprep.subr.mxu0 0.0
        %3007 = vmatpush2.msra.mxu0 0.0
        %3008 = vmatprep.subr.mxu0 0.0
        %3009 = vmatpush2.msra.mxu0 0.0
        %3010 = vmatprep.subr.mxu0 0.0
        %3011 = vmatpush2.msra.mxu0 0.0
        %3012 = vmatprep.subr.mxu0 0.0
        %3013 = vmatpush2.msra.mxu0 0.0
        %3014 = vmatprep.subr.mxu0 0.0
        %3015 = vmatpush2.msra.mxu0 0.0
        %3016 = vmatprep.subr.mxu0 0.0
        %3017 = vmatpush2.msra.mxu0 0.0
        %3018 = vmatprep.subr.mxu0 0.0
        %3019 = vmatpush2.msra.mxu0 0.0
        %3020 = vmatprep.subr.mxu0 0.0
        %3021 = vmatpush2.msra.mxu0 0.0
        %3022 = vmatprep.mubr.f32.mxu0 0.0
        %3023 = vmatmul.mubr.f32.gmra.mxu0 %v2954
        %v3024 = vpop.f32.mrf.mxu0
        %v3025 = vadd.f32 0.0, %v3024
        %v3026 = vpop.f32.mrf.mxu0
        %3027 = vdwg.mxu0
        %v3029 = vsel %vm1481, %v3025, 0
        %3031 = vmatprep.subr.mxu0 0.0
        %3032 = vmatpush1.msra.mxu0 0.0
        %3033 = vmatprep.subr.mxu0 0.0
        %3034 = vmatpush1.msra.mxu0 0.0
        %3035 = vmatprep.subr.mxu0 0.0
        %3036 = vmatpush1.msra.mxu0 0.0
        %3037 = vmatprep.subr.mxu0 0.0
        %3038 = vmatpush1.msra.mxu0 0.0
        %3039 = vmatprep.subr.mxu0 0.0
        %3040 = vmatpush1.msra.mxu0 0.0
        %3041 = vmatprep.subr.mxu0 0.0
        %3042 = vmatpush1.msra.mxu0 0.0
        %3043 = vmatprep.subr.mxu0 0.0
        %3044 = vmatpush1.msra.mxu0 0.0
        %3045 = vmatprep.subr.mxu0 0.0
        %3046 = vmatpush1.msra.mxu0 0.0
        %3047 = vmatprep.subr.mxu0 0.0
        %3048 = vmatpush1.msra.mxu0 0.0
        %3049 = vmatprep.subr.mxu0 0.0
        %3050 = vmatpush1.msra.mxu0 0.0
        %3051 = vmatprep.subr.mxu0 0.0
        %3052 = vmatpush1.msra.mxu0 0.0
        %3053 = vmatprep.subr.mxu0 0.0
        %3054 = vmatpush1.msra.mxu0 0.0
        %3055 = vmatprep.subr.mxu0 0.0
        %3056 = vmatpush1.msra.mxu0 0.0
        %3057 = vmatprep.subr.mxu0 0.0
        %3058 = vmatpush1.msra.mxu0 0.0
        %3059 = vmatprep.subr.mxu0 0.0
        %3060 = vmatpush1.msra.mxu0 %v2947
        %3061 = vmatprep.subr.mxu0 0.0
        %3062 = vmatpush1.msra.mxu0 %v2946
        %3063 = vmatprep.subr.mxu0 0.0
        %3064 = vmatpush2.msra.mxu0 0.0
        %3065 = vmatprep.subr.mxu0 0.0
        %3066 = vmatpush2.msra.mxu0 0.0
        %3067 = vmatprep.subr.mxu0 0.0
        %3068 = vmatpush2.msra.mxu0 0.0
        %3069 = vmatprep.subr.mxu0 0.0
        %3070 = vmatpush2.msra.mxu0 0.0
        %3071 = vmatprep.subr.mxu0 0.0
        %3072 = vmatpush2.msra.mxu0 0.0
        %3073 = vmatprep.subr.mxu0 0.0
        %3074 = vmatpush2.msra.mxu0 0.0
        %3075 = vmatprep.subr.mxu0 0.0
        %3076 = vmatpush2.msra.mxu0 0.0
        %3077 = vmatprep.subr.mxu0 0.0
        %3078 = vmatpush2.msra.mxu0 0.0
        %3079 = vmatprep.subr.mxu0 0.0
        %3080 = vmatpush2.msra.mxu0 0.0
        %3081 = vmatprep.subr.mxu0 0.0
        %3082 = vmatpush2.msra.mxu0 0.0
        %3083 = vmatprep.subr.mxu0 0.0
        %3084 = vmatpush2.msra.mxu0 0.0
        %3085 = vmatprep.subr.mxu0 0.0
        %3086 = vmatpush2.msra.mxu0 0.0
        %3087 = vmatprep.subr.mxu0 0.0
        %3088 = vmatpush2.msra.mxu0 0.0
        %3089 = vmatprep.subr.mxu0 0.0
        %3090 = vmatpush2.msra.mxu0 0.0
        %3091 = vmatprep.subr.mxu0 0.0
        %3092 = vmatpush2.msra.mxu0 0.0
        %3093 = vmatprep.subr.mxu0 0.0
        %3094 = vmatpush2.msra.mxu0 0.0
        %3095 = vmatprep.mubr.f32.mxu0 0.0
        %3096 = vmatmul.mubr.f32.gmra.mxu0 %v3029
        %v3097 = vpop.f32.mrf.mxu0
        %v3098 = vadd.f32 0.0, %v3097
        %v3099 = vpop.f32.mrf.mxu0
        %3100 = vdwg.mxu0
        %v3102 = vlaneseq
        %v3103 = vshrl.u32 %v3102, 7
        %v3104 = vsub.s32 0, %v3103
        %v3105 = vrot.slane %v2951, %v3104
        %v3107 = vadd.f32 %v3105, %v3098
        %s3108 = scalar_lea.vmem [#allocation11], 2
        %v3109 = vld [vmem:[%s3108] sm:$0x3]
        %v3111 = vsel %vm1232, %v3109, 0
        %3113 = vmatprep.subr.mxu0 0.0
        %3114 = vmatpush1.msra.mxu0 0.0
        %3115 = vmatprep.subr.mxu0 0.0
        %3116 = vmatpush1.msra.mxu0 0.0
        %3117 = vmatprep.subr.mxu0 0.0
        %3118 = vmatpush1.msra.mxu0 0.0
        %3119 = vmatprep.subr.mxu0 0.0
        %3120 = vmatpush1.msra.mxu0 0.0
        %3121 = vmatprep.subr.mxu0 0.0
        %3122 = vmatpush1.msra.mxu0 0.0
        %3123 = vmatprep.subr.mxu0 0.0
        %3124 = vmatpush1.msra.mxu0 0.0
        %3125 = vmatprep.subr.mxu0 0.0
        %3126 = vmatpush1.msra.mxu0 0.0
        %3127 = vmatprep.subr.mxu0 0.0
        %3128 = vmatpush1.msra.mxu0 0.0
        %3129 = vmatprep.subr.mxu0 0.0
        %3130 = vmatpush1.msra.mxu0 0.0
        %3131 = vmatprep.subr.mxu0 0.0
        %3132 = vmatpush1.msra.mxu0 0.0
        %3133 = vmatprep.subr.mxu0 0.0
        %3134 = vmatpush1.msra.mxu0 0.0
        %3135 = vmatprep.subr.mxu0 0.0
        %3136 = vmatpush1.msra.mxu0 0.0
        %3137 = vmatprep.subr.mxu0 0.0
        %3138 = vmatpush1.msra.mxu0 0.0
        %3139 = vmatprep.subr.mxu0 0.0
        %3140 = vmatpush1.msra.mxu0 0.0
        %3141 = vmatprep.subr.mxu0 0.0
        %3142 = vmatpush1.msra.mxu0 0.0
        %3143 = vmatprep.subr.mxu0 0.0
        %3144 = vmatpush1.msra.mxu0 %v2956
        %3145 = vmatprep.subr.mxu0 0.0
        %3146 = vmatpush2.msra.mxu0 0.0
        %3147 = vmatprep.subr.mxu0 0.0
        %3148 = vmatpush2.msra.mxu0 0.0
        %3149 = vmatprep.subr.mxu0 0.0
        %3150 = vmatpush2.msra.mxu0 0.0
        %3151 = vmatprep.subr.mxu0 0.0
        %3152 = vmatpush2.msra.mxu0 0.0
        %3153 = vmatprep.subr.mxu0 0.0
        %3154 = vmatpush2.msra.mxu0 0.0
        %3155 = vmatprep.subr.mxu0 0.0
        %3156 = vmatpush2.msra.mxu0 0.0
        %3157 = vmatprep.subr.mxu0 0.0
        %3158 = vmatpush2.msra.mxu0 0.0
        %3159 = vmatprep.subr.mxu0 0.0
        %3160 = vmatpush2.msra.mxu0 0.0
        %3161 = vmatprep.subr.mxu0 0.0
        %3162 = vmatpush2.msra.mxu0 0.0
        %3163 = vmatprep.subr.mxu0 0.0
        %3164 = vmatpush2.msra.mxu0 0.0
        %3165 = vmatprep.subr.mxu0 0.0
        %3166 = vmatpush2.msra.mxu0 0.0
        %3167 = vmatprep.subr.mxu0 0.0
        %3168 = vmatpush2.msra.mxu0 0.0
        %3169 = vmatprep.subr.mxu0 0.0
        %3170 = vmatpush2.msra.mxu0 0.0
        %3171 = vmatprep.subr.mxu0 0.0
        %3172 = vmatpush2.msra.mxu0 0.0
        %3173 = vmatprep.subr.mxu0 0.0
        %3174 = vmatpush2.msra.mxu0 0.0
        %3175 = vmatprep.subr.mxu0 0.0
        %3176 = vmatpush2.msra.mxu0 0.0
        %3177 = vmatprep.mubr.f32.mxu0 0.0
        %3178 = vmatmul.mubr.f32.gmra.mxu0 %v3111
        %v3179 = vpop.f32.mrf.mxu0
        %v3180 = vadd.f32 0.0, %v3179
        %v3181 = vpop.f32.mrf.mxu0
        %3182 = vdwg.mxu0
        %v3184 = vsel %vm1481, %v3180, 0
        %3186 = vmatprep.subr.mxu0 0.0
        %3187 = vmatpush1.msra.mxu0 0.0
        %3188 = vmatprep.subr.mxu0 0.0
        %3189 = vmatpush1.msra.mxu0 0.0
        %3190 = vmatprep.subr.mxu0 0.0
        %3191 = vmatpush1.msra.mxu0 0.0
        %3192 = vmatprep.subr.mxu0 0.0
        %3193 = vmatpush1.msra.mxu0 0.0
        %3194 = vmatprep.subr.mxu0 0.0
        %3195 = vmatpush1.msra.mxu0 0.0
        %3196 = vmatprep.subr.mxu0 0.0
        %3197 = vmatpush1.msra.mxu0 0.0
        %3198 = vmatprep.subr.mxu0 0.0
        %3199 = vmatpush1.msra.mxu0 0.0
        %3200 = vmatprep.subr.mxu0 0.0
        %3201 = vmatpush1.msra.mxu0 0.0
        %3202 = vmatprep.subr.mxu0 0.0
        %3203 = vmatpush1.msra.mxu0 0.0
        %3204 = vmatprep.subr.mxu0 0.0
        %3205 = vmatpush1.msra.mxu0 0.0
        %3206 = vmatprep.subr.mxu0 0.0
        %3207 = vmatpush1.msra.mxu0 0.0
        %3208 = vmatprep.subr.mxu0 0.0
        %3209 = vmatpush1.msra.mxu0 0.0
        %3210 = vmatprep.subr.mxu0 0.0
        %3211 = vmatpush1.msra.mxu0 0.0
        %3212 = vmatprep.subr.mxu0 0.0
        %3213 = vmatpush1.msra.mxu0 0.0
        %3214 = vmatprep.subr.mxu0 0.0
        %3215 = vmatpush1.msra.mxu0 %v2949
        %3216 = vmatprep.subr.mxu0 0.0
        %3217 = vmatpush1.msra.mxu0 %v2948
        %3218 = vmatprep.subr.mxu0 0.0
        %3219 = vmatpush2.msra.mxu0 0.0
        %3220 = vmatprep.subr.mxu0 0.0
        %3221 = vmatpush2.msra.mxu0 0.0
        %3222 = vmatprep.subr.mxu0 0.0
        %3223 = vmatpush2.msra.mxu0 0.0
        %3224 = vmatprep.subr.mxu0 0.0
        %3225 = vmatpush2.msra.mxu0 0.0
        %3226 = vmatprep.subr.mxu0 0.0
        %3227 = vmatpush2.msra.mxu0 0.0
        %3228 = vmatprep.subr.mxu0 0.0
        %3229 = vmatpush2.msra.mxu0 0.0
        %3230 = vmatprep.subr.mxu0 0.0
        %3231 = vmatpush2.msra.mxu0 0.0
        %3232 = vmatprep.subr.mxu0 0.0
        %3233 = vmatpush2.msra.mxu0 0.0
        %3234 = vmatprep.subr.mxu0 0.0
        %3235 = vmatpush2.msra.mxu0 0.0
        %3236 = vmatprep.subr.mxu0 0.0
        %3237 = vmatpush2.msra.mxu0 0.0
        %3238 = vmatprep.subr.mxu0 0.0
        %3239 = vmatpush2.msra.mxu0 0.0
        %3240 = vmatprep.subr.mxu0 0.0
        %3241 = vmatpush2.msra.mxu0 0.0
        %3242 = vmatprep.subr.mxu0 0.0
        %3243 = vmatpush2.msra.mxu0 0.0
        %3244 = vmatprep.subr.mxu0 0.0
        %3245 = vmatpush2.msra.mxu0 0.0
        %3246 = vmatprep.subr.mxu0 0.0
        %3247 = vmatpush2.msra.mxu0 0.0
        %3248 = vmatprep.subr.mxu0 0.0
        %3249 = vmatpush2.msra.mxu0 0.0
        %3250 = vmatprep.mubr.f32.mxu0 0.0
        %3251 = vmatmul.mubr.f32.gmra.mxu0 %v3184
        %v3252 = vpop.f32.mrf.mxu0
        %v3253 = vadd.f32 0.0, %v3252
        %v3254 = vpop.f32.mrf.mxu0
        %3255 = vdwg.mxu0
        %v3256 = vadd.f32 %v3107, %v3253
        %vm3257 = vcmp.gt.f32.partialorder %v3256, 0.0
        %v3258 = vmin.f32 %v3256, 0.0
        %v3259 = vmul.f32 %v3258, 1.442695
        %v3260 = vpow.pop %v3259
        %v3261 = vsub.f32 %v3260, 1.0
        %v3262 = vsel %vm3257, %v3256, %v3261
        %v3263 = vld [vmem:[%s35] sm:$0xff]
        %v3264 = vld [vmem:[%s35 + $0x8] sm:$0xff]
        %v3265 = vld [vmem:[%s35 + $0x10] sm:$0xff]
        %v3266 = vld [vmem:[%s35 + $0x18] sm:$0x3f]
        %v3268 = vsel %vm1481, %v3262, 0
        %3270 = vmatprep.subr.mxu0 0.0
        %3271 = vmatpush1.msra.mxu0 0.0
        %3272 = vmatprep.subr.mxu0 0.0
        %3273 = vmatpush1.msra.mxu0 0.0
        %3274 = vmatprep.subr.mxu0 0.0
        %3275 = vmatpush1.msra.mxu0 0.0
        %3276 = vmatprep.subr.mxu0 0.0
        %3277 = vmatpush1.msra.mxu0 0.0
        %3278 = vmatprep.subr.mxu0 0.0
        %3279 = vmatpush1.msra.mxu0 0.0
        %3280 = vmatprep.subr.mxu0 0.0
        %3281 = vmatpush1.msra.mxu0 0.0
        %3282 = vmatprep.subr.mxu0 0.0
        %3283 = vmatpush1.msra.mxu0 0.0
        %3284 = vmatprep.subr.mxu0 0.0
        %3285 = vmatpush1.msra.mxu0 0.0
        %3286 = vmatprep.subr.mxu0 0.0
        %3287 = vmatpush1.msra.mxu0 0.0
        %3288 = vmatprep.subr.mxu0 0.0
        %3289 = vmatpush1.msra.mxu0 0.0
        %3290 = vmatprep.subr.mxu0 0.0
        %3291 = vmatpush1.msra.mxu0 0.0
        %3292 = vmatprep.subr.mxu0 0.0
        %3293 = vmatpush1.msra.mxu0 0.0
        %3294 = vmatprep.subr.mxu0 0.0
        %3295 = vmatpush1.msra.mxu0 0.0
        %3296 = vmatprep.subr.mxu0 0.0
        %3297 = vmatpush1.msra.mxu0 0.0
        %3298 = vmatprep.subr.mxu0 0.0
        %3299 = vmatpush1.msra.mxu0 %v2272
        %3300 = vmatprep.subr.mxu0 0.0
        %3301 = vmatpush1.msra.mxu0 %v2271
        %3302 = vmatprep.subr.mxu0 0.0
        %3303 = vmatpush2.msra.mxu0 0.0
        %3304 = vmatprep.subr.mxu0 0.0
        %3305 = vmatpush2.msra.mxu0 0.0
        %3306 = vmatprep.subr.mxu0 0.0
        %3307 = vmatpush2.msra.mxu0 0.0
        %3308 = vmatprep.subr.mxu0 0.0
        %3309 = vmatpush2.msra.mxu0 0.0
        %3310 = vmatprep.subr.mxu0 0.0
        %3311 = vmatpush2.msra.mxu0 0.0
        %3312 = vmatprep.subr.mxu0 0.0
        %3313 = vmatpush2.msra.mxu0 0.0
        %3314 = vmatprep.subr.mxu0 0.0
        %3315 = vmatpush2.msra.mxu0 0.0
        %3316 = vmatprep.subr.mxu0 0.0
        %3317 = vmatpush2.msra.mxu0 0.0
        %3318 = vmatprep.subr.mxu0 0.0
        %3319 = vmatpush2.msra.mxu0 0.0
        %3320 = vmatprep.subr.mxu0 0.0
        %3321 = vmatpush2.msra.mxu0 0.0
        %3322 = vmatprep.subr.mxu0 0.0
        %3323 = vmatpush2.msra.mxu0 0.0
        %3324 = vmatprep.subr.mxu0 0.0
        %3325 = vmatpush2.msra.mxu0 0.0
        %3326 = vmatprep.subr.mxu0 0.0
        %3327 = vmatpush2.msra.mxu0 0.0
        %3328 = vmatprep.subr.mxu0 0.0
        %3329 = vmatpush2.msra.mxu0 0.0
        %3330 = vmatprep.subr.mxu0 0.0
        %3331 = vmatpush2.msra.mxu0 0.0
        %3332 = vmatprep.subr.mxu0 0.0
        %3333 = vmatpush2.msra.mxu0 0.0
        %3334 = vmatprep.mubr.f32.mxu0 0.0
        %3335 = vmatmul.mubr.f32.gmra.mxu0 %v3268
        %v3336 = vpop.f32.mrf.mxu0
        %v3337 = vadd.f32 0.0, %v3336
        %v3338 = vpop.f32.mrf.mxu0
        %3339 = vdwg.mxu0
        %vm3340 = vcmask 15360
        %v3342 = vsel %vm3340, %v3263, 0
        %v3345 = vsel %vm3340, %v3264, 0
        %v3348 = vsel %vm3340, %v3265, 0
        %v3351 = vsel %vm3340, %v3266, 0
        %vm3353 = vcmask 1041408
        %v3355 = vsel %vm3353, %v3337, 0
        %3357 = vmatprep.subr.mxu0 0.0
        %3358 = vmatpush1.msra.mxu0 0.0
        %3359 = vmatprep.subr.mxu0 0.0
        %3360 = vmatpush1.msra.mxu0 0.0
        %3361 = vmatprep.subr.mxu0 0.0
        %3362 = vmatpush1.msra.mxu0 0.0
        %3363 = vmatprep.subr.mxu0 0.0
        %3364 = vmatpush1.msra.mxu0 0.0
        %3365 = vmatprep.subr.mxu0 0.0
        %3366 = vmatpush1.msra.mxu0 0.0
        %3367 = vmatprep.subr.mxu0 0.0
        %3368 = vmatpush1.msra.mxu0 0.0
        %3369 = vmatprep.subr.mxu0 0.0
        %3370 = vmatpush1.msra.mxu0 0.0
        %3371 = vmatprep.subr.mxu0 0.0
        %3372 = vmatpush1.msra.mxu0 0.0
        %3373 = vmatprep.subr.mxu0 0.0
        %3374 = vmatpush1.msra.mxu0 0.0
        %3375 = vmatprep.subr.mxu0 0.0
        %3376 = vmatpush1.msra.mxu0 0.0
        %3377 = vmatprep.subr.mxu0 0.0
        %3378 = vmatpush1.msra.mxu0 0.0
        %3379 = vmatprep.subr.mxu0 0.0
        %3380 = vmatpush1.msra.mxu0 0.0
        %3381 = vmatprep.subr.mxu0 0.0
        %3382 = vmatpush1.msra.mxu0 0.0
        %3383 = vmatprep.subr.mxu0 0.0
        %3384 = vmatpush1.msra.mxu0 0.0
        %3385 = vmatprep.subr.mxu0 0.0
        %3386 = vmatpush1.msra.mxu0 0.0
        %3387 = vmatprep.subr.mxu0 0.0
        %3388 = vmatpush1.msra.mxu0 %v3355
        %3389 = vmatprep.subr.mxu0 0.0
        %3390 = vmatpush2.msra.mxu0 0.0
        %3391 = vmatprep.subr.mxu0 0.0
        %3392 = vmatpush2.msra.mxu0 0.0
        %3393 = vmatprep.subr.mxu0 0.0
        %3394 = vmatpush2.msra.mxu0 0.0
        %3395 = vmatprep.subr.mxu0 0.0
        %3396 = vmatpush2.msra.mxu0 0.0
        %3397 = vmatprep.subr.mxu0 0.0
        %3398 = vmatpush2.msra.mxu0 0.0
        %3399 = vmatprep.subr.mxu0 0.0
        %3400 = vmatpush2.msra.mxu0 0.0
        %3401 = vmatprep.subr.mxu0 0.0
        %3402 = vmatpush2.msra.mxu0 0.0
        %3403 = vmatprep.subr.mxu0 0.0
        %3404 = vmatpush2.msra.mxu0 0.0
        %3405 = vmatprep.subr.mxu0 0.0
        %3406 = vmatpush2.msra.mxu0 0.0
        %3407 = vmatprep.subr.mxu0 0.0
        %3408 = vmatpush2.msra.mxu0 0.0
        %3409 = vmatprep.subr.mxu0 0.0
        %3410 = vmatpush2.msra.mxu0 0.0
        %3411 = vmatprep.subr.mxu0 0.0
        %3412 = vmatpush2.msra.mxu0 0.0
        %3413 = vmatprep.subr.mxu0 0.0
        %3414 = vmatpush2.msra.mxu0 0.0
        %3415 = vmatprep.subr.mxu0 0.0
        %3416 = vmatpush2.msra.mxu0 0.0
        %3417 = vmatprep.subr.mxu0 0.0
        %3418 = vmatpush2.msra.mxu0 0.0
        %3419 = vmatprep.subr.mxu0 0.0
        %3420 = vmatpush2.msra.mxu0 0.0
        %3421 = vmatprep.mubr.f32.mxu0 0.0
        %3422 = vmatmul.mubr.f32.gmra.mxu0 %v3342
        %v3423 = vpop.f32.mrf.mxu0
        %v3424 = vadd.f32 0.0, %v3423
        %v3425 = vpop.f32.mrf.mxu0
        %3426 = vmatprep.mubr.f32.mxu0 0.0
        %3427 = vmatmul.mubr.f32.gmra.mxu0 %v3345
        %v3428 = vpop.f32.mrf.mxu0
        %v3429 = vadd.f32 0.0, %v3428
        %v3430 = vpop.f32.mrf.mxu0
        %3431 = vmatprep.mubr.f32.mxu0 0.0
        %3432 = vmatmul.mubr.f32.gmra.mxu0 %v3348
        %v3433 = vpop.f32.mrf.mxu0
        %v3434 = vadd.f32 0.0, %v3433
        %v3435 = vpop.f32.mrf.mxu0
        %3436 = vmatprep.mubr.f32.mxu0 0.0
        %3437 = vmatmul.mubr.f32.gmra.mxu0 %v3351
        %v3438 = vpop.f32.mrf.mxu0
        %v3439 = vadd.f32 0.0, %v3438
        %v3440 = vpop.f32.mrf.mxu0
        %3441 = vdwg.mxu0
        %v3442 = vadd.f32 %v2941, %v3424
        %v3443 = vadd.f32 %v2942, %v3429
        %v3444 = vadd.f32 %v2943, %v3434
        %v3445 = vadd.f32 %v2944, %v3439
        %v3446 = vld [vmem:[%s43] sm:$0x1]
        %v3447 = vld [vmem:[%s45] sm:$0x1]
        %v3448 = vsel %vm1766, %v3442, 0.0
        %3449 = vadd.xlane.f32.xlu0 %v3448
        %v3450 = vpop.xlane.xlu0 %3449
        %v3451 = vsel %vm1766, %v3443, 0.0
        %3452 = vadd.xlane.f32.xlu0 %v3451
        %v3453 = vpop.xlane.xlu0 %3452
        %v3454 = vsel %vm1766, %v3444, 0.0
        %3455 = vadd.xlane.f32.xlu0 %v3454
        %v3456 = vpop.xlane.xlu0 %3455
        %vm3457 = vcmask 259072
        %v3458 = vsel %vm3457, %v3445, 0.0
        %3459 = vadd.xlane.f32.xlu0 %v3458
        %v3460 = vpop.xlane.xlu0 %3459
        %v3461 = vrcp.pop 32.0
        %v3462 = vmul.f32 %v3450, %v3461
        %v3463 = vmul.f32 %v3453, %v3461
        %v3464 = vmul.f32 %v3456, %v3461
        %v3465 = vmul.f32 %v3460, %v3461
        %v3466 = vsub.f32 %v3442, %v3462
        %v3467 = vsub.f32 %v3443, %v3463
        %v3468 = vsub.f32 %v3444, %v3464
        %v3469 = vsub.f32 %v3445, %v3465
        %v3470 = vmul.f32 %v3466, %v3466
        %v3471 = vmul.f32 %v3467, %v3467
        %v3472 = vmul.f32 %v3468, %v3468
        %v3473 = vmul.f32 %v3469, %v3469
        %v3474 = vsel %vm1766, %v3470, 0.0
        %3475 = vadd.xlane.f32.xlu0 %v3474
        %v3476 = vpop.xlane.xlu0 %3475
        %v3477 = vsel %vm1766, %v3471, 0.0
        %3478 = vadd.xlane.f32.xlu0 %v3477
        %v3479 = vpop.xlane.xlu0 %3478
        %v3480 = vsel %vm1766, %v3472, 0.0
        %3481 = vadd.xlane.f32.xlu0 %v3480
        %v3482 = vpop.xlane.xlu0 %3481
        %v3483 = vsel %vm3457, %v3473, 0.0
        %3484 = vadd.xlane.f32.xlu0 %v3483
        %v3485 = vpop.xlane.xlu0 %3484
        %v3486 = vmul.f32 %v3476, %v3461
        %v3487 = vmul.f32 %v3479, %v3461
        %v3488 = vmul.f32 %v3482, %v3461
        %v3489 = vmul.f32 %v3485, %v3461
        %v3490 = vadd.f32 %v3486, 1e-05
        %v3491 = vadd.f32 %v3487, 1e-05
        %v3492 = vadd.f32 %v3488, 1e-05
        %v3493 = vadd.f32 %v3489, 1e-05
        %v3494 = vrsqrt.pop %v3490
        %v3495 = vrsqrt.pop %v3491
        %v3496 = vrsqrt.pop %v3492
        %v3497 = vrsqrt.pop %v3493
        %v3498 = vmul.f32 %v3466, %v3494
        %v3499 = vmul.f32 %v3467, %v3495
        %v3500 = vmul.f32 %v3468, %v3496
        %v3501 = vmul.f32 %v3469, %v3497
        %v3503 = vlaneseq
        %v3504 = vshrl.u32 %v3503, 7
        %v3505 = vsub.s32 0, %v3504
        %v3506 = vrot.slane %v3446, %v3505
        %v3508 = vmul.f32 %v3498, %v3506
        %v3509 = vmul.f32 %v3499, %v3506
        %v3510 = vmul.f32 %v3500, %v3506
        %v3511 = vmul.f32 %v3501, %v3506
        %v3513 = vlaneseq
        %v3514 = vshrl.u32 %v3513, 7
        %v3515 = vsub.s32 0, %v3514
        %v3516 = vrot.slane %v3447, %v3515
        %v3518 = vadd.f32 %v3508, %v3516
        %v3519 = vadd.f32 %v3509, %v3516
        %v3520 = vadd.f32 %v3510, %v3516
        %v3521 = vadd.f32 %v3511, %v3516
        %v3522 = vld [vmem:[%s47] sm:$0xff]
        %v3523 = vld [vmem:[%s47 + $0x8] sm:$0xff]
        %v3524 = vld [vmem:[%s47 + $0x10] sm:$0xff]
        %v3525 = vld [vmem:[%s47 + $0x18] sm:$0x3f]
        %v3526 = vld [vmem:[%s49] sm:$0xff]
        %v3527 = vld [vmem:[%s49 + $0x8] sm:$0xff]
        %v3528 = vld [vmem:[%s49 + $0x10] sm:$0xff]
        %v3529 = vld [vmem:[%s49 + $0x18] sm:$0xff]
        %v3531 = vsel %vm1766, %v3518, 0
        %v3534 = vsel %vm1766, %v3519, 0
        %v3537 = vsel %vm1766, %v3520, 0
        %v3540 = vsel %vm1766, %v3521, 0
        %3542 = vmatprep.subr.mxu0 0.0
        %3543 = vmatpush1.msra.mxu0 0.0
        %3544 = vmatprep.subr.mxu0 0.0
        %3545 = vmatpush1.msra.mxu0 0.0
        %3546 = vmatprep.subr.mxu0 0.0
        %3547 = vmatpush1.msra.mxu0 0.0
        %3548 = vmatprep.subr.mxu0 0.0
        %3549 = vmatpush1.msra.mxu0 0.0
        %3550 = vmatprep.subr.mxu0 0.0
        %3551 = vmatpush1.msra.mxu0 0.0
        %3552 = vmatprep.subr.mxu0 0.0
        %3553 = vmatpush1.msra.mxu0 0.0
        %3554 = vmatprep.subr.mxu0 0.0
        %3555 = vmatpush1.msra.mxu0 0.0
        %3556 = vmatprep.subr.mxu0 0.0
        %3557 = vmatpush1.msra.mxu0 0.0
        %3558 = vmatprep.subr.mxu0 0.0
        %3559 = vmatpush1.msra.mxu0 0.0
        %3560 = vmatprep.subr.mxu0 0.0
        %3561 = vmatpush1.msra.mxu0 0.0
        %3562 = vmatprep.subr.mxu0 0.0
        %3563 = vmatpush1.msra.mxu0 0.0
        %3564 = vmatprep.subr.mxu0 0.0
        %3565 = vmatpush1.msra.mxu0 0.0
        %3566 = vmatprep.subr.mxu0 0.0
        %3567 = vmatpush1.msra.mxu0 %v3529
        %3568 = vmatprep.subr.mxu0 0.0
        %3569 = vmatpush1.msra.mxu0 %v3528
        %3570 = vmatprep.subr.mxu0 0.0
        %3571 = vmatpush1.msra.mxu0 %v3527
        %3572 = vmatprep.subr.mxu0 0.0
        %3573 = vmatpush1.msra.mxu0 %v3526
        %3574 = vmatprep.subr.mxu0 0.0
        %3575 = vmatpush2.msra.mxu0 0.0
        %3576 = vmatprep.subr.mxu0 0.0
        %3577 = vmatpush2.msra.mxu0 0.0
        %3578 = vmatprep.subr.mxu0 0.0
        %3579 = vmatpush2.msra.mxu0 0.0
        %3580 = vmatprep.subr.mxu0 0.0
        %3581 = vmatpush2.msra.mxu0 0.0
        %3582 = vmatprep.subr.mxu0 0.0
        %3583 = vmatpush2.msra.mxu0 0.0
        %3584 = vmatprep.subr.mxu0 0.0
        %3585 = vmatpush2.msra.mxu0 0.0
        %3586 = vmatprep.subr.mxu0 0.0
        %3587 = vmatpush2.msra.mxu0 0.0
        %3588 = vmatprep.subr.mxu0 0.0
        %3589 = vmatpush2.msra.mxu0 0.0
        %3590 = vmatprep.subr.mxu0 0.0
        %3591 = vmatpush2.msra.mxu0 0.0
        %3592 = vmatprep.subr.mxu0 0.0
        %3593 = vmatpush2.msra.mxu0 0.0
        %3594 = vmatprep.subr.mxu0 0.0
        %3595 = vmatpush2.msra.mxu0 0.0
        %3596 = vmatprep.subr.mxu0 0.0
        %3597 = vmatpush2.msra.mxu0 0.0
        %3598 = vmatprep.subr.mxu0 0.0
        %3599 = vmatpush2.msra.mxu0 0.0
        %3600 = vmatprep.subr.mxu0 0.0
        %3601 = vmatpush2.msra.mxu0 0.0
        %3602 = vmatprep.subr.mxu0 0.0
        %3603 = vmatpush2.msra.mxu0 0.0
        %3604 = vmatprep.subr.mxu0 0.0
        %3605 = vmatpush2.msra.mxu0 0.0
        %3606 = vmatprep.mubr.f32.mxu0 0.0
        %3607 = vmatmul.mubr.f32.gmra.mxu0 %v3531
        %v3608 = vpop.f32.mrf.mxu0
        %v3609 = vadd.f32 0.0, %v3608
        %v3610 = vpop.f32.mrf.mxu0
        %3611 = vmatprep.mubr.f32.mxu0 0.0
        %3612 = vmatmul.mubr.f32.gmra.mxu0 %v3534
        %v3613 = vpop.f32.mrf.mxu0
        %v3614 = vadd.f32 0.0, %v3613
        %v3615 = vpop.f32.mrf.mxu0
        %3616 = vmatprep.mubr.f32.mxu0 0.0
        %3617 = vmatmul.mubr.f32.gmra.mxu0 %v3537
        %v3618 = vpop.f32.mrf.mxu0
        %v3619 = vadd.f32 0.0, %v3618
        %v3620 = vpop.f32.mrf.mxu0
        %3621 = vmatprep.mubr.f32.mxu0 0.0
        %3622 = vmatmul.mubr.f32.gmra.mxu0 %v3540
        %v3623 = vpop.f32.mrf.mxu0
        %v3624 = vadd.f32 0.0, %v3623
        %v3625 = vpop.f32.mrf.mxu0
        %3626 = vdwg.mxu0
        %v3627 = vld [vmem:[%s51] sm:$0xff]
        %v3628 = vld [vmem:[%s51 + $0x8] sm:$0xff]
        %v3629 = vld [vmem:[%s51 + $0x10] sm:$0xff]
        %v3630 = vld [vmem:[%s51 + $0x18] sm:$0xff]
        %3631 = vmatprep.subr.mxu0 0.0
        %3632 = vmatpush1.msra.mxu0 0.0
        %3633 = vmatprep.subr.mxu0 0.0
        %3634 = vmatpush1.msra.mxu0 0.0
        %3635 = vmatprep.subr.mxu0 0.0
        %3636 = vmatpush1.msra.mxu0 0.0
        %3637 = vmatprep.subr.mxu0 0.0
        %3638 = vmatpush1.msra.mxu0 0.0
        %3639 = vmatprep.subr.mxu0 0.0
        %3640 = vmatpush1.msra.mxu0 0.0
        %3641 = vmatprep.subr.mxu0 0.0
        %3642 = vmatpush1.msra.mxu0 0.0
        %3643 = vmatprep.subr.mxu0 0.0
        %3644 = vmatpush1.msra.mxu0 0.0
        %3645 = vmatprep.subr.mxu0 0.0
        %3646 = vmatpush1.msra.mxu0 0.0
        %3647 = vmatprep.subr.mxu0 0.0
        %3648 = vmatpush1.msra.mxu0 0.0
        %3649 = vmatprep.subr.mxu0 0.0
        %3650 = vmatpush1.msra.mxu0 0.0
        %3651 = vmatprep.subr.mxu0 0.0
        %3652 = vmatpush1.msra.mxu0 0.0
        %3653 = vmatprep.subr.mxu0 0.0
        %3654 = vmatpush1.msra.mxu0 0.0
        %3655 = vmatprep.subr.mxu0 0.0
        %3656 = vmatpush1.msra.mxu0 %v3630
        %3657 = vmatprep.subr.mxu0 0.0
        %3658 = vmatpush1.msra.mxu0 %v3629
        %3659 = vmatprep.subr.mxu0 0.0
        %3660 = vmatpush1.msra.mxu0 %v3628
        %3661 = vmatprep.subr.mxu0 0.0
        %3662 = vmatpush1.msra.mxu0 %v3627
        %3663 = vmatprep.subr.mxu0 0.0
        %3664 = vmatpush2.msra.mxu0 0.0
        %3665 = vmatprep.subr.mxu0 0.0
        %3666 = vmatpush2.msra.mxu0 0.0
        %3667 = vmatprep.subr.mxu0 0.0
        %3668 = vmatpush2.msra.mxu0 0.0
        %3669 = vmatprep.subr.mxu0 0.0
        %3670 = vmatpush2.msra.mxu0 0.0
        %3671 = vmatprep.subr.mxu0 0.0
        %3672 = vmatpush2.msra.mxu0 0.0
        %3673 = vmatprep.subr.mxu0 0.0
        %3674 = vmatpush2.msra.mxu0 0.0
        %3675 = vmatprep.subr.mxu0 0.0
        %3676 = vmatpush2.msra.mxu0 0.0
        %3677 = vmatprep.subr.mxu0 0.0
        %3678 = vmatpush2.msra.mxu0 0.0
        %3679 = vmatprep.subr.mxu0 0.0
        %3680 = vmatpush2.msra.mxu0 0.0
        %3681 = vmatprep.subr.mxu0 0.0
        %3682 = vmatpush2.msra.mxu0 0.0
        %3683 = vmatprep.subr.mxu0 0.0
        %3684 = vmatpush2.msra.mxu0 0.0
        %3685 = vmatprep.subr.mxu0 0.0
        %3686 = vmatpush2.msra.mxu0 0.0
        %3687 = vmatprep.subr.mxu0 0.0
        %3688 = vmatpush2.msra.mxu0 0.0
        %3689 = vmatprep.subr.mxu0 0.0
        %3690 = vmatpush2.msra.mxu0 0.0
        %3691 = vmatprep.subr.mxu0 0.0
        %3692 = vmatpush2.msra.mxu0 0.0
        %3693 = vmatprep.subr.mxu0 0.0
        %3694 = vmatpush2.msra.mxu0 0.0
        %3695 = vmatprep.mubr.f32.mxu0 0.0
        %3696 = vmatmul.mubr.f32.gmra.mxu0 %v3531
        %v3697 = vpop.f32.mrf.mxu0
        %v3698 = vadd.f32 0.0, %v3697
        %v3699 = vpop.f32.mrf.mxu0
        %3700 = vmatprep.mubr.f32.mxu0 0.0
        %3701 = vmatmul.mubr.f32.gmra.mxu0 %v3534
        %v3702 = vpop.f32.mrf.mxu0
        %v3703 = vadd.f32 0.0, %v3702
        %v3704 = vpop.f32.mrf.mxu0
        %3705 = vmatprep.mubr.f32.mxu0 0.0
        %3706 = vmatmul.mubr.f32.gmra.mxu0 %v3537
        %v3707 = vpop.f32.mrf.mxu0
        %v3708 = vadd.f32 0.0, %v3707
        %v3709 = vpop.f32.mrf.mxu0
        %3710 = vmatprep.mubr.f32.mxu0 0.0
        %3711 = vmatmul.mubr.f32.gmra.mxu0 %v3540
        %v3712 = vpop.f32.mrf.mxu0
        %v3713 = vadd.f32 0.0, %v3712
        %v3714 = vpop.f32.mrf.mxu0
        %3715 = vdwg.mxu0
        %v3716 = vld [vmem:[%s53] sm:$0xff]
        %v3717 = vld [vmem:[%s53 + $0x8] sm:$0xff]
        %v3718 = vld [vmem:[%s53 + $0x10] sm:$0xff]
        %v3719 = vld [vmem:[%s53 + $0x18] sm:$0xff]
        %3720 = vmatprep.subr.mxu0 0.0
        %3721 = vmatpush1.msra.mxu0 0.0
        %3722 = vmatprep.subr.mxu0 0.0
        %3723 = vmatpush1.msra.mxu0 0.0
        %3724 = vmatprep.subr.mxu0 0.0
        %3725 = vmatpush1.msra.mxu0 0.0
        %3726 = vmatprep.subr.mxu0 0.0
        %3727 = vmatpush1.msra.mxu0 0.0
        %3728 = vmatprep.subr.mxu0 0.0
        %3729 = vmatpush1.msra.mxu0 0.0
        %3730 = vmatprep.subr.mxu0 0.0
        %3731 = vmatpush1.msra.mxu0 0.0
        %3732 = vmatprep.subr.mxu0 0.0
        %3733 = vmatpush1.msra.mxu0 0.0
        %3734 = vmatprep.subr.mxu0 0.0
        %3735 = vmatpush1.msra.mxu0 0.0
        %3736 = vmatprep.subr.mxu0 0.0
        %3737 = vmatpush1.msra.mxu0 0.0
        %3738 = vmatprep.subr.mxu0 0.0
        %3739 = vmatpush1.msra.mxu0 0.0
        %3740 = vmatprep.subr.mxu0 0.0
        %3741 = vmatpush1.msra.mxu0 0.0
        %3742 = vmatprep.subr.mxu0 0.0
        %3743 = vmatpush1.msra.mxu0 0.0
        %3744 = vmatprep.subr.mxu0 0.0
        %3745 = vmatpush1.msra.mxu0 %v3719
        %3746 = vmatprep.subr.mxu0 0.0
        %3747 = vmatpush1.msra.mxu0 %v3718
        %3748 = vmatprep.subr.mxu0 0.0
        %3749 = vmatpush1.msra.mxu0 %v3717
        %3750 = vmatprep.subr.mxu0 0.0
        %3751 = vmatpush1.msra.mxu0 %v3716
        %3752 = vmatprep.subr.mxu0 0.0
        %3753 = vmatpush2.msra.mxu0 0.0
        %3754 = vmatprep.subr.mxu0 0.0
        %3755 = vmatpush2.msra.mxu0 0.0
        %3756 = vmatprep.subr.mxu0 0.0
        %3757 = vmatpush2.msra.mxu0 0.0
        %3758 = vmatprep.subr.mxu0 0.0
        %3759 = vmatpush2.msra.mxu0 0.0
        %3760 = vmatprep.subr.mxu0 0.0
        %3761 = vmatpush2.msra.mxu0 0.0
        %3762 = vmatprep.subr.mxu0 0.0
        %3763 = vmatpush2.msra.mxu0 0.0
        %3764 = vmatprep.subr.mxu0 0.0
        %3765 = vmatpush2.msra.mxu0 0.0
        %3766 = vmatprep.subr.mxu0 0.0
        %3767 = vmatpush2.msra.mxu0 0.0
        %3768 = vmatprep.subr.mxu0 0.0
        %3769 = vmatpush2.msra.mxu0 0.0
        %3770 = vmatprep.subr.mxu0 0.0
        %3771 = vmatpush2.msra.mxu0 0.0
        %3772 = vmatprep.subr.mxu0 0.0
        %3773 = vmatpush2.msra.mxu0 0.0
        %3774 = vmatprep.subr.mxu0 0.0
        %3775 = vmatpush2.msra.mxu0 0.0
        %3776 = vmatprep.subr.mxu0 0.0
        %3777 = vmatpush2.msra.mxu0 0.0
        %3778 = vmatprep.subr.mxu0 0.0
        %3779 = vmatpush2.msra.mxu0 0.0
        %3780 = vmatprep.subr.mxu0 0.0
        %3781 = vmatpush2.msra.mxu0 0.0
        %3782 = vmatprep.subr.mxu0 0.0
        %3783 = vmatpush2.msra.mxu0 0.0
        %3784 = vmatprep.mubr.f32.mxu0 0.0
        %3785 = vmatmul.mubr.f32.gmra.mxu0 %v3531
        %v3786 = vpop.f32.mrf.mxu0
        %v3787 = vadd.f32 0.0, %v3786
        %v3788 = vpop.f32.mrf.mxu0
        %3789 = vmatprep.mubr.f32.mxu0 0.0
        %3790 = vmatmul.mubr.f32.gmra.mxu0 %v3534
        %v3791 = vpop.f32.mrf.mxu0
        %v3792 = vadd.f32 0.0, %v3791
        %v3793 = vpop.f32.mrf.mxu0
        %3794 = vmatprep.mubr.f32.mxu0 0.0
        %3795 = vmatmul.mubr.f32.gmra.mxu0 %v3537
        %v3796 = vpop.f32.mrf.mxu0
        %v3797 = vadd.f32 0.0, %v3796
        %v3798 = vpop.f32.mrf.mxu0
        %3799 = vmatprep.mubr.f32.mxu0 0.0
        %3800 = vmatmul.mubr.f32.gmra.mxu0 %v3540
        %v3801 = vpop.f32.mrf.mxu0
        %v3802 = vadd.f32 0.0, %v3801
        %v3803 = vpop.f32.mrf.mxu0
        %3804 = vdwg.mxu0
        %v3805 = vld [vmem:[%s55] sm:$0xff]
        %v3806 = vld [vmem:[%s55 + $0x8] sm:$0xff]
        %v3807 = vld [vmem:[%s55 + $0x10] sm:$0xff]
        %v3808 = vld [vmem:[%s55 + $0x18] sm:$0xff]
        %v3809 = vld [vmem:[%s57] sm:$0x1]
        %v3811 = vsel %vm2346, %v3609, 0
        %v3814 = vsel %vm2346, %v3614, 0
        %v3817 = vsel %vm2346, %v3619, 0
        %v3820 = vsel %vm2346, %v3624, 0
        %v3823 = vsel %vm2346, %v3698, 0
        %v3826 = vsel %vm2346, %v3703, 0
        %v3829 = vsel %vm2346, %v3708, 0
        %v3832 = vsel %vm2346, %v3713, 0
        %3834 = vmatprep.subr.mxu0 0.0
        %3835 = vmatpush1.xpose.msra.mxu0 0.0
        %3836 = vmatprep.subr.mxu0 0.0
        %3837 = vmatpush1.xpose.msra.mxu0 0.0
        %3838 = vmatprep.subr.mxu0 0.0
        %3839 = vmatpush1.xpose.msra.mxu0 0.0
        %3840 = vmatprep.subr.mxu0 0.0
        %3841 = vmatpush1.xpose.msra.mxu0 0.0
        %3842 = vmatprep.subr.mxu0 0.0
        %3843 = vmatpush1.xpose.msra.mxu0 0.0
        %3844 = vmatprep.subr.mxu0 0.0
        %3845 = vmatpush1.xpose.msra.mxu0 0.0
        %3846 = vmatprep.subr.mxu0 0.0
        %3847 = vmatpush1.xpose.msra.mxu0 0.0
        %3848 = vmatprep.subr.mxu0 0.0
        %3849 = vmatpush1.xpose.msra.mxu0 0.0
        %3850 = vmatprep.subr.mxu0 0.0
        %3851 = vmatpush1.xpose.msra.mxu0 0.0
        %3852 = vmatprep.subr.mxu0 0.0
        %3853 = vmatpush1.xpose.msra.mxu0 0.0
        %3854 = vmatprep.subr.mxu0 0.0
        %3855 = vmatpush1.xpose.msra.mxu0 0.0
        %3856 = vmatprep.subr.mxu0 0.0
        %3857 = vmatpush1.xpose.msra.mxu0 0.0
        %3858 = vmatprep.subr.mxu0 0.0
        %3859 = vmatpush1.xpose.msra.mxu0 %v3832
        %3860 = vmatprep.subr.mxu0 0.0
        %3861 = vmatpush1.xpose.msra.mxu0 %v3829
        %3862 = vmatprep.subr.mxu0 0.0
        %3863 = vmatpush1.xpose.msra.mxu0 %v3826
        %3864 = vmatprep.subr.mxu0 0.0
        %3865 = vmatpush1.xpose.msra.mxu0 %v3823
        %3866 = vmatprep.subr.mxu0 0.0
        %3867 = vmatpush2.xpose.msra.mxu0 0.0
        %3868 = vmatprep.subr.mxu0 0.0
        %3869 = vmatpush2.xpose.msra.mxu0 0.0
        %3870 = vmatprep.subr.mxu0 0.0
        %3871 = vmatpush2.xpose.msra.mxu0 0.0
        %3872 = vmatprep.subr.mxu0 0.0
        %3873 = vmatpush2.xpose.msra.mxu0 0.0
        %3874 = vmatprep.subr.mxu0 0.0
        %3875 = vmatpush2.xpose.msra.mxu0 0.0
        %3876 = vmatprep.subr.mxu0 0.0
        %3877 = vmatpush2.xpose.msra.mxu0 0.0
        %3878 = vmatprep.subr.mxu0 0.0
        %3879 = vmatpush2.xpose.msra.mxu0 0.0
        %3880 = vmatprep.subr.mxu0 0.0
        %3881 = vmatpush2.xpose.msra.mxu0 0.0
        %3882 = vmatprep.subr.mxu0 0.0
        %3883 = vmatpush2.xpose.msra.mxu0 0.0
        %3884 = vmatprep.subr.mxu0 0.0
        %3885 = vmatpush2.xpose.msra.mxu0 0.0
        %3886 = vmatprep.subr.mxu0 0.0
        %3887 = vmatpush2.xpose.msra.mxu0 0.0
        %3888 = vmatprep.subr.mxu0 0.0
        %3889 = vmatpush2.xpose.msra.mxu0 0.0
        %3890 = vmatprep.subr.mxu0 0.0
        %3891 = vmatpush2.xpose.msra.mxu0 0.0
        %3892 = vmatprep.subr.mxu0 0.0
        %3893 = vmatpush2.xpose.msra.mxu0 0.0
        %3894 = vmatprep.subr.mxu0 0.0
        %3895 = vmatpush2.xpose.msra.mxu0 0.0
        %3896 = vmatprep.subr.mxu0 0.0
        %3897 = vmatpush2.xpose.msra.mxu0 0.0
        %3898 = vmatprep.mubr.f32.mxu0 0.0
        %3899 = vmatmul.mubr.f32.gmra.mxu0 %v3811
        %v3900 = vpop.f32.mrf.mxu0
        %v3901 = vadd.f32 %v3522, %v3900
        %v3902 = vpop.f32.mrf.mxu0
        %3903 = vmatprep.mubr.f32.mxu0 0.0
        %3904 = vmatmul.mubr.f32.gmra.mxu0 %v3814
        %v3905 = vpop.f32.mrf.mxu0
        %v3906 = vadd.f32 %v3523, %v3905
        %v3907 = vpop.f32.mrf.mxu0
        %3908 = vmatprep.mubr.f32.mxu0 0.0
        %3909 = vmatmul.mubr.f32.gmra.mxu0 %v3817
        %v3910 = vpop.f32.mrf.mxu0
        %v3911 = vadd.f32 %v3524, %v3910
        %v3912 = vpop.f32.mrf.mxu0
        %3913 = vmatprep.mubr.f32.mxu0 0.0
        %3914 = vmatmul.mubr.f32.gmra.mxu0 %v3820
        %v3915 = vpop.f32.mrf.mxu0
        %v3916 = vadd.f32 %v3525, %v3915
        %v3917 = vpop.f32.mrf.mxu0
        %3918 = vdwg.mxu0
        %vm3919 = vcmask 244736
        %v3920 = vsel %vm3919, %v3901, -inf
        %3921 = vmax.xlane.f32.xlu0 %v3920
        %v3922 = vpop.xlane.xlu0 %3921
        %v3923 = vsel %vm3919, %v3906, -inf
        %3924 = vmax.xlane.f32.xlu0 %v3923
        %v3925 = vpop.xlane.xlu0 %3924
        %v3926 = vsel %vm3919, %v3911, -inf
        %3927 = vmax.xlane.f32.xlu0 %v3926
        %v3928 = vpop.xlane.xlu0 %3927
        %vm3929 = vcmask 242688
        %v3930 = vsel %vm3929, %v3916, -inf
        %3931 = vmax.xlane.f32.xlu0 %v3930
        %v3932 = vpop.xlane.xlu0 %3931
        %v3933 = vsub.f32 %v3901, %v3922
        %v3934 = vsub.f32 %v3906, %v3925
        %v3935 = vsub.f32 %v3911, %v3928
        %v3936 = vsub.f32 %v3916, %v3932
        %v3937 = vmul.f32 %v3933, 1.442695
        %v3938 = vpow.pop %v3937
        %v3939 = vmul.f32 %v3934, 1.442695
        %v3940 = vpow.pop %v3939
        %v3941 = vmul.f32 %v3935, 1.442695
        %v3942 = vpow.pop %v3941
        %v3943 = vmul.f32 %v3936, 1.442695
        %v3944 = vpow.pop %v3943
        %v3945 = vsel %vm3919, %v3938, 0.0
        %3946 = vadd.xlane.f32.xlu0 %v3945
        %v3947 = vpop.xlane.xlu0 %3946
        %v3948 = vsel %vm3919, %v3940, 0.0
        %3949 = vadd.xlane.f32.xlu0 %v3948
        %v3950 = vpop.xlane.xlu0 %3949
        %v3951 = vsel %vm3919, %v3942, 0.0
        %3952 = vadd.xlane.f32.xlu0 %v3951
        %v3953 = vpop.xlane.xlu0 %3952
        %v3954 = vsel %vm3929, %v3944, 0.0
        %3955 = vadd.xlane.f32.xlu0 %v3954
        %v3956 = vpop.xlane.xlu0 %3955
        %v3957 = vrcp.pop %v3947
        %v3958 = vrcp.pop %v3950
        %v3959 = vrcp.pop %v3953
        %v3960 = vrcp.pop %v3956
        %v3961 = vmul.f32 %v3938, %v3957
        %v3962 = vmul.f32 %v3940, %v3958
        %v3963 = vmul.f32 %v3942, %v3959
        %v3964 = vmul.f32 %v3944, %v3960
        %v3966 = vsel %vm3919, %v3961, 0
        %v3969 = vsel %vm3919, %v3962, 0
        %v3972 = vsel %vm3919, %v3963, 0
        %v3975 = vsel %vm3919, %v3964, 0
        %vm3977 = vcmask 1045504
        %v3979 = vsel %vm3977, %v3802, 0
        %3981 = vmatprep.subr.mxu0 0.0
        %3982 = vmatpush1.msra.mxu0 0.0
        %3983 = vmatprep.subr.mxu0 0.0
        %3984 = vmatpush1.msra.mxu0 0.0
        %3985 = vmatprep.subr.mxu0 0.0
        %3986 = vmatpush1.msra.mxu0 0.0
        %3987 = vmatprep.subr.mxu0 0.0
        %3988 = vmatpush1.msra.mxu0 0.0
        %3989 = vmatprep.subr.mxu0 0.0
        %3990 = vmatpush1.msra.mxu0 0.0
        %3991 = vmatprep.subr.mxu0 0.0
        %3992 = vmatpush1.msra.mxu0 0.0
        %3993 = vmatprep.subr.mxu0 0.0
        %3994 = vmatpush1.msra.mxu0 0.0
        %3995 = vmatprep.subr.mxu0 0.0
        %3996 = vmatpush1.msra.mxu0 0.0
        %3997 = vmatprep.subr.mxu0 0.0
        %3998 = vmatpush1.msra.mxu0 0.0
        %3999 = vmatprep.subr.mxu0 0.0
        %4000 = vmatpush1.msra.mxu0 0.0
        %4001 = vmatprep.subr.mxu0 0.0
        %4002 = vmatpush1.msra.mxu0 0.0
        %4003 = vmatprep.subr.mxu0 0.0
        %4004 = vmatpush1.msra.mxu0 0.0
        %4005 = vmatprep.subr.mxu0 0.0
        %4006 = vmatpush1.msra.mxu0 %v3979
        %4007 = vmatprep.subr.mxu0 0.0
        %4008 = vmatpush1.msra.mxu0 %v3797
        %4009 = vmatprep.subr.mxu0 0.0
        %4010 = vmatpush1.msra.mxu0 %v3792
        %4011 = vmatprep.subr.mxu0 0.0
        %4012 = vmatpush1.msra.mxu0 %v3787
        %4013 = vmatprep.subr.mxu0 0.0
        %4014 = vmatpush2.msra.mxu0 0.0
        %4015 = vmatprep.subr.mxu0 0.0
        %4016 = vmatpush2.msra.mxu0 0.0
        %4017 = vmatprep.subr.mxu0 0.0
        %4018 = vmatpush2.msra.mxu0 0.0
        %4019 = vmatprep.subr.mxu0 0.0
        %4020 = vmatpush2.msra.mxu0 0.0
        %4021 = vmatprep.subr.mxu0 0.0
        %4022 = vmatpush2.msra.mxu0 0.0
        %4023 = vmatprep.subr.mxu0 0.0
        %4024 = vmatpush2.msra.mxu0 0.0
        %4025 = vmatprep.subr.mxu0 0.0
        %4026 = vmatpush2.msra.mxu0 0.0
        %4027 = vmatprep.subr.mxu0 0.0
        %4028 = vmatpush2.msra.mxu0 0.0
        %4029 = vmatprep.subr.mxu0 0.0
        %4030 = vmatpush2.msra.mxu0 0.0
        %4031 = vmatprep.subr.mxu0 0.0
        %4032 = vmatpush2.msra.mxu0 0.0
        %4033 = vmatprep.subr.mxu0 0.0
        %4034 = vmatpush2.msra.mxu0 0.0
        %4035 = vmatprep.subr.mxu0 0.0
        %4036 = vmatpush2.msra.mxu0 0.0
        %4037 = vmatprep.subr.mxu0 0.0
        %4038 = vmatpush2.msra.mxu0 0.0
        %4039 = vmatprep.subr.mxu0 0.0
        %4040 = vmatpush2.msra.mxu0 0.0
        %4041 = vmatprep.subr.mxu0 0.0
        %4042 = vmatpush2.msra.mxu0 0.0
        %4043 = vmatprep.subr.mxu0 0.0
        %4044 = vmatpush2.msra.mxu0 0.0
        %4045 = vmatprep.mubr.f32.mxu0 0.0
        %4046 = vmatmul.mubr.f32.gmra.mxu0 %v3966
        %v4047 = vpop.f32.mrf.mxu0
        %v4048 = vadd.f32 0.0, %v4047
        %v4049 = vpop.f32.mrf.mxu0
        %4050 = vmatprep.mubr.f32.mxu0 0.0
        %4051 = vmatmul.mubr.f32.gmra.mxu0 %v3969
        %v4052 = vpop.f32.mrf.mxu0
        %v4053 = vadd.f32 0.0, %v4052
        %v4054 = vpop.f32.mrf.mxu0
        %4055 = vmatprep.mubr.f32.mxu0 0.0
        %4056 = vmatmul.mubr.f32.gmra.mxu0 %v3972
        %v4057 = vpop.f32.mrf.mxu0
        %v4058 = vadd.f32 0.0, %v4057
        %v4059 = vpop.f32.mrf.mxu0
        %4060 = vmatprep.mubr.f32.mxu0 0.0
        %4061 = vmatmul.mubr.f32.gmra.mxu0 %v3975
        %v4062 = vpop.f32.mrf.mxu0
        %v4063 = vadd.f32 0.0, %v4062
        %v4064 = vpop.f32.mrf.mxu0
        %4065 = vdwg.mxu0
        %v4067 = vsel %vm2346, %v4048, 0
        %v4070 = vsel %vm2346, %v4053, 0
        %v4073 = vsel %vm2346, %v4058, 0
        %v4076 = vsel %vm2346, %v4063, 0
        %4078 = vmatprep.subr.mxu0 0.0
        %4079 = vmatpush1.msra.mxu0 0.0
        %4080 = vmatprep.subr.mxu0 0.0
        %4081 = vmatpush1.msra.mxu0 0.0
        %4082 = vmatprep.subr.mxu0 0.0
        %4083 = vmatpush1.msra.mxu0 0.0
        %4084 = vmatprep.subr.mxu0 0.0
        %4085 = vmatpush1.msra.mxu0 0.0
        %4086 = vmatprep.subr.mxu0 0.0
        %4087 = vmatpush1.msra.mxu0 0.0
        %4088 = vmatprep.subr.mxu0 0.0
        %4089 = vmatpush1.msra.mxu0 0.0
        %4090 = vmatprep.subr.mxu0 0.0
        %4091 = vmatpush1.msra.mxu0 0.0
        %4092 = vmatprep.subr.mxu0 0.0
        %4093 = vmatpush1.msra.mxu0 0.0
        %4094 = vmatprep.subr.mxu0 0.0
        %4095 = vmatpush1.msra.mxu0 0.0
        %4096 = vmatprep.subr.mxu0 0.0
        %4097 = vmatpush1.msra.mxu0 0.0
        %4098 = vmatprep.subr.mxu0 0.0
        %4099 = vmatpush1.msra.mxu0 0.0
        %4100 = vmatprep.subr.mxu0 0.0
        %4101 = vmatpush1.msra.mxu0 0.0
        %4102 = vmatprep.subr.mxu0 0.0
        %4103 = vmatpush1.msra.mxu0 0.0
        %4104 = vmatprep.subr.mxu0 0.0
        %4105 = vmatpush1.msra.mxu0 0.0
        %4106 = vmatprep.subr.mxu0 0.0
        %4107 = vmatpush1.msra.mxu0 0.0
        %4108 = vmatprep.subr.mxu0 0.0
        %4109 = vmatpush1.msra.mxu0 %v3805
        %4110 = vmatprep.subr.mxu0 0.0
        %4111 = vmatpush2.msra.mxu0 0.0
        %4112 = vmatprep.subr.mxu0 0.0
        %4113 = vmatpush2.msra.mxu0 0.0
        %4114 = vmatprep.subr.mxu0 0.0
        %4115 = vmatpush2.msra.mxu0 0.0
        %4116 = vmatprep.subr.mxu0 0.0
        %4117 = vmatpush2.msra.mxu0 0.0
        %4118 = vmatprep.subr.mxu0 0.0
        %4119 = vmatpush2.msra.mxu0 0.0
        %4120 = vmatprep.subr.mxu0 0.0
        %4121 = vmatpush2.msra.mxu0 0.0
        %4122 = vmatprep.subr.mxu0 0.0
        %4123 = vmatpush2.msra.mxu0 0.0
        %4124 = vmatprep.subr.mxu0 0.0
        %4125 = vmatpush2.msra.mxu0 0.0
        %4126 = vmatprep.subr.mxu0 0.0
        %4127 = vmatpush2.msra.mxu0 0.0
        %4128 = vmatprep.subr.mxu0 0.0
        %4129 = vmatpush2.msra.mxu0 0.0
        %4130 = vmatprep.subr.mxu0 0.0
        %4131 = vmatpush2.msra.mxu0 0.0
        %4132 = vmatprep.subr.mxu0 0.0
        %4133 = vmatpush2.msra.mxu0 0.0
        %4134 = vmatprep.subr.mxu0 0.0
        %4135 = vmatpush2.msra.mxu0 0.0
        %4136 = vmatprep.subr.mxu0 0.0
        %4137 = vmatpush2.msra.mxu0 0.0
        %4138 = vmatprep.subr.mxu0 0.0
        %4139 = vmatpush2.msra.mxu0 0.0
        %4140 = vmatprep.subr.mxu0 0.0
        %4141 = vmatpush2.msra.mxu0 0.0
        %4142 = vmatprep.mubr.f32.mxu0 0.0
        %4143 = vmatmul.mubr.f32.gmra.mxu0 %v4067
        %v4144 = vpop.f32.mrf.mxu0
        %v4145 = vadd.f32 0.0, %v4144
        %v4146 = vpop.f32.mrf.mxu0
        %4147 = vmatprep.mubr.f32.mxu0 0.0
        %4148 = vmatmul.mubr.f32.gmra.mxu0 %v4070
        %v4149 = vpop.f32.mrf.mxu0
        %v4150 = vadd.f32 0.0, %v4149
        %v4151 = vpop.f32.mrf.mxu0
        %4152 = vmatprep.mubr.f32.mxu0 0.0
        %4153 = vmatmul.mubr.f32.gmra.mxu0 %v4073
        %v4154 = vpop.f32.mrf.mxu0
        %v4155 = vadd.f32 0.0, %v4154
        %v4156 = vpop.f32.mrf.mxu0
        %4157 = vmatprep.mubr.f32.mxu0 0.0
        %4158 = vmatmul.mubr.f32.gmra.mxu0 %v4076
        %v4159 = vpop.f32.mrf.mxu0
        %v4160 = vadd.f32 0.0, %v4159
        %v4161 = vpop.f32.mrf.mxu0
        %4162 = vdwg.mxu0
        %v4164 = vlaneseq
        %v4165 = vshrl.u32 %v4164, 7
        %v4166 = vsub.s32 0, %v4165
        %v4167 = vrot.slane %v3809, %v4166
        %v4169 = vadd.f32 %v4167, %v4145
        %v4170 = vadd.f32 %v4167, %v4150
        %v4171 = vadd.f32 %v4167, %v4155
        %v4172 = vadd.f32 %v4167, %v4160
        %4173 = vrot.lane.b32.xlu0 %v3609, 120
        %v4174 = vpop.permute.xlu0 %4173
        %4175 = vrot.lane.b32.xlu0 %v3614, 120
        %v4176 = vpop.permute.xlu0 %4175
        %4177 = vrot.lane.b32.xlu0 %v3619, 120
        %v4178 = vpop.permute.xlu0 %4177
        %4179 = vrot.lane.b32.xlu0 %v3624, 120
        %v4180 = vpop.permute.xlu0 %4179
        %4181 = vrot.lane.b32.xlu0 %v3698, 120
        %v4182 = vpop.permute.xlu0 %4181
        %4183 = vrot.lane.b32.xlu0 %v3703, 120
        %v4184 = vpop.permute.xlu0 %4183
        %4185 = vrot.lane.b32.xlu0 %v3708, 120
        %v4186 = vpop.permute.xlu0 %4185
        %4187 = vrot.lane.b32.xlu0 %v3713, 120
        %v4188 = vpop.permute.xlu0 %4187
        %v4189 = vsel %vm2346, %v4174, 0
        %v4191 = vsel %vm2346, %v4176, 0
        %v4193 = vsel %vm2346, %v4178, 0
        %v4195 = vsel %vm2346, %v4180, 0
        %v4197 = vsel %vm2346, %v4182, 0
        %v4199 = vsel %vm2346, %v4184, 0
        %v4201 = vsel %vm2346, %v4186, 0
        %v4203 = vsel %vm2346, %v4188, 0
        %4205 = vmatprep.subr.mxu0 0.0
        %4206 = vmatpush1.xpose.msra.mxu0 0.0
        %4207 = vmatprep.subr.mxu0 0.0
        %4208 = vmatpush1.xpose.msra.mxu0 0.0
        %4209 = vmatprep.subr.mxu0 0.0
        %4210 = vmatpush1.xpose.msra.mxu0 0.0
        %4211 = vmatprep.subr.mxu0 0.0
        %4212 = vmatpush1.xpose.msra.mxu0 0.0
        %4213 = vmatprep.subr.mxu0 0.0
        %4214 = vmatpush1.xpose.msra.mxu0 0.0
        %4215 = vmatprep.subr.mxu0 0.0
        %4216 = vmatpush1.xpose.msra.mxu0 0.0
        %4217 = vmatprep.subr.mxu0 0.0
        %4218 = vmatpush1.xpose.msra.mxu0 0.0
        %4219 = vmatprep.subr.mxu0 0.0
        %4220 = vmatpush1.xpose.msra.mxu0 0.0
        %4221 = vmatprep.subr.mxu0 0.0
        %4222 = vmatpush1.xpose.msra.mxu0 0.0
        %4223 = vmatprep.subr.mxu0 0.0
        %4224 = vmatpush1.xpose.msra.mxu0 0.0
        %4225 = vmatprep.subr.mxu0 0.0
        %4226 = vmatpush1.xpose.msra.mxu0 0.0
        %4227 = vmatprep.subr.mxu0 0.0
        %4228 = vmatpush1.xpose.msra.mxu0 0.0
        %4229 = vmatprep.subr.mxu0 0.0
        %4230 = vmatpush1.xpose.msra.mxu0 %v4203
        %4231 = vmatprep.subr.mxu0 0.0
        %4232 = vmatpush1.xpose.msra.mxu0 %v4201
        %4233 = vmatprep.subr.mxu0 0.0
        %4234 = vmatpush1.xpose.msra.mxu0 %v4199
        %4235 = vmatprep.subr.mxu0 0.0
        %4236 = vmatpush1.xpose.msra.mxu0 %v4197
        %4237 = vmatprep.subr.mxu0 0.0
        %4238 = vmatpush2.xpose.msra.mxu0 0.0
        %4239 = vmatprep.subr.mxu0 0.0
        %4240 = vmatpush2.xpose.msra.mxu0 0.0
        %4241 = vmatprep.subr.mxu0 0.0
        %4242 = vmatpush2.xpose.msra.mxu0 0.0
        %4243 = vmatprep.subr.mxu0 0.0
        %4244 = vmatpush2.xpose.msra.mxu0 0.0
        %4245 = vmatprep.subr.mxu0 0.0
        %4246 = vmatpush2.xpose.msra.mxu0 0.0
        %4247 = vmatprep.subr.mxu0 0.0
        %4248 = vmatpush2.xpose.msra.mxu0 0.0
        %4249 = vmatprep.subr.mxu0 0.0
        %4250 = vmatpush2.xpose.msra.mxu0 0.0
        %4251 = vmatprep.subr.mxu0 0.0
        %4252 = vmatpush2.xpose.msra.mxu0 0.0
        %4253 = vmatprep.subr.mxu0 0.0
        %4254 = vmatpush2.xpose.msra.mxu0 0.0
        %4255 = vmatprep.subr.mxu0 0.0
        %4256 = vmatpush2.xpose.msra.mxu0 0.0
        %4257 = vmatprep.subr.mxu0 0.0
        %4258 = vmatpush2.xpose.msra.mxu0 0.0
        %4259 = vmatprep.subr.mxu0 0.0
        %4260 = vmatpush2.xpose.msra.mxu0 0.0
        %4261 = vmatprep.subr.mxu0 0.0
        %4262 = vmatpush2.xpose.msra.mxu0 0.0
        %4263 = vmatprep.subr.mxu0 0.0
        %4264 = vmatpush2.xpose.msra.mxu0 0.0
        %4265 = vmatprep.subr.mxu0 0.0
        %4266 = vmatpush2.xpose.msra.mxu0 0.0
        %4267 = vmatprep.subr.mxu0 0.0
        %4268 = vmatpush2.xpose.msra.mxu0 0.0
        %4269 = vmatprep.mubr.f32.mxu0 0.0
        %4270 = vmatmul.mubr.f32.gmra.mxu0 %v4189
        %v4271 = vpop.f32.mrf.mxu0
        %v4272 = vadd.f32 %v3522, %v4271
        %v4273 = vpop.f32.mrf.mxu0
        %4274 = vmatprep.mubr.f32.mxu0 0.0
        %4275 = vmatmul.mubr.f32.gmra.mxu0 %v4191
        %v4276 = vpop.f32.mrf.mxu0
        %v4277 = vadd.f32 %v3523, %v4276
        %v4278 = vpop.f32.mrf.mxu0
        %4279 = vmatprep.mubr.f32.mxu0 0.0
        %4280 = vmatmul.mubr.f32.gmra.mxu0 %v4193
        %v4281 = vpop.f32.mrf.mxu0
        %v4282 = vadd.f32 %v3524, %v4281
        %v4283 = vpop.f32.mrf.mxu0
        %4284 = vmatprep.mubr.f32.mxu0 0.0
        %4285 = vmatmul.mubr.f32.gmra.mxu0 %v4195
        %v4286 = vpop.f32.mrf.mxu0
        %v4287 = vadd.f32 %v3525, %v4286
        %v4288 = vpop.f32.mrf.mxu0
        %4289 = vdwg.mxu0
        %v4290 = vsel %vm3919, %v4272, -inf
        %4291 = vmax.xlane.f32.xlu0 %v4290
        %v4292 = vpop.xlane.xlu0 %4291
        %v4293 = vsel %vm3919, %v4277, -inf
        %4294 = vmax.xlane.f32.xlu0 %v4293
        %v4295 = vpop.xlane.xlu0 %4294
        %v4296 = vsel %vm3919, %v4282, -inf
        %4297 = vmax.xlane.f32.xlu0 %v4296
        %v4298 = vpop.xlane.xlu0 %4297
        %v4299 = vsel %vm3929, %v4287, -inf
        %4300 = vmax.xlane.f32.xlu0 %v4299
        %v4301 = vpop.xlane.xlu0 %4300
        %v4302 = vsub.f32 %v4272, %v4292
        %v4303 = vsub.f32 %v4277, %v4295
        %v4304 = vsub.f32 %v4282, %v4298
        %v4305 = vsub.f32 %v4287, %v4301
        %v4306 = vmul.f32 %v4302, 1.442695
        %v4307 = vpow.pop %v4306
        %v4308 = vmul.f32 %v4303, 1.442695
        %v4309 = vpow.pop %v4308
        %v4310 = vmul.f32 %v4304, 1.442695
        %v4311 = vpow.pop %v4310
        %v4312 = vmul.f32 %v4305, 1.442695
        %v4313 = vpow.pop %v4312
        %v4314 = vsel %vm3919, %v4307, 0.0
        %4315 = vadd.xlane.f32.xlu0 %v4314
        %v4316 = vpop.xlane.xlu0 %4315
        %v4317 = vsel %vm3919, %v4309, 0.0
        %4318 = vadd.xlane.f32.xlu0 %v4317
        %v4319 = vpop.xlane.xlu0 %4318
        %v4320 = vsel %vm3919, %v4311, 0.0
        %4321 = vadd.xlane.f32.xlu0 %v4320
        %v4322 = vpop.xlane.xlu0 %4321
        %v4323 = vsel %vm3929, %v4313, 0.0
        %4324 = vadd.xlane.f32.xlu0 %v4323
        %v4325 = vpop.xlane.xlu0 %4324
        %v4326 = vrcp.pop %v4316
        %v4327 = vrcp.pop %v4319
        %v4328 = vrcp.pop %v4322
        %v4329 = vrcp.pop %v4325
        %v4330 = vmul.f32 %v4307, %v4326
        %v4331 = vmul.f32 %v4309, %v4327
        %v4332 = vmul.f32 %v4311, %v4328
        %v4333 = vmul.f32 %v4313, %v4329
        %4337 = vrot.lane.b32.xlu0 %v3787, 120
        %v4338 = vpop.permute.xlu0 %4337
        %4339 = vrot.lane.b32.xlu0 %v3792, 120
        %v4340 = vpop.permute.xlu0 %4339
        %4341 = vrot.lane.b32.xlu0 %v3797, 120
        %v4342 = vpop.permute.xlu0 %4341
        %4343 = vrot.lane.b32.xlu0 %v3802, 120
        %v4344 = vpop.permute.xlu0 %4343
        %v4349 = vsel %vm3919, %v4330, 0
        %v4352 = vsel %vm3919, %v4331, 0
        %v4355 = vsel %vm3919, %v4332, 0
        %v4358 = vsel %vm3919, %v4333, 0
        %v4360 = vsel %vm3977, %v4344, 0
        %4362 = vmatprep.subr.mxu0 0.0
        %4363 = vmatpush1.msra.mxu0 0.0
        %4364 = vmatprep.subr.mxu0 0.0
        %4365 = vmatpush1.msra.mxu0 0.0
        %4366 = vmatprep.subr.mxu0 0.0
        %4367 = vmatpush1.msra.mxu0 0.0
        %4368 = vmatprep.subr.mxu0 0.0
        %4369 = vmatpush1.msra.mxu0 0.0
        %4370 = vmatprep.subr.mxu0 0.0
        %4371 = vmatpush1.msra.mxu0 0.0
        %4372 = vmatprep.subr.mxu0 0.0
        %4373 = vmatpush1.msra.mxu0 0.0
        %4374 = vmatprep.subr.mxu0 0.0
        %4375 = vmatpush1.msra.mxu0 0.0
        %4376 = vmatprep.subr.mxu0 0.0
        %4377 = vmatpush1.msra.mxu0 0.0
        %4378 = vmatprep.subr.mxu0 0.0
        %4379 = vmatpush1.msra.mxu0 0.0
        %4380 = vmatprep.subr.mxu0 0.0
        %4381 = vmatpush1.msra.mxu0 0.0
        %4382 = vmatprep.subr.mxu0 0.0
        %4383 = vmatpush1.msra.mxu0 0.0
        %4384 = vmatprep.subr.mxu0 0.0
        %4385 = vmatpush1.msra.mxu0 0.0
        %4386 = vmatprep.subr.mxu0 0.0
        %4387 = vmatpush1.msra.mxu0 %v4360
        %4388 = vmatprep.subr.mxu0 0.0
        %4389 = vmatpush1.msra.mxu0 %v4342
        %4390 = vmatprep.subr.mxu0 0.0
        %4391 = vmatpush1.msra.mxu0 %v4340
        %4392 = vmatprep.subr.mxu0 0.0
        %4393 = vmatpush1.msra.mxu0 %v4338
        %4394 = vmatprep.subr.mxu0 0.0
        %4395 = vmatpush2.msra.mxu0 0.0
        %4396 = vmatprep.subr.mxu0 0.0
        %4397 = vmatpush2.msra.mxu0 0.0
        %4398 = vmatprep.subr.mxu0 0.0
        %4399 = vmatpush2.msra.mxu0 0.0
        %4400 = vmatprep.subr.mxu0 0.0
        %4401 = vmatpush2.msra.mxu0 0.0
        %4402 = vmatprep.subr.mxu0 0.0
        %4403 = vmatpush2.msra.mxu0 0.0
        %4404 = vmatprep.subr.mxu0 0.0
        %4405 = vmatpush2.msra.mxu0 0.0
        %4406 = vmatprep.subr.mxu0 0.0
        %4407 = vmatpush2.msra.mxu0 0.0
        %4408 = vmatprep.subr.mxu0 0.0
        %4409 = vmatpush2.msra.mxu0 0.0
        %4410 = vmatprep.subr.mxu0 0.0
        %4411 = vmatpush2.msra.mxu0 0.0
        %4412 = vmatprep.subr.mxu0 0.0
        %4413 = vmatpush2.msra.mxu0 0.0
        %4414 = vmatprep.subr.mxu0 0.0
        %4415 = vmatpush2.msra.mxu0 0.0
        %4416 = vmatprep.subr.mxu0 0.0
        %4417 = vmatpush2.msra.mxu0 0.0
        %4418 = vmatprep.subr.mxu0 0.0
        %4419 = vmatpush2.msra.mxu0 0.0
        %4420 = vmatprep.subr.mxu0 0.0
        %4421 = vmatpush2.msra.mxu0 0.0
        %4422 = vmatprep.subr.mxu0 0.0
        %4423 = vmatpush2.msra.mxu0 0.0
        %4424 = vmatprep.subr.mxu0 0.0
        %4425 = vmatpush2.msra.mxu0 0.0
        %4426 = vmatprep.mubr.f32.mxu0 0.0
        %4427 = vmatmul.mubr.f32.gmra.mxu0 %v4349
        %v4428 = vpop.f32.mrf.mxu0
        %v4429 = vadd.f32 0.0, %v4428
        %v4430 = vpop.f32.mrf.mxu0
        %4431 = vmatprep.mubr.f32.mxu0 0.0
        %4432 = vmatmul.mubr.f32.gmra.mxu0 %v4352
        %v4433 = vpop.f32.mrf.mxu0
        %v4434 = vadd.f32 0.0, %v4433
        %v4435 = vpop.f32.mrf.mxu0
        %4436 = vmatprep.mubr.f32.mxu0 0.0
        %4437 = vmatmul.mubr.f32.gmra.mxu0 %v4355
        %v4438 = vpop.f32.mrf.mxu0
        %v4439 = vadd.f32 0.0, %v4438
        %v4440 = vpop.f32.mrf.mxu0
        %4441 = vmatprep.mubr.f32.mxu0 0.0
        %4442 = vmatmul.mubr.f32.gmra.mxu0 %v4358
        %v4443 = vpop.f32.mrf.mxu0
        %v4444 = vadd.f32 0.0, %v4443
        %v4445 = vpop.f32.mrf.mxu0
        %4446 = vdwg.mxu0
        %v4448 = vsel %vm2346, %v4429, 0
        %v4451 = vsel %vm2346, %v4434, 0
        %v4454 = vsel %vm2346, %v4439, 0
        %v4457 = vsel %vm2346, %v4444, 0
        %4459 = vmatprep.subr.mxu0 0.0
        %4460 = vmatpush1.msra.mxu0 0.0
        %4461 = vmatprep.subr.mxu0 0.0
        %4462 = vmatpush1.msra.mxu0 0.0
        %4463 = vmatprep.subr.mxu0 0.0
        %4464 = vmatpush1.msra.mxu0 0.0
        %4465 = vmatprep.subr.mxu0 0.0
        %4466 = vmatpush1.msra.mxu0 0.0
        %4467 = vmatprep.subr.mxu0 0.0
        %4468 = vmatpush1.msra.mxu0 0.0
        %4469 = vmatprep.subr.mxu0 0.0
        %4470 = vmatpush1.msra.mxu0 0.0
        %4471 = vmatprep.subr.mxu0 0.0
        %4472 = vmatpush1.msra.mxu0 0.0
        %4473 = vmatprep.subr.mxu0 0.0
        %4474 = vmatpush1.msra.mxu0 0.0
        %4475 = vmatprep.subr.mxu0 0.0
        %4476 = vmatpush1.msra.mxu0 0.0
        %4477 = vmatprep.subr.mxu0 0.0
        %4478 = vmatpush1.msra.mxu0 0.0
        %4479 = vmatprep.subr.mxu0 0.0
        %4480 = vmatpush1.msra.mxu0 0.0
        %4481 = vmatprep.subr.mxu0 0.0
        %4482 = vmatpush1.msra.mxu0 0.0
        %4483 = vmatprep.subr.mxu0 0.0
        %4484 = vmatpush1.msra.mxu0 0.0
        %4485 = vmatprep.subr.mxu0 0.0
        %4486 = vmatpush1.msra.mxu0 0.0
        %4487 = vmatprep.subr.mxu0 0.0
        %4488 = vmatpush1.msra.mxu0 0.0
        %4489 = vmatprep.subr.mxu0 0.0
        %4490 = vmatpush1.msra.mxu0 %v3806
        %4491 = vmatprep.subr.mxu0 0.0
        %4492 = vmatpush2.msra.mxu0 0.0
        %4493 = vmatprep.subr.mxu0 0.0
        %4494 = vmatpush2.msra.mxu0 0.0
        %4495 = vmatprep.subr.mxu0 0.0
        %4496 = vmatpush2.msra.mxu0 0.0
        %4497 = vmatprep.subr.mxu0 0.0
        %4498 = vmatpush2.msra.mxu0 0.0
        %4499 = vmatprep.subr.mxu0 0.0
        %4500 = vmatpush2.msra.mxu0 0.0
        %4501 = vmatprep.subr.mxu0 0.0
        %4502 = vmatpush2.msra.mxu0 0.0
        %4503 = vmatprep.subr.mxu0 0.0
        %4504 = vmatpush2.msra.mxu0 0.0
        %4505 = vmatprep.subr.mxu0 0.0
        %4506 = vmatpush2.msra.mxu0 0.0
        %4507 = vmatprep.subr.mxu0 0.0
        %4508 = vmatpush2.msra.mxu0 0.0
        %4509 = vmatprep.subr.mxu0 0.0
        %4510 = vmatpush2.msra.mxu0 0.0
        %4511 = vmatprep.subr.mxu0 0.0
        %4512 = vmatpush2.msra.mxu0 0.0
        %4513 = vmatprep.subr.mxu0 0.0
        %4514 = vmatpush2.msra.mxu0 0.0
        %4515 = vmatprep.subr.mxu0 0.0
        %4516 = vmatpush2.msra.mxu0 0.0
        %4517 = vmatprep.subr.mxu0 0.0
        %4518 = vmatpush2.msra.mxu0 0.0
        %4519 = vmatprep.subr.mxu0 0.0
        %4520 = vmatpush2.msra.mxu0 0.0
        %4521 = vmatprep.subr.mxu0 0.0
        %4522 = vmatpush2.msra.mxu0 0.0
        %4523 = vmatprep.mubr.f32.mxu0 0.0
        %4524 = vmatmul.mubr.f32.gmra.mxu0 %v4448
        %v4525 = vpop.f32.mrf.mxu0
        %v4526 = vadd.f32 0.0, %v4525
        %v4527 = vpop.f32.mrf.mxu0
        %4528 = vmatprep.mubr.f32.mxu0 0.0
        %4529 = vmatmul.mubr.f32.gmra.mxu0 %v4451
        %v4530 = vpop.f32.mrf.mxu0
        %v4531 = vadd.f32 0.0, %v4530
        %v4532 = vpop.f32.mrf.mxu0
        %4533 = vmatprep.mubr.f32.mxu0 0.0
        %4534 = vmatmul.mubr.f32.gmra.mxu0 %v4454
        %v4535 = vpop.f32.mrf.mxu0
        %v4536 = vadd.f32 0.0, %v4535
        %v4537 = vpop.f32.mrf.mxu0
        %4538 = vmatprep.mubr.f32.mxu0 0.0
        %4539 = vmatmul.mubr.f32.gmra.mxu0 %v4457
        %v4540 = vpop.f32.mrf.mxu0
        %v4541 = vadd.f32 0.0, %v4540
        %v4542 = vpop.f32.mrf.mxu0
        %4543 = vdwg.mxu0
        %v4544 = vadd.f32 %v4169, %v4526
        %v4545 = vadd.f32 %v4170, %v4531
        %v4546 = vadd.f32 %v4171, %v4536
        %v4547 = vadd.f32 %v4172, %v4541
        %4548 = vrot.lane.b32.xlu0 %v3609, 112
        %v4549 = vpop.permute.xlu0 %4548
        %4550 = vrot.lane.b32.xlu0 %v3614, 112
        %v4551 = vpop.permute.xlu0 %4550
        %4552 = vrot.lane.b32.xlu0 %v3619, 112
        %v4553 = vpop.permute.xlu0 %4552
        %4554 = vrot.lane.b32.xlu0 %v3624, 112
        %v4555 = vpop.permute.xlu0 %4554
        %4556 = vrot.lane.b32.xlu0 %v3698, 112
        %v4557 = vpop.permute.xlu0 %4556
        %4558 = vrot.lane.b32.xlu0 %v3703, 112
        %v4559 = vpop.permute.xlu0 %4558
        %4560 = vrot.lane.b32.xlu0 %v3708, 112
        %v4561 = vpop.permute.xlu0 %4560
        %4562 = vrot.lane.b32.xlu0 %v3713, 112
        %v4563 = vpop.permute.xlu0 %4562
        %v4564 = vsel %vm2346, %v4549, 0
        %v4566 = vsel %vm2346, %v4551, 0
        %v4568 = vsel %vm2346, %v4553, 0
        %v4570 = vsel %vm2346, %v4555, 0
        %v4572 = vsel %vm2346, %v4557, 0
        %v4574 = vsel %vm2346, %v4559, 0
        %v4576 = vsel %vm2346, %v4561, 0
        %v4578 = vsel %vm2346, %v4563, 0
        %4580 = vmatprep.subr.mxu0 0.0
        %4581 = vmatpush1.xpose.msra.mxu0 0.0
        %4582 = vmatprep.subr.mxu0 0.0
        %4583 = vmatpush1.xpose.msra.mxu0 0.0
        %4584 = vmatprep.subr.mxu0 0.0
        %4585 = vmatpush1.xpose.msra.mxu0 0.0
        %4586 = vmatprep.subr.mxu0 0.0
        %4587 = vmatpush1.xpose.msra.mxu0 0.0
        %4588 = vmatprep.subr.mxu0 0.0
        %4589 = vmatpush1.xpose.msra.mxu0 0.0
        %4590 = vmatprep.subr.mxu0 0.0
        %4591 = vmatpush1.xpose.msra.mxu0 0.0
        %4592 = vmatprep.subr.mxu0 0.0
        %4593 = vmatpush1.xpose.msra.mxu0 0.0
        %4594 = vmatprep.subr.mxu0 0.0
        %4595 = vmatpush1.xpose.msra.mxu0 0.0
        %4596 = vmatprep.subr.mxu0 0.0
        %4597 = vmatpush1.xpose.msra.mxu0 0.0
        %4598 = vmatprep.subr.mxu0 0.0
        %4599 = vmatpush1.xpose.msra.mxu0 0.0
        %4600 = vmatprep.subr.mxu0 0.0
        %4601 = vmatpush1.xpose.msra.mxu0 0.0
        %4602 = vmatprep.subr.mxu0 0.0
        %4603 = vmatpush1.xpose.msra.mxu0 0.0
        %4604 = vmatprep.subr.mxu0 0.0
        %4605 = vmatpush1.xpose.msra.mxu0 %v4578
        %4606 = vmatprep.subr.mxu0 0.0
        %4607 = vmatpush1.xpose.msra.mxu0 %v4576
        %4608 = vmatprep.subr.mxu0 0.0
        %4609 = vmatpush1.xpose.msra.mxu0 %v4574
        %4610 = vmatprep.subr.mxu0 0.0
        %4611 = vmatpush1.xpose.msra.mxu0 %v4572
        %4612 = vmatprep.subr.mxu0 0.0
        %4613 = vmatpush2.xpose.msra.mxu0 0.0
        %4614 = vmatprep.subr.mxu0 0.0
        %4615 = vmatpush2.xpose.msra.mxu0 0.0
        %4616 = vmatprep.subr.mxu0 0.0
        %4617 = vmatpush2.xpose.msra.mxu0 0.0
        %4618 = vmatprep.subr.mxu0 0.0
        %4619 = vmatpush2.xpose.msra.mxu0 0.0
        %4620 = vmatprep.subr.mxu0 0.0
        %4621 = vmatpush2.xpose.msra.mxu0 0.0
        %4622 = vmatprep.subr.mxu0 0.0
        %4623 = vmatpush2.xpose.msra.mxu0 0.0
        %4624 = vmatprep.subr.mxu0 0.0
        %4625 = vmatpush2.xpose.msra.mxu0 0.0
        %4626 = vmatprep.subr.mxu0 0.0
        %4627 = vmatpush2.xpose.msra.mxu0 0.0
        %4628 = vmatprep.subr.mxu0 0.0
        %4629 = vmatpush2.xpose.msra.mxu0 0.0
        %4630 = vmatprep.subr.mxu0 0.0
        %4631 = vmatpush2.xpose.msra.mxu0 0.0
        %4632 = vmatprep.subr.mxu0 0.0
        %4633 = vmatpush2.xpose.msra.mxu0 0.0
        %4634 = vmatprep.subr.mxu0 0.0
        %4635 = vmatpush2.xpose.msra.mxu0 0.0
        %4636 = vmatprep.subr.mxu0 0.0
        %4637 = vmatpush2.xpose.msra.mxu0 0.0
        %4638 = vmatprep.subr.mxu0 0.0
        %4639 = vmatpush2.xpose.msra.mxu0 0.0
        %4640 = vmatprep.subr.mxu0 0.0
        %4641 = vmatpush2.xpose.msra.mxu0 0.0
        %4642 = vmatprep.subr.mxu0 0.0
        %4643 = vmatpush2.xpose.msra.mxu0 0.0
        %4644 = vmatprep.mubr.f32.mxu0 0.0
        %4645 = vmatmul.mubr.f32.gmra.mxu0 %v4564
        %v4646 = vpop.f32.mrf.mxu0
        %v4647 = vadd.f32 %v3522, %v4646
        %v4648 = vpop.f32.mrf.mxu0
        %4649 = vmatprep.mubr.f32.mxu0 0.0
        %4650 = vmatmul.mubr.f32.gmra.mxu0 %v4566
        %v4651 = vpop.f32.mrf.mxu0
        %v4652 = vadd.f32 %v3523, %v4651
        %v4653 = vpop.f32.mrf.mxu0
        %4654 = vmatprep.mubr.f32.mxu0 0.0
        %4655 = vmatmul.mubr.f32.gmra.mxu0 %v4568
        %v4656 = vpop.f32.mrf.mxu0
        %v4657 = vadd.f32 %v3524, %v4656
        %v4658 = vpop.f32.mrf.mxu0
        %4659 = vmatprep.mubr.f32.mxu0 0.0
        %4660 = vmatmul.mubr.f32.gmra.mxu0 %v4570
        %v4661 = vpop.f32.mrf.mxu0
        %v4662 = vadd.f32 %v3525, %v4661
        %v4663 = vpop.f32.mrf.mxu0
        %4664 = vdwg.mxu0
        %v4665 = vsel %vm3919, %v4647, -inf
        %4666 = vmax.xlane.f32.xlu0 %v4665
        %v4667 = vpop.xlane.xlu0 %4666
        %v4668 = vsel %vm3919, %v4652, -inf
        %4669 = vmax.xlane.f32.xlu0 %v4668
        %v4670 = vpop.xlane.xlu0 %4669
        %v4671 = vsel %vm3919, %v4657, -inf
        %4672 = vmax.xlane.f32.xlu0 %v4671
        %v4673 = vpop.xlane.xlu0 %4672
        %v4674 = vsel %vm3929, %v4662, -inf
        %4675 = vmax.xlane.f32.xlu0 %v4674
        %v4676 = vpop.xlane.xlu0 %4675
        %v4677 = vsub.f32 %v4647, %v4667
        %v4678 = vsub.f32 %v4652, %v4670
        %v4679 = vsub.f32 %v4657, %v4673
        %v4680 = vsub.f32 %v4662, %v4676
        %v4681 = vmul.f32 %v4677, 1.442695
        %v4682 = vpow.pop %v4681
        %v4683 = vmul.f32 %v4678, 1.442695
        %v4684 = vpow.pop %v4683
        %v4685 = vmul.f32 %v4679, 1.442695
        %v4686 = vpow.pop %v4685
        %v4687 = vmul.f32 %v4680, 1.442695
        %v4688 = vpow.pop %v4687
        %v4689 = vsel %vm3919, %v4682, 0.0
        %4690 = vadd.xlane.f32.xlu0 %v4689
        %v4691 = vpop.xlane.xlu0 %4690
        %v4692 = vsel %vm3919, %v4684, 0.0
        %4693 = vadd.xlane.f32.xlu0 %v4692
        %v4694 = vpop.xlane.xlu0 %4693
        %v4695 = vsel %vm3919, %v4686, 0.0
        %4696 = vadd.xlane.f32.xlu0 %v4695
        %v4697 = vpop.xlane.xlu0 %4696
        %v4698 = vsel %vm3929, %v4688, 0.0
        %4699 = vadd.xlane.f32.xlu0 %v4698
        %v4700 = vpop.xlane.xlu0 %4699
        %v4701 = vrcp.pop %v4691
        %v4702 = vrcp.pop %v4694
        %v4703 = vrcp.pop %v4697
        %v4704 = vrcp.pop %v4700
        %v4705 = vmul.f32 %v4682, %v4701
        %v4706 = vmul.f32 %v4684, %v4702
        %v4707 = vmul.f32 %v4686, %v4703
        %v4708 = vmul.f32 %v4688, %v4704
        %4709 = vrot.lane.b32.xlu0 %v3787, 112
        %v4710 = vpop.permute.xlu0 %4709
        %4711 = vrot.lane.b32.xlu0 %v3792, 112
        %v4712 = vpop.permute.xlu0 %4711
        %4713 = vrot.lane.b32.xlu0 %v3797, 112
        %v4714 = vpop.permute.xlu0 %4713
        %4715 = vrot.lane.b32.xlu0 %v3802, 112
        %v4716 = vpop.permute.xlu0 %4715
        %v4721 = vsel %vm3919, %v4705, 0
        %v4724 = vsel %vm3919, %v4706, 0
        %v4727 = vsel %vm3919, %v4707, 0
        %v4730 = vsel %vm3919, %v4708, 0
        %v4732 = vsel %vm3977, %v4716, 0
        %4734 = vmatprep.subr.mxu0 0.0
        %4735 = vmatpush1.msra.mxu0 0.0
        %4736 = vmatprep.subr.mxu0 0.0
        %4737 = vmatpush1.msra.mxu0 0.0
        %4738 = vmatprep.subr.mxu0 0.0
        %4739 = vmatpush1.msra.mxu0 0.0
        %4740 = vmatprep.subr.mxu0 0.0
        %4741 = vmatpush1.msra.mxu0 0.0
        %4742 = vmatprep.subr.mxu0 0.0
        %4743 = vmatpush1.msra.mxu0 0.0
        %4744 = vmatprep.subr.mxu0 0.0
        %4745 = vmatpush1.msra.mxu0 0.0
        %4746 = vmatprep.subr.mxu0 0.0
        %4747 = vmatpush1.msra.mxu0 0.0
        %4748 = vmatprep.subr.mxu0 0.0
        %4749 = vmatpush1.msra.mxu0 0.0
        %4750 = vmatprep.subr.mxu0 0.0
        %4751 = vmatpush1.msra.mxu0 0.0
        %4752 = vmatprep.subr.mxu0 0.0
        %4753 = vmatpush1.msra.mxu0 0.0
        %4754 = vmatprep.subr.mxu0 0.0
        %4755 = vmatpush1.msra.mxu0 0.0
        %4756 = vmatprep.subr.mxu0 0.0
        %4757 = vmatpush1.msra.mxu0 0.0
        %4758 = vmatprep.subr.mxu0 0.0
        %4759 = vmatpush1.msra.mxu0 %v4732
        %4760 = vmatprep.subr.mxu0 0.0
        %4761 = vmatpush1.msra.mxu0 %v4714
        %4762 = vmatprep.subr.mxu0 0.0
        %4763 = vmatpush1.msra.mxu0 %v4712
        %4764 = vmatprep.subr.mxu0 0.0
        %4765 = vmatpush1.msra.mxu0 %v4710
        %4766 = vmatprep.subr.mxu0 0.0
        %4767 = vmatpush2.msra.mxu0 0.0
        %4768 = vmatprep.subr.mxu0 0.0
        %4769 = vmatpush2.msra.mxu0 0.0
        %4770 = vmatprep.subr.mxu0 0.0
        %4771 = vmatpush2.msra.mxu0 0.0
        %4772 = vmatprep.subr.mxu0 0.0
        %4773 = vmatpush2.msra.mxu0 0.0
        %4774 = vmatprep.subr.mxu0 0.0
        %4775 = vmatpush2.msra.mxu0 0.0
        %4776 = vmatprep.subr.mxu0 0.0
        %4777 = vmatpush2.msra.mxu0 0.0
        %4778 = vmatprep.subr.mxu0 0.0
        %4779 = vmatpush2.msra.mxu0 0.0
        %4780 = vmatprep.subr.mxu0 0.0
        %4781 = vmatpush2.msra.mxu0 0.0
        %4782 = vmatprep.subr.mxu0 0.0
        %4783 = vmatpush2.msra.mxu0 0.0
        %4784 = vmatprep.subr.mxu0 0.0
        %4785 = vmatpush2.msra.mxu0 0.0
        %4786 = vmatprep.subr.mxu0 0.0
        %4787 = vmatpush2.msra.mxu0 0.0
        %4788 = vmatprep.subr.mxu0 0.0
        %4789 = vmatpush2.msra.mxu0 0.0
        %4790 = vmatprep.subr.mxu0 0.0
        %4791 = vmatpush2.msra.mxu0 0.0
        %4792 = vmatprep.subr.mxu0 0.0
        %4793 = vmatpush2.msra.mxu0 0.0
        %4794 = vmatprep.subr.mxu0 0.0
        %4795 = vmatpush2.msra.mxu0 0.0
        %4796 = vmatprep.subr.mxu0 0.0
        %4797 = vmatpush2.msra.mxu0 0.0
        %4798 = vmatprep.mubr.f32.mxu0 0.0
        %4799 = vmatmul.mubr.f32.gmra.mxu0 %v4721
        %v4800 = vpop.f32.mrf.mxu0
        %v4801 = vadd.f32 0.0, %v4800
        %v4802 = vpop.f32.mrf.mxu0
        %4803 = vmatprep.mubr.f32.mxu0 0.0
        %4804 = vmatmul.mubr.f32.gmra.mxu0 %v4724
        %v4805 = vpop.f32.mrf.mxu0
        %v4806 = vadd.f32 0.0, %v4805
        %v4807 = vpop.f32.mrf.mxu0
        %4808 = vmatprep.mubr.f32.mxu0 0.0
        %4809 = vmatmul.mubr.f32.gmra.mxu0 %v4727
        %v4810 = vpop.f32.mrf.mxu0
        %v4811 = vadd.f32 0.0, %v4810
        %v4812 = vpop.f32.mrf.mxu0
        %4813 = vmatprep.mubr.f32.mxu0 0.0
        %4814 = vmatmul.mubr.f32.gmra.mxu0 %v4730
        %v4815 = vpop.f32.mrf.mxu0
        %v4816 = vadd.f32 0.0, %v4815
        %v4817 = vpop.f32.mrf.mxu0
        %4818 = vdwg.mxu0
        %v4820 = vsel %vm2346, %v4801, 0
        %v4823 = vsel %vm2346, %v4806, 0
        %v4826 = vsel %vm2346, %v4811, 0
        %v4829 = vsel %vm2346, %v4816, 0
        %4831 = vmatprep.subr.mxu0 0.0
        %4832 = vmatpush1.msra.mxu0 0.0
        %4833 = vmatprep.subr.mxu0 0.0
        %4834 = vmatpush1.msra.mxu0 0.0
        %4835 = vmatprep.subr.mxu0 0.0
        %4836 = vmatpush1.msra.mxu0 0.0
        %4837 = vmatprep.subr.mxu0 0.0
        %4838 = vmatpush1.msra.mxu0 0.0
        %4839 = vmatprep.subr.mxu0 0.0
        %4840 = vmatpush1.msra.mxu0 0.0
        %4841 = vmatprep.subr.mxu0 0.0
        %4842 = vmatpush1.msra.mxu0 0.0
        %4843 = vmatprep.subr.mxu0 0.0
        %4844 = vmatpush1.msra.mxu0 0.0
        %4845 = vmatprep.subr.mxu0 0.0
        %4846 = vmatpush1.msra.mxu0 0.0
        %4847 = vmatprep.subr.mxu0 0.0
        %4848 = vmatpush1.msra.mxu0 0.0
        %4849 = vmatprep.subr.mxu0 0.0
        %4850 = vmatpush1.msra.mxu0 0.0
        %4851 = vmatprep.subr.mxu0 0.0
        %4852 = vmatpush1.msra.mxu0 0.0
        %4853 = vmatprep.subr.mxu0 0.0
        %4854 = vmatpush1.msra.mxu0 0.0
        %4855 = vmatprep.subr.mxu0 0.0
        %4856 = vmatpush1.msra.mxu0 0.0
        %4857 = vmatprep.subr.mxu0 0.0
        %4858 = vmatpush1.msra.mxu0 0.0
        %4859 = vmatprep.subr.mxu0 0.0
        %4860 = vmatpush1.msra.mxu0 0.0
        %4861 = vmatprep.subr.mxu0 0.0
        %4862 = vmatpush1.msra.mxu0 %v3807
        %4863 = vmatprep.subr.mxu0 0.0
        %4864 = vmatpush2.msra.mxu0 0.0
        %4865 = vmatprep.subr.mxu0 0.0
        %4866 = vmatpush2.msra.mxu0 0.0
        %4867 = vmatprep.subr.mxu0 0.0
        %4868 = vmatpush2.msra.mxu0 0.0
        %4869 = vmatprep.subr.mxu0 0.0
        %4870 = vmatpush2.msra.mxu0 0.0
        %4871 = vmatprep.subr.mxu0 0.0
        %4872 = vmatpush2.msra.mxu0 0.0
        %4873 = vmatprep.subr.mxu0 0.0
        %4874 = vmatpush2.msra.mxu0 0.0
        %4875 = vmatprep.subr.mxu0 0.0
        %4876 = vmatpush2.msra.mxu0 0.0
        %4877 = vmatprep.subr.mxu0 0.0
        %4878 = vmatpush2.msra.mxu0 0.0
        %4879 = vmatprep.subr.mxu0 0.0
        %4880 = vmatpush2.msra.mxu0 0.0
        %4881 = vmatprep.subr.mxu0 0.0
        %4882 = vmatpush2.msra.mxu0 0.0
        %4883 = vmatprep.subr.mxu0 0.0
        %4884 = vmatpush2.msra.mxu0 0.0
        %4885 = vmatprep.subr.mxu0 0.0
        %4886 = vmatpush2.msra.mxu0 0.0
        %4887 = vmatprep.subr.mxu0 0.0
        %4888 = vmatpush2.msra.mxu0 0.0
        %4889 = vmatprep.subr.mxu0 0.0
        %4890 = vmatpush2.msra.mxu0 0.0
        %4891 = vmatprep.subr.mxu0 0.0
        %4892 = vmatpush2.msra.mxu0 0.0
        %4893 = vmatprep.subr.mxu0 0.0
        %4894 = vmatpush2.msra.mxu0 0.0
        %4895 = vmatprep.mubr.f32.mxu0 0.0
        %4896 = vmatmul.mubr.f32.gmra.mxu0 %v4820
        %v4897 = vpop.f32.mrf.mxu0
        %v4898 = vadd.f32 0.0, %v4897
        %v4899 = vpop.f32.mrf.mxu0
        %4900 = vmatprep.mubr.f32.mxu0 0.0
        %4901 = vmatmul.mubr.f32.gmra.mxu0 %v4823
        %v4902 = vpop.f32.mrf.mxu0
        %v4903 = vadd.f32 0.0, %v4902
        %v4904 = vpop.f32.mrf.mxu0
        %4905 = vmatprep.mubr.f32.mxu0 0.0
        %4906 = vmatmul.mubr.f32.gmra.mxu0 %v4826
        %v4907 = vpop.f32.mrf.mxu0
        %v4908 = vadd.f32 0.0, %v4907
        %v4909 = vpop.f32.mrf.mxu0
        %4910 = vmatprep.mubr.f32.mxu0 0.0
        %4911 = vmatmul.mubr.f32.gmra.mxu0 %v4829
        %v4912 = vpop.f32.mrf.mxu0
        %v4913 = vadd.f32 0.0, %v4912
        %v4914 = vpop.f32.mrf.mxu0
        %4915 = vdwg.mxu0
        %v4916 = vadd.f32 %v4544, %v4898
        %v4917 = vadd.f32 %v4545, %v4903
        %v4918 = vadd.f32 %v4546, %v4908
        %v4919 = vadd.f32 %v4547, %v4913
        %4920 = vrot.lane.b32.xlu0 %v3609, 104
        %v4921 = vpop.permute.xlu0 %4920
        %4922 = vrot.lane.b32.xlu0 %v3614, 104
        %v4923 = vpop.permute.xlu0 %4922
        %4924 = vrot.lane.b32.xlu0 %v3619, 104
        %v4925 = vpop.permute.xlu0 %4924
        %4926 = vrot.lane.b32.xlu0 %v3624, 104
        %v4927 = vpop.permute.xlu0 %4926
        %4928 = vrot.lane.b32.xlu0 %v3698, 104
        %v4929 = vpop.permute.xlu0 %4928
        %4930 = vrot.lane.b32.xlu0 %v3703, 104
        %v4931 = vpop.permute.xlu0 %4930
        %4932 = vrot.lane.b32.xlu0 %v3708, 104
        %v4933 = vpop.permute.xlu0 %4932
        %4934 = vrot.lane.b32.xlu0 %v3713, 104
        %v4935 = vpop.permute.xlu0 %4934
        %v4936 = vsel %vm2346, %v4921, 0
        %v4938 = vsel %vm2346, %v4923, 0
        %v4940 = vsel %vm2346, %v4925, 0
        %v4942 = vsel %vm2346, %v4927, 0
        %v4944 = vsel %vm2346, %v4929, 0
        %v4946 = vsel %vm2346, %v4931, 0
        %v4948 = vsel %vm2346, %v4933, 0
        %v4950 = vsel %vm2346, %v4935, 0
        %4952 = vmatprep.subr.mxu0 0.0
        %4953 = vmatpush1.xpose.msra.mxu0 0.0
        %4954 = vmatprep.subr.mxu0 0.0
        %4955 = vmatpush1.xpose.msra.mxu0 0.0
        %4956 = vmatprep.subr.mxu0 0.0
        %4957 = vmatpush1.xpose.msra.mxu0 0.0
        %4958 = vmatprep.subr.mxu0 0.0
        %4959 = vmatpush1.xpose.msra.mxu0 0.0
        %4960 = vmatprep.subr.mxu0 0.0
        %4961 = vmatpush1.xpose.msra.mxu0 0.0
        %4962 = vmatprep.subr.mxu0 0.0
        %4963 = vmatpush1.xpose.msra.mxu0 0.0
        %4964 = vmatprep.subr.mxu0 0.0
        %4965 = vmatpush1.xpose.msra.mxu0 0.0
        %4966 = vmatprep.subr.mxu0 0.0
        %4967 = vmatpush1.xpose.msra.mxu0 0.0
        %4968 = vmatprep.subr.mxu0 0.0
        %4969 = vmatpush1.xpose.msra.mxu0 0.0
        %4970 = vmatprep.subr.mxu0 0.0
        %4971 = vmatpush1.xpose.msra.mxu0 0.0
        %4972 = vmatprep.subr.mxu0 0.0
        %4973 = vmatpush1.xpose.msra.mxu0 0.0
        %4974 = vmatprep.subr.mxu0 0.0
        %4975 = vmatpush1.xpose.msra.mxu0 0.0
        %4976 = vmatprep.subr.mxu0 0.0
        %4977 = vmatpush1.xpose.msra.mxu0 %v4950
        %4978 = vmatprep.subr.mxu0 0.0
        %4979 = vmatpush1.xpose.msra.mxu0 %v4948
        %4980 = vmatprep.subr.mxu0 0.0
        %4981 = vmatpush1.xpose.msra.mxu0 %v4946
        %4982 = vmatprep.subr.mxu0 0.0
        %4983 = vmatpush1.xpose.msra.mxu0 %v4944
        %4984 = vmatprep.subr.mxu0 0.0
        %4985 = vmatpush2.xpose.msra.mxu0 0.0
        %4986 = vmatprep.subr.mxu0 0.0
        %4987 = vmatpush2.xpose.msra.mxu0 0.0
        %4988 = vmatprep.subr.mxu0 0.0
        %4989 = vmatpush2.xpose.msra.mxu0 0.0
        %4990 = vmatprep.subr.mxu0 0.0
        %4991 = vmatpush2.xpose.msra.mxu0 0.0
        %4992 = vmatprep.subr.mxu0 0.0
        %4993 = vmatpush2.xpose.msra.mxu0 0.0
        %4994 = vmatprep.subr.mxu0 0.0
        %4995 = vmatpush2.xpose.msra.mxu0 0.0
        %4996 = vmatprep.subr.mxu0 0.0
        %4997 = vmatpush2.xpose.msra.mxu0 0.0
        %4998 = vmatprep.subr.mxu0 0.0
        %4999 = vmatpush2.xpose.msra.mxu0 0.0
        %5000 = vmatprep.subr.mxu0 0.0
        %5001 = vmatpush2.xpose.msra.mxu0 0.0
        %5002 = vmatprep.subr.mxu0 0.0
        %5003 = vmatpush2.xpose.msra.mxu0 0.0
        %5004 = vmatprep.subr.mxu0 0.0
        %5005 = vmatpush2.xpose.msra.mxu0 0.0
        %5006 = vmatprep.subr.mxu0 0.0
        %5007 = vmatpush2.xpose.msra.mxu0 0.0
        %5008 = vmatprep.subr.mxu0 0.0
        %5009 = vmatpush2.xpose.msra.mxu0 0.0
        %5010 = vmatprep.subr.mxu0 0.0
        %5011 = vmatpush2.xpose.msra.mxu0 0.0
        %5012 = vmatprep.subr.mxu0 0.0
        %5013 = vmatpush2.xpose.msra.mxu0 0.0
        %5014 = vmatprep.subr.mxu0 0.0
        %5015 = vmatpush2.xpose.msra.mxu0 0.0
        %5016 = vmatprep.mubr.f32.mxu0 0.0
        %5017 = vmatmul.mubr.f32.gmra.mxu0 %v4936
        %v5018 = vpop.f32.mrf.mxu0
        %v5019 = vadd.f32 %v3522, %v5018
        %v5020 = vpop.f32.mrf.mxu0
        %5021 = vmatprep.mubr.f32.mxu0 0.0
        %5022 = vmatmul.mubr.f32.gmra.mxu0 %v4938
        %v5023 = vpop.f32.mrf.mxu0
        %v5024 = vadd.f32 %v3523, %v5023
        %v5025 = vpop.f32.mrf.mxu0
        %5026 = vmatprep.mubr.f32.mxu0 0.0
        %5027 = vmatmul.mubr.f32.gmra.mxu0 %v4940
        %v5028 = vpop.f32.mrf.mxu0
        %v5029 = vadd.f32 %v3524, %v5028
        %v5030 = vpop.f32.mrf.mxu0
        %5031 = vmatprep.mubr.f32.mxu0 0.0
        %5032 = vmatmul.mubr.f32.gmra.mxu0 %v4942
        %v5033 = vpop.f32.mrf.mxu0
        %v5034 = vadd.f32 %v3525, %v5033
        %v5035 = vpop.f32.mrf.mxu0
        %5036 = vdwg.mxu0
        %v5037 = vsel %vm3919, %v5019, -inf
        %5038 = vmax.xlane.f32.xlu0 %v5037
        %v5039 = vpop.xlane.xlu0 %5038
        %v5040 = vsel %vm3919, %v5024, -inf
        %5041 = vmax.xlane.f32.xlu0 %v5040
        %v5042 = vpop.xlane.xlu0 %5041
        %v5043 = vsel %vm3919, %v5029, -inf
        %5044 = vmax.xlane.f32.xlu0 %v5043
        %v5045 = vpop.xlane.xlu0 %5044
        %v5046 = vsel %vm3929, %v5034, -inf
        %5047 = vmax.xlane.f32.xlu0 %v5046
        %v5048 = vpop.xlane.xlu0 %5047
        %v5049 = vsub.f32 %v5019, %v5039
        %v5050 = vsub.f32 %v5024, %v5042
        %v5051 = vsub.f32 %v5029, %v5045
        %v5052 = vsub.f32 %v5034, %v5048
        %v5053 = vmul.f32 %v5049, 1.442695
        %v5054 = vpow.pop %v5053
        %v5055 = vmul.f32 %v5050, 1.442695
        %v5056 = vpow.pop %v5055
        %v5057 = vmul.f32 %v5051, 1.442695
        %v5058 = vpow.pop %v5057
        %v5059 = vmul.f32 %v5052, 1.442695
        %v5060 = vpow.pop %v5059
        %v5061 = vsel %vm3919, %v5054, 0.0
        %5062 = vadd.xlane.f32.xlu0 %v5061
        %v5063 = vpop.xlane.xlu0 %5062
        %v5064 = vsel %vm3919, %v5056, 0.0
        %5065 = vadd.xlane.f32.xlu0 %v5064
        %v5066 = vpop.xlane.xlu0 %5065
        %v5067 = vsel %vm3919, %v5058, 0.0
        %5068 = vadd.xlane.f32.xlu0 %v5067
        %v5069 = vpop.xlane.xlu0 %5068
        %v5070 = vsel %vm3929, %v5060, 0.0
        %5071 = vadd.xlane.f32.xlu0 %v5070
        %v5072 = vpop.xlane.xlu0 %5071
        %v5073 = vrcp.pop %v5063
        %v5074 = vrcp.pop %v5066
        %v5075 = vrcp.pop %v5069
        %v5076 = vrcp.pop %v5072
        %v5077 = vmul.f32 %v5054, %v5073
        %v5078 = vmul.f32 %v5056, %v5074
        %v5079 = vmul.f32 %v5058, %v5075
        %v5080 = vmul.f32 %v5060, %v5076
        %5081 = vrot.lane.b32.xlu0 %v3787, 104
        %v5082 = vpop.permute.xlu0 %5081
        %5083 = vrot.lane.b32.xlu0 %v3792, 104
        %v5084 = vpop.permute.xlu0 %5083
        %5085 = vrot.lane.b32.xlu0 %v3797, 104
        %v5086 = vpop.permute.xlu0 %5085
        %5087 = vrot.lane.b32.xlu0 %v3802, 104
        %v5088 = vpop.permute.xlu0 %5087
        %v5093 = vsel %vm3919, %v5077, 0
        %v5096 = vsel %vm3919, %v5078, 0
        %v5099 = vsel %vm3919, %v5079, 0
        %v5102 = vsel %vm3919, %v5080, 0
        %v5104 = vsel %vm3977, %v5088, 0
        %5106 = vmatprep.subr.mxu0 0.0
        %5107 = vmatpush1.msra.mxu0 0.0
        %5108 = vmatprep.subr.mxu0 0.0
        %5109 = vmatpush1.msra.mxu0 0.0
        %5110 = vmatprep.subr.mxu0 0.0
        %5111 = vmatpush1.msra.mxu0 0.0
        %5112 = vmatprep.subr.mxu0 0.0
        %5113 = vmatpush1.msra.mxu0 0.0
        %5114 = vmatprep.subr.mxu0 0.0
        %5115 = vmatpush1.msra.mxu0 0.0
        %5116 = vmatprep.subr.mxu0 0.0
        %5117 = vmatpush1.msra.mxu0 0.0
        %5118 = vmatprep.subr.mxu0 0.0
        %5119 = vmatpush1.msra.mxu0 0.0
        %5120 = vmatprep.subr.mxu0 0.0
        %5121 = vmatpush1.msra.mxu0 0.0
        %5122 = vmatprep.subr.mxu0 0.0
        %5123 = vmatpush1.msra.mxu0 0.0
        %5124 = vmatprep.subr.mxu0 0.0
        %5125 = vmatpush1.msra.mxu0 0.0
        %5126 = vmatprep.subr.mxu0 0.0
        %5127 = vmatpush1.msra.mxu0 0.0
        %5128 = vmatprep.subr.mxu0 0.0
        %5129 = vmatpush1.msra.mxu0 0.0
        %5130 = vmatprep.subr.mxu0 0.0
        %5131 = vmatpush1.msra.mxu0 %v5104
        %5132 = vmatprep.subr.mxu0 0.0
        %5133 = vmatpush1.msra.mxu0 %v5086
        %5134 = vmatprep.subr.mxu0 0.0
        %5135 = vmatpush1.msra.mxu0 %v5084
        %5136 = vmatprep.subr.mxu0 0.0
        %5137 = vmatpush1.msra.mxu0 %v5082
        %5138 = vmatprep.subr.mxu0 0.0
        %5139 = vmatpush2.msra.mxu0 0.0
        %5140 = vmatprep.subr.mxu0 0.0
        %5141 = vmatpush2.msra.mxu0 0.0
        %5142 = vmatprep.subr.mxu0 0.0
        %5143 = vmatpush2.msra.mxu0 0.0
        %5144 = vmatprep.subr.mxu0 0.0
        %5145 = vmatpush2.msra.mxu0 0.0
        %5146 = vmatprep.subr.mxu0 0.0
        %5147 = vmatpush2.msra.mxu0 0.0
        %5148 = vmatprep.subr.mxu0 0.0
        %5149 = vmatpush2.msra.mxu0 0.0
        %5150 = vmatprep.subr.mxu0 0.0
        %5151 = vmatpush2.msra.mxu0 0.0
        %5152 = vmatprep.subr.mxu0 0.0
        %5153 = vmatpush2.msra.mxu0 0.0
        %5154 = vmatprep.subr.mxu0 0.0
        %5155 = vmatpush2.msra.mxu0 0.0
        %5156 = vmatprep.subr.mxu0 0.0
        %5157 = vmatpush2.msra.mxu0 0.0
        %5158 = vmatprep.subr.mxu0 0.0
        %5159 = vmatpush2.msra.mxu0 0.0
        %5160 = vmatprep.subr.mxu0 0.0
        %5161 = vmatpush2.msra.mxu0 0.0
        %5162 = vmatprep.subr.mxu0 0.0
        %5163 = vmatpush2.msra.mxu0 0.0
        %5164 = vmatprep.subr.mxu0 0.0
        %5165 = vmatpush2.msra.mxu0 0.0
        %5166 = vmatprep.subr.mxu0 0.0
        %5167 = vmatpush2.msra.mxu0 0.0
        %5168 = vmatprep.subr.mxu0 0.0
        %5169 = vmatpush2.msra.mxu0 0.0
        %5170 = vmatprep.mubr.f32.mxu0 0.0
        %5171 = vmatmul.mubr.f32.gmra.mxu0 %v5093
        %v5172 = vpop.f32.mrf.mxu0
        %v5173 = vadd.f32 0.0, %v5172
        %v5174 = vpop.f32.mrf.mxu0
        %5175 = vmatprep.mubr.f32.mxu0 0.0
        %5176 = vmatmul.mubr.f32.gmra.mxu0 %v5096
        %v5177 = vpop.f32.mrf.mxu0
        %v5178 = vadd.f32 0.0, %v5177
        %v5179 = vpop.f32.mrf.mxu0
        %5180 = vmatprep.mubr.f32.mxu0 0.0
        %5181 = vmatmul.mubr.f32.gmra.mxu0 %v5099
        %v5182 = vpop.f32.mrf.mxu0
        %v5183 = vadd.f32 0.0, %v5182
        %v5184 = vpop.f32.mrf.mxu0
        %5185 = vmatprep.mubr.f32.mxu0 0.0
        %5186 = vmatmul.mubr.f32.gmra.mxu0 %v5102
        %v5187 = vpop.f32.mrf.mxu0
        %v5188 = vadd.f32 0.0, %v5187
        %v5189 = vpop.f32.mrf.mxu0
        %5190 = vdwg.mxu0
        %v5192 = vsel %vm2346, %v5173, 0
        %v5195 = vsel %vm2346, %v5178, 0
        %v5198 = vsel %vm2346, %v5183, 0
        %v5201 = vsel %vm2346, %v5188, 0
        %5203 = vmatprep.subr.mxu0 0.0
        %5204 = vmatpush1.msra.mxu0 0.0
        %5205 = vmatprep.subr.mxu0 0.0
        %5206 = vmatpush1.msra.mxu0 0.0
        %5207 = vmatprep.subr.mxu0 0.0
        %5208 = vmatpush1.msra.mxu0 0.0
        %5209 = vmatprep.subr.mxu0 0.0
        %5210 = vmatpush1.msra.mxu0 0.0
        %5211 = vmatprep.subr.mxu0 0.0
        %5212 = vmatpush1.msra.mxu0 0.0
        %5213 = vmatprep.subr.mxu0 0.0
        %5214 = vmatpush1.msra.mxu0 0.0
        %5215 = vmatprep.subr.mxu0 0.0
        %5216 = vmatpush1.msra.mxu0 0.0
        %5217 = vmatprep.subr.mxu0 0.0
        %5218 = vmatpush1.msra.mxu0 0.0
        %5219 = vmatprep.subr.mxu0 0.0
        %5220 = vmatpush1.msra.mxu0 0.0
        %5221 = vmatprep.subr.mxu0 0.0
        %5222 = vmatpush1.msra.mxu0 0.0
        %5223 = vmatprep.subr.mxu0 0.0
        %5224 = vmatpush1.msra.mxu0 0.0
        %5225 = vmatprep.subr.mxu0 0.0
        %5226 = vmatpush1.msra.mxu0 0.0
        %5227 = vmatprep.subr.mxu0 0.0
        %5228 = vmatpush1.msra.mxu0 0.0
        %5229 = vmatprep.subr.mxu0 0.0
        %5230 = vmatpush1.msra.mxu0 0.0
        %5231 = vmatprep.subr.mxu0 0.0
        %5232 = vmatpush1.msra.mxu0 0.0
        %5233 = vmatprep.subr.mxu0 0.0
        %5234 = vmatpush1.msra.mxu0 %v3808
        %5235 = vmatprep.subr.mxu0 0.0
        %5236 = vmatpush2.msra.mxu0 0.0
        %5237 = vmatprep.subr.mxu0 0.0
        %5238 = vmatpush2.msra.mxu0 0.0
        %5239 = vmatprep.subr.mxu0 0.0
        %5240 = vmatpush2.msra.mxu0 0.0
        %5241 = vmatprep.subr.mxu0 0.0
        %5242 = vmatpush2.msra.mxu0 0.0
        %5243 = vmatprep.subr.mxu0 0.0
        %5244 = vmatpush2.msra.mxu0 0.0
        %5245 = vmatprep.subr.mxu0 0.0
        %5246 = vmatpush2.msra.mxu0 0.0
        %5247 = vmatprep.subr.mxu0 0.0
        %5248 = vmatpush2.msra.mxu0 0.0
        %5249 = vmatprep.subr.mxu0 0.0
        %5250 = vmatpush2.msra.mxu0 0.0
        %5251 = vmatprep.subr.mxu0 0.0
        %5252 = vmatpush2.msra.mxu0 0.0
        %5253 = vmatprep.subr.mxu0 0.0
        %5254 = vmatpush2.msra.mxu0 0.0
        %5255 = vmatprep.subr.mxu0 0.0
        %5256 = vmatpush2.msra.mxu0 0.0
        %5257 = vmatprep.subr.mxu0 0.0
        %5258 = vmatpush2.msra.mxu0 0.0
        %5259 = vmatprep.subr.mxu0 0.0
        %5260 = vmatpush2.msra.mxu0 0.0
        %5261 = vmatprep.subr.mxu0 0.0
        %5262 = vmatpush2.msra.mxu0 0.0
        %5263 = vmatprep.subr.mxu0 0.0
        %5264 = vmatpush2.msra.mxu0 0.0
        %5265 = vmatprep.subr.mxu0 0.0
        %5266 = vmatpush2.msra.mxu0 0.0
        %5267 = vmatprep.mubr.f32.mxu0 0.0
        %5268 = vmatmul.mubr.f32.gmra.mxu0 %v5192
        %v5269 = vpop.f32.mrf.mxu0
        %v5270 = vadd.f32 0.0, %v5269
        %v5271 = vpop.f32.mrf.mxu0
        %5272 = vmatprep.mubr.f32.mxu0 0.0
        %5273 = vmatmul.mubr.f32.gmra.mxu0 %v5195
        %v5274 = vpop.f32.mrf.mxu0
        %v5275 = vadd.f32 0.0, %v5274
        %v5276 = vpop.f32.mrf.mxu0
        %5277 = vmatprep.mubr.f32.mxu0 0.0
        %5278 = vmatmul.mubr.f32.gmra.mxu0 %v5198
        %v5279 = vpop.f32.mrf.mxu0
        %v5280 = vadd.f32 0.0, %v5279
        %v5281 = vpop.f32.mrf.mxu0
        %5282 = vmatprep.mubr.f32.mxu0 0.0
        %5283 = vmatmul.mubr.f32.gmra.mxu0 %v5201
        %v5284 = vpop.f32.mrf.mxu0
        %v5285 = vadd.f32 0.0, %v5284
        %v5286 = vpop.f32.mrf.mxu0
        %5287 = vdwg.mxu0
        %v5288 = vadd.f32 %v4916, %v5270
        %v5289 = vadd.f32 %v4917, %v5275
        %v5290 = vadd.f32 %v4918, %v5280
        %v5291 = vadd.f32 %v4919, %v5285
        %v5292 = vadd.f32 %v5288, %v3518
        %v5293 = vadd.f32 %v5289, %v3519
        %v5294 = vadd.f32 %v5290, %v3520
        %v5295 = vadd.f32 %v5291, %v3521
        %v5296 = vld [vmem:[%s59] sm:$0x1]
        %v5297 = vld [vmem:[%s61] sm:$0x1]
        %v5298 = vsel %vm1766, %v5292, 0.0
        %5299 = vadd.xlane.f32.xlu0 %v5298
        %v5300 = vpop.xlane.xlu0 %5299
        %v5301 = vsel %vm1766, %v5293, 0.0
        %5302 = vadd.xlane.f32.xlu0 %v5301
        %v5303 = vpop.xlane.xlu0 %5302
        %v5304 = vsel %vm1766, %v5294, 0.0
        %5305 = vadd.xlane.f32.xlu0 %v5304
        %v5306 = vpop.xlane.xlu0 %5305
        %v5307 = vsel %vm3457, %v5295, 0.0
        %5308 = vadd.xlane.f32.xlu0 %v5307
        %v5309 = vpop.xlane.xlu0 %5308
        %v5310 = vmul.f32 %v5300, %v3461
        %v5311 = vmul.f32 %v5303, %v3461
        %v5312 = vmul.f32 %v5306, %v3461
        %v5313 = vmul.f32 %v5309, %v3461
        %v5314 = vsub.f32 %v5292, %v5310
        %v5315 = vsub.f32 %v5293, %v5311
        %v5316 = vsub.f32 %v5294, %v5312
        %v5317 = vsub.f32 %v5295, %v5313
        %v5318 = vmul.f32 %v5314, %v5314
        %v5319 = vmul.f32 %v5315, %v5315
        %v5320 = vmul.f32 %v5316, %v5316
        %v5321 = vmul.f32 %v5317, %v5317
        %v5322 = vsel %vm1766, %v5318, 0.0
        %5323 = vadd.xlane.f32.xlu0 %v5322
        %v5324 = vpop.xlane.xlu0 %5323
        %v5325 = vsel %vm1766, %v5319, 0.0
        %5326 = vadd.xlane.f32.xlu0 %v5325
        %v5327 = vpop.xlane.xlu0 %5326
        %v5328 = vsel %vm1766, %v5320, 0.0
        %5329 = vadd.xlane.f32.xlu0 %v5328
        %v5330 = vpop.xlane.xlu0 %5329
        %v5331 = vsel %vm3457, %v5321, 0.0
        %5332 = vadd.xlane.f32.xlu0 %v5331
        %v5333 = vpop.xlane.xlu0 %5332
        %v5334 = vmul.f32 %v5324, %v3461
        %v5335 = vmul.f32 %v5327, %v3461
        %v5336 = vmul.f32 %v5330, %v3461
        %v5337 = vmul.f32 %v5333, %v3461
        %v5338 = vadd.f32 %v5334, 1e-06
        %v5339 = vadd.f32 %v5335, 1e-06
        %v5340 = vadd.f32 %v5336, 1e-06
        %v5341 = vadd.f32 %v5337, 1e-06
        %v5342 = vrsqrt.pop %v5338
        %v5343 = vrsqrt.pop %v5339
        %v5344 = vrsqrt.pop %v5340
        %v5345 = vrsqrt.pop %v5341
        %v5346 = vmul.f32 %v5314, %v5342
        %v5347 = vmul.f32 %v5315, %v5343
        %v5348 = vmul.f32 %v5316, %v5344
        %v5349 = vmul.f32 %v5317, %v5345
        %v5351 = vlaneseq
        %v5352 = vshrl.u32 %v5351, 7
        %v5353 = vsub.s32 0, %v5352
        %v5354 = vrot.slane %v5296, %v5353
        %v5356 = vmul.f32 %v5346, %v5354
        %v5357 = vmul.f32 %v5347, %v5354
        %v5358 = vmul.f32 %v5348, %v5354
        %v5359 = vmul.f32 %v5349, %v5354
        %v5361 = vlaneseq
        %v5362 = vshrl.u32 %v5361, 7
        %v5363 = vsub.s32 0, %v5362
        %v5364 = vrot.slane %v5297, %v5363
        %v5366 = vadd.f32 %v5356, %v5364
        %v5367 = vadd.f32 %v5357, %v5364
        %v5368 = vadd.f32 %v5358, %v5364
        %v5369 = vadd.f32 %v5359, %v5364
        %v5370 = vld [vmem:[%s63] sm:$0xff]
        %v5371 = vld [vmem:[%s63 + $0x8] sm:$0xff]
        %v5372 = vld [vmem:[%s63 + $0x10] sm:$0xff]
        %v5373 = vld [vmem:[%s63 + $0x18] sm:$0xff]
        %v5374 = vld [vmem:[%s65] sm:$0x1]
        %v5376 = vlaneseq
        %v5377 = vshrl.u32 %v5376, 7
        %v5378 = vsub.s32 0, %v5377
        %v5379 = vrot.slane %v5374, %v5378
        %v5382 = vsel %vm1766, %v5366, 0
        %v5385 = vsel %vm1766, %v5367, 0
        %v5388 = vsel %vm1766, %v5368, 0
        %v5391 = vsel %vm1766, %v5369, 0
        %5393 = vmatprep.subr.mxu0 0.0
        %5394 = vmatpush1.msra.mxu0 0.0
        %5395 = vmatprep.subr.mxu0 0.0
        %5396 = vmatpush1.msra.mxu0 0.0
        %5397 = vmatprep.subr.mxu0 0.0
        %5398 = vmatpush1.msra.mxu0 0.0
        %5399 = vmatprep.subr.mxu0 0.0
        %5400 = vmatpush1.msra.mxu0 0.0
        %5401 = vmatprep.subr.mxu0 0.0
        %5402 = vmatpush1.msra.mxu0 0.0
        %5403 = vmatprep.subr.mxu0 0.0
        %5404 = vmatpush1.msra.mxu0 0.0
        %5405 = vmatprep.subr.mxu0 0.0
        %5406 = vmatpush1.msra.mxu0 0.0
        %5407 = vmatprep.subr.mxu0 0.0
        %5408 = vmatpush1.msra.mxu0 0.0
        %5409 = vmatprep.subr.mxu0 0.0
        %5410 = vmatpush1.msra.mxu0 0.0
        %5411 = vmatprep.subr.mxu0 0.0
        %5412 = vmatpush1.msra.mxu0 0.0
        %5413 = vmatprep.subr.mxu0 0.0
        %5414 = vmatpush1.msra.mxu0 0.0
        %5415 = vmatprep.subr.mxu0 0.0
        %5416 = vmatpush1.msra.mxu0 0.0
        %5417 = vmatprep.subr.mxu0 0.0
        %5418 = vmatpush1.msra.mxu0 %v5373
        %5419 = vmatprep.subr.mxu0 0.0
        %5420 = vmatpush1.msra.mxu0 %v5372
        %5421 = vmatprep.subr.mxu0 0.0
        %5422 = vmatpush1.msra.mxu0 %v5371
        %5423 = vmatprep.subr.mxu0 0.0
        %5424 = vmatpush1.msra.mxu0 %v5370
        %5425 = vmatprep.subr.mxu0 0.0
        %5426 = vmatpush2.msra.mxu0 0.0
        %5427 = vmatprep.subr.mxu0 0.0
        %5428 = vmatpush2.msra.mxu0 0.0
        %5429 = vmatprep.subr.mxu0 0.0
        %5430 = vmatpush2.msra.mxu0 0.0
        %5431 = vmatprep.subr.mxu0 0.0
        %5432 = vmatpush2.msra.mxu0 0.0
        %5433 = vmatprep.subr.mxu0 0.0
        %5434 = vmatpush2.msra.mxu0 0.0
        %5435 = vmatprep.subr.mxu0 0.0
        %5436 = vmatpush2.msra.mxu0 0.0
        %5437 = vmatprep.subr.mxu0 0.0
        %5438 = vmatpush2.msra.mxu0 0.0
        %5439 = vmatprep.subr.mxu0 0.0
        %5440 = vmatpush2.msra.mxu0 0.0
        %5441 = vmatprep.subr.mxu0 0.0
        %5442 = vmatpush2.msra.mxu0 0.0
        %5443 = vmatprep.subr.mxu0 0.0
        %5444 = vmatpush2.msra.mxu0 0.0
        %5445 = vmatprep.subr.mxu0 0.0
        %5446 = vmatpush2.msra.mxu0 0.0
        %5447 = vmatprep.subr.mxu0 0.0
        %5448 = vmatpush2.msra.mxu0 0.0
        %5449 = vmatprep.subr.mxu0 0.0
        %5450 = vmatpush2.msra.mxu0 0.0
        %5451 = vmatprep.subr.mxu0 0.0
        %5452 = vmatpush2.msra.mxu0 0.0
        %5453 = vmatprep.subr.mxu0 0.0
        %5454 = vmatpush2.msra.mxu0 0.0
        %5455 = vmatprep.subr.mxu0 0.0
        %5456 = vmatpush2.msra.mxu0 0.0
        %5457 = vmatprep.mubr.f32.mxu0 0.0
        %5458 = vmatmul.mubr.f32.gmra.mxu0 %v5382
        %v5459 = vpop.f32.mrf.mxu0
        %v5460 = vadd.f32 %v5379, %v5459
        %v5461 = vpop.f32.mrf.mxu0
        %5462 = vmatprep.mubr.f32.mxu0 0.0
        %5463 = vmatmul.mubr.f32.gmra.mxu0 %v5385
        %v5464 = vpop.f32.mrf.mxu0
        %v5465 = vadd.f32 %v5379, %v5464
        %v5466 = vpop.f32.mrf.mxu0
        %5467 = vmatprep.mubr.f32.mxu0 0.0
        %5468 = vmatmul.mubr.f32.gmra.mxu0 %v5388
        %v5469 = vpop.f32.mrf.mxu0
        %v5470 = vadd.f32 %v5379, %v5469
        %v5471 = vpop.f32.mrf.mxu0
        %5472 = vmatprep.mubr.f32.mxu0 0.0
        %5473 = vmatmul.mubr.f32.gmra.mxu0 %v5391
        %v5474 = vpop.f32.mrf.mxu0
        %v5475 = vadd.f32 %v5379, %v5474
        %v5476 = vpop.f32.mrf.mxu0
        %5477 = vdwg.mxu0
        %v5478 = vmul.f32 %v5460, 0.5
        %v5479 = vmul.f32 %v5465, 0.5
        %v5480 = vmul.f32 %v5470, 0.5
        %v5481 = vmul.f32 %v5475, 0.5
        %v5482 = vmul.f32 %v5460, 0.044715
        %v5483 = vmul.f32 %v5465, 0.044715
        %v5484 = vmul.f32 %v5470, 0.044715
        %v5485 = vmul.f32 %v5475, 0.044715
        %v5486 = vmul.f32 %v5482, %v5460
        %v5487 = vmul.f32 %v5483, %v5465
        %v5488 = vmul.f32 %v5484, %v5470
        %v5489 = vmul.f32 %v5485, %v5475
        %v5490 = vmul.f32 %v5486, %v5460
        %v5491 = vmul.f32 %v5487, %v5465
        %v5492 = vmul.f32 %v5488, %v5470
        %v5493 = vmul.f32 %v5489, %v5475
        %v5494 = vadd.f32 %v5460, %v5490
        %v5495 = vadd.f32 %v5465, %v5491
        %v5496 = vadd.f32 %v5470, %v5492
        %v5497 = vadd.f32 %v5475, %v5493
        %v5498 = vmul.f32 %v5494, 0.7978846
        %v5499 = vmul.f32 %v5495, 0.7978846
        %v5500 = vmul.f32 %v5496, 0.7978846
        %v5501 = vmul.f32 %v5497, 0.7978846
        %v5502 = vtanh.pop %v5498
        %v5503 = vtanh.pop %v5499
        %v5504 = vtanh.pop %v5500
        %v5505 = vtanh.pop %v5501
        %v5506 = vadd.f32 %v5502, 1.0
        %v5507 = vadd.f32 %v5503, 1.0
        %v5508 = vadd.f32 %v5504, 1.0
        %v5509 = vadd.f32 %v5505, 1.0
        %v5510 = vmul.f32 %v5478, %v5506
        %v5511 = vmul.f32 %v5479, %v5507
        %v5512 = vmul.f32 %v5480, %v5508
        %v5513 = vmul.f32 %v5481, %v5509
        %v5514 = vld [vmem:[%s67] sm:$0xff]
        %v5515 = vld [vmem:[%s67 + $0x8] sm:$0xff]
        %v5516 = vld [vmem:[%s67 + $0x10] sm:$0xff]
        %v5517 = vld [vmem:[%s67 + $0x18] sm:$0xff]
        %v5518 = vld [vmem:[%s67 + $0x20] sm:$0xff]
        %v5519 = vld [vmem:[%s67 + $0x28] sm:$0xff]
        %v5520 = vld [vmem:[%s67 + $0x30] sm:$0xff]
        %v5521 = vld [vmem:[%s67 + $0x38] sm:$0xff]
        %v5522 = vld [vmem:[%s69] sm:$0x1]
        %v5524 = vlaneseq
        %v5525 = vshrl.u32 %v5524, 7
        %v5526 = vsub.s32 0, %v5525
        %v5527 = vrot.slane %v5522, %v5526
        %vm5529 = vcmask 523264
        %v5531 = vsel %vm5529, %v5510, 0
        %v5534 = vsel %vm5529, %v5511, 0
        %v5537 = vsel %vm5529, %v5512, 0
        %v5540 = vsel %vm5529, %v5513, 0
        %5542 = vmatprep.subr.mxu0 0.0
        %5543 = vmatpush1.msra.mxu0 0.0
        %5544 = vmatprep.subr.mxu0 0.0
        %5545 = vmatpush1.msra.mxu0 0.0
        %5546 = vmatprep.subr.mxu0 0.0
        %5547 = vmatpush1.msra.mxu0 0.0
        %5548 = vmatprep.subr.mxu0 0.0
        %5549 = vmatpush1.msra.mxu0 0.0
        %5550 = vmatprep.subr.mxu0 0.0
        %5551 = vmatpush1.msra.mxu0 0.0
        %5552 = vmatprep.subr.mxu0 0.0
        %5553 = vmatpush1.msra.mxu0 0.0
        %5554 = vmatprep.subr.mxu0 0.0
        %5555 = vmatpush1.msra.mxu0 0.0
        %5556 = vmatprep.subr.mxu0 0.0
        %5557 = vmatpush1.msra.mxu0 0.0
        %5558 = vmatprep.subr.mxu0 0.0
        %5559 = vmatpush1.msra.mxu0 %v5521
        %5560 = vmatprep.subr.mxu0 0.0
        %5561 = vmatpush1.msra.mxu0 %v5520
        %5562 = vmatprep.subr.mxu0 0.0
        %5563 = vmatpush1.msra.mxu0 %v5519
        %5564 = vmatprep.subr.mxu0 0.0
        %5565 = vmatpush1.msra.mxu0 %v5518
        %5566 = vmatprep.subr.mxu0 0.0
        %5567 = vmatpush1.msra.mxu0 %v5517
        %5568 = vmatprep.subr.mxu0 0.0
        %5569 = vmatpush1.msra.mxu0 %v5516
        %5570 = vmatprep.subr.mxu0 0.0
        %5571 = vmatpush1.msra.mxu0 %v5515
        %5572 = vmatprep.subr.mxu0 0.0
        %5573 = vmatpush1.msra.mxu0 %v5514
        %5574 = vmatprep.subr.mxu0 0.0
        %5575 = vmatpush2.msra.mxu0 0.0
        %5576 = vmatprep.subr.mxu0 0.0
        %5577 = vmatpush2.msra.mxu0 0.0
        %5578 = vmatprep.subr.mxu0 0.0
        %5579 = vmatpush2.msra.mxu0 0.0
        %5580 = vmatprep.subr.mxu0 0.0
        %5581 = vmatpush2.msra.mxu0 0.0
        %5582 = vmatprep.subr.mxu0 0.0
        %5583 = vmatpush2.msra.mxu0 0.0
        %5584 = vmatprep.subr.mxu0 0.0
        %5585 = vmatpush2.msra.mxu0 0.0
        %5586 = vmatprep.subr.mxu0 0.0
        %5587 = vmatpush2.msra.mxu0 0.0
        %5588 = vmatprep.subr.mxu0 0.0
        %5589 = vmatpush2.msra.mxu0 0.0
        %5590 = vmatprep.subr.mxu0 0.0
        %5591 = vmatpush2.msra.mxu0 0.0
        %5592 = vmatprep.subr.mxu0 0.0
        %5593 = vmatpush2.msra.mxu0 0.0
        %5594 = vmatprep.subr.mxu0 0.0
        %5595 = vmatpush2.msra.mxu0 0.0
        %5596 = vmatprep.subr.mxu0 0.0
        %5597 = vmatpush2.msra.mxu0 0.0
        %5598 = vmatprep.subr.mxu0 0.0
        %5599 = vmatpush2.msra.mxu0 0.0
        %5600 = vmatprep.subr.mxu0 0.0
        %5601 = vmatpush2.msra.mxu0 0.0
        %5602 = vmatprep.subr.mxu0 0.0
        %5603 = vmatpush2.msra.mxu0 0.0
        %5604 = vmatprep.subr.mxu0 0.0
        %5605 = vmatpush2.msra.mxu0 0.0
        %5606 = vmatprep.mubr.f32.mxu0 0.0
        %5607 = vmatmul.mubr.f32.gmra.mxu0 %v5531
        %v5608 = vpop.f32.mrf.mxu0
        %v5609 = vadd.f32 %v5527, %v5608
        %v5610 = vpop.f32.mrf.mxu0
        %5611 = vmatprep.mubr.f32.mxu0 0.0
        %5612 = vmatmul.mubr.f32.gmra.mxu0 %v5534
        %v5613 = vpop.f32.mrf.mxu0
        %v5614 = vadd.f32 %v5527, %v5613
        %v5615 = vpop.f32.mrf.mxu0
        %5616 = vmatprep.mubr.f32.mxu0 0.0
        %5617 = vmatmul.mubr.f32.gmra.mxu0 %v5537
        %v5618 = vpop.f32.mrf.mxu0
        %v5619 = vadd.f32 %v5527, %v5618
        %v5620 = vpop.f32.mrf.mxu0
        %5621 = vmatprep.mubr.f32.mxu0 0.0
        %5622 = vmatmul.mubr.f32.gmra.mxu0 %v5540
        %v5623 = vpop.f32.mrf.mxu0
        %v5624 = vadd.f32 %v5527, %v5623
        %v5625 = vpop.f32.mrf.mxu0
        %5626 = vdwg.mxu0
        %v5627 = vadd.f32 %v5609, %v5366
        %v5628 = vadd.f32 %v5614, %v5367
        %v5629 = vadd.f32 %v5619, %v5368
        %v5630 = vadd.f32 %v5624, %v5369
        %v5631 = vld [vmem:[%s71] sm:$0x1]
        %v5632 = vld [vmem:[%s73] sm:$0x1]
        %v5633 = vsel %vm1766, %v5627, 0.0
        %5634 = vadd.xlane.f32.xlu0 %v5633
        %v5635 = vpop.xlane.xlu0 %5634
        %v5636 = vsel %vm1766, %v5628, 0.0
        %5637 = vadd.xlane.f32.xlu0 %v5636
        %v5638 = vpop.xlane.xlu0 %5637
        %v5639 = vsel %vm1766, %v5629, 0.0
        %5640 = vadd.xlane.f32.xlu0 %v5639
        %v5641 = vpop.xlane.xlu0 %5640
        %v5642 = vsel %vm3457, %v5630, 0.0
        %5643 = vadd.xlane.f32.xlu0 %v5642
        %v5644 = vpop.xlane.xlu0 %5643
        %v5645 = vmul.f32 %v5635, %v3461
        %v5646 = vmul.f32 %v5638, %v3461
        %v5647 = vmul.f32 %v5641, %v3461
        %v5648 = vmul.f32 %v5644, %v3461
        %v5649 = vsub.f32 %v5627, %v5645
        %v5650 = vsub.f32 %v5628, %v5646
        %v5651 = vsub.f32 %v5629, %v5647
        %v5652 = vsub.f32 %v5630, %v5648
        %v5653 = vmul.f32 %v5649, %v5649
        %v5654 = vmul.f32 %v5650, %v5650
        %v5655 = vmul.f32 %v5651, %v5651
        %v5656 = vmul.f32 %v5652, %v5652
        %v5657 = vsel %vm1766, %v5653, 0.0
        %5658 = vadd.xlane.f32.xlu0 %v5657
        %v5659 = vpop.xlane.xlu0 %5658
        %v5660 = vsel %vm1766, %v5654, 0.0
        %5661 = vadd.xlane.f32.xlu0 %v5660
        %v5662 = vpop.xlane.xlu0 %5661
        %v5663 = vsel %vm1766, %v5655, 0.0
        %5664 = vadd.xlane.f32.xlu0 %v5663
        %v5665 = vpop.xlane.xlu0 %5664
        %v5666 = vsel %vm3457, %v5656, 0.0
        %5667 = vadd.xlane.f32.xlu0 %v5666
        %v5668 = vpop.xlane.xlu0 %5667
        %v5669 = vmul.f32 %v5659, %v3461
        %v5670 = vmul.f32 %v5662, %v3461
        %v5671 = vmul.f32 %v5665, %v3461
        %v5672 = vmul.f32 %v5668, %v3461
        %v5673 = vadd.f32 %v5669, 1e-06
        %v5674 = vadd.f32 %v5670, 1e-06
        %v5675 = vadd.f32 %v5671, 1e-06
        %v5676 = vadd.f32 %v5672, 1e-06
        %v5677 = vrsqrt.pop %v5673
        %v5678 = vrsqrt.pop %v5674
        %v5679 = vrsqrt.pop %v5675
        %v5680 = vrsqrt.pop %v5676
        %v5681 = vmul.f32 %v5649, %v5677
        %v5682 = vmul.f32 %v5650, %v5678
        %v5683 = vmul.f32 %v5651, %v5679
        %v5684 = vmul.f32 %v5652, %v5680
        %v5686 = vlaneseq
        %v5687 = vshrl.u32 %v5686, 7
        %v5688 = vsub.s32 0, %v5687
        %v5689 = vrot.slane %v5631, %v5688
        %v5691 = vmul.f32 %v5681, %v5689
        %v5692 = vmul.f32 %v5682, %v5689
        %v5693 = vmul.f32 %v5683, %v5689
        %v5694 = vmul.f32 %v5684, %v5689
        %v5696 = vlaneseq
        %v5697 = vshrl.u32 %v5696, 7
        %v5698 = vsub.s32 0, %v5697
        %v5699 = vrot.slane %v5632, %v5698
        %v5701 = vadd.f32 %v5691, %v5699
        %v5702 = vadd.f32 %v5692, %v5699
        %v5703 = vadd.f32 %v5693, %v5699
        %v5704 = vadd.f32 %v5694, %v5699
        %s5705 = scalar_lea.vmem %s49, 32
        %v5706 = vld [vmem:[%s5705] sm:$0xff]
        %v5707 = vld [vmem:[%s5705 + $0x8] sm:$0xff]
        %v5708 = vld [vmem:[%s5705 + $0x10] sm:$0xff]
        %v5709 = vld [vmem:[%s5705 + $0x18] sm:$0xff]
        %v5711 = vsel %vm1766, %v5701, 0
        %v5714 = vsel %vm1766, %v5702, 0
        %v5717 = vsel %vm1766, %v5703, 0
        %v5720 = vsel %vm1766, %v5704, 0
        %5722 = vmatprep.subr.mxu0 0.0
        %5723 = vmatpush1.msra.mxu0 0.0
        %5724 = vmatprep.subr.mxu0 0.0
        %5725 = vmatpush1.msra.mxu0 0.0
        %5726 = vmatprep.subr.mxu0 0.0
        %5727 = vmatpush1.msra.mxu0 0.0
        %5728 = vmatprep.subr.mxu0 0.0
        %5729 = vmatpush1.msra.mxu0 0.0
        %5730 = vmatprep.subr.mxu0 0.0
        %5731 = vmatpush1.msra.mxu0 0.0
        %5732 = vmatprep.subr.mxu0 0.0
        %5733 = vmatpush1.msra.mxu0 0.0
        %5734 = vmatprep.subr.mxu0 0.0
        %5735 = vmatpush1.msra.mxu0 0.0
        %5736 = vmatprep.subr.mxu0 0.0
        %5737 = vmatpush1.msra.mxu0 0.0
        %5738 = vmatprep.subr.mxu0 0.0
        %5739 = vmatpush1.msra.mxu0 0.0
        %5740 = vmatprep.subr.mxu0 0.0
        %5741 = vmatpush1.msra.mxu0 0.0
        %5742 = vmatprep.subr.mxu0 0.0
        %5743 = vmatpush1.msra.mxu0 0.0
        %5744 = vmatprep.subr.mxu0 0.0
        %5745 = vmatpush1.msra.mxu0 0.0
        %5746 = vmatprep.subr.mxu0 0.0
        %5747 = vmatpush1.msra.mxu0 %v5709
        %5748 = vmatprep.subr.mxu0 0.0
        %5749 = vmatpush1.msra.mxu0 %v5708
        %5750 = vmatprep.subr.mxu0 0.0
        %5751 = vmatpush1.msra.mxu0 %v5707
        %5752 = vmatprep.subr.mxu0 0.0
        %5753 = vmatpush1.msra.mxu0 %v5706
        %5754 = vmatprep.subr.mxu0 0.0
        %5755 = vmatpush2.msra.mxu0 0.0
        %5756 = vmatprep.subr.mxu0 0.0
        %5757 = vmatpush2.msra.mxu0 0.0
        %5758 = vmatprep.subr.mxu0 0.0
        %5759 = vmatpush2.msra.mxu0 0.0
        %5760 = vmatprep.subr.mxu0 0.0
        %5761 = vmatpush2.msra.mxu0 0.0
        %5762 = vmatprep.subr.mxu0 0.0
        %5763 = vmatpush2.msra.mxu0 0.0
        %5764 = vmatprep.subr.mxu0 0.0
        %5765 = vmatpush2.msra.mxu0 0.0
        %5766 = vmatprep.subr.mxu0 0.0
        %5767 = vmatpush2.msra.mxu0 0.0
        %5768 = vmatprep.subr.mxu0 0.0
        %5769 = vmatpush2.msra.mxu0 0.0
        %5770 = vmatprep.subr.mxu0 0.0
        %5771 = vmatpush2.msra.mxu0 0.0
        %5772 = vmatprep.subr.mxu0 0.0
        %5773 = vmatpush2.msra.mxu0 0.0
        %5774 = vmatprep.subr.mxu0 0.0
        %5775 = vmatpush2.msra.mxu0 0.0
        %5776 = vmatprep.subr.mxu0 0.0
        %5777 = vmatpush2.msra.mxu0 0.0
        %5778 = vmatprep.subr.mxu0 0.0
        %5779 = vmatpush2.msra.mxu0 0.0
        %5780 = vmatprep.subr.mxu0 0.0
        %5781 = vmatpush2.msra.mxu0 0.0
        %5782 = vmatprep.subr.mxu0 0.0
        %5783 = vmatpush2.msra.mxu0 0.0
        %5784 = vmatprep.subr.mxu0 0.0
        %5785 = vmatpush2.msra.mxu0 0.0
        %5786 = vmatprep.mubr.f32.mxu0 0.0
        %5787 = vmatmul.mubr.f32.gmra.mxu0 %v5711
        %v5788 = vpop.f32.mrf.mxu0
        %v5789 = vadd.f32 0.0, %v5788
        %v5790 = vpop.f32.mrf.mxu0
        %5791 = vmatprep.mubr.f32.mxu0 0.0
        %5792 = vmatmul.mubr.f32.gmra.mxu0 %v5714
        %v5793 = vpop.f32.mrf.mxu0
        %v5794 = vadd.f32 0.0, %v5793
        %v5795 = vpop.f32.mrf.mxu0
        %5796 = vmatprep.mubr.f32.mxu0 0.0
        %5797 = vmatmul.mubr.f32.gmra.mxu0 %v5717
        %v5798 = vpop.f32.mrf.mxu0
        %v5799 = vadd.f32 0.0, %v5798
        %v5800 = vpop.f32.mrf.mxu0
        %5801 = vmatprep.mubr.f32.mxu0 0.0
        %5802 = vmatmul.mubr.f32.gmra.mxu0 %v5720
        %v5803 = vpop.f32.mrf.mxu0
        %v5804 = vadd.f32 0.0, %v5803
        %v5805 = vpop.f32.mrf.mxu0
        %5806 = vdwg.mxu0
        %s5807 = scalar_lea.vmem %s51, 32
        %v5808 = vld [vmem:[%s5807] sm:$0xff]
        %v5809 = vld [vmem:[%s5807 + $0x8] sm:$0xff]
        %v5810 = vld [vmem:[%s5807 + $0x10] sm:$0xff]
        %v5811 = vld [vmem:[%s5807 + $0x18] sm:$0xff]
        %5812 = vmatprep.subr.mxu0 0.0
        %5813 = vmatpush1.msra.mxu0 0.0
        %5814 = vmatprep.subr.mxu0 0.0
        %5815 = vmatpush1.msra.mxu0 0.0
        %5816 = vmatprep.subr.mxu0 0.0
        %5817 = vmatpush1.msra.mxu0 0.0
        %5818 = vmatprep.subr.mxu0 0.0
        %5819 = vmatpush1.msra.mxu0 0.0
        %5820 = vmatprep.subr.mxu0 0.0
        %5821 = vmatpush1.msra.mxu0 0.0
        %5822 = vmatprep.subr.mxu0 0.0
        %5823 = vmatpush1.msra.mxu0 0.0
        %5824 = vmatprep.subr.mxu0 0.0
        %5825 = vmatpush1.msra.mxu0 0.0
        %5826 = vmatprep.subr.mxu0 0.0
        %5827 = vmatpush1.msra.mxu0 0.0
        %5828 = vmatprep.subr.mxu0 0.0
        %5829 = vmatpush1.msra.mxu0 0.0
        %5830 = vmatprep.subr.mxu0 0.0
        %5831 = vmatpush1.msra.mxu0 0.0
        %5832 = vmatprep.subr.mxu0 0.0
        %5833 = vmatpush1.msra.mxu0 0.0
        %5834 = vmatprep.subr.mxu0 0.0
        %5835 = vmatpush1.msra.mxu0 0.0
        %5836 = vmatprep.subr.mxu0 0.0
        %5837 = vmatpush1.msra.mxu0 %v5811
        %5838 = vmatprep.subr.mxu0 0.0
        %5839 = vmatpush1.msra.mxu0 %v5810
        %5840 = vmatprep.subr.mxu0 0.0
        %5841 = vmatpush1.msra.mxu0 %v5809
        %5842 = vmatprep.subr.mxu0 0.0
        %5843 = vmatpush1.msra.mxu0 %v5808
        %5844 = vmatprep.subr.mxu0 0.0
        %5845 = vmatpush2.msra.mxu0 0.0
        %5846 = vmatprep.subr.mxu0 0.0
        %5847 = vmatpush2.msra.mxu0 0.0
        %5848 = vmatprep.subr.mxu0 0.0
        %5849 = vmatpush2.msra.mxu0 0.0
        %5850 = vmatprep.subr.mxu0 0.0
        %5851 = vmatpush2.msra.mxu0 0.0
        %5852 = vmatprep.subr.mxu0 0.0
        %5853 = vmatpush2.msra.mxu0 0.0
        %5854 = vmatprep.subr.mxu0 0.0
        %5855 = vmatpush2.msra.mxu0 0.0
        %5856 = vmatprep.subr.mxu0 0.0
        %5857 = vmatpush2.msra.mxu0 0.0
        %5858 = vmatprep.subr.mxu0 0.0
        %5859 = vmatpush2.msra.mxu0 0.0
        %5860 = vmatprep.subr.mxu0 0.0
        %5861 = vmatpush2.msra.mxu0 0.0
        %5862 = vmatprep.subr.mxu0 0.0
        %5863 = vmatpush2.msra.mxu0 0.0
        %5864 = vmatprep.subr.mxu0 0.0
        %5865 = vmatpush2.msra.mxu0 0.0
        %5866 = vmatprep.subr.mxu0 0.0
        %5867 = vmatpush2.msra.mxu0 0.0
        %5868 = vmatprep.subr.mxu0 0.0
        %5869 = vmatpush2.msra.mxu0 0.0
        %5870 = vmatprep.subr.mxu0 0.0
        %5871 = vmatpush2.msra.mxu0 0.0
        %5872 = vmatprep.subr.mxu0 0.0
        %5873 = vmatpush2.msra.mxu0 0.0
        %5874 = vmatprep.subr.mxu0 0.0
        %5875 = vmatpush2.msra.mxu0 0.0
        %5876 = vmatprep.mubr.f32.mxu0 0.0
        %5877 = vmatmul.mubr.f32.gmra.mxu0 %v5711
        %v5878 = vpop.f32.mrf.mxu0
        %v5879 = vadd.f32 0.0, %v5878
        %v5880 = vpop.f32.mrf.mxu0
        %5881 = vmatprep.mubr.f32.mxu0 0.0
        %5882 = vmatmul.mubr.f32.gmra.mxu0 %v5714
        %v5883 = vpop.f32.mrf.mxu0
        %v5884 = vadd.f32 0.0, %v5883
        %v5885 = vpop.f32.mrf.mxu0
        %5886 = vmatprep.mubr.f32.mxu0 0.0
        %5887 = vmatmul.mubr.f32.gmra.mxu0 %v5717
        %v5888 = vpop.f32.mrf.mxu0
        %v5889 = vadd.f32 0.0, %v5888
        %v5890 = vpop.f32.mrf.mxu0
        %5891 = vmatprep.mubr.f32.mxu0 0.0
        %5892 = vmatmul.mubr.f32.gmra.mxu0 %v5720
        %v5893 = vpop.f32.mrf.mxu0
        %v5894 = vadd.f32 0.0, %v5893
        %v5895 = vpop.f32.mrf.mxu0
        %5896 = vdwg.mxu0
        %s5897 = scalar_lea.vmem %s53, 32
        %v5898 = vld [vmem:[%s5897] sm:$0xff]
        %v5899 = vld [vmem:[%s5897 + $0x8] sm:$0xff]
        %v5900 = vld [vmem:[%s5897 + $0x10] sm:$0xff]
        %v5901 = vld [vmem:[%s5897 + $0x18] sm:$0xff]
        %5902 = vmatprep.subr.mxu0 0.0
        %5903 = vmatpush1.msra.mxu0 0.0
        %5904 = vmatprep.subr.mxu0 0.0
        %5905 = vmatpush1.msra.mxu0 0.0
        %5906 = vmatprep.subr.mxu0 0.0
        %5907 = vmatpush1.msra.mxu0 0.0
        %5908 = vmatprep.subr.mxu0 0.0
        %5909 = vmatpush1.msra.mxu0 0.0
        %5910 = vmatprep.subr.mxu0 0.0
        %5911 = vmatpush1.msra.mxu0 0.0
        %5912 = vmatprep.subr.mxu0 0.0
        %5913 = vmatpush1.msra.mxu0 0.0
        %5914 = vmatprep.subr.mxu0 0.0
        %5915 = vmatpush1.msra.mxu0 0.0
        %5916 = vmatprep.subr.mxu0 0.0
        %5917 = vmatpush1.msra.mxu0 0.0
        %5918 = vmatprep.subr.mxu0 0.0
        %5919 = vmatpush1.msra.mxu0 0.0
        %5920 = vmatprep.subr.mxu0 0.0
        %5921 = vmatpush1.msra.mxu0 0.0
        %5922 = vmatprep.subr.mxu0 0.0
        %5923 = vmatpush1.msra.mxu0 0.0
        %5924 = vmatprep.subr.mxu0 0.0
        %5925 = vmatpush1.msra.mxu0 0.0
        %5926 = vmatprep.subr.mxu0 0.0
        %5927 = vmatpush1.msra.mxu0 %v5901
        %5928 = vmatprep.subr.mxu0 0.0
        %5929 = vmatpush1.msra.mxu0 %v5900
        %5930 = vmatprep.subr.mxu0 0.0
        %5931 = vmatpush1.msra.mxu0 %v5899
        %5932 = vmatprep.subr.mxu0 0.0
        %5933 = vmatpush1.msra.mxu0 %v5898
        %5934 = vmatprep.subr.mxu0 0.0
        %5935 = vmatpush2.msra.mxu0 0.0
        %5936 = vmatprep.subr.mxu0 0.0
        %5937 = vmatpush2.msra.mxu0 0.0
        %5938 = vmatprep.subr.mxu0 0.0
        %5939 = vmatpush2.msra.mxu0 0.0
        %5940 = vmatprep.subr.mxu0 0.0
        %5941 = vmatpush2.msra.mxu0 0.0
        %5942 = vmatprep.subr.mxu0 0.0
        %5943 = vmatpush2.msra.mxu0 0.0
        %5944 = vmatprep.subr.mxu0 0.0
        %5945 = vmatpush2.msra.mxu0 0.0
        %5946 = vmatprep.subr.mxu0 0.0
        %5947 = vmatpush2.msra.mxu0 0.0
        %5948 = vmatprep.subr.mxu0 0.0
        %5949 = vmatpush2.msra.mxu0 0.0
        %5950 = vmatprep.subr.mxu0 0.0
        %5951 = vmatpush2.msra.mxu0 0.0
        %5952 = vmatprep.subr.mxu0 0.0
        %5953 = vmatpush2.msra.mxu0 0.0
        %5954 = vmatprep.subr.mxu0 0.0
        %5955 = vmatpush2.msra.mxu0 0.0
        %5956 = vmatprep.subr.mxu0 0.0
        %5957 = vmatpush2.msra.mxu0 0.0
        %5958 = vmatprep.subr.mxu0 0.0
        %5959 = vmatpush2.msra.mxu0 0.0
        %5960 = vmatprep.subr.mxu0 0.0
        %5961 = vmatpush2.msra.mxu0 0.0
        %5962 = vmatprep.subr.mxu0 0.0
        %5963 = vmatpush2.msra.mxu0 0.0
        %5964 = vmatprep.subr.mxu0 0.0
        %5965 = vmatpush2.msra.mxu0 0.0
        %5966 = vmatprep.mubr.f32.mxu0 0.0
        %5967 = vmatmul.mubr.f32.gmra.mxu0 %v5711
        %v5968 = vpop.f32.mrf.mxu0
        %v5969 = vadd.f32 0.0, %v5968
        %v5970 = vpop.f32.mrf.mxu0
        %5971 = vmatprep.mubr.f32.mxu0 0.0
        %5972 = vmatmul.mubr.f32.gmra.mxu0 %v5714
        %v5973 = vpop.f32.mrf.mxu0
        %v5974 = vadd.f32 0.0, %v5973
        %v5975 = vpop.f32.mrf.mxu0
        %5976 = vmatprep.mubr.f32.mxu0 0.0
        %5977 = vmatmul.mubr.f32.gmra.mxu0 %v5717
        %v5978 = vpop.f32.mrf.mxu0
        %v5979 = vadd.f32 0.0, %v5978
        %v5980 = vpop.f32.mrf.mxu0
        %5981 = vmatprep.mubr.f32.mxu0 0.0
        %5982 = vmatmul.mubr.f32.gmra.mxu0 %v5720
        %v5983 = vpop.f32.mrf.mxu0
        %v5984 = vadd.f32 0.0, %v5983
        %v5985 = vpop.f32.mrf.mxu0
        %5986 = vdwg.mxu0
        %s5987 = scalar_lea.vmem %s55, 32
        %v5988 = vld [vmem:[%s5987] sm:$0xff]
        %v5989 = vld [vmem:[%s5987 + $0x8] sm:$0xff]
        %v5990 = vld [vmem:[%s5987 + $0x10] sm:$0xff]
        %v5991 = vld [vmem:[%s5987 + $0x18] sm:$0xff]
        %s5992 = scalar_lea.vmem %s57, 1
        %v5993 = vld [vmem:[%s5992] sm:$0x1]
        %v5995 = vsel %vm2346, %v5789, 0
        %v5998 = vsel %vm2346, %v5794, 0
        %v6001 = vsel %vm2346, %v5799, 0
        %v6004 = vsel %vm2346, %v5804, 0
        %v6007 = vsel %vm2346, %v5879, 0
        %v6010 = vsel %vm2346, %v5884, 0
        %v6013 = vsel %vm2346, %v5889, 0
        %v6016 = vsel %vm2346, %v5894, 0
        %6018 = vmatprep.subr.mxu0 0.0
        %6019 = vmatpush1.xpose.msra.mxu0 0.0
        %6020 = vmatprep.subr.mxu0 0.0
        %6021 = vmatpush1.xpose.msra.mxu0 0.0
        %6022 = vmatprep.subr.mxu0 0.0
        %6023 = vmatpush1.xpose.msra.mxu0 0.0
        %6024 = vmatprep.subr.mxu0 0.0
        %6025 = vmatpush1.xpose.msra.mxu0 0.0
        %6026 = vmatprep.subr.mxu0 0.0
        %6027 = vmatpush1.xpose.msra.mxu0 0.0
        %6028 = vmatprep.subr.mxu0 0.0
        %6029 = vmatpush1.xpose.msra.mxu0 0.0
        %6030 = vmatprep.subr.mxu0 0.0
        %6031 = vmatpush1.xpose.msra.mxu0 0.0
        %6032 = vmatprep.subr.mxu0 0.0
        %6033 = vmatpush1.xpose.msra.mxu0 0.0
        %6034 = vmatprep.subr.mxu0 0.0
        %6035 = vmatpush1.xpose.msra.mxu0 0.0
        %6036 = vmatprep.subr.mxu0 0.0
        %6037 = vmatpush1.xpose.msra.mxu0 0.0
        %6038 = vmatprep.subr.mxu0 0.0
        %6039 = vmatpush1.xpose.msra.mxu0 0.0
        %6040 = vmatprep.subr.mxu0 0.0
        %6041 = vmatpush1.xpose.msra.mxu0 0.0
        %6042 = vmatprep.subr.mxu0 0.0
        %6043 = vmatpush1.xpose.msra.mxu0 %v6016
        %6044 = vmatprep.subr.mxu0 0.0
        %6045 = vmatpush1.xpose.msra.mxu0 %v6013
        %6046 = vmatprep.subr.mxu0 0.0
        %6047 = vmatpush1.xpose.msra.mxu0 %v6010
        %6048 = vmatprep.subr.mxu0 0.0
        %6049 = vmatpush1.xpose.msra.mxu0 %v6007
        %6050 = vmatprep.subr.mxu0 0.0
        %6051 = vmatpush2.xpose.msra.mxu0 0.0
        %6052 = vmatprep.subr.mxu0 0.0
        %6053 = vmatpush2.xpose.msra.mxu0 0.0
        %6054 = vmatprep.subr.mxu0 0.0
        %6055 = vmatpush2.xpose.msra.mxu0 0.0
        %6056 = vmatprep.subr.mxu0 0.0
        %6057 = vmatpush2.xpose.msra.mxu0 0.0
        %6058 = vmatprep.subr.mxu0 0.0
        %6059 = vmatpush2.xpose.msra.mxu0 0.0
        %6060 = vmatprep.subr.mxu0 0.0
        %6061 = vmatpush2.xpose.msra.mxu0 0.0
        %6062 = vmatprep.subr.mxu0 0.0
        %6063 = vmatpush2.xpose.msra.mxu0 0.0
        %6064 = vmatprep.subr.mxu0 0.0
        %6065 = vmatpush2.xpose.msra.mxu0 0.0
        %6066 = vmatprep.subr.mxu0 0.0
        %6067 = vmatpush2.xpose.msra.mxu0 0.0
        %6068 = vmatprep.subr.mxu0 0.0
        %6069 = vmatpush2.xpose.msra.mxu0 0.0
        %6070 = vmatprep.subr.mxu0 0.0
        %6071 = vmatpush2.xpose.msra.mxu0 0.0
        %6072 = vmatprep.subr.mxu0 0.0
        %6073 = vmatpush2.xpose.msra.mxu0 0.0
        %6074 = vmatprep.subr.mxu0 0.0
        %6075 = vmatpush2.xpose.msra.mxu0 0.0
        %6076 = vmatprep.subr.mxu0 0.0
        %6077 = vmatpush2.xpose.msra.mxu0 0.0
        %6078 = vmatprep.subr.mxu0 0.0
        %6079 = vmatpush2.xpose.msra.mxu0 0.0
        %6080 = vmatprep.subr.mxu0 0.0
        %6081 = vmatpush2.xpose.msra.mxu0 0.0
        %6082 = vmatprep.mubr.f32.mxu0 0.0
        %6083 = vmatmul.mubr.f32.gmra.mxu0 %v5995
        %v6084 = vpop.f32.mrf.mxu0
        %v6085 = vadd.f32 %v3522, %v6084
        %v6086 = vpop.f32.mrf.mxu0
        %6087 = vmatprep.mubr.f32.mxu0 0.0
        %6088 = vmatmul.mubr.f32.gmra.mxu0 %v5998
        %v6089 = vpop.f32.mrf.mxu0
        %v6090 = vadd.f32 %v3523, %v6089
        %v6091 = vpop.f32.mrf.mxu0
        %6092 = vmatprep.mubr.f32.mxu0 0.0
        %6093 = vmatmul.mubr.f32.gmra.mxu0 %v6001
        %v6094 = vpop.f32.mrf.mxu0
        %v6095 = vadd.f32 %v3524, %v6094
        %v6096 = vpop.f32.mrf.mxu0
        %6097 = vmatprep.mubr.f32.mxu0 0.0
        %6098 = vmatmul.mubr.f32.gmra.mxu0 %v6004
        %v6099 = vpop.f32.mrf.mxu0
        %v6100 = vadd.f32 %v3525, %v6099
        %v6101 = vpop.f32.mrf.mxu0
        %6102 = vdwg.mxu0
        %v6103 = vsel %vm3919, %v6085, -inf
        %6104 = vmax.xlane.f32.xlu0 %v6103
        %v6105 = vpop.xlane.xlu0 %6104
        %v6106 = vsel %vm3919, %v6090, -inf
        %6107 = vmax.xlane.f32.xlu0 %v6106
        %v6108 = vpop.xlane.xlu0 %6107
        %v6109 = vsel %vm3919, %v6095, -inf
        %6110 = vmax.xlane.f32.xlu0 %v6109
        %v6111 = vpop.xlane.xlu0 %6110
        %v6112 = vsel %vm3929, %v6100, -inf
        %6113 = vmax.xlane.f32.xlu0 %v6112
        %v6114 = vpop.xlane.xlu0 %6113
        %v6115 = vsub.f32 %v6085, %v6105
        %v6116 = vsub.f32 %v6090, %v6108
        %v6117 = vsub.f32 %v6095, %v6111
        %v6118 = vsub.f32 %v6100, %v6114
        %v6119 = vmul.f32 %v6115, 1.442695
        %v6120 = vpow.pop %v6119
        %v6121 = vmul.f32 %v6116, 1.442695
        %v6122 = vpow.pop %v6121
        %v6123 = vmul.f32 %v6117, 1.442695
        %v6124 = vpow.pop %v6123
        %v6125 = vmul.f32 %v6118, 1.442695
        %v6126 = vpow.pop %v6125
        %v6127 = vsel %vm3919, %v6120, 0.0
        %6128 = vadd.xlane.f32.xlu0 %v6127
        %v6129 = vpop.xlane.xlu0 %6128
        %v6130 = vsel %vm3919, %v6122, 0.0
        %6131 = vadd.xlane.f32.xlu0 %v6130
        %v6132 = vpop.xlane.xlu0 %6131
        %v6133 = vsel %vm3919, %v6124, 0.0
        %6134 = vadd.xlane.f32.xlu0 %v6133
        %v6135 = vpop.xlane.xlu0 %6134
        %v6136 = vsel %vm3929, %v6126, 0.0
        %6137 = vadd.xlane.f32.xlu0 %v6136
        %v6138 = vpop.xlane.xlu0 %6137
        %v6139 = vrcp.pop %v6129
        %v6140 = vrcp.pop %v6132
        %v6141 = vrcp.pop %v6135
        %v6142 = vrcp.pop %v6138
        %v6143 = vmul.f32 %v6120, %v6139
        %v6144 = vmul.f32 %v6122, %v6140
        %v6145 = vmul.f32 %v6124, %v6141
        %v6146 = vmul.f32 %v6126, %v6142
        %v6148 = vsel %vm3919, %v6143, 0
        %v6151 = vsel %vm3919, %v6144, 0
        %v6154 = vsel %vm3919, %v6145, 0
        %v6157 = vsel %vm3919, %v6146, 0
        %v6160 = vsel %vm3977, %v5984, 0
        %6162 = vmatprep.subr.mxu0 0.0
        %6163 = vmatpush1.msra.mxu0 0.0
        %6164 = vmatprep.subr.mxu0 0.0
        %6165 = vmatpush1.msra.mxu0 0.0
        %6166 = vmatprep.subr.mxu0 0.0
        %6167 = vmatpush1.msra.mxu0 0.0
        %6168 = vmatprep.subr.mxu0 0.0
        %6169 = vmatpush1.msra.mxu0 0.0
        %6170 = vmatprep.subr.mxu0 0.0
        %6171 = vmatpush1.msra.mxu0 0.0
        %6172 = vmatprep.subr.mxu0 0.0
        %6173 = vmatpush1.msra.mxu0 0.0
        %6174 = vmatprep.subr.mxu0 0.0
        %6175 = vmatpush1.msra.mxu0 0.0
        %6176 = vmatprep.subr.mxu0 0.0
        %6177 = vmatpush1.msra.mxu0 0.0
        %6178 = vmatprep.subr.mxu0 0.0
        %6179 = vmatpush1.msra.mxu0 0.0
        %6180 = vmatprep.subr.mxu0 0.0
        %6181 = vmatpush1.msra.mxu0 0.0
        %6182 = vmatprep.subr.mxu0 0.0
        %6183 = vmatpush1.msra.mxu0 0.0
        %6184 = vmatprep.subr.mxu0 0.0
        %6185 = vmatpush1.msra.mxu0 0.0
        %6186 = vmatprep.subr.mxu0 0.0
        %6187 = vmatpush1.msra.mxu0 %v6160
        %6188 = vmatprep.subr.mxu0 0.0
        %6189 = vmatpush1.msra.mxu0 %v5979
        %6190 = vmatprep.subr.mxu0 0.0
        %6191 = vmatpush1.msra.mxu0 %v5974
        %6192 = vmatprep.subr.mxu0 0.0
        %6193 = vmatpush1.msra.mxu0 %v5969
        %6194 = vmatprep.subr.mxu0 0.0
        %6195 = vmatpush2.msra.mxu0 0.0
        %6196 = vmatprep.subr.mxu0 0.0
        %6197 = vmatpush2.msra.mxu0 0.0
        %6198 = vmatprep.subr.mxu0 0.0
        %6199 = vmatpush2.msra.mxu0 0.0
        %6200 = vmatprep.subr.mxu0 0.0
        %6201 = vmatpush2.msra.mxu0 0.0
        %6202 = vmatprep.subr.mxu0 0.0
        %6203 = vmatpush2.msra.mxu0 0.0
        %6204 = vmatprep.subr.mxu0 0.0
        %6205 = vmatpush2.msra.mxu0 0.0
        %6206 = vmatprep.subr.mxu0 0.0
        %6207 = vmatpush2.msra.mxu0 0.0
        %6208 = vmatprep.subr.mxu0 0.0
        %6209 = vmatpush2.msra.mxu0 0.0
        %6210 = vmatprep.subr.mxu0 0.0
        %6211 = vmatpush2.msra.mxu0 0.0
        %6212 = vmatprep.subr.mxu0 0.0
        %6213 = vmatpush2.msra.mxu0 0.0
        %6214 = vmatprep.subr.mxu0 0.0
        %6215 = vmatpush2.msra.mxu0 0.0
        %6216 = vmatprep.subr.mxu0 0.0
        %6217 = vmatpush2.msra.mxu0 0.0
        %6218 = vmatprep.subr.mxu0 0.0
        %6219 = vmatpush2.msra.mxu0 0.0
        %6220 = vmatprep.subr.mxu0 0.0
        %6221 = vmatpush2.msra.mxu0 0.0
        %6222 = vmatprep.subr.mxu0 0.0
        %6223 = vmatpush2.msra.mxu0 0.0
        %6224 = vmatprep.subr.mxu0 0.0
        %6225 = vmatpush2.msra.mxu0 0.0
        %6226 = vmatprep.mubr.f32.mxu0 0.0
        %6227 = vmatmul.mubr.f32.gmra.mxu0 %v6148
        %v6228 = vpop.f32.mrf.mxu0
        %v6229 = vadd.f32 0.0, %v6228
        %v6230 = vpop.f32.mrf.mxu0
        %6231 = vmatprep.mubr.f32.mxu0 0.0
        %6232 = vmatmul.mubr.f32.gmra.mxu0 %v6151
        %v6233 = vpop.f32.mrf.mxu0
        %v6234 = vadd.f32 0.0, %v6233
        %v6235 = vpop.f32.mrf.mxu0
        %6236 = vmatprep.mubr.f32.mxu0 0.0
        %6237 = vmatmul.mubr.f32.gmra.mxu0 %v6154
        %v6238 = vpop.f32.mrf.mxu0
        %v6239 = vadd.f32 0.0, %v6238
        %v6240 = vpop.f32.mrf.mxu0
        %6241 = vmatprep.mubr.f32.mxu0 0.0
        %6242 = vmatmul.mubr.f32.gmra.mxu0 %v6157
        %v6243 = vpop.f32.mrf.mxu0
        %v6244 = vadd.f32 0.0, %v6243
        %v6245 = vpop.f32.mrf.mxu0
        %6246 = vdwg.mxu0
        %v6248 = vsel %vm2346, %v6229, 0
        %v6251 = vsel %vm2346, %v6234, 0
        %v6254 = vsel %vm2346, %v6239, 0
        %v6257 = vsel %vm2346, %v6244, 0
        %6259 = vmatprep.subr.mxu0 0.0
        %6260 = vmatpush1.msra.mxu0 0.0
        %6261 = vmatprep.subr.mxu0 0.0
        %6262 = vmatpush1.msra.mxu0 0.0
        %6263 = vmatprep.subr.mxu0 0.0
        %6264 = vmatpush1.msra.mxu0 0.0
        %6265 = vmatprep.subr.mxu0 0.0
        %6266 = vmatpush1.msra.mxu0 0.0
        %6267 = vmatprep.subr.mxu0 0.0
        %6268 = vmatpush1.msra.mxu0 0.0
        %6269 = vmatprep.subr.mxu0 0.0
        %6270 = vmatpush1.msra.mxu0 0.0
        %6271 = vmatprep.subr.mxu0 0.0
        %6272 = vmatpush1.msra.mxu0 0.0
        %6273 = vmatprep.subr.mxu0 0.0
        %6274 = vmatpush1.msra.mxu0 0.0
        %6275 = vmatprep.subr.mxu0 0.0
        %6276 = vmatpush1.msra.mxu0 0.0
        %6277 = vmatprep.subr.mxu0 0.0
        %6278 = vmatpush1.msra.mxu0 0.0
        %6279 = vmatprep.subr.mxu0 0.0
        %6280 = vmatpush1.msra.mxu0 0.0
        %6281 = vmatprep.subr.mxu0 0.0
        %6282 = vmatpush1.msra.mxu0 0.0
        %6283 = vmatprep.subr.mxu0 0.0
        %6284 = vmatpush1.msra.mxu0 0.0
        %6285 = vmatprep.subr.mxu0 0.0
        %6286 = vmatpush1.msra.mxu0 0.0
        %6287 = vmatprep.subr.mxu0 0.0
        %6288 = vmatpush1.msra.mxu0 0.0
        %6289 = vmatprep.subr.mxu0 0.0
        %6290 = vmatpush1.msra.mxu0 %v5988
        %6291 = vmatprep.subr.mxu0 0.0
        %6292 = vmatpush2.msra.mxu0 0.0
        %6293 = vmatprep.subr.mxu0 0.0
        %6294 = vmatpush2.msra.mxu0 0.0
        %6295 = vmatprep.subr.mxu0 0.0
        %6296 = vmatpush2.msra.mxu0 0.0
        %6297 = vmatprep.subr.mxu0 0.0
        %6298 = vmatpush2.msra.mxu0 0.0
        %6299 = vmatprep.subr.mxu0 0.0
        %6300 = vmatpush2.msra.mxu0 0.0
        %6301 = vmatprep.subr.mxu0 0.0
        %6302 = vmatpush2.msra.mxu0 0.0
        %6303 = vmatprep.subr.mxu0 0.0
        %6304 = vmatpush2.msra.mxu0 0.0
        %6305 = vmatprep.subr.mxu0 0.0
        %6306 = vmatpush2.msra.mxu0 0.0
        %6307 = vmatprep.subr.mxu0 0.0
        %6308 = vmatpush2.msra.mxu0 0.0
        %6309 = vmatprep.subr.mxu0 0.0
        %6310 = vmatpush2.msra.mxu0 0.0
        %6311 = vmatprep.subr.mxu0 0.0
        %6312 = vmatpush2.msra.mxu0 0.0
        %6313 = vmatprep.subr.mxu0 0.0
        %6314 = vmatpush2.msra.mxu0 0.0
        %6315 = vmatprep.subr.mxu0 0.0
        %6316 = vmatpush2.msra.mxu0 0.0
        %6317 = vmatprep.subr.mxu0 0.0
        %6318 = vmatpush2.msra.mxu0 0.0
        %6319 = vmatprep.subr.mxu0 0.0
        %6320 = vmatpush2.msra.mxu0 0.0
        %6321 = vmatprep.subr.mxu0 0.0
        %6322 = vmatpush2.msra.mxu0 0.0
        %6323 = vmatprep.mubr.f32.mxu0 0.0
        %6324 = vmatmul.mubr.f32.gmra.mxu0 %v6248
        %v6325 = vpop.f32.mrf.mxu0
        %v6326 = vadd.f32 0.0, %v6325
        %v6327 = vpop.f32.mrf.mxu0
        %6328 = vmatprep.mubr.f32.mxu0 0.0
        %6329 = vmatmul.mubr.f32.gmra.mxu0 %v6251
        %v6330 = vpop.f32.mrf.mxu0
        %v6331 = vadd.f32 0.0, %v6330
        %v6332 = vpop.f32.mrf.mxu0
        %6333 = vmatprep.mubr.f32.mxu0 0.0
        %6334 = vmatmul.mubr.f32.gmra.mxu0 %v6254
        %v6335 = vpop.f32.mrf.mxu0
        %v6336 = vadd.f32 0.0, %v6335
        %v6337 = vpop.f32.mrf.mxu0
        %6338 = vmatprep.mubr.f32.mxu0 0.0
        %6339 = vmatmul.mubr.f32.gmra.mxu0 %v6257
        %v6340 = vpop.f32.mrf.mxu0
        %v6341 = vadd.f32 0.0, %v6340
        %v6342 = vpop.f32.mrf.mxu0
        %6343 = vdwg.mxu0
        %v6345 = vlaneseq
        %v6346 = vshrl.u32 %v6345, 7
        %v6347 = vsub.s32 0, %v6346
        %v6348 = vrot.slane %v5993, %v6347
        %v6350 = vadd.f32 %v6348, %v6326
        %v6351 = vadd.f32 %v6348, %v6331
        %v6352 = vadd.f32 %v6348, %v6336
        %v6353 = vadd.f32 %v6348, %v6341
        %6354 = vrot.lane.b32.xlu0 %v5789, 120
        %v6355 = vpop.permute.xlu0 %6354
        %6356 = vrot.lane.b32.xlu0 %v5794, 120
        %v6357 = vpop.permute.xlu0 %6356
        %6358 = vrot.lane.b32.xlu0 %v5799, 120
        %v6359 = vpop.permute.xlu0 %6358
        %6360 = vrot.lane.b32.xlu0 %v5804, 120
        %v6361 = vpop.permute.xlu0 %6360
        %6362 = vrot.lane.b32.xlu0 %v5879, 120
        %v6363 = vpop.permute.xlu0 %6362
        %6364 = vrot.lane.b32.xlu0 %v5884, 120
        %v6365 = vpop.permute.xlu0 %6364
        %6366 = vrot.lane.b32.xlu0 %v5889, 120
        %v6367 = vpop.permute.xlu0 %6366
        %6368 = vrot.lane.b32.xlu0 %v5894, 120
        %v6369 = vpop.permute.xlu0 %6368
        %v6370 = vsel %vm2346, %v6355, 0
        %v6372 = vsel %vm2346, %v6357, 0
        %v6374 = vsel %vm2346, %v6359, 0
        %v6376 = vsel %vm2346, %v6361, 0
        %v6378 = vsel %vm2346, %v6363, 0
        %v6380 = vsel %vm2346, %v6365, 0
        %v6382 = vsel %vm2346, %v6367, 0
        %v6384 = vsel %vm2346, %v6369, 0
        %6386 = vmatprep.subr.mxu0 0.0
        %6387 = vmatpush1.xpose.msra.mxu0 0.0
        %6388 = vmatprep.subr.mxu0 0.0
        %6389 = vmatpush1.xpose.msra.mxu0 0.0
        %6390 = vmatprep.subr.mxu0 0.0
        %6391 = vmatpush1.xpose.msra.mxu0 0.0
        %6392 = vmatprep.subr.mxu0 0.0
        %6393 = vmatpush1.xpose.msra.mxu0 0.0
        %6394 = vmatprep.subr.mxu0 0.0
        %6395 = vmatpush1.xpose.msra.mxu0 0.0
        %6396 = vmatprep.subr.mxu0 0.0
        %6397 = vmatpush1.xpose.msra.mxu0 0.0
        %6398 = vmatprep.subr.mxu0 0.0
        %6399 = vmatpush1.xpose.msra.mxu0 0.0
        %6400 = vmatprep.subr.mxu0 0.0
        %6401 = vmatpush1.xpose.msra.mxu0 0.0
        %6402 = vmatprep.subr.mxu0 0.0
        %6403 = vmatpush1.xpose.msra.mxu0 0.0
        %6404 = vmatprep.subr.mxu0 0.0
        %6405 = vmatpush1.xpose.msra.mxu0 0.0
        %6406 = vmatprep.subr.mxu0 0.0
        %6407 = vmatpush1.xpose.msra.mxu0 0.0
        %6408 = vmatprep.subr.mxu0 0.0
        %6409 = vmatpush1.xpose.msra.mxu0 0.0
        %6410 = vmatprep.subr.mxu0 0.0
        %6411 = vmatpush1.xpose.msra.mxu0 %v6384
        %6412 = vmatprep.subr.mxu0 0.0
        %6413 = vmatpush1.xpose.msra.mxu0 %v6382
        %6414 = vmatprep.subr.mxu0 0.0
        %6415 = vmatpush1.xpose.msra.mxu0 %v6380
        %6416 = vmatprep.subr.mxu0 0.0
        %6417 = vmatpush1.xpose.msra.mxu0 %v6378
        %6418 = vmatprep.subr.mxu0 0.0
        %6419 = vmatpush2.xpose.msra.mxu0 0.0
        %6420 = vmatprep.subr.mxu0 0.0
        %6421 = vmatpush2.xpose.msra.mxu0 0.0
        %6422 = vmatprep.subr.mxu0 0.0
        %6423 = vmatpush2.xpose.msra.mxu0 0.0
        %6424 = vmatprep.subr.mxu0 0.0
        %6425 = vmatpush2.xpose.msra.mxu0 0.0
        %6426 = vmatprep.subr.mxu0 0.0
        %6427 = vmatpush2.xpose.msra.mxu0 0.0
        %6428 = vmatprep.subr.mxu0 0.0
        %6429 = vmatpush2.xpose.msra.mxu0 0.0
        %6430 = vmatprep.subr.mxu0 0.0
        %6431 = vmatpush2.xpose.msra.mxu0 0.0
        %6432 = vmatprep.subr.mxu0 0.0
        %6433 = vmatpush2.xpose.msra.mxu0 0.0
        %6434 = vmatprep.subr.mxu0 0.0
        %6435 = vmatpush2.xpose.msra.mxu0 0.0
        %6436 = vmatprep.subr.mxu0 0.0
        %6437 = vmatpush2.xpose.msra.mxu0 0.0
        %6438 = vmatprep.subr.mxu0 0.0
        %6439 = vmatpush2.xpose.msra.mxu0 0.0
        %6440 = vmatprep.subr.mxu0 0.0
        %6441 = vmatpush2.xpose.msra.mxu0 0.0
        %6442 = vmatprep.subr.mxu0 0.0
        %6443 = vmatpush2.xpose.msra.mxu0 0.0
        %6444 = vmatprep.subr.mxu0 0.0
        %6445 = vmatpush2.xpose.msra.mxu0 0.0
        %6446 = vmatprep.subr.mxu0 0.0
        %6447 = vmatpush2.xpose.msra.mxu0 0.0
        %6448 = vmatprep.subr.mxu0 0.0
        %6449 = vmatpush2.xpose.msra.mxu0 0.0
        %6450 = vmatprep.mubr.f32.mxu0 0.0
        %6451 = vmatmul.mubr.f32.gmra.mxu0 %v6370
        %v6452 = vpop.f32.mrf.mxu0
        %v6453 = vadd.f32 %v3522, %v6452
        %v6454 = vpop.f32.mrf.mxu0
        %6455 = vmatprep.mubr.f32.mxu0 0.0
        %6456 = vmatmul.mubr.f32.gmra.mxu0 %v6372
        %v6457 = vpop.f32.mrf.mxu0
        %v6458 = vadd.f32 %v3523, %v6457
        %v6459 = vpop.f32.mrf.mxu0
        %6460 = vmatprep.mubr.f32.mxu0 0.0
        %6461 = vmatmul.mubr.f32.gmra.mxu0 %v6374
        %v6462 = vpop.f32.mrf.mxu0
        %v6463 = vadd.f32 %v3524, %v6462
        %v6464 = vpop.f32.mrf.mxu0
        %6465 = vmatprep.mubr.f32.mxu0 0.0
        %6466 = vmatmul.mubr.f32.gmra.mxu0 %v6376
        %v6467 = vpop.f32.mrf.mxu0
        %v6468 = vadd.f32 %v3525, %v6467
        %v6469 = vpop.f32.mrf.mxu0
        %6470 = vdwg.mxu0
        %v6471 = vsel %vm3919, %v6453, -inf
        %6472 = vmax.xlane.f32.xlu0 %v6471
        %v6473 = vpop.xlane.xlu0 %6472
        %v6474 = vsel %vm3919, %v6458, -inf
        %6475 = vmax.xlane.f32.xlu0 %v6474
        %v6476 = vpop.xlane.xlu0 %6475
        %v6477 = vsel %vm3919, %v6463, -inf
        %6478 = vmax.xlane.f32.xlu0 %v6477
        %v6479 = vpop.xlane.xlu0 %6478
        %v6480 = vsel %vm3929, %v6468, -inf
        %6481 = vmax.xlane.f32.xlu0 %v6480
        %v6482 = vpop.xlane.xlu0 %6481
        %v6483 = vsub.f32 %v6453, %v6473
        %v6484 = vsub.f32 %v6458, %v6476
        %v6485 = vsub.f32 %v6463, %v6479
        %v6486 = vsub.f32 %v6468, %v6482
        %v6487 = vmul.f32 %v6483, 1.442695
        %v6488 = vpow.pop %v6487
        %v6489 = vmul.f32 %v6484, 1.442695
        %v6490 = vpow.pop %v6489
        %v6491 = vmul.f32 %v6485, 1.442695
        %v6492 = vpow.pop %v6491
        %v6493 = vmul.f32 %v6486, 1.442695
        %v6494 = vpow.pop %v6493
        %v6495 = vsel %vm3919, %v6488, 0.0
        %6496 = vadd.xlane.f32.xlu0 %v6495
        %v6497 = vpop.xlane.xlu0 %6496
        %v6498 = vsel %vm3919, %v6490, 0.0
        %6499 = vadd.xlane.f32.xlu0 %v6498
        %v6500 = vpop.xlane.xlu0 %6499
        %v6501 = vsel %vm3919, %v6492, 0.0
        %6502 = vadd.xlane.f32.xlu0 %v6501
        %v6503 = vpop.xlane.xlu0 %6502
        %v6504 = vsel %vm3929, %v6494, 0.0
        %6505 = vadd.xlane.f32.xlu0 %v6504
        %v6506 = vpop.xlane.xlu0 %6505
        %v6507 = vrcp.pop %v6497
        %v6508 = vrcp.pop %v6500
        %v6509 = vrcp.pop %v6503
        %v6510 = vrcp.pop %v6506
        %v6511 = vmul.f32 %v6488, %v6507
        %v6512 = vmul.f32 %v6490, %v6508
        %v6513 = vmul.f32 %v6492, %v6509
        %v6514 = vmul.f32 %v6494, %v6510
        %6518 = vrot.lane.b32.xlu0 %v5969, 120
        %v6519 = vpop.permute.xlu0 %6518
        %6520 = vrot.lane.b32.xlu0 %v5974, 120
        %v6521 = vpop.permute.xlu0 %6520
        %6522 = vrot.lane.b32.xlu0 %v5979, 120
        %v6523 = vpop.permute.xlu0 %6522
        %6524 = vrot.lane.b32.xlu0 %v5984, 120
        %v6525 = vpop.permute.xlu0 %6524
        %v6530 = vsel %vm3919, %v6511, 0
        %v6533 = vsel %vm3919, %v6512, 0
        %v6536 = vsel %vm3919, %v6513, 0
        %v6539 = vsel %vm3919, %v6514, 0
        %v6541 = vsel %vm3977, %v6525, 0
        %6543 = vmatprep.subr.mxu0 0.0
        %6544 = vmatpush1.msra.mxu0 0.0
        %6545 = vmatprep.subr.mxu0 0.0
        %6546 = vmatpush1.msra.mxu0 0.0
        %6547 = vmatprep.subr.mxu0 0.0
        %6548 = vmatpush1.msra.mxu0 0.0
        %6549 = vmatprep.subr.mxu0 0.0
        %6550 = vmatpush1.msra.mxu0 0.0
        %6551 = vmatprep.subr.mxu0 0.0
        %6552 = vmatpush1.msra.mxu0 0.0
        %6553 = vmatprep.subr.mxu0 0.0
        %6554 = vmatpush1.msra.mxu0 0.0
        %6555 = vmatprep.subr.mxu0 0.0
        %6556 = vmatpush1.msra.mxu0 0.0
        %6557 = vmatprep.subr.mxu0 0.0
        %6558 = vmatpush1.msra.mxu0 0.0
        %6559 = vmatprep.subr.mxu0 0.0
        %6560 = vmatpush1.msra.mxu0 0.0
        %6561 = vmatprep.subr.mxu0 0.0
        %6562 = vmatpush1.msra.mxu0 0.0
        %6563 = vmatprep.subr.mxu0 0.0
        %6564 = vmatpush1.msra.mxu0 0.0
        %6565 = vmatprep.subr.mxu0 0.0
        %6566 = vmatpush1.msra.mxu0 0.0
        %6567 = vmatprep.subr.mxu0 0.0
        %6568 = vmatpush1.msra.mxu0 %v6541
        %6569 = vmatprep.subr.mxu0 0.0
        %6570 = vmatpush1.msra.mxu0 %v6523
        %6571 = vmatprep.subr.mxu0 0.0
        %6572 = vmatpush1.msra.mxu0 %v6521
        %6573 = vmatprep.subr.mxu0 0.0
        %6574 = vmatpush1.msra.mxu0 %v6519
        %6575 = vmatprep.subr.mxu0 0.0
        %6576 = vmatpush2.msra.mxu0 0.0
        %6577 = vmatprep.subr.mxu0 0.0
        %6578 = vmatpush2.msra.mxu0 0.0
        %6579 = vmatprep.subr.mxu0 0.0
        %6580 = vmatpush2.msra.mxu0 0.0
        %6581 = vmatprep.subr.mxu0 0.0
        %6582 = vmatpush2.msra.mxu0 0.0
        %6583 = vmatprep.subr.mxu0 0.0
        %6584 = vmatpush2.msra.mxu0 0.0
        %6585 = vmatprep.subr.mxu0 0.0
        %6586 = vmatpush2.msra.mxu0 0.0
        %6587 = vmatprep.subr.mxu0 0.0
        %6588 = vmatpush2.msra.mxu0 0.0
        %6589 = vmatprep.subr.mxu0 0.0
        %6590 = vmatpush2.msra.mxu0 0.0
        %6591 = vmatprep.subr.mxu0 0.0
        %6592 = vmatpush2.msra.mxu0 0.0
        %6593 = vmatprep.subr.mxu0 0.0
        %6594 = vmatpush2.msra.mxu0 0.0
        %6595 = vmatprep.subr.mxu0 0.0
        %6596 = vmatpush2.msra.mxu0 0.0
        %6597 = vmatprep.subr.mxu0 0.0
        %6598 = vmatpush2.msra.mxu0 0.0
        %6599 = vmatprep.subr.mxu0 0.0
        %6600 = vmatpush2.msra.mxu0 0.0
        %6601 = vmatprep.subr.mxu0 0.0
        %6602 = vmatpush2.msra.mxu0 0.0
        %6603 = vmatprep.subr.mxu0 0.0
        %6604 = vmatpush2.msra.mxu0 0.0
        %6605 = vmatprep.subr.mxu0 0.0
        %6606 = vmatpush2.msra.mxu0 0.0
        %6607 = vmatprep.mubr.f32.mxu0 0.0
        %6608 = vmatmul.mubr.f32.gmra.mxu0 %v6530
        %v6609 = vpop.f32.mrf.mxu0
        %v6610 = vadd.f32 0.0, %v6609
        %v6611 = vpop.f32.mrf.mxu0
        %6612 = vmatprep.mubr.f32.mxu0 0.0
        %6613 = vmatmul.mubr.f32.gmra.mxu0 %v6533
        %v6614 = vpop.f32.mrf.mxu0
        %v6615 = vadd.f32 0.0, %v6614
        %v6616 = vpop.f32.mrf.mxu0
        %6617 = vmatprep.mubr.f32.mxu0 0.0
        %6618 = vmatmul.mubr.f32.gmra.mxu0 %v6536
        %v6619 = vpop.f32.mrf.mxu0
        %v6620 = vadd.f32 0.0, %v6619
        %v6621 = vpop.f32.mrf.mxu0
        %6622 = vmatprep.mubr.f32.mxu0 0.0
        %6623 = vmatmul.mubr.f32.gmra.mxu0 %v6539
        %v6624 = vpop.f32.mrf.mxu0
        %v6625 = vadd.f32 0.0, %v6624
        %v6626 = vpop.f32.mrf.mxu0
        %6627 = vdwg.mxu0
        %v6629 = vsel %vm2346, %v6610, 0
        %v6632 = vsel %vm2346, %v6615, 0
        %v6635 = vsel %vm2346, %v6620, 0
        %v6638 = vsel %vm2346, %v6625, 0
        %6640 = vmatprep.subr.mxu0 0.0
        %6641 = vmatpush1.msra.mxu0 0.0
        %6642 = vmatprep.subr.mxu0 0.0
        %6643 = vmatpush1.msra.mxu0 0.0
        %6644 = vmatprep.subr.mxu0 0.0
        %6645 = vmatpush1.msra.mxu0 0.0
        %6646 = vmatprep.subr.mxu0 0.0
        %6647 = vmatpush1.msra.mxu0 0.0
        %6648 = vmatprep.subr.mxu0 0.0
        %6649 = vmatpush1.msra.mxu0 0.0
        %6650 = vmatprep.subr.mxu0 0.0
        %6651 = vmatpush1.msra.mxu0 0.0
        %6652 = vmatprep.subr.mxu0 0.0
        %6653 = vmatpush1.msra.mxu0 0.0
        %6654 = vmatprep.subr.mxu0 0.0
        %6655 = vmatpush1.msra.mxu0 0.0
        %6656 = vmatprep.subr.mxu0 0.0
        %6657 = vmatpush1.msra.mxu0 0.0
        %6658 = vmatprep.subr.mxu0 0.0
        %6659 = vmatpush1.msra.mxu0 0.0
        %6660 = vmatprep.subr.mxu0 0.0
        %6661 = vmatpush1.msra.mxu0 0.0
        %6662 = vmatprep.subr.mxu0 0.0
        %6663 = vmatpush1.msra.mxu0 0.0
        %6664 = vmatprep.subr.mxu0 0.0
        %6665 = vmatpush1.msra.mxu0 0.0
        %6666 = vmatprep.subr.mxu0 0.0
        %6667 = vmatpush1.msra.mxu0 0.0
        %6668 = vmatprep.subr.mxu0 0.0
        %6669 = vmatpush1.msra.mxu0 0.0
        %6670 = vmatprep.subr.mxu0 0.0
        %6671 = vmatpush1.msra.mxu0 %v5989
        %6672 = vmatprep.subr.mxu0 0.0
        %6673 = vmatpush2.msra.mxu0 0.0
        %6674 = vmatprep.subr.mxu0 0.0
        %6675 = vmatpush2.msra.mxu0 0.0
        %6676 = vmatprep.subr.mxu0 0.0
        %6677 = vmatpush2.msra.mxu0 0.0
        %6678 = vmatprep.subr.mxu0 0.0
        %6679 = vmatpush2.msra.mxu0 0.0
        %6680 = vmatprep.subr.mxu0 0.0
        %6681 = vmatpush2.msra.mxu0 0.0
        %6682 = vmatprep.subr.mxu0 0.0
        %6683 = vmatpush2.msra.mxu0 0.0
        %6684 = vmatprep.subr.mxu0 0.0
        %6685 = vmatpush2.msra.mxu0 0.0
        %6686 = vmatprep.subr.mxu0 0.0
        %6687 = vmatpush2.msra.mxu0 0.0
        %6688 = vmatprep.subr.mxu0 0.0
        %6689 = vmatpush2.msra.mxu0 0.0
        %6690 = vmatprep.subr.mxu0 0.0
        %6691 = vmatpush2.msra.mxu0 0.0
        %6692 = vmatprep.subr.mxu0 0.0
        %6693 = vmatpush2.msra.mxu0 0.0
        %6694 = vmatprep.subr.mxu0 0.0
        %6695 = vmatpush2.msra.mxu0 0.0
        %6696 = vmatprep.subr.mxu0 0.0
        %6697 = vmatpush2.msra.mxu0 0.0
        %6698 = vmatprep.subr.mxu0 0.0
        %6699 = vmatpush2.msra.mxu0 0.0
        %6700 = vmatprep.subr.mxu0 0.0
        %6701 = vmatpush2.msra.mxu0 0.0
        %6702 = vmatprep.subr.mxu0 0.0
        %6703 = vmatpush2.msra.mxu0 0.0
        %6704 = vmatprep.mubr.f32.mxu0 0.0
        %6705 = vmatmul.mubr.f32.gmra.mxu0 %v6629
        %v6706 = vpop.f32.mrf.mxu0
        %v6707 = vadd.f32 0.0, %v6706
        %v6708 = vpop.f32.mrf.mxu0
        %6709 = vmatprep.mubr.f32.mxu0 0.0
        %6710 = vmatmul.mubr.f32.gmra.mxu0 %v6632
        %v6711 = vpop.f32.mrf.mxu0
        %v6712 = vadd.f32 0.0, %v6711
        %v6713 = vpop.f32.mrf.mxu0
        %6714 = vmatprep.mubr.f32.mxu0 0.0
        %6715 = vmatmul.mubr.f32.gmra.mxu0 %v6635
        %v6716 = vpop.f32.mrf.mxu0
        %v6717 = vadd.f32 0.0, %v6716
        %v6718 = vpop.f32.mrf.mxu0
        %6719 = vmatprep.mubr.f32.mxu0 0.0
        %6720 = vmatmul.mubr.f32.gmra.mxu0 %v6638
        %v6721 = vpop.f32.mrf.mxu0
        %v6722 = vadd.f32 0.0, %v6721
        %v6723 = vpop.f32.mrf.mxu0
        %6724 = vdwg.mxu0
        %v6725 = vadd.f32 %v6350, %v6707
        %v6726 = vadd.f32 %v6351, %v6712
        %v6727 = vadd.f32 %v6352, %v6717
        %v6728 = vadd.f32 %v6353, %v6722
        %6729 = vrot.lane.b32.xlu0 %v5789, 112
        %v6730 = vpop.permute.xlu0 %6729
        %6731 = vrot.lane.b32.xlu0 %v5794, 112
        %v6732 = vpop.permute.xlu0 %6731
        %6733 = vrot.lane.b32.xlu0 %v5799, 112
        %v6734 = vpop.permute.xlu0 %6733
        %6735 = vrot.lane.b32.xlu0 %v5804, 112
        %v6736 = vpop.permute.xlu0 %6735
        %6737 = vrot.lane.b32.xlu0 %v5879, 112
        %v6738 = vpop.permute.xlu0 %6737
        %6739 = vrot.lane.b32.xlu0 %v5884, 112
        %v6740 = vpop.permute.xlu0 %6739
        %6741 = vrot.lane.b32.xlu0 %v5889, 112
        %v6742 = vpop.permute.xlu0 %6741
        %6743 = vrot.lane.b32.xlu0 %v5894, 112
        %v6744 = vpop.permute.xlu0 %6743
        %v6745 = vsel %vm2346, %v6730, 0
        %v6747 = vsel %vm2346, %v6732, 0
        %v6749 = vsel %vm2346, %v6734, 0
        %v6751 = vsel %vm2346, %v6736, 0
        %v6753 = vsel %vm2346, %v6738, 0
        %v6755 = vsel %vm2346, %v6740, 0
        %v6757 = vsel %vm2346, %v6742, 0
        %v6759 = vsel %vm2346, %v6744, 0
        %6761 = vmatprep.subr.mxu0 0.0
        %6762 = vmatpush1.xpose.msra.mxu0 0.0
        %6763 = vmatprep.subr.mxu0 0.0
        %6764 = vmatpush1.xpose.msra.mxu0 0.0
        %6765 = vmatprep.subr.mxu0 0.0
        %6766 = vmatpush1.xpose.msra.mxu0 0.0
        %6767 = vmatprep.subr.mxu0 0.0
        %6768 = vmatpush1.xpose.msra.mxu0 0.0
        %6769 = vmatprep.subr.mxu0 0.0
        %6770 = vmatpush1.xpose.msra.mxu0 0.0
        %6771 = vmatprep.subr.mxu0 0.0
        %6772 = vmatpush1.xpose.msra.mxu0 0.0
        %6773 = vmatprep.subr.mxu0 0.0
        %6774 = vmatpush1.xpose.msra.mxu0 0.0
        %6775 = vmatprep.subr.mxu0 0.0
        %6776 = vmatpush1.xpose.msra.mxu0 0.0
        %6777 = vmatprep.subr.mxu0 0.0
        %6778 = vmatpush1.xpose.msra.mxu0 0.0
        %6779 = vmatprep.subr.mxu0 0.0
        %6780 = vmatpush1.xpose.msra.mxu0 0.0
        %6781 = vmatprep.subr.mxu0 0.0
        %6782 = vmatpush1.xpose.msra.mxu0 0.0
        %6783 = vmatprep.subr.mxu0 0.0
        %6784 = vmatpush1.xpose.msra.mxu0 0.0
        %6785 = vmatprep.subr.mxu0 0.0
        %6786 = vmatpush1.xpose.msra.mxu0 %v6759
        %6787 = vmatprep.subr.mxu0 0.0
        %6788 = vmatpush1.xpose.msra.mxu0 %v6757
        %6789 = vmatprep.subr.mxu0 0.0
        %6790 = vmatpush1.xpose.msra.mxu0 %v6755
        %6791 = vmatprep.subr.mxu0 0.0
        %6792 = vmatpush1.xpose.msra.mxu0 %v6753
        %6793 = vmatprep.subr.mxu0 0.0
        %6794 = vmatpush2.xpose.msra.mxu0 0.0
        %6795 = vmatprep.subr.mxu0 0.0
        %6796 = vmatpush2.xpose.msra.mxu0 0.0
        %6797 = vmatprep.subr.mxu0 0.0
        %6798 = vmatpush2.xpose.msra.mxu0 0.0
        %6799 = vmatprep.subr.mxu0 0.0
        %6800 = vmatpush2.xpose.msra.mxu0 0.0
        %6801 = vmatprep.subr.mxu0 0.0
        %6802 = vmatpush2.xpose.msra.mxu0 0.0
        %6803 = vmatprep.subr.mxu0 0.0
        %6804 = vmatpush2.xpose.msra.mxu0 0.0
        %6805 = vmatprep.subr.mxu0 0.0
        %6806 = vmatpush2.xpose.msra.mxu0 0.0
        %6807 = vmatprep.subr.mxu0 0.0
        %6808 = vmatpush2.xpose.msra.mxu0 0.0
        %6809 = vmatprep.subr.mxu0 0.0
        %6810 = vmatpush2.xpose.msra.mxu0 0.0
        %6811 = vmatprep.subr.mxu0 0.0
        %6812 = vmatpush2.xpose.msra.mxu0 0.0
        %6813 = vmatprep.subr.mxu0 0.0
        %6814 = vmatpush2.xpose.msra.mxu0 0.0
        %6815 = vmatprep.subr.mxu0 0.0
        %6816 = vmatpush2.xpose.msra.mxu0 0.0
        %6817 = vmatprep.subr.mxu0 0.0
        %6818 = vmatpush2.xpose.msra.mxu0 0.0
        %6819 = vmatprep.subr.mxu0 0.0
        %6820 = vmatpush2.xpose.msra.mxu0 0.0
        %6821 = vmatprep.subr.mxu0 0.0
        %6822 = vmatpush2.xpose.msra.mxu0 0.0
        %6823 = vmatprep.subr.mxu0 0.0
        %6824 = vmatpush2.xpose.msra.mxu0 0.0
        %6825 = vmatprep.mubr.f32.mxu0 0.0
        %6826 = vmatmul.mubr.f32.gmra.mxu0 %v6745
        %v6827 = vpop.f32.mrf.mxu0
        %v6828 = vadd.f32 %v3522, %v6827
        %v6829 = vpop.f32.mrf.mxu0
        %6830 = vmatprep.mubr.f32.mxu0 0.0
        %6831 = vmatmul.mubr.f32.gmra.mxu0 %v6747
        %v6832 = vpop.f32.mrf.mxu0
        %v6833 = vadd.f32 %v3523, %v6832
        %v6834 = vpop.f32.mrf.mxu0
        %6835 = vmatprep.mubr.f32.mxu0 0.0
        %6836 = vmatmul.mubr.f32.gmra.mxu0 %v6749
        %v6837 = vpop.f32.mrf.mxu0
        %v6838 = vadd.f32 %v3524, %v6837
        %v6839 = vpop.f32.mrf.mxu0
        %6840 = vmatprep.mubr.f32.mxu0 0.0
        %6841 = vmatmul.mubr.f32.gmra.mxu0 %v6751
        %v6842 = vpop.f32.mrf.mxu0
        %v6843 = vadd.f32 %v3525, %v6842
        %v6844 = vpop.f32.mrf.mxu0
        %6845 = vdwg.mxu0
        %v6846 = vsel %vm3919, %v6828, -inf
        %6847 = vmax.xlane.f32.xlu0 %v6846
        %v6848 = vpop.xlane.xlu0 %6847
        %v6849 = vsel %vm3919, %v6833, -inf
        %6850 = vmax.xlane.f32.xlu0 %v6849
        %v6851 = vpop.xlane.xlu0 %6850
        %v6852 = vsel %vm3919, %v6838, -inf
        %6853 = vmax.xlane.f32.xlu0 %v6852
        %v6854 = vpop.xlane.xlu0 %6853
        %v6855 = vsel %vm3929, %v6843, -inf
        %6856 = vmax.xlane.f32.xlu0 %v6855
        %v6857 = vpop.xlane.xlu0 %6856
        %v6858 = vsub.f32 %v6828, %v6848
        %v6859 = vsub.f32 %v6833, %v6851
        %v6860 = vsub.f32 %v6838, %v6854
        %v6861 = vsub.f32 %v6843, %v6857
        %v6862 = vmul.f32 %v6858, 1.442695
        %v6863 = vpow.pop %v6862
        %v6864 = vmul.f32 %v6859, 1.442695
        %v6865 = vpow.pop %v6864
        %v6866 = vmul.f32 %v6860, 1.442695
        %v6867 = vpow.pop %v6866
        %v6868 = vmul.f32 %v6861, 1.442695
        %v6869 = vpow.pop %v6868
        %v6870 = vsel %vm3919, %v6863, 0.0
        %6871 = vadd.xlane.f32.xlu0 %v6870
        %v6872 = vpop.xlane.xlu0 %6871
        %v6873 = vsel %vm3919, %v6865, 0.0
        %6874 = vadd.xlane.f32.xlu0 %v6873
        %v6875 = vpop.xlane.xlu0 %6874
        %v6876 = vsel %vm3919, %v6867, 0.0
        %6877 = vadd.xlane.f32.xlu0 %v6876
        %v6878 = vpop.xlane.xlu0 %6877
        %v6879 = vsel %vm3929, %v6869, 0.0
        %6880 = vadd.xlane.f32.xlu0 %v6879
        %v6881 = vpop.xlane.xlu0 %6880
        %v6882 = vrcp.pop %v6872
        %v6883 = vrcp.pop %v6875
        %v6884 = vrcp.pop %v6878
        %v6885 = vrcp.pop %v6881
        %v6886 = vmul.f32 %v6863, %v6882
        %v6887 = vmul.f32 %v6865, %v6883
        %v6888 = vmul.f32 %v6867, %v6884
        %v6889 = vmul.f32 %v6869, %v6885
        %6890 = vrot.lane.b32.xlu0 %v5969, 112
        %v6891 = vpop.permute.xlu0 %6890
        %6892 = vrot.lane.b32.xlu0 %v5974, 112
        %v6893 = vpop.permute.xlu0 %6892
        %6894 = vrot.lane.b32.xlu0 %v5979, 112
        %v6895 = vpop.permute.xlu0 %6894
        %6896 = vrot.lane.b32.xlu0 %v5984, 112
        %v6897 = vpop.permute.xlu0 %6896
        %v6902 = vsel %vm3919, %v6886, 0
        %v6905 = vsel %vm3919, %v6887, 0
        %v6908 = vsel %vm3919, %v6888, 0
        %v6911 = vsel %vm3919, %v6889, 0
        %v6913 = vsel %vm3977, %v6897, 0
        %6915 = vmatprep.subr.mxu0 0.0
        %6916 = vmatpush1.msra.mxu0 0.0
        %6917 = vmatprep.subr.mxu0 0.0
        %6918 = vmatpush1.msra.mxu0 0.0
        %6919 = vmatprep.subr.mxu0 0.0
        %6920 = vmatpush1.msra.mxu0 0.0
        %6921 = vmatprep.subr.mxu0 0.0
        %6922 = vmatpush1.msra.mxu0 0.0
        %6923 = vmatprep.subr.mxu0 0.0
        %6924 = vmatpush1.msra.mxu0 0.0
        %6925 = vmatprep.subr.mxu0 0.0
        %6926 = vmatpush1.msra.mxu0 0.0
        %6927 = vmatprep.subr.mxu0 0.0
        %6928 = vmatpush1.msra.mxu0 0.0
        %6929 = vmatprep.subr.mxu0 0.0
        %6930 = vmatpush1.msra.mxu0 0.0
        %6931 = vmatprep.subr.mxu0 0.0
        %6932 = vmatpush1.msra.mxu0 0.0
        %6933 = vmatprep.subr.mxu0 0.0
        %6934 = vmatpush1.msra.mxu0 0.0
        %6935 = vmatprep.subr.mxu0 0.0
        %6936 = vmatpush1.msra.mxu0 0.0
        %6937 = vmatprep.subr.mxu0 0.0
        %6938 = vmatpush1.msra.mxu0 0.0
        %6939 = vmatprep.subr.mxu0 0.0
        %6940 = vmatpush1.msra.mxu0 %v6913
        %6941 = vmatprep.subr.mxu0 0.0
        %6942 = vmatpush1.msra.mxu0 %v6895
        %6943 = vmatprep.subr.mxu0 0.0
        %6944 = vmatpush1.msra.mxu0 %v6893
        %6945 = vmatprep.subr.mxu0 0.0
        %6946 = vmatpush1.msra.mxu0 %v6891
        %6947 = vmatprep.subr.mxu0 0.0
        %6948 = vmatpush2.msra.mxu0 0.0
        %6949 = vmatprep.subr.mxu0 0.0
        %6950 = vmatpush2.msra.mxu0 0.0
        %6951 = vmatprep.subr.mxu0 0.0
        %6952 = vmatpush2.msra.mxu0 0.0
        %6953 = vmatprep.subr.mxu0 0.0
        %6954 = vmatpush2.msra.mxu0 0.0
        %6955 = vmatprep.subr.mxu0 0.0
        %6956 = vmatpush2.msra.mxu0 0.0
        %6957 = vmatprep.subr.mxu0 0.0
        %6958 = vmatpush2.msra.mxu0 0.0
        %6959 = vmatprep.subr.mxu0 0.0
        %6960 = vmatpush2.msra.mxu0 0.0
        %6961 = vmatprep.subr.mxu0 0.0
        %6962 = vmatpush2.msra.mxu0 0.0
        %6963 = vmatprep.subr.mxu0 0.0
        %6964 = vmatpush2.msra.mxu0 0.0
        %6965 = vmatprep.subr.mxu0 0.0
        %6966 = vmatpush2.msra.mxu0 0.0
        %6967 = vmatprep.subr.mxu0 0.0
        %6968 = vmatpush2.msra.mxu0 0.0
        %6969 = vmatprep.subr.mxu0 0.0
        %6970 = vmatpush2.msra.mxu0 0.0
        %6971 = vmatprep.subr.mxu0 0.0
        %6972 = vmatpush2.msra.mxu0 0.0
        %6973 = vmatprep.subr.mxu0 0.0
        %6974 = vmatpush2.msra.mxu0 0.0
        %6975 = vmatprep.subr.mxu0 0.0
        %6976 = vmatpush2.msra.mxu0 0.0
        %6977 = vmatprep.subr.mxu0 0.0
        %6978 = vmatpush2.msra.mxu0 0.0
        %6979 = vmatprep.mubr.f32.mxu0 0.0
        %6980 = vmatmul.mubr.f32.gmra.mxu0 %v6902
        %v6981 = vpop.f32.mrf.mxu0
        %v6982 = vadd.f32 0.0, %v6981
        %v6983 = vpop.f32.mrf.mxu0
        %6984 = vmatprep.mubr.f32.mxu0 0.0
        %6985 = vmatmul.mubr.f32.gmra.mxu0 %v6905
        %v6986 = vpop.f32.mrf.mxu0
        %v6987 = vadd.f32 0.0, %v6986
        %v6988 = vpop.f32.mrf.mxu0
        %6989 = vmatprep.mubr.f32.mxu0 0.0
        %6990 = vmatmul.mubr.f32.gmra.mxu0 %v6908
        %v6991 = vpop.f32.mrf.mxu0
        %v6992 = vadd.f32 0.0, %v6991
        %v6993 = vpop.f32.mrf.mxu0
        %6994 = vmatprep.mubr.f32.mxu0 0.0
        %6995 = vmatmul.mubr.f32.gmra.mxu0 %v6911
        %v6996 = vpop.f32.mrf.mxu0
        %v6997 = vadd.f32 0.0, %v6996
        %v6998 = vpop.f32.mrf.mxu0
        %6999 = vdwg.mxu0
        %v7001 = vsel %vm2346, %v6982, 0
        %v7004 = vsel %vm2346, %v6987, 0
        %v7007 = vsel %vm2346, %v6992, 0
        %v7010 = vsel %vm2346, %v6997, 0
        %7012 = vmatprep.subr.mxu0 0.0
        %7013 = vmatpush1.msra.mxu0 0.0
        %7014 = vmatprep.subr.mxu0 0.0
        %7015 = vmatpush1.msra.mxu0 0.0
        %7016 = vmatprep.subr.mxu0 0.0
        %7017 = vmatpush1.msra.mxu0 0.0
        %7018 = vmatprep.subr.mxu0 0.0
        %7019 = vmatpush1.msra.mxu0 0.0
        %7020 = vmatprep.subr.mxu0 0.0
        %7021 = vmatpush1.msra.mxu0 0.0
        %7022 = vmatprep.subr.mxu0 0.0
        %7023 = vmatpush1.msra.mxu0 0.0
        %7024 = vmatprep.subr.mxu0 0.0
        %7025 = vmatpush1.msra.mxu0 0.0
        %7026 = vmatprep.subr.mxu0 0.0
        %7027 = vmatpush1.msra.mxu0 0.0
        %7028 = vmatprep.subr.mxu0 0.0
        %7029 = vmatpush1.msra.mxu0 0.0
        %7030 = vmatprep.subr.mxu0 0.0
        %7031 = vmatpush1.msra.mxu0 0.0
        %7032 = vmatprep.subr.mxu0 0.0
        %7033 = vmatpush1.msra.mxu0 0.0
        %7034 = vmatprep.subr.mxu0 0.0
        %7035 = vmatpush1.msra.mxu0 0.0
        %7036 = vmatprep.subr.mxu0 0.0
        %7037 = vmatpush1.msra.mxu0 0.0
        %7038 = vmatprep.subr.mxu0 0.0
        %7039 = vmatpush1.msra.mxu0 0.0
        %7040 = vmatprep.subr.mxu0 0.0
        %7041 = vmatpush1.msra.mxu0 0.0
        %7042 = vmatprep.subr.mxu0 0.0
        %7043 = vmatpush1.msra.mxu0 %v5990
        %7044 = vmatprep.subr.mxu0 0.0
        %7045 = vmatpush2.msra.mxu0 0.0
        %7046 = vmatprep.subr.mxu0 0.0
        %7047 = vmatpush2.msra.mxu0 0.0
        %7048 = vmatprep.subr.mxu0 0.0
        %7049 = vmatpush2.msra.mxu0 0.0
        %7050 = vmatprep.subr.mxu0 0.0
        %7051 = vmatpush2.msra.mxu0 0.0
        %7052 = vmatprep.subr.mxu0 0.0
        %7053 = vmatpush2.msra.mxu0 0.0
        %7054 = vmatprep.subr.mxu0 0.0
        %7055 = vmatpush2.msra.mxu0 0.0
        %7056 = vmatprep.subr.mxu0 0.0
        %7057 = vmatpush2.msra.mxu0 0.0
        %7058 = vmatprep.subr.mxu0 0.0
        %7059 = vmatpush2.msra.mxu0 0.0
        %7060 = vmatprep.subr.mxu0 0.0
        %7061 = vmatpush2.msra.mxu0 0.0
        %7062 = vmatprep.subr.mxu0 0.0
        %7063 = vmatpush2.msra.mxu0 0.0
        %7064 = vmatprep.subr.mxu0 0.0
        %7065 = vmatpush2.msra.mxu0 0.0
        %7066 = vmatprep.subr.mxu0 0.0
        %7067 = vmatpush2.msra.mxu0 0.0
        %7068 = vmatprep.subr.mxu0 0.0
        %7069 = vmatpush2.msra.mxu0 0.0
        %7070 = vmatprep.subr.mxu0 0.0
        %7071 = vmatpush2.msra.mxu0 0.0
        %7072 = vmatprep.subr.mxu0 0.0
        %7073 = vmatpush2.msra.mxu0 0.0
        %7074 = vmatprep.subr.mxu0 0.0
        %7075 = vmatpush2.msra.mxu0 0.0
        %7076 = vmatprep.mubr.f32.mxu0 0.0
        %7077 = vmatmul.mubr.f32.gmra.mxu0 %v7001
        %v7078 = vpop.f32.mrf.mxu0
        %v7079 = vadd.f32 0.0, %v7078
        %v7080 = vpop.f32.mrf.mxu0
        %7081 = vmatprep.mubr.f32.mxu0 0.0
        %7082 = vmatmul.mubr.f32.gmra.mxu0 %v7004
        %v7083 = vpop.f32.mrf.mxu0
        %v7084 = vadd.f32 0.0, %v7083
        %v7085 = vpop.f32.mrf.mxu0
        %7086 = vmatprep.mubr.f32.mxu0 0.0
        %7087 = vmatmul.mubr.f32.gmra.mxu0 %v7007
        %v7088 = vpop.f32.mrf.mxu0
        %v7089 = vadd.f32 0.0, %v7088
        %v7090 = vpop.f32.mrf.mxu0
        %7091 = vmatprep.mubr.f32.mxu0 0.0
        %7092 = vmatmul.mubr.f32.gmra.mxu0 %v7010
        %v7093 = vpop.f32.mrf.mxu0
        %v7094 = vadd.f32 0.0, %v7093
        %v7095 = vpop.f32.mrf.mxu0
        %7096 = vdwg.mxu0
        %v7097 = vadd.f32 %v6725, %v7079
        %v7098 = vadd.f32 %v6726, %v7084
        %v7099 = vadd.f32 %v6727, %v7089
        %v7100 = vadd.f32 %v6728, %v7094
        %7101 = vrot.lane.b32.xlu0 %v5789, 104
        %v7102 = vpop.permute.xlu0 %7101
        %7103 = vrot.lane.b32.xlu0 %v5794, 104
        %v7104 = vpop.permute.xlu0 %7103
        %7105 = vrot.lane.b32.xlu0 %v5799, 104
        %v7106 = vpop.permute.xlu0 %7105
        %7107 = vrot.lane.b32.xlu0 %v5804, 104
        %v7108 = vpop.permute.xlu0 %7107
        %7109 = vrot.lane.b32.xlu0 %v5879, 104
        %v7110 = vpop.permute.xlu0 %7109
        %7111 = vrot.lane.b32.xlu0 %v5884, 104
        %v7112 = vpop.permute.xlu0 %7111
        %7113 = vrot.lane.b32.xlu0 %v5889, 104
        %v7114 = vpop.permute.xlu0 %7113
        %7115 = vrot.lane.b32.xlu0 %v5894, 104
        %v7116 = vpop.permute.xlu0 %7115
        %v7117 = vsel %vm2346, %v7102, 0
        %v7119 = vsel %vm2346, %v7104, 0
        %v7121 = vsel %vm2346, %v7106, 0
        %v7123 = vsel %vm2346, %v7108, 0
        %v7125 = vsel %vm2346, %v7110, 0
        %v7127 = vsel %vm2346, %v7112, 0
        %v7129 = vsel %vm2346, %v7114, 0
        %v7131 = vsel %vm2346, %v7116, 0
        %7133 = vmatprep.subr.mxu0 0.0
        %7134 = vmatpush1.xpose.msra.mxu0 0.0
        %7135 = vmatprep.subr.mxu0 0.0
        %7136 = vmatpush1.xpose.msra.mxu0 0.0
        %7137 = vmatprep.subr.mxu0 0.0
        %7138 = vmatpush1.xpose.msra.mxu0 0.0
        %7139 = vmatprep.subr.mxu0 0.0
        %7140 = vmatpush1.xpose.msra.mxu0 0.0
        %7141 = vmatprep.subr.mxu0 0.0
        %7142 = vmatpush1.xpose.msra.mxu0 0.0
        %7143 = vmatprep.subr.mxu0 0.0
        %7144 = vmatpush1.xpose.msra.mxu0 0.0
        %7145 = vmatprep.subr.mxu0 0.0
        %7146 = vmatpush1.xpose.msra.mxu0 0.0
        %7147 = vmatprep.subr.mxu0 0.0
        %7148 = vmatpush1.xpose.msra.mxu0 0.0
        %7149 = vmatprep.subr.mxu0 0.0
        %7150 = vmatpush1.xpose.msra.mxu0 0.0
        %7151 = vmatprep.subr.mxu0 0.0
        %7152 = vmatpush1.xpose.msra.mxu0 0.0
        %7153 = vmatprep.subr.mxu0 0.0
        %7154 = vmatpush1.xpose.msra.mxu0 0.0
        %7155 = vmatprep.subr.mxu0 0.0
        %7156 = vmatpush1.xpose.msra.mxu0 0.0
        %7157 = vmatprep.subr.mxu0 0.0
        %7158 = vmatpush1.xpose.msra.mxu0 %v7131
        %7159 = vmatprep.subr.mxu0 0.0
        %7160 = vmatpush1.xpose.msra.mxu0 %v7129
        %7161 = vmatprep.subr.mxu0 0.0
        %7162 = vmatpush1.xpose.msra.mxu0 %v7127
        %7163 = vmatprep.subr.mxu0 0.0
        %7164 = vmatpush1.xpose.msra.mxu0 %v7125
        %7165 = vmatprep.subr.mxu0 0.0
        %7166 = vmatpush2.xpose.msra.mxu0 0.0
        %7167 = vmatprep.subr.mxu0 0.0
        %7168 = vmatpush2.xpose.msra.mxu0 0.0
        %7169 = vmatprep.subr.mxu0 0.0
        %7170 = vmatpush2.xpose.msra.mxu0 0.0
        %7171 = vmatprep.subr.mxu0 0.0
        %7172 = vmatpush2.xpose.msra.mxu0 0.0
        %7173 = vmatprep.subr.mxu0 0.0
        %7174 = vmatpush2.xpose.msra.mxu0 0.0
        %7175 = vmatprep.subr.mxu0 0.0
        %7176 = vmatpush2.xpose.msra.mxu0 0.0
        %7177 = vmatprep.subr.mxu0 0.0
        %7178 = vmatpush2.xpose.msra.mxu0 0.0
        %7179 = vmatprep.subr.mxu0 0.0
        %7180 = vmatpush2.xpose.msra.mxu0 0.0
        %7181 = vmatprep.subr.mxu0 0.0
        %7182 = vmatpush2.xpose.msra.mxu0 0.0
        %7183 = vmatprep.subr.mxu0 0.0
        %7184 = vmatpush2.xpose.msra.mxu0 0.0
        %7185 = vmatprep.subr.mxu0 0.0
        %7186 = vmatpush2.xpose.msra.mxu0 0.0
        %7187 = vmatprep.subr.mxu0 0.0
        %7188 = vmatpush2.xpose.msra.mxu0 0.0
        %7189 = vmatprep.subr.mxu0 0.0
        %7190 = vmatpush2.xpose.msra.mxu0 0.0
        %7191 = vmatprep.subr.mxu0 0.0
        %7192 = vmatpush2.xpose.msra.mxu0 0.0
        %7193 = vmatprep.subr.mxu0 0.0
        %7194 = vmatpush2.xpose.msra.mxu0 0.0
        %7195 = vmatprep.subr.mxu0 0.0
        %7196 = vmatpush2.xpose.msra.mxu0 0.0
        %7197 = vmatprep.mubr.f32.mxu0 0.0
        %7198 = vmatmul.mubr.f32.gmra.mxu0 %v7117
        %v7199 = vpop.f32.mrf.mxu0
        %v7200 = vadd.f32 %v3522, %v7199
        %v7201 = vpop.f32.mrf.mxu0
        %7202 = vmatprep.mubr.f32.mxu0 0.0
        %7203 = vmatmul.mubr.f32.gmra.mxu0 %v7119
        %v7204 = vpop.f32.mrf.mxu0
        %v7205 = vadd.f32 %v3523, %v7204
        %v7206 = vpop.f32.mrf.mxu0
        %7207 = vmatprep.mubr.f32.mxu0 0.0
        %7208 = vmatmul.mubr.f32.gmra.mxu0 %v7121
        %v7209 = vpop.f32.mrf.mxu0
        %v7210 = vadd.f32 %v3524, %v7209
        %v7211 = vpop.f32.mrf.mxu0
        %7212 = vmatprep.mubr.f32.mxu0 0.0
        %7213 = vmatmul.mubr.f32.gmra.mxu0 %v7123
        %v7214 = vpop.f32.mrf.mxu0
        %v7215 = vadd.f32 %v3525, %v7214
        %v7216 = vpop.f32.mrf.mxu0
        %7217 = vdwg.mxu0
        %v7218 = vsel %vm3919, %v7200, -inf
        %7219 = vmax.xlane.f32.xlu0 %v7218
        %v7220 = vpop.xlane.xlu0 %7219
        %v7221 = vsel %vm3919, %v7205, -inf
        %7222 = vmax.xlane.f32.xlu0 %v7221
        %v7223 = vpop.xlane.xlu0 %7222
        %v7224 = vsel %vm3919, %v7210, -inf
        %7225 = vmax.xlane.f32.xlu0 %v7224
        %v7226 = vpop.xlane.xlu0 %7225
        %v7227 = vsel %vm3929, %v7215, -inf
        %7228 = vmax.xlane.f32.xlu0 %v7227
        %v7229 = vpop.xlane.xlu0 %7228
        %v7230 = vsub.f32 %v7200, %v7220
        %v7231 = vsub.f32 %v7205, %v7223
        %v7232 = vsub.f32 %v7210, %v7226
        %v7233 = vsub.f32 %v7215, %v7229
        %v7234 = vmul.f32 %v7230, 1.442695
        %v7235 = vpow.pop %v7234
        %v7236 = vmul.f32 %v7231, 1.442695
        %v7237 = vpow.pop %v7236
        %v7238 = vmul.f32 %v7232, 1.442695
        %v7239 = vpow.pop %v7238
        %v7240 = vmul.f32 %v7233, 1.442695
        %v7241 = vpow.pop %v7240
        %v7242 = vsel %vm3919, %v7235, 0.0
        %7243 = vadd.xlane.f32.xlu0 %v7242
        %v7244 = vpop.xlane.xlu0 %7243
        %v7245 = vsel %vm3919, %v7237, 0.0
        %7246 = vadd.xlane.f32.xlu0 %v7245
        %v7247 = vpop.xlane.xlu0 %7246
        %v7248 = vsel %vm3919, %v7239, 0.0
        %7249 = vadd.xlane.f32.xlu0 %v7248
        %v7250 = vpop.xlane.xlu0 %7249
        %v7251 = vsel %vm3929, %v7241, 0.0
        %7252 = vadd.xlane.f32.xlu0 %v7251
        %v7253 = vpop.xlane.xlu0 %7252
        %v7254 = vrcp.pop %v7244
        %v7255 = vrcp.pop %v7247
        %v7256 = vrcp.pop %v7250
        %v7257 = vrcp.pop %v7253
        %v7258 = vmul.f32 %v7235, %v7254
        %v7259 = vmul.f32 %v7237, %v7255
        %v7260 = vmul.f32 %v7239, %v7256
        %v7261 = vmul.f32 %v7241, %v7257
        %7262 = vrot.lane.b32.xlu0 %v5969, 104
        %v7263 = vpop.permute.xlu0 %7262
        %7264 = vrot.lane.b32.xlu0 %v5974, 104
        %v7265 = vpop.permute.xlu0 %7264
        %7266 = vrot.lane.b32.xlu0 %v5979, 104
        %v7267 = vpop.permute.xlu0 %7266
        %7268 = vrot.lane.b32.xlu0 %v5984, 104
        %v7269 = vpop.permute.xlu0 %7268
        %v7274 = vsel %vm3919, %v7258, 0
        %v7277 = vsel %vm3919, %v7259, 0
        %v7280 = vsel %vm3919, %v7260, 0
        %v7283 = vsel %vm3919, %v7261, 0
        %v7285 = vsel %vm3977, %v7269, 0
        %7287 = vmatprep.subr.mxu0 0.0
        %7288 = vmatpush1.msra.mxu0 0.0
        %7289 = vmatprep.subr.mxu0 0.0
        %7290 = vmatpush1.msra.mxu0 0.0
        %7291 = vmatprep.subr.mxu0 0.0
        %7292 = vmatpush1.msra.mxu0 0.0
        %7293 = vmatprep.subr.mxu0 0.0
        %7294 = vmatpush1.msra.mxu0 0.0
        %7295 = vmatprep.subr.mxu0 0.0
        %7296 = vmatpush1.msra.mxu0 0.0
        %7297 = vmatprep.subr.mxu0 0.0
        %7298 = vmatpush1.msra.mxu0 0.0
        %7299 = vmatprep.subr.mxu0 0.0
        %7300 = vmatpush1.msra.mxu0 0.0
        %7301 = vmatprep.subr.mxu0 0.0
        %7302 = vmatpush1.msra.mxu0 0.0
        %7303 = vmatprep.subr.mxu0 0.0
        %7304 = vmatpush1.msra.mxu0 0.0
        %7305 = vmatprep.subr.mxu0 0.0
        %7306 = vmatpush1.msra.mxu0 0.0
        %7307 = vmatprep.subr.mxu0 0.0
        %7308 = vmatpush1.msra.mxu0 0.0
        %7309 = vmatprep.subr.mxu0 0.0
        %7310 = vmatpush1.msra.mxu0 0.0
        %7311 = vmatprep.subr.mxu0 0.0
        %7312 = vmatpush1.msra.mxu0 %v7285
        %7313 = vmatprep.subr.mxu0 0.0
        %7314 = vmatpush1.msra.mxu0 %v7267
        %7315 = vmatprep.subr.mxu0 0.0
        %7316 = vmatpush1.msra.mxu0 %v7265
        %7317 = vmatprep.subr.mxu0 0.0
        %7318 = vmatpush1.msra.mxu0 %v7263
        %7319 = vmatprep.subr.mxu0 0.0
        %7320 = vmatpush2.msra.mxu0 0.0
        %7321 = vmatprep.subr.mxu0 0.0
        %7322 = vmatpush2.msra.mxu0 0.0
        %7323 = vmatprep.subr.mxu0 0.0
        %7324 = vmatpush2.msra.mxu0 0.0
        %7325 = vmatprep.subr.mxu0 0.0
        %7326 = vmatpush2.msra.mxu0 0.0
        %7327 = vmatprep.subr.mxu0 0.0
        %7328 = vmatpush2.msra.mxu0 0.0
        %7329 = vmatprep.subr.mxu0 0.0
        %7330 = vmatpush2.msra.mxu0 0.0
        %7331 = vmatprep.subr.mxu0 0.0
        %7332 = vmatpush2.msra.mxu0 0.0
        %7333 = vmatprep.subr.mxu0 0.0
        %7334 = vmatpush2.msra.mxu0 0.0
        %7335 = vmatprep.subr.mxu0 0.0
        %7336 = vmatpush2.msra.mxu0 0.0
        %7337 = vmatprep.subr.mxu0 0.0
        %7338 = vmatpush2.msra.mxu0 0.0
        %7339 = vmatprep.subr.mxu0 0.0
        %7340 = vmatpush2.msra.mxu0 0.0
        %7341 = vmatprep.subr.mxu0 0.0
        %7342 = vmatpush2.msra.mxu0 0.0
        %7343 = vmatprep.subr.mxu0 0.0
        %7344 = vmatpush2.msra.mxu0 0.0
        %7345 = vmatprep.subr.mxu0 0.0
        %7346 = vmatpush2.msra.mxu0 0.0
        %7347 = vmatprep.subr.mxu0 0.0
        %7348 = vmatpush2.msra.mxu0 0.0
        %7349 = vmatprep.subr.mxu0 0.0
        %7350 = vmatpush2.msra.mxu0 0.0
        %7351 = vmatprep.mubr.f32.mxu0 0.0
        %7352 = vmatmul.mubr.f32.gmra.mxu0 %v7274
        %v7353 = vpop.f32.mrf.mxu0
        %v7354 = vadd.f32 0.0, %v7353
        %v7355 = vpop.f32.mrf.mxu0
        %7356 = vmatprep.mubr.f32.mxu0 0.0
        %7357 = vmatmul.mubr.f32.gmra.mxu0 %v7277
        %v7358 = vpop.f32.mrf.mxu0
        %v7359 = vadd.f32 0.0, %v7358
        %v7360 = vpop.f32.mrf.mxu0
        %7361 = vmatprep.mubr.f32.mxu0 0.0
        %7362 = vmatmul.mubr.f32.gmra.mxu0 %v7280
        %v7363 = vpop.f32.mrf.mxu0
        %v7364 = vadd.f32 0.0, %v7363
        %v7365 = vpop.f32.mrf.mxu0
        %7366 = vmatprep.mubr.f32.mxu0 0.0
        %7367 = vmatmul.mubr.f32.gmra.mxu0 %v7283
        %v7368 = vpop.f32.mrf.mxu0
        %v7369 = vadd.f32 0.0, %v7368
        %v7370 = vpop.f32.mrf.mxu0
        %7371 = vdwg.mxu0
        %v7373 = vsel %vm2346, %v7354, 0
        %v7376 = vsel %vm2346, %v7359, 0
        %v7379 = vsel %vm2346, %v7364, 0
        %v7382 = vsel %vm2346, %v7369, 0
        %7384 = vmatprep.subr.mxu0 0.0
        %7385 = vmatpush1.msra.mxu0 0.0
        %7386 = vmatprep.subr.mxu0 0.0
        %7387 = vmatpush1.msra.mxu0 0.0
        %7388 = vmatprep.subr.mxu0 0.0
        %7389 = vmatpush1.msra.mxu0 0.0
        %7390 = vmatprep.subr.mxu0 0.0
        %7391 = vmatpush1.msra.mxu0 0.0
        %7392 = vmatprep.subr.mxu0 0.0
        %7393 = vmatpush1.msra.mxu0 0.0
        %7394 = vmatprep.subr.mxu0 0.0
        %7395 = vmatpush1.msra.mxu0 0.0
        %7396 = vmatprep.subr.mxu0 0.0
        %7397 = vmatpush1.msra.mxu0 0.0
        %7398 = vmatprep.subr.mxu0 0.0
        %7399 = vmatpush1.msra.mxu0 0.0
        %7400 = vmatprep.subr.mxu0 0.0
        %7401 = vmatpush1.msra.mxu0 0.0
        %7402 = vmatprep.subr.mxu0 0.0
        %7403 = vmatpush1.msra.mxu0 0.0
        %7404 = vmatprep.subr.mxu0 0.0
        %7405 = vmatpush1.msra.mxu0 0.0
        %7406 = vmatprep.subr.mxu0 0.0
        %7407 = vmatpush1.msra.mxu0 0.0
        %7408 = vmatprep.subr.mxu0 0.0
        %7409 = vmatpush1.msra.mxu0 0.0
        %7410 = vmatprep.subr.mxu0 0.0
        %7411 = vmatpush1.msra.mxu0 0.0
        %7412 = vmatprep.subr.mxu0 0.0
        %7413 = vmatpush1.msra.mxu0 0.0
        %7414 = vmatprep.subr.mxu0 0.0
        %7415 = vmatpush1.msra.mxu0 %v5991
        %7416 = vmatprep.subr.mxu0 0.0
        %7417 = vmatpush2.msra.mxu0 0.0
        %7418 = vmatprep.subr.mxu0 0.0
        %7419 = vmatpush2.msra.mxu0 0.0
        %7420 = vmatprep.subr.mxu0 0.0
        %7421 = vmatpush2.msra.mxu0 0.0
        %7422 = vmatprep.subr.mxu0 0.0
        %7423 = vmatpush2.msra.mxu0 0.0
        %7424 = vmatprep.subr.mxu0 0.0
        %7425 = vmatpush2.msra.mxu0 0.0
        %7426 = vmatprep.subr.mxu0 0.0
        %7427 = vmatpush2.msra.mxu0 0.0
        %7428 = vmatprep.subr.mxu0 0.0
        %7429 = vmatpush2.msra.mxu0 0.0
        %7430 = vmatprep.subr.mxu0 0.0
        %7431 = vmatpush2.msra.mxu0 0.0
        %7432 = vmatprep.subr.mxu0 0.0
        %7433 = vmatpush2.msra.mxu0 0.0
        %7434 = vmatprep.subr.mxu0 0.0
        %7435 = vmatpush2.msra.mxu0 0.0
        %7436 = vmatprep.subr.mxu0 0.0
        %7437 = vmatpush2.msra.mxu0 0.0
        %7438 = vmatprep.subr.mxu0 0.0
        %7439 = vmatpush2.msra.mxu0 0.0
        %7440 = vmatprep.subr.mxu0 0.0
        %7441 = vmatpush2.msra.mxu0 0.0
        %7442 = vmatprep.subr.mxu0 0.0
        %7443 = vmatpush2.msra.mxu0 0.0
        %7444 = vmatprep.subr.mxu0 0.0
        %7445 = vmatpush2.msra.mxu0 0.0
        %7446 = vmatprep.subr.mxu0 0.0
        %7447 = vmatpush2.msra.mxu0 0.0
        %7448 = vmatprep.mubr.f32.mxu0 0.0
        %7449 = vmatmul.mubr.f32.gmra.mxu0 %v7373
        %v7450 = vpop.f32.mrf.mxu0
        %v7451 = vadd.f32 0.0, %v7450
        %v7452 = vpop.f32.mrf.mxu0
        %7453 = vmatprep.mubr.f32.mxu0 0.0
        %7454 = vmatmul.mubr.f32.gmra.mxu0 %v7376
        %v7455 = vpop.f32.mrf.mxu0
        %v7456 = vadd.f32 0.0, %v7455
        %v7457 = vpop.f32.mrf.mxu0
        %7458 = vmatprep.mubr.f32.mxu0 0.0
        %7459 = vmatmul.mubr.f32.gmra.mxu0 %v7379
        %v7460 = vpop.f32.mrf.mxu0
        %v7461 = vadd.f32 0.0, %v7460
        %v7462 = vpop.f32.mrf.mxu0
        %7463 = vmatprep.mubr.f32.mxu0 0.0
        %7464 = vmatmul.mubr.f32.gmra.mxu0 %v7382
        %v7465 = vpop.f32.mrf.mxu0
        %v7466 = vadd.f32 0.0, %v7465
        %v7467 = vpop.f32.mrf.mxu0
        %7468 = vdwg.mxu0
        %v7469 = vadd.f32 %v7097, %v7451
        %v7470 = vadd.f32 %v7098, %v7456
        %v7471 = vadd.f32 %v7099, %v7461
        %v7472 = vadd.f32 %v7100, %v7466
        %v7473 = vadd.f32 %v7469, %v5701
        %v7474 = vadd.f32 %v7470, %v5702
        %v7475 = vadd.f32 %v7471, %v5703
        %v7476 = vadd.f32 %v7472, %v5704
        %s7477 = scalar_lea.vmem %s59, 1
        %v7478 = vld [vmem:[%s7477] sm:$0x1]
        %s7479 = scalar_lea.vmem %s61, 1
        %v7480 = vld [vmem:[%s7479] sm:$0x1]
        %v7481 = vsel %vm1766, %v7473, 0.0
        %7482 = vadd.xlane.f32.xlu0 %v7481
        %v7483 = vpop.xlane.xlu0 %7482
        %v7484 = vsel %vm1766, %v7474, 0.0
        %7485 = vadd.xlane.f32.xlu0 %v7484
        %v7486 = vpop.xlane.xlu0 %7485
        %v7487 = vsel %vm1766, %v7475, 0.0
        %7488 = vadd.xlane.f32.xlu0 %v7487
        %v7489 = vpop.xlane.xlu0 %7488
        %v7490 = vsel %vm3457, %v7476, 0.0
        %7491 = vadd.xlane.f32.xlu0 %v7490
        %v7492 = vpop.xlane.xlu0 %7491
        %v7493 = vmul.f32 %v7483, %v3461
        %v7494 = vmul.f32 %v7486, %v3461
        %v7495 = vmul.f32 %v7489, %v3461
        %v7496 = vmul.f32 %v7492, %v3461
        %v7497 = vsub.f32 %v7473, %v7493
        %v7498 = vsub.f32 %v7474, %v7494
        %v7499 = vsub.f32 %v7475, %v7495
        %v7500 = vsub.f32 %v7476, %v7496
        %v7501 = vmul.f32 %v7497, %v7497
        %v7502 = vmul.f32 %v7498, %v7498
        %v7503 = vmul.f32 %v7499, %v7499
        %v7504 = vmul.f32 %v7500, %v7500
        %v7505 = vsel %vm1766, %v7501, 0.0
        %7506 = vadd.xlane.f32.xlu0 %v7505
        %v7507 = vpop.xlane.xlu0 %7506
        %v7508 = vsel %vm1766, %v7502, 0.0
        %7509 = vadd.xlane.f32.xlu0 %v7508
        %v7510 = vpop.xlane.xlu0 %7509
        %v7511 = vsel %vm1766, %v7503, 0.0
        %7512 = vadd.xlane.f32.xlu0 %v7511
        %v7513 = vpop.xlane.xlu0 %7512
        %v7514 = vsel %vm3457, %v7504, 0.0
        %7515 = vadd.xlane.f32.xlu0 %v7514
        %v7516 = vpop.xlane.xlu0 %7515
        %v7517 = vmul.f32 %v7507, %v3461
        %v7518 = vmul.f32 %v7510, %v3461
        %v7519 = vmul.f32 %v7513, %v3461
        %v7520 = vmul.f32 %v7516, %v3461
        %v7521 = vadd.f32 %v7517, 1e-06
        %v7522 = vadd.f32 %v7518, 1e-06
        %v7523 = vadd.f32 %v7519, 1e-06
        %v7524 = vadd.f32 %v7520, 1e-06
        %v7525 = vrsqrt.pop %v7521
        %v7526 = vrsqrt.pop %v7522
        %v7527 = vrsqrt.pop %v7523
        %v7528 = vrsqrt.pop %v7524
        %v7529 = vmul.f32 %v7497, %v7525
        %v7530 = vmul.f32 %v7498, %v7526
        %v7531 = vmul.f32 %v7499, %v7527
        %v7532 = vmul.f32 %v7500, %v7528
        %v7534 = vlaneseq
        %v7535 = vshrl.u32 %v7534, 7
        %v7536 = vsub.s32 0, %v7535
        %v7537 = vrot.slane %v7478, %v7536
        %v7539 = vmul.f32 %v7529, %v7537
        %v7540 = vmul.f32 %v7530, %v7537
        %v7541 = vmul.f32 %v7531, %v7537
        %v7542 = vmul.f32 %v7532, %v7537
        %v7544 = vlaneseq
        %v7545 = vshrl.u32 %v7544, 7
        %v7546 = vsub.s32 0, %v7545
        %v7547 = vrot.slane %v7480, %v7546
        %v7549 = vadd.f32 %v7539, %v7547
        %v7550 = vadd.f32 %v7540, %v7547
        %v7551 = vadd.f32 %v7541, %v7547
        %v7552 = vadd.f32 %v7542, %v7547
        %s7553 = scalar_lea.vmem %s63, 32
        %v7554 = vld [vmem:[%s7553] sm:$0xff]
        %v7555 = vld [vmem:[%s7553 + $0x8] sm:$0xff]
        %v7556 = vld [vmem:[%s7553 + $0x10] sm:$0xff]
        %v7557 = vld [vmem:[%s7553 + $0x18] sm:$0xff]
        %s7558 = scalar_lea.vmem %s65, 1
        %v7559 = vld [vmem:[%s7558] sm:$0x1]
        %v7561 = vlaneseq
        %v7562 = vshrl.u32 %v7561, 7
        %v7563 = vsub.s32 0, %v7562
        %v7564 = vrot.slane %v7559, %v7563
        %v7567 = vsel %vm1766, %v7549, 0
        %v7570 = vsel %vm1766, %v7550, 0
        %v7573 = vsel %vm1766, %v7551, 0
        %v7576 = vsel %vm1766, %v7552, 0
        %7578 = vmatprep.subr.mxu0 0.0
        %7579 = vmatpush1.msra.mxu0 0.0
        %7580 = vmatprep.subr.mxu0 0.0
        %7581 = vmatpush1.msra.mxu0 0.0
        %7582 = vmatprep.subr.mxu0 0.0
        %7583 = vmatpush1.msra.mxu0 0.0
        %7584 = vmatprep.subr.mxu0 0.0
        %7585 = vmatpush1.msra.mxu0 0.0
        %7586 = vmatprep.subr.mxu0 0.0
        %7587 = vmatpush1.msra.mxu0 0.0
        %7588 = vmatprep.subr.mxu0 0.0
        %7589 = vmatpush1.msra.mxu0 0.0
        %7590 = vmatprep.subr.mxu0 0.0
        %7591 = vmatpush1.msra.mxu0 0.0
        %7592 = vmatprep.subr.mxu0 0.0
        %7593 = vmatpush1.msra.mxu0 0.0
        %7594 = vmatprep.subr.mxu0 0.0
        %7595 = vmatpush1.msra.mxu0 0.0
        %7596 = vmatprep.subr.mxu0 0.0
        %7597 = vmatpush1.msra.mxu0 0.0
        %7598 = vmatprep.subr.mxu0 0.0
        %7599 = vmatpush1.msra.mxu0 0.0
        %7600 = vmatprep.subr.mxu0 0.0
        %7601 = vmatpush1.msra.mxu0 0.0
        %7602 = vmatprep.subr.mxu0 0.0
        %7603 = vmatpush1.msra.mxu0 %v7557
        %7604 = vmatprep.subr.mxu0 0.0
        %7605 = vmatpush1.msra.mxu0 %v7556
        %7606 = vmatprep.subr.mxu0 0.0
        %7607 = vmatpush1.msra.mxu0 %v7555
        %7608 = vmatprep.subr.mxu0 0.0
        %7609 = vmatpush1.msra.mxu0 %v7554
        %7610 = vmatprep.subr.mxu0 0.0
        %7611 = vmatpush2.msra.mxu0 0.0
        %7612 = vmatprep.subr.mxu0 0.0
        %7613 = vmatpush2.msra.mxu0 0.0
        %7614 = vmatprep.subr.mxu0 0.0
        %7615 = vmatpush2.msra.mxu0 0.0
        %7616 = vmatprep.subr.mxu0 0.0
        %7617 = vmatpush2.msra.mxu0 0.0
        %7618 = vmatprep.subr.mxu0 0.0
        %7619 = vmatpush2.msra.mxu0 0.0
        %7620 = vmatprep.subr.mxu0 0.0
        %7621 = vmatpush2.msra.mxu0 0.0
        %7622 = vmatprep.subr.mxu0 0.0
        %7623 = vmatpush2.msra.mxu0 0.0
        %7624 = vmatprep.subr.mxu0 0.0
        %7625 = vmatpush2.msra.mxu0 0.0
        %7626 = vmatprep.subr.mxu0 0.0
        %7627 = vmatpush2.msra.mxu0 0.0
        %7628 = vmatprep.subr.mxu0 0.0
        %7629 = vmatpush2.msra.mxu0 0.0
        %7630 = vmatprep.subr.mxu0 0.0
        %7631 = vmatpush2.msra.mxu0 0.0
        %7632 = vmatprep.subr.mxu0 0.0
        %7633 = vmatpush2.msra.mxu0 0.0
        %7634 = vmatprep.subr.mxu0 0.0
        %7635 = vmatpush2.msra.mxu0 0.0
        %7636 = vmatprep.subr.mxu0 0.0
        %7637 = vmatpush2.msra.mxu0 0.0
        %7638 = vmatprep.subr.mxu0 0.0
        %7639 = vmatpush2.msra.mxu0 0.0
        %7640 = vmatprep.subr.mxu0 0.0
        %7641 = vmatpush2.msra.mxu0 0.0
        %7642 = vmatprep.mubr.f32.mxu0 0.0
        %7643 = vmatmul.mubr.f32.gmra.mxu0 %v7567
        %v7644 = vpop.f32.mrf.mxu0
        %v7645 = vadd.f32 %v7564, %v7644
        %v7646 = vpop.f32.mrf.mxu0
        %7647 = vmatprep.mubr.f32.mxu0 0.0
        %7648 = vmatmul.mubr.f32.gmra.mxu0 %v7570
        %v7649 = vpop.f32.mrf.mxu0
        %v7650 = vadd.f32 %v7564, %v7649
        %v7651 = vpop.f32.mrf.mxu0
        %7652 = vmatprep.mubr.f32.mxu0 0.0
        %7653 = vmatmul.mubr.f32.gmra.mxu0 %v7573
        %v7654 = vpop.f32.mrf.mxu0
        %v7655 = vadd.f32 %v7564, %v7654
        %v7656 = vpop.f32.mrf.mxu0
        %7657 = vmatprep.mubr.f32.mxu0 0.0
        %7658 = vmatmul.mubr.f32.gmra.mxu0 %v7576
        %v7659 = vpop.f32.mrf.mxu0
        %v7660 = vadd.f32 %v7564, %v7659
        %v7661 = vpop.f32.mrf.mxu0
        %7662 = vdwg.mxu0
        %v7663 = vmul.f32 %v7645, 0.5
        %v7664 = vmul.f32 %v7650, 0.5
        %v7665 = vmul.f32 %v7655, 0.5
        %v7666 = vmul.f32 %v7660, 0.5
        %v7667 = vmul.f32 %v7645, 0.044715
        %v7668 = vmul.f32 %v7650, 0.044715
        %v7669 = vmul.f32 %v7655, 0.044715
        %v7670 = vmul.f32 %v7660, 0.044715
        %v7671 = vmul.f32 %v7667, %v7645
        %v7672 = vmul.f32 %v7668, %v7650
        %v7673 = vmul.f32 %v7669, %v7655
        %v7674 = vmul.f32 %v7670, %v7660
        %v7675 = vmul.f32 %v7671, %v7645
        %v7676 = vmul.f32 %v7672, %v7650
        %v7677 = vmul.f32 %v7673, %v7655
        %v7678 = vmul.f32 %v7674, %v7660
        %v7679 = vadd.f32 %v7645, %v7675
        %v7680 = vadd.f32 %v7650, %v7676
        %v7681 = vadd.f32 %v7655, %v7677
        %v7682 = vadd.f32 %v7660, %v7678
        %v7683 = vmul.f32 %v7679, 0.7978846
        %v7684 = vmul.f32 %v7680, 0.7978846
        %v7685 = vmul.f32 %v7681, 0.7978846
        %v7686 = vmul.f32 %v7682, 0.7978846
        %v7687 = vtanh.pop %v7683
        %v7688 = vtanh.pop %v7684
        %v7689 = vtanh.pop %v7685
        %v7690 = vtanh.pop %v7686
        %v7691 = vadd.f32 %v7687, 1.0
        %v7692 = vadd.f32 %v7688, 1.0
        %v7693 = vadd.f32 %v7689, 1.0
        %v7694 = vadd.f32 %v7690, 1.0
        %v7695 = vmul.f32 %v7663, %v7691
        %v7696 = vmul.f32 %v7664, %v7692
        %v7697 = vmul.f32 %v7665, %v7693
        %v7698 = vmul.f32 %v7666, %v7694
        %s7699 = scalar_lea.vmem %s67, 64
        %v7700 = vld [vmem:[%s7699] sm:$0xff]
        %v7701 = vld [vmem:[%s7699 + $0x8] sm:$0xff]
        %v7702 = vld [vmem:[%s7699 + $0x10] sm:$0xff]
        %v7703 = vld [vmem:[%s7699 + $0x18] sm:$0xff]
        %v7704 = vld [vmem:[%s7699 + $0x20] sm:$0xff]
        %v7705 = vld [vmem:[%s7699 + $0x28] sm:$0xff]
        %v7706 = vld [vmem:[%s7699 + $0x30] sm:$0xff]
        %v7707 = vld [vmem:[%s7699 + $0x38] sm:$0xff]
        %s7708 = scalar_lea.vmem %s69, 1
        %v7709 = vld [vmem:[%s7708] sm:$0x1]
        %v7711 = vlaneseq
        %v7712 = vshrl.u32 %v7711, 7
        %v7713 = vsub.s32 0, %v7712
        %v7714 = vrot.slane %v7709, %v7713
        %v7717 = vsel %vm5529, %v7695, 0
        %v7720 = vsel %vm5529, %v7696, 0
        %v7723 = vsel %vm5529, %v7697, 0
        %v7726 = vsel %vm5529, %v7698, 0
        %7728 = vmatprep.subr.mxu0 0.0
        %7729 = vmatpush1.msra.mxu0 0.0
        %7730 = vmatprep.subr.mxu0 0.0
        %7731 = vmatpush1.msra.mxu0 0.0
        %7732 = vmatprep.subr.mxu0 0.0
        %7733 = vmatpush1.msra.mxu0 0.0
        %7734 = vmatprep.subr.mxu0 0.0
        %7735 = vmatpush1.msra.mxu0 0.0
        %7736 = vmatprep.subr.mxu0 0.0
        %7737 = vmatpush1.msra.mxu0 0.0
        %7738 = vmatprep.subr.mxu0 0.0
        %7739 = vmatpush1.msra.mxu0 0.0
        %7740 = vmatprep.subr.mxu0 0.0
        %7741 = vmatpush1.msra.mxu0 0.0
        %7742 = vmatprep.subr.mxu0 0.0
        %7743 = vmatpush1.msra.mxu0 0.0
        %7744 = vmatprep.subr.mxu0 0.0
        %7745 = vmatpush1.msra.mxu0 %v7707
        %7746 = vmatprep.subr.mxu0 0.0
        %7747 = vmatpush1.msra.mxu0 %v7706
        %7748 = vmatprep.subr.mxu0 0.0
        %7749 = vmatpush1.msra.mxu0 %v7705
        %7750 = vmatprep.subr.mxu0 0.0
        %7751 = vmatpush1.msra.mxu0 %v7704
        %7752 = vmatprep.subr.mxu0 0.0
        %7753 = vmatpush1.msra.mxu0 %v7703
        %7754 = vmatprep.subr.mxu0 0.0
        %7755 = vmatpush1.msra.mxu0 %v7702
        %7756 = vmatprep.subr.mxu0 0.0
        %7757 = vmatpush1.msra.mxu0 %v7701
        %7758 = vmatprep.subr.mxu0 0.0
        %7759 = vmatpush1.msra.mxu0 %v7700
        %7760 = vmatprep.subr.mxu0 0.0
        %7761 = vmatpush2.msra.mxu0 0.0
        %7762 = vmatprep.subr.mxu0 0.0
        %7763 = vmatpush2.msra.mxu0 0.0
        %7764 = vmatprep.subr.mxu0 0.0
        %7765 = vmatpush2.msra.mxu0 0.0
        %7766 = vmatprep.subr.mxu0 0.0
        %7767 = vmatpush2.msra.mxu0 0.0
        %7768 = vmatprep.subr.mxu0 0.0
        %7769 = vmatpush2.msra.mxu0 0.0
        %7770 = vmatprep.subr.mxu0 0.0
        %7771 = vmatpush2.msra.mxu0 0.0
        %7772 = vmatprep.subr.mxu0 0.0
        %7773 = vmatpush2.msra.mxu0 0.0
        %7774 = vmatprep.subr.mxu0 0.0
        %7775 = vmatpush2.msra.mxu0 0.0
        %7776 = vmatprep.subr.mxu0 0.0
        %7777 = vmatpush2.msra.mxu0 0.0
        %7778 = vmatprep.subr.mxu0 0.0
        %7779 = vmatpush2.msra.mxu0 0.0
        %7780 = vmatprep.subr.mxu0 0.0
        %7781 = vmatpush2.msra.mxu0 0.0
        %7782 = vmatprep.subr.mxu0 0.0
        %7783 = vmatpush2.msra.mxu0 0.0
        %7784 = vmatprep.subr.mxu0 0.0
        %7785 = vmatpush2.msra.mxu0 0.0
        %7786 = vmatprep.subr.mxu0 0.0
        %7787 = vmatpush2.msra.mxu0 0.0
        %7788 = vmatprep.subr.mxu0 0.0
        %7789 = vmatpush2.msra.mxu0 0.0
        %7790 = vmatprep.subr.mxu0 0.0
        %7791 = vmatpush2.msra.mxu0 0.0
        %7792 = vmatprep.mubr.f32.mxu0 0.0
        %7793 = vmatmul.mubr.f32.gmra.mxu0 %v7717
        %v7794 = vpop.f32.mrf.mxu0
        %v7795 = vadd.f32 %v7714, %v7794
        %v7796 = vpop.f32.mrf.mxu0
        %7797 = vmatprep.mubr.f32.mxu0 0.0
        %7798 = vmatmul.mubr.f32.gmra.mxu0 %v7720
        %v7799 = vpop.f32.mrf.mxu0
        %v7800 = vadd.f32 %v7714, %v7799
        %v7801 = vpop.f32.mrf.mxu0
        %7802 = vmatprep.mubr.f32.mxu0 0.0
        %7803 = vmatmul.mubr.f32.gmra.mxu0 %v7723
        %v7804 = vpop.f32.mrf.mxu0
        %v7805 = vpop.f32.mrf.mxu0
        %7806 = vmatprep.mubr.f32.mxu0 0.0
        %7807 = vmatmul.mubr.f32.gmra.mxu0 %v7726
        %v7808 = vpop.f32.mrf.mxu0
        %v7809 = vpop.f32.mrf.mxu0
        %7810 = vdwg.mxu0
        %v7811 = vadd.f32 %v7795, %v7549
        %v7812 = vadd.f32 %v7800, %v7550
        %s7813 = scalar_lea.vmem %s71, 1
        %v7814 = vld [vmem:[%s7813] sm:$0x1]
        %s7815 = scalar_lea.vmem %s73, 1
        %v7816 = vld [vmem:[%s7815] sm:$0x1]
        %v7817 = vsel %vm1766, %v7811, 0.0
        %7818 = vadd.xlane.f32.xlu0 %v7817
        %v7819 = vpop.xlane.xlu0 %7818
        %v7820 = vsel %vm1766, %v7812, 0.0
        %7821 = vadd.xlane.f32.xlu0 %v7820
        %v7822 = vpop.xlane.xlu0 %7821
        %v7823 = vmul.f32 %v7819, %v3461
        %v7824 = vmul.f32 %v7822, %v3461
        %v7825 = vsub.f32 %v7811, %v7823
        %v7826 = vsub.f32 %v7812, %v7824
        %v7827 = vmul.f32 %v7825, %v7825
        %v7828 = vmul.f32 %v7826, %v7826
        %v7829 = vsel %vm1766, %v7827, 0.0
        %7830 = vadd.xlane.f32.xlu0 %v7829
        %v7831 = vpop.xlane.xlu0 %7830
        %v7832 = vsel %vm1766, %v7828, 0.0
        %7833 = vadd.xlane.f32.xlu0 %v7832
        %v7834 = vpop.xlane.xlu0 %7833
        %v7835 = vmul.f32 %v7831, %v3461
        %v7836 = vmul.f32 %v7834, %v3461
        %v7837 = vadd.f32 %v7835, 1e-06
        %v7838 = vadd.f32 %v7836, 1e-06
        %v7839 = vrsqrt.pop %v7837
        %v7840 = vrsqrt.pop %v7838
        %v7841 = vmul.f32 %v7825, %v7839
        %v7842 = vmul.f32 %v7826, %v7840
        %v7844 = vlaneseq
        %v7845 = vshrl.u32 %v7844, 7
        %v7846 = vsub.s32 0, %v7845
        %v7847 = vrot.slane %v7814, %v7846
        %v7849 = vmul.f32 %v7841, %v7847
        %v7850 = vmul.f32 %v7842, %v7847
        %v7852 = vlaneseq
        %v7853 = vshrl.u32 %v7852, 7
        %v7854 = vsub.s32 0, %v7853
        %v7855 = vrot.slane %v7816, %v7854
        %v7857 = vadd.f32 %v7849, %v7855
        %v7858 = vadd.f32 %v7850, %v7855
        %7859 = vst.msk [vmem:[%s1214] sm:$0xff] %vm1766, %v7857
        %7860 = vst.msk [vmem:[%s1214 + $0x8] sm:$0xff] %vm1766, %v7858
        %s7861 = sand.u32 %s888, 1
        %s7862 = scalar_lea.sflag [#allocation4], %s7861
        %s7863 = sand.u32 %s888, 1
        %s7864 = smul.addr %s7863, 16
        %s7865 = scalar_lea.vmem [#allocation13], %s7864
        // Predicated region
        $region193: #{tpu_custom_call.1} parent=167 // pred_check
          %p7866 = pneg %p898
        $region194: #{tpu_custom_call.1} parent=167 // pred_check_branch
          %7868 = sbr.rel (%p7866) target = $region196
        $region195: #{tpu_custom_call.1} parent=167 // pred_region
          %s7870 = ssub.s32 256, 256
          %7871 = vsyncadd %s7862, %s7870
          %s7872 = smul.addr %s93, 2
          %s7873 = smul.addr %s7872, 128
          %s7874 = scalar_lea.hbm %s75, %s7873
          %s7875 = sshll.u32 %s7865, 4
          %s7876 = int_to_ptr.vmem [resolvable:$true] %s7875
          %7881 = dma.vmem_to_hbm [thread:$0]  %s7876, 256, %s7874, %s7862, 128, 128, 8
        $region196: #{tpu_custom_call.1} parent=167 // pred_fallthru
          _
      $region168: #{tpu_custom_call.1} parent=5 // pred_fallthru
        _
      %p7882 = scmp.le.s32.totalorder 2, %s88
      // Predicated region
      $region197: #{tpu_custom_call.1} parent=5 // pred_check
        %p7883 = pneg %p7882
      $region198: #{tpu_custom_call.1} parent=5 // pred_check_branch
        %7885 = sbr.rel (%p7883) target = $region200
      $region199: #{tpu_custom_call.1} parent=5 // pred_region
        %s7886 = ssub.s32 %s88, 2
        // Predicated region
        $region201: #{tpu_custom_call.1} parent=199 // pred_check
          %p7887 = pneg %p904
        $region202: #{tpu_custom_call.1} parent=199 // pred_check_branch
          %7889 = sbr.rel (%p7887) target = $region204
        $region203: #{tpu_custom_call.1} parent=199 // pred_region
          %s7890 = sand.u32 %s889, 1
          %s7891 = scalar_lea.sflag [#allocation4], %s7890
          %s7892 = sand.u32 %s889, 1
          %s7893 = smul.addr %s7892, 16
          %s7894 = scalar_lea.vmem [#allocation13], %s7893
          %7895 = dma.done %s7891, 256
        $region204: #{tpu_custom_call.1} parent=199 // pred_fallthru
          _
      $region200: #{tpu_custom_call.1} parent=5 // pred_fallthru
        _
    $region6: #{tpu_custom_call.1} parent=1 // loop_footer
      %s92 = sadd.s32 1, %s88
    $region7: #{tpu_custom_call.1} parent=1 // loop_footer_branch
      %87 = sbr.rel target = $region3
    $region8: #{tpu_custom_call.1} parent=1 // loop_exit
      _
    %7896 = vsyncpa [#allocation3], 1
    %s7897 = scalar_lea.sflag [#allocation3], 1
    %7898 = vsyncpa %s7897, 1
    %7899 = vsyncpa [#allocation6], 1
    %7900 = vsyncpa [#allocation9], 1
    %7901 = vsyncpa [#allocation12], 1
    %7902 = vsyncpa [#allocation4], 1
    %s7903 = scalar_lea.sflag [#allocation4], 1
    %7904 = vsyncpa %s7903, 1

</llo_original>
